<compile_context>
chip_gen: v5e
topology: v5e:2x2
jax: 0.10.0
libtpu: 0.0.40
codegen_flags: <defaults>
</compile_context>

<pallas_src>
import functools

import jax
import jax.numpy as jnp
from jax import lax
from jax.experimental import pallas as pl
from jax.experimental.pallas import tpu as pltpu

EPS = 1e-5  # PyTorch nn.LayerNorm default eps
_NT = (((1,), (1,)), ((), ()))  # contract last dim of both operands: A @ B.T


def _layernorm_lastaxis(x, gamma, beta):
    mean = jnp.mean(x, axis=-1, keepdims=True)
    var = jnp.mean(jnp.square(x - mean), axis=-1, keepdims=True)
    return (x - mean) * lax.rsqrt(var + EPS) * gamma + beta


def seg_head_kernel(num_classes, num_heads,
                    x_ref, embed_ref,
                    g1_ref, b1_ref,
                    wq_ref, wv_ref, wproj_ref, bproj_ref,
                    g2_ref, b2_ref,
                    wfc1_ref, bfc1_ref, wfc2_ref, bfc2_ref,
                    gm_ref, bm_ref,
                    out_ref):
    # Synthesize the class-token rows in-kernel from the resident f32 embed
    # weight (sublane-aligned concat, K is a multiple of 8): the wrapper never
    # writes a (b, n_tok, dim) concat through HBM.
    x = jnp.concatenate([embed_ref[...], x_ref[...]], axis=0)   # (N, C) f32
    n_tok, dim = x.shape
    hd = dim // num_heads
    # shared-QK: fold sqrt(scale) into q so (q*s) @ (q*s).T == scale * q @ q.T
    sqrt_scale = float(hd) ** -0.25

    residual = x
    xn = _layernorm_lastaxis(x, g1_ref[...], b1_ref[...])
    xn_bf = xn.astype(jnp.bfloat16)

    # Per-head attention with per-head weight slabs: only leading-axis weight
    # indexing (no lane slicing of a fused q/v activation), and the output
    # projection is accumulated per head into a single f32 (N, dim) value
    # (no masked scratch stores, no bf16 store/reload round trip).
    attn_acc = jnp.zeros((n_tok, dim), jnp.float32)
    for h in range(num_heads):
        qh = jnp.dot(xn_bf, wq_ref[h], preferred_element_type=jnp.float32)
        vh = jnp.dot(xn_bf, wv_ref[h], preferred_element_type=jnp.float32)
        qh_bf = (qh * sqrt_scale).astype(jnp.bfloat16)
        vh_bf = vh.astype(jnp.bfloat16)
        # logits = scale * qh @ qh.T  (NT matmul, no explicit transpose)
        logits = lax.dot_general(qh_bf, qh_bf, _NT,
                                 preferred_element_type=jnp.float32)
        m = jnp.max(logits, axis=-1, keepdims=True)
        p = jnp.exp(logits - m)
        denom = jnp.sum(p, axis=-1, keepdims=True)
        p = p * pl.reciprocal(denom, approx=True)            # EUP slot
        oh = jnp.dot(p.astype(jnp.bfloat16), vh_bf,
                     preferred_element_type=jnp.float32)     # (N, hd)
        attn_acc = attn_acc + jnp.dot(oh.astype(jnp.bfloat16), wproj_ref[h],
                                      preferred_element_type=jnp.float32)

    x2 = residual + attn_acc + bproj_ref[...]
    x2 = _layernorm_lastaxis(x2, g2_ref[...], b2_ref[...])

    # classes = x2[:num_classes] -> classes_mlp(classes) is dead code in the
    # reference forward (result unused), so it is intentionally omitted.
    patches = x2[num_classes:, :]                            # (HW, C) f32

    hmid = jnp.dot(patches.astype(jnp.bfloat16), wfc1_ref[...],
                   preferred_element_type=jnp.float32) + bfc1_ref[...]
    hmid = jax.nn.gelu(hmid, approximate=True)               # tanh GELU -> EUP
    patches = jnp.dot(hmid.astype(jnp.bfloat16), wfc2_ref[...],
                      preferred_element_type=jnp.float32) + bfc2_ref[...]

    # masks^T = embed @ patches^T computed directly in lane-dense (K, HW)
    # layout (NT dot): no transposes, unmasked output stores (HW % 128 == 0).
    masks_t = lax.dot_general(embed_ref[...].astype(jnp.bfloat16),
                              patches.astype(jnp.bfloat16),
                              _NT, preferred_element_type=jnp.float32)
    mean = jnp.mean(masks_t, axis=0, keepdims=True)
    var = jnp.mean(jnp.square(masks_t - mean), axis=0, keepdims=True)
    masks_t = (masks_t - mean) * lax.rsqrt(var + EPS) * gm_ref[...] + bm_ref[...]
    out_ref[...] = masks_t


def transformer_segmentation_head(x_nchw, params, *, num_classes, num_heads):
    b, c, h, w = x_nchw.shape
    dim = c
    hw = h * w
    n_tok = num_classes + hw
    hd = dim // num_heads
    hidden = params["wfc1"].shape[1]

    # Glue: NCHW -> (b, hw, dim).  No class-token broadcast/concat here: the
    # class rows are built inside the kernel from the resident embed weight.
    x_seq = jnp.transpose(x_nchw, (0, 2, 3, 1)).reshape(b, hw, dim)

    bf16 = jnp.bfloat16
    wqkv = params["wqkv"]
    wq = wqkv[:, :dim]                                        # (dim, dim)
    wv = wqkv[:, dim:]                                        # (dim, dim)
    # Per-head weight slabs (leading head axis): no in-kernel lane slicing.
    wq_heads = wq.reshape(dim, num_heads, hd).transpose(1, 0, 2).astype(bf16)
    wv_heads = wv.reshape(dim, num_heads, hd).transpose(1, 0, 2).astype(bf16)
    wproj_heads = params["wproj"].reshape(num_heads, hd, dim).astype(bf16)

    weights = [
        params["embed"],                          # (K, dim)  f32 (tokens + mask dot)
        params["g1"], params["b1"],               # LN1       f32
        wq_heads, wv_heads, wproj_heads,          # per-head  bf16
        params["bproj"],                          # (1, dim)  f32
        params["g2"], params["b2"],               # LN2       f32
        params["wfc1"].astype(bf16), params["bfc1"],
        params["wfc2"].astype(bf16), params["bfc2"],
        params["gm"].reshape(num_classes, 1),     # (K, 1)    f32
        params["bm"].reshape(num_classes, 1),     # (K, 1)    f32
    ]

    def _resident(shape):
        nd = len(shape)
        return pl.BlockSpec(shape, lambda i, _nd=nd: (0,) * _nd)

    in_specs = [pl.BlockSpec((pl.Squeezed(), hw, dim), lambda i: (i, 0, 0))]
    in_specs += [_resident(wgt.shape) for wgt in weights]

    kernel = functools.partial(seg_head_kernel, num_classes, num_heads)

    # Advisory cost estimate so XLA schedules the surrounding reshapes sensibly.
    flops = b * (
        2 * n_tok * dim * (2 * dim)                 # q/v projections
        + num_heads * 4 * n_tok * n_tok * hd        # logits + p@v
        + 2 * n_tok * dim * dim                     # output projection
        + 4 * hw * dim * hidden                     # MLP
        + 2 * num_classes * hw * dim)               # mask matmul
    transcendentals = b * (num_heads * n_tok * n_tok + hw * hidden)
    bytes_accessed = (b * hw * dim * 4 + b * num_classes * hw * 4
                      + sum(int(wgt.size) * wgt.dtype.itemsize for wgt in weights))

    masks_t = pl.pallas_call(
        kernel,
        out_shape=jax.ShapeDtypeStruct((b, num_classes, hw), jnp.float32),
        grid_spec=pltpu.PrefetchScalarGridSpec(
            num_scalar_prefetch=0,
            grid=(b,),
            in_specs=in_specs,
            out_specs=pl.BlockSpec((pl.Squeezed(), num_classes, hw),
                                   lambda i: (i, 0, 0)),
        ),
        compiler_params=pltpu.CompilerParams(
            dimension_semantics=("parallel",),
            vmem_limit_bytes=48 * 1024 * 1024),
        cost_estimate=pl.CostEstimate(flops=flops,
                                      transcendentals=transcendentals,
                                      bytes_accessed=bytes_accessed),
    )(x_seq, *weights)

    # (b, K, hw) is already the output layout: reshape only, no transpose.
    return masks_t.reshape(b, num_classes, h, w)


def reference_forward(x_nchw, params, *, num_classes, num_heads):
    """Pure-JAX f32 reference replicating the PyTorch forward (shared_qk=True)."""
    b, c, h, w = x_nchw.shape
    dim = c
    hw = h * w
    hd = dim // num_heads
    scale = float(hd) ** -0.5

    x = jnp.transpose(x_nchw, (0, 2, 3, 1)).reshape(b, hw, dim)
    embed = params["embed"]
    x = jnp.concatenate([jnp.broadcast_to(embed[None], (b, num_classes, dim)), x], axis=1)
    residual = x
    x = _layernorm_lastaxis(x, params["g1"], params["b1"])

    qkv = x @ params["wqkv"]                       # (b, N, 2C)
    q = qkv[..., :dim]
    v = qkv[..., dim:]
    n_tok = q.shape[1]
    q = q.reshape(b, n_tok, num_heads, hd).transpose(0, 2, 1, 3)
    v = v.reshape(b, n_tok, num_heads, hd).transpose(0, 2, 1, 3)
    attn = jnp.einsum("bhnd,bhmd->bhnm", q, q) * scale
    attn = jax.nn.softmax(attn, axis=-1)
    out = jnp.einsum("bhnm,bhmd->bhnd", attn, v)
    out = out.transpose(0, 2, 1, 3).reshape(b, n_tok, dim)
    out = out @ params["wproj"] + params["bproj"]

    x = residual + out
    x = _layernorm_lastaxis(x, params["g2"], params["b2"])
    patches = x[:, num_classes:]
    hmid = jax.nn.gelu(patches @ params["wfc1"] + params["bfc1"], approximate=False)
    patches = hmid @ params["wfc2"] + params["bfc2"]
    masks = patches @ embed.T
    masks = _layernorm_lastaxis(masks, params["gm"], params["bm"])
    return jnp.transpose(masks, (0, 2, 1)).reshape(b, num_classes, h, w)


def init_params(key, *, num_classes, dim, mlp_ratio=1.0):
    hidden = int(dim * mlp_ratio)
    ks = jax.random.split(key, 8)
    return {
        "embed": jax.random.normal(ks[0], (num_classes, dim), jnp.float32),
        "g1": jnp.ones((1, dim), jnp.float32),
        "b1": jnp.zeros((1, dim), jnp.float32),
        "wqkv": 0.05 * jax.random.normal(ks[1], (dim, 2 * dim), jnp.float32),
        "wproj": 0.05 * jax.random.normal(ks[2], (dim, dim), jnp.float32),
        "bproj": 0.01 * jax.random.normal(ks[3], (1, dim), jnp.float32),
        "g2": jnp.ones((1, dim), jnp.float32),
        "b2": jnp.zeros((1, dim), jnp.float32),
        "wfc1": 0.05 * jax.random.normal(ks[4], (dim, hidden), jnp.float32),
        "bfc1": 0.01 * jax.random.normal(ks[5], (1, hidden), jnp.float32),
        "wfc2": 0.05 * jax.random.normal(ks[6], (hidden, dim), jnp.float32),
        "bfc2": 0.01 * jax.random.normal(ks[7], (1, dim), jnp.float32),
        "gm": jnp.ones((1, num_classes), jnp.float32),
        "bm": jnp.zeros((1, num_classes), jnp.float32),
    }


if __name__ == "__main__":
    # hw = 16*16 = 256 (multiple of 128) -> lane-dense output stores.
    B, DIM, H, W = 2, 64, 16, 16
    NUM_CLASSES, NUM_HEADS = 8, 4

    key = jax.random.PRNGKey(0)
    k_x, k_p = jax.random.split(key)
    x = jax.random.normal(k_x, (B, DIM, H, W), jnp.float32)
    params = init_params(k_p, num_classes=NUM_CLASSES, dim=DIM, mlp_ratio=1.0)

    run = jax.jit(functools.partial(
        transformer_segmentation_head, num_classes=NUM_CLASSES, num_heads=NUM_HEADS))
    out = run(x, params)
    out = jax.block_until_ready(out)

    ref = reference_forward(x, params, num_classes=NUM_CLASSES, num_heads=NUM_HEADS)
    assert out.shape == (B, NUM_CLASSES, H, W), out.shape
    assert jnp.all(jnp.isfinite(out))
    # Loose tolerance: bf16 matmul operands + tanh GELU + approx reciprocal.
    assert jnp.allclose(out, ref, atol=5e-2, rtol=5e-2), float(jnp.max(jnp.abs(out - ref)))

    print("KERNEL_OK")
</pallas_src>

<mosaic_0001>
module attributes {stable_mosaic.version = 11 : i64} {
  func.func @seg_head_kernel(%arg0: i32, %arg1: memref<1x256x64xf32, #tpu.memory_space<vmem>>, %arg2: memref<8x64xf32, #tpu.memory_space<vmem>>, %arg3: memref<1x64xf32, #tpu.memory_space<vmem>>, %arg4: memref<1x64xf32, #tpu.memory_space<vmem>>, %arg5: memref<4x64x16xbf16, #tpu.memory_space<vmem>>, %arg6: memref<4x64x16xbf16, #tpu.memory_space<vmem>>, %arg7: memref<4x16x64xbf16, #tpu.memory_space<vmem>>, %arg8: memref<1x64xf32, #tpu.memory_space<vmem>>, %arg9: memref<1x64xf32, #tpu.memory_space<vmem>>, %arg10: memref<1x64xf32, #tpu.memory_space<vmem>>, %arg11: memref<64x64xbf16, #tpu.memory_space<vmem>>, %arg12: memref<1x64xf32, #tpu.memory_space<vmem>>, %arg13: memref<64x64xbf16, #tpu.memory_space<vmem>>, %arg14: memref<1x64xf32, #tpu.memory_space<vmem>>, %arg15: memref<8x1xf32, #tpu.memory_space<vmem>>, %arg16: memref<8x1xf32, #tpu.memory_space<vmem>>, %arg17: memref<1x8x256xf32, #tpu.memory_space<vmem>>) attributes {dimension_semantics = [#tpu.dimension_semantics<parallel>], iteration_bounds = array<i64: 2>, scalar_prefetch = 0 : i64, scratch_operands = 0 : i64, tpu.core_type = #tpu.core_type<tc>, window_params = [{transform_indices = @transform_0, window_bounds = array<i64: 1, 256, 64>}, {pipeline_mode = #tpu.pipeline_mode<synchronous>, transform_indices = @transform_1, window_bounds = array<i64: 8, 64>}, {pipeline_mode = #tpu.pipeline_mode<synchronous>, transform_indices = @transform_2, window_bounds = array<i64: 1, 64>}, {pipeline_mode = #tpu.pipeline_mode<synchronous>, transform_indices = @transform_3, window_bounds = array<i64: 1, 64>}, {pipeline_mode = #tpu.pipeline_mode<synchronous>, transform_indices = @transform_4, window_bounds = array<i64: 4, 64, 16>}, {pipeline_mode = #tpu.pipeline_mode<synchronous>, transform_indices = @transform_5, window_bounds = array<i64: 4, 64, 16>}, {pipeline_mode = #tpu.pipeline_mode<synchronous>, transform_indices = @transform_6, window_bounds = array<i64: 4, 16, 64>}, {pipeline_mode = #tpu.pipeline_mode<synchronous>, transform_indices = @transform_7, window_bounds = array<i64: 1, 64>}, {pipeline_mode = #tpu.pipeline_mode<synchronous>, transform_indices = @transform_8, window_bounds = array<i64: 1, 64>}, {pipeline_mode = #tpu.pipeline_mode<synchronous>, transform_indices = @transform_9, window_bounds = array<i64: 1, 64>}, {pipeline_mode = #tpu.pipeline_mode<synchronous>, transform_indices = @transform_10, window_bounds = array<i64: 64, 64>}, {pipeline_mode = #tpu.pipeline_mode<synchronous>, transform_indices = @transform_11, window_bounds = array<i64: 1, 64>}, {pipeline_mode = #tpu.pipeline_mode<synchronous>, transform_indices = @transform_12, window_bounds = array<i64: 64, 64>}, {pipeline_mode = #tpu.pipeline_mode<synchronous>, transform_indices = @transform_13, window_bounds = array<i64: 1, 64>}, {pipeline_mode = #tpu.pipeline_mode<synchronous>, transform_indices = @transform_14, window_bounds = array<i64: 8, 1>}, {pipeline_mode = #tpu.pipeline_mode<synchronous>, transform_indices = @transform_15, window_bounds = array<i64: 8, 1>}, {transform_indices = @transform_16, window_bounds = array<i64: 1, 8, 256>}]} {
    %c0 = arith.constant 0 : index
    %c0_0 = arith.constant 0 : index
    %0 = vector.load %arg2[%c0, %c0_0] : memref<8x64xf32, #tpu.memory_space<vmem>>, vector<8x64xf32>
    %c0_1 = arith.constant 0 : index
    %c0_2 = arith.constant 0 : index
    %c0_3 = arith.constant 0 : index
    %1 = vector.load %arg1[%c0_1, %c0_2, %c0_3] : memref<1x256x64xf32, #tpu.memory_space<vmem>>, vector<1x256x64xf32>
    %2 = vector.shape_cast %1 : vector<1x256x64xf32> to vector<256x64xf32>
    %3 = tpu.concatenate %0, %2 in 0 : vector<8x64xf32>, vector<256x64xf32> -> vector<264x64xf32>
    %c0_4 = arith.constant 0 : index
    %c0_5 = arith.constant 0 : index
    %4 = vector.load %arg3[%c0_4, %c0_5] : memref<1x64xf32, #tpu.memory_space<vmem>>, vector<1x64xf32>
    %c0_6 = arith.constant 0 : index
    %c0_7 = arith.constant 0 : index
    %5 = vector.load %arg4[%c0_6, %c0_7] : memref<1x64xf32, #tpu.memory_space<vmem>>, vector<1x64xf32>
    %cst = arith.constant dense<0.000000e+00> : vector<264xf32>
    %6 = vector.multi_reduction <add>, %3, %cst [1] : vector<264x64xf32> to vector<264xf32>
    %7 = vector.shape_cast %6 : vector<264xf32> to vector<264x1xf32>
    %cst_8 = arith.constant 6.400000e+01 : f32
    %8 = vector.broadcast %cst_8 : f32 to vector<264x1xf32>
    %9 = arith.divf %7, %8 : vector<264x1xf32>
    %10 = vector.broadcast %9 : vector<264x1xf32> to vector<264x64xf32>
    %11 = arith.subf %3, %10 : vector<264x64xf32>
    %12 = arith.mulf %11, %11 : vector<264x64xf32>
    %cst_9 = arith.constant dense<0.000000e+00> : vector<264xf32>
    %13 = vector.multi_reduction <add>, %12, %cst_9 [1] : vector<264x64xf32> to vector<264xf32>
    %14 = vector.shape_cast %13 : vector<264xf32> to vector<264x1xf32>
    %cst_10 = arith.constant 6.400000e+01 : f32
    %15 = vector.broadcast %cst_10 : f32 to vector<264x1xf32>
    %16 = arith.divf %14, %15 : vector<264x1xf32>
    %17 = vector.broadcast %9 : vector<264x1xf32> to vector<264x64xf32>
    %18 = arith.subf %3, %17 : vector<264x64xf32>
    %cst_11 = arith.constant 9.99999974E-6 : f32
    %19 = vector.broadcast %cst_11 : f32 to vector<264x1xf32>
    %20 = arith.addf %16, %19 : vector<264x1xf32>
    %21 = math.rsqrt %20 : vector<264x1xf32>
    %22 = vector.broadcast %21 : vector<264x1xf32> to vector<264x64xf32>
    %23 = arith.mulf %18, %22 : vector<264x64xf32>
    %24 = vector.broadcast %4 : vector<1x64xf32> to vector<264x64xf32>
    %25 = arith.mulf %23, %24 : vector<264x64xf32>
    %26 = vector.broadcast %5 : vector<1x64xf32> to vector<264x64xf32>
    %27 = arith.addf %25, %26 : vector<264x64xf32>
    %28 = arith.truncf %27 : vector<264x64xf32> to vector<264x64xbf16>
    %cst_12 = arith.constant 0.000000e+00 : f32
    %29 = vector.broadcast %cst_12 : f32 to vector<264x64xf32>
    %c0_13 = arith.constant 0 : index
    %c0_14 = arith.constant 0 : index
    %c0_15 = arith.constant 0 : index
    %30 = vector.load %arg5[%c0_13, %c0_14, %c0_15] : memref<4x64x16xbf16, #tpu.memory_space<vmem>>, vector<1x64x16xbf16>
    %31 = vector.shape_cast %30 : vector<1x64x16xbf16> to vector<64x16xbf16>
    %cst_16 = arith.constant dense<0.000000e+00> : vector<264x16xf32>
    %32 = tpu.matmul %28, %31, %cst_16 {dimension_numbers = #tpu.dot_dimension_numbers<[1], [0], [0], [1], [0, 0, 1, 1], [], []>} : vector<264x64xbf16>, vector<64x16xbf16>, vector<264x16xf32> -> vector<264x16xf32>
    %c0_17 = arith.constant 0 : index
    %c0_18 = arith.constant 0 : index
    %c0_19 = arith.constant 0 : index
    %33 = vector.load %arg6[%c0_17, %c0_18, %c0_19] : memref<4x64x16xbf16, #tpu.memory_space<vmem>>, vector<1x64x16xbf16>
    %34 = vector.shape_cast %33 : vector<1x64x16xbf16> to vector<64x16xbf16>
    %cst_20 = arith.constant dense<0.000000e+00> : vector<264x16xf32>
    %35 = tpu.matmul %28, %34, %cst_20 {dimension_numbers = #tpu.dot_dimension_numbers<[1], [0], [0], [1], [0, 0, 1, 1], [], []>} : vector<264x64xbf16>, vector<64x16xbf16>, vector<264x16xf32> -> vector<264x16xf32>
    %cst_21 = arith.constant 5.000000e-01 : f32
    %36 = vector.broadcast %cst_21 : f32 to vector<264x16xf32>
    %37 = arith.mulf %32, %36 : vector<264x16xf32>
    %38 = arith.truncf %37 : vector<264x16xf32> to vector<264x16xbf16>
    %39 = arith.truncf %35 : vector<264x16xf32> to vector<264x16xbf16>
    %cst_22 = arith.constant dense<0.000000e+00> : vector<264x264xf32>
    %40 = tpu.matmul %38, %38, %cst_22 {dimension_numbers = #tpu.dot_dimension_numbers<[1], [1], [0], [0], [0, 0, 1, 0], [], []>} : vector<264x16xbf16>, vector<264x16xbf16>, vector<264x264xf32> -> vector<264x264xf32>
    %cst_23 = arith.constant dense<0xFF800000> : vector<264xf32>
    %41 = vector.multi_reduction <maximumf>, %40, %cst_23 [1] : vector<264x264xf32> to vector<264xf32>
    %42 = vector.shape_cast %41 : vector<264xf32> to vector<264x1xf32>
    %43 = vector.broadcast %42 : vector<264x1xf32> to vector<264x264xf32>
    %44 = arith.subf %40, %43 : vector<264x264xf32>
    %45 = math.exp %44 : vector<264x264xf32>
    %cst_24 = arith.constant dense<0.000000e+00> : vector<264xf32>
    %46 = vector.multi_reduction <add>, %45, %cst_24 [1] : vector<264x264xf32> to vector<264xf32>
    %47 = vector.shape_cast %46 : vector<264xf32> to vector<264x1xf32>
    %48 = tpu.reciprocal %47 {approx = true} : vector<264x1xf32> -> vector<264x1xf32>
    %49 = vector.broadcast %48 : vector<264x1xf32> to vector<264x264xf32>
    %50 = arith.mulf %45, %49 : vector<264x264xf32>
    %51 = arith.truncf %50 : vector<264x264xf32> to vector<264x264xbf16>
    %cst_25 = arith.constant dense<0.000000e+00> : vector<264x16xf32>
    %52 = tpu.matmul %51, %39, %cst_25 {dimension_numbers = #tpu.dot_dimension_numbers<[1], [0], [0], [1], [0, 0, 1, 1], [], []>} : vector<264x264xbf16>, vector<264x16xbf16>, vector<264x16xf32> -> vector<264x16xf32>
    %53 = arith.truncf %52 : vector<264x16xf32> to vector<264x16xbf16>
    %c0_26 = arith.constant 0 : index
    %c0_27 = arith.constant 0 : index
    %c0_28 = arith.constant 0 : index
    %54 = vector.load %arg7[%c0_26, %c0_27, %c0_28] : memref<4x16x64xbf16, #tpu.memory_space<vmem>>, vector<1x16x64xbf16>
    %55 = vector.shape_cast %54 : vector<1x16x64xbf16> to vector<16x64xbf16>
    %cst_29 = arith.constant dense<0.000000e+00> : vector<264x64xf32>
    %56 = tpu.matmul %53, %55, %cst_29 {dimension_numbers = #tpu.dot_dimension_numbers<[1], [0], [0], [1], [0, 0, 1, 1], [], []>} : vector<264x16xbf16>, vector<16x64xbf16>, vector<264x64xf32> -> vector<264x64xf32>
    %57 = arith.addf %29, %56 : vector<264x64xf32>
    %c1 = arith.constant 1 : index
    %c0_30 = arith.constant 0 : index
    %c0_31 = arith.constant 0 : index
    %58 = vector.load %arg5[%c1, %c0_30, %c0_31] : memref<4x64x16xbf16, #tpu.memory_space<vmem>>, vector<1x64x16xbf16>
    %59 = vector.shape_cast %58 : vector<1x64x16xbf16> to vector<64x16xbf16>
    %cst_32 = arith.constant dense<0.000000e+00> : vector<264x16xf32>
    %60 = tpu.matmul %28, %59, %cst_32 {dimension_numbers = #tpu.dot_dimension_numbers<[1], [0], [0], [1], [0, 0, 1, 1], [], []>} : vector<264x64xbf16>, vector<64x16xbf16>, vector<264x16xf32> -> vector<264x16xf32>
    %c1_33 = arith.constant 1 : index
    %c0_34 = arith.constant 0 : index
    %c0_35 = arith.constant 0 : index
    %61 = vector.load %arg6[%c1_33, %c0_34, %c0_35] : memref<4x64x16xbf16, #tpu.memory_space<vmem>>, vector<1x64x16xbf16>
    %62 = vector.shape_cast %61 : vector<1x64x16xbf16> to vector<64x16xbf16>
    %cst_36 = arith.constant dense<0.000000e+00> : vector<264x16xf32>
    %63 = tpu.matmul %28, %62, %cst_36 {dimension_numbers = #tpu.dot_dimension_numbers<[1], [0], [0], [1], [0, 0, 1, 1], [], []>} : vector<264x64xbf16>, vector<64x16xbf16>, vector<264x16xf32> -> vector<264x16xf32>
    %cst_37 = arith.constant 5.000000e-01 : f32
    %64 = vector.broadcast %cst_37 : f32 to vector<264x16xf32>
    %65 = arith.mulf %60, %64 : vector<264x16xf32>
    %66 = arith.truncf %65 : vector<264x16xf32> to vector<264x16xbf16>
    %67 = arith.truncf %63 : vector<264x16xf32> to vector<264x16xbf16>
    %cst_38 = arith.constant dense<0.000000e+00> : vector<264x264xf32>
    %68 = tpu.matmul %66, %66, %cst_38 {dimension_numbers = #tpu.dot_dimension_numbers<[1], [1], [0], [0], [0, 0, 1, 0], [], []>} : vector<264x16xbf16>, vector<264x16xbf16>, vector<264x264xf32> -> vector<264x264xf32>
    %cst_39 = arith.constant dense<0xFF800000> : vector<264xf32>
    %69 = vector.multi_reduction <maximumf>, %68, %cst_39 [1] : vector<264x264xf32> to vector<264xf32>
    %70 = vector.shape_cast %69 : vector<264xf32> to vector<264x1xf32>
    %71 = vector.broadcast %70 : vector<264x1xf32> to vector<264x264xf32>
    %72 = arith.subf %68, %71 : vector<264x264xf32>
    %73 = math.exp %72 : vector<264x264xf32>
    %cst_40 = arith.constant dense<0.000000e+00> : vector<264xf32>
    %74 = vector.multi_reduction <add>, %73, %cst_40 [1] : vector<264x264xf32> to vector<264xf32>
    %75 = vector.shape_cast %74 : vector<264xf32> to vector<264x1xf32>
    %76 = tpu.reciprocal %75 {approx = true} : vector<264x1xf32> -> vector<264x1xf32>
    %77 = vector.broadcast %76 : vector<264x1xf32> to vector<264x264xf32>
    %78 = arith.mulf %73, %77 : vector<264x264xf32>
    %79 = arith.truncf %78 : vector<264x264xf32> to vector<264x264xbf16>
    %cst_41 = arith.constant dense<0.000000e+00> : vector<264x16xf32>
    %80 = tpu.matmul %79, %67, %cst_41 {dimension_numbers = #tpu.dot_dimension_numbers<[1], [0], [0], [1], [0, 0, 1, 1], [], []>} : vector<264x264xbf16>, vector<264x16xbf16>, vector<264x16xf32> -> vector<264x16xf32>
    %81 = arith.truncf %80 : vector<264x16xf32> to vector<264x16xbf16>
    %c1_42 = arith.constant 1 : index
    %c0_43 = arith.constant 0 : index
    %c0_44 = arith.constant 0 : index
    %82 = vector.load %arg7[%c1_42, %c0_43, %c0_44] : memref<4x16x64xbf16, #tpu.memory_space<vmem>>, vector<1x16x64xbf16>
    %83 = vector.shape_cast %82 : vector<1x16x64xbf16> to vector<16x64xbf16>
    %cst_45 = arith.constant dense<0.000000e+00> : vector<264x64xf32>
    %84 = tpu.matmul %81, %83, %cst_45 {dimension_numbers = #tpu.dot_dimension_numbers<[1], [0], [0], [1], [0, 0, 1, 1], [], []>} : vector<264x16xbf16>, vector<16x64xbf16>, vector<264x64xf32> -> vector<264x64xf32>
    %85 = arith.addf %57, %84 : vector<264x64xf32>
    %c2 = arith.constant 2 : index
    %c0_46 = arith.constant 0 : index
    %c0_47 = arith.constant 0 : index
    %86 = vector.load %arg5[%c2, %c0_46, %c0_47] : memref<4x64x16xbf16, #tpu.memory_space<vmem>>, vector<1x64x16xbf16>
    %87 = vector.shape_cast %86 : vector<1x64x16xbf16> to vector<64x16xbf16>
    %cst_48 = arith.constant dense<0.000000e+00> : vector<264x16xf32>
    %88 = tpu.matmul %28, %87, %cst_48 {dimension_numbers = #tpu.dot_dimension_numbers<[1], [0], [0], [1], [0, 0, 1, 1], [], []>} : vector<264x64xbf16>, vector<64x16xbf16>, vector<264x16xf32> -> vector<264x16xf32>
    %c2_49 = arith.constant 2 : index
    %c0_50 = arith.constant 0 : index
    %c0_51 = arith.constant 0 : index
    %89 = vector.load %arg6[%c2_49, %c0_50, %c0_51] : memref<4x64x16xbf16, #tpu.memory_space<vmem>>, vector<1x64x16xbf16>
    %90 = vector.shape_cast %89 : vector<1x64x16xbf16> to vector<64x16xbf16>
    %cst_52 = arith.constant dense<0.000000e+00> : vector<264x16xf32>
    %91 = tpu.matmul %28, %90, %cst_52 {dimension_numbers = #tpu.dot_dimension_numbers<[1], [0], [0], [1], [0, 0, 1, 1], [], []>} : vector<264x64xbf16>, vector<64x16xbf16>, vector<264x16xf32> -> vector<264x16xf32>
    %cst_53 = arith.constant 5.000000e-01 : f32
    %92 = vector.broadcast %cst_53 : f32 to vector<264x16xf32>
    %93 = arith.mulf %88, %92 : vector<264x16xf32>
    %94 = arith.truncf %93 : vector<264x16xf32> to vector<264x16xbf16>
    %95 = arith.truncf %91 : vector<264x16xf32> to vector<264x16xbf16>
    %cst_54 = arith.constant dense<0.000000e+00> : vector<264x264xf32>
    %96 = tpu.matmul %94, %94, %cst_54 {dimension_numbers = #tpu.dot_dimension_numbers<[1], [1], [0], [0], [0, 0, 1, 0], [], []>} : vector<264x16xbf16>, vector<264x16xbf16>, vector<264x264xf32> -> vector<264x264xf32>
    %cst_55 = arith.constant dense<0xFF800000> : vector<264xf32>
    %97 = vector.multi_reduction <maximumf>, %96, %cst_55 [1] : vector<264x264xf32> to vector<264xf32>
    %98 = vector.shape_cast %97 : vector<264xf32> to vector<264x1xf32>
    %99 = vector.broadcast %98 : vector<264x1xf32> to vector<264x264xf32>
    %100 = arith.subf %96, %99 : vector<264x264xf32>
    %101 = math.exp %100 : vector<264x264xf32>
    %cst_56 = arith.constant dense<0.000000e+00> : vector<264xf32>
    %102 = vector.multi_reduction <add>, %101, %cst_56 [1] : vector<264x264xf32> to vector<264xf32>
    %103 = vector.shape_cast %102 : vector<264xf32> to vector<264x1xf32>
    %104 = tpu.reciprocal %103 {approx = true} : vector<264x1xf32> -> vector<264x1xf32>
    %105 = vector.broadcast %104 : vector<264x1xf32> to vector<264x264xf32>
    %106 = arith.mulf %101, %105 : vector<264x264xf32>
    %107 = arith.truncf %106 : vector<264x264xf32> to vector<264x264xbf16>
    %cst_57 = arith.constant dense<0.000000e+00> : vector<264x16xf32>
    %108 = tpu.matmul %107, %95, %cst_57 {dimension_numbers = #tpu.dot_dimension_numbers<[1], [0], [0], [1], [0, 0, 1, 1], [], []>} : vector<264x264xbf16>, vector<264x16xbf16>, vector<264x16xf32> -> vector<264x16xf32>
    %109 = arith.truncf %108 : vector<264x16xf32> to vector<264x16xbf16>
    %c2_58 = arith.constant 2 : index
    %c0_59 = arith.constant 0 : index
    %c0_60 = arith.constant 0 : index
    %110 = vector.load %arg7[%c2_58, %c0_59, %c0_60] : memref<4x16x64xbf16, #tpu.memory_space<vmem>>, vector<1x16x64xbf16>
    %111 = vector.shape_cast %110 : vector<1x16x64xbf16> to vector<16x64xbf16>
    %cst_61 = arith.constant dense<0.000000e+00> : vector<264x64xf32>
    %112 = tpu.matmul %109, %111, %cst_61 {dimension_numbers = #tpu.dot_dimension_numbers<[1], [0], [0], [1], [0, 0, 1, 1], [], []>} : vector<264x16xbf16>, vector<16x64xbf16>, vector<264x64xf32> -> vector<264x64xf32>
    %113 = arith.addf %85, %112 : vector<264x64xf32>
    %c3 = arith.constant 3 : index
    %c0_62 = arith.constant 0 : index
    %c0_63 = arith.constant 0 : index
    %114 = vector.load %arg5[%c3, %c0_62, %c0_63] : memref<4x64x16xbf16, #tpu.memory_space<vmem>>, vector<1x64x16xbf16>
    %115 = vector.shape_cast %114 : vector<1x64x16xbf16> to vector<64x16xbf16>
    %cst_64 = arith.constant dense<0.000000e+00> : vector<264x16xf32>
    %116 = tpu.matmul %28, %115, %cst_64 {dimension_numbers = #tpu.dot_dimension_numbers<[1], [0], [0], [1], [0, 0, 1, 1], [], []>} : vector<264x64xbf16>, vector<64x16xbf16>, vector<264x16xf32> -> vector<264x16xf32>
    %c3_65 = arith.constant 3 : index
    %c0_66 = arith.constant 0 : index
    %c0_67 = arith.constant 0 : index
    %117 = vector.load %arg6[%c3_65, %c0_66, %c0_67] : memref<4x64x16xbf16, #tpu.memory_space<vmem>>, vector<1x64x16xbf16>
    %118 = vector.shape_cast %117 : vector<1x64x16xbf16> to vector<64x16xbf16>
    %cst_68 = arith.constant dense<0.000000e+00> : vector<264x16xf32>
    %119 = tpu.matmul %28, %118, %cst_68 {dimension_numbers = #tpu.dot_dimension_numbers<[1], [0], [0], [1], [0, 0, 1, 1], [], []>} : vector<264x64xbf16>, vector<64x16xbf16>, vector<264x16xf32> -> vector<264x16xf32>
    %cst_69 = arith.constant 5.000000e-01 : f32
    %120 = vector.broadcast %cst_69 : f32 to vector<264x16xf32>
    %121 = arith.mulf %116, %120 : vector<264x16xf32>
    %122 = arith.truncf %121 : vector<264x16xf32> to vector<264x16xbf16>
    %123 = arith.truncf %119 : vector<264x16xf32> to vector<264x16xbf16>
    %cst_70 = arith.constant dense<0.000000e+00> : vector<264x264xf32>
    %124 = tpu.matmul %122, %122, %cst_70 {dimension_numbers = #tpu.dot_dimension_numbers<[1], [1], [0], [0], [0, 0, 1, 0], [], []>} : vector<264x16xbf16>, vector<264x16xbf16>, vector<264x264xf32> -> vector<264x264xf32>
    %cst_71 = arith.constant dense<0xFF800000> : vector<264xf32>
    %125 = vector.multi_reduction <maximumf>, %124, %cst_71 [1] : vector<264x264xf32> to vector<264xf32>
    %126 = vector.shape_cast %125 : vector<264xf32> to vector<264x1xf32>
    %127 = vector.broadcast %126 : vector<264x1xf32> to vector<264x264xf32>
    %128 = arith.subf %124, %127 : vector<264x264xf32>
    %129 = math.exp %128 : vector<264x264xf32>
    %cst_72 = arith.constant dense<0.000000e+00> : vector<264xf32>
    %130 = vector.multi_reduction <add>, %129, %cst_72 [1] : vector<264x264xf32> to vector<264xf32>
    %131 = vector.shape_cast %130 : vector<264xf32> to vector<264x1xf32>
    %132 = tpu.reciprocal %131 {approx = true} : vector<264x1xf32> -> vector<264x1xf32>
    %133 = vector.broadcast %132 : vector<264x1xf32> to vector<264x264xf32>
    %134 = arith.mulf %129, %133 : vector<264x264xf32>
    %135 = arith.truncf %134 : vector<264x264xf32> to vector<264x264xbf16>
    %cst_73 = arith.constant dense<0.000000e+00> : vector<264x16xf32>
    %136 = tpu.matmul %135, %123, %cst_73 {dimension_numbers = #tpu.dot_dimension_numbers<[1], [0], [0], [1], [0, 0, 1, 1], [], []>} : vector<264x264xbf16>, vector<264x16xbf16>, vector<264x16xf32> -> vector<264x16xf32>
    %137 = arith.truncf %136 : vector<264x16xf32> to vector<264x16xbf16>
    %c3_74 = arith.constant 3 : index
    %c0_75 = arith.constant 0 : index
    %c0_76 = arith.constant 0 : index
    %138 = vector.load %arg7[%c3_74, %c0_75, %c0_76] : memref<4x16x64xbf16, #tpu.memory_space<vmem>>, vector<1x16x64xbf16>
    %139 = vector.shape_cast %138 : vector<1x16x64xbf16> to vector<16x64xbf16>
    %cst_77 = arith.constant dense<0.000000e+00> : vector<264x64xf32>
    %140 = tpu.matmul %137, %139, %cst_77 {dimension_numbers = #tpu.dot_dimension_numbers<[1], [0], [0], [1], [0, 0, 1, 1], [], []>} : vector<264x16xbf16>, vector<16x64xbf16>, vector<264x64xf32> -> vector<264x64xf32>
    %141 = arith.addf %113, %140 : vector<264x64xf32>
    %142 = arith.addf %3, %141 : vector<264x64xf32>
    %c0_78 = arith.constant 0 : index
    %c0_79 = arith.constant 0 : index
    %143 = vector.load %arg8[%c0_78, %c0_79] : memref<1x64xf32, #tpu.memory_space<vmem>>, vector<1x64xf32>
    %144 = vector.broadcast %143 : vector<1x64xf32> to vector<264x64xf32>
    %145 = arith.addf %142, %144 : vector<264x64xf32>
    %c0_80 = arith.constant 0 : index
    %c0_81 = arith.constant 0 : index
    %146 = vector.load %arg9[%c0_80, %c0_81] : memref<1x64xf32, #tpu.memory_space<vmem>>, vector<1x64xf32>
    %c0_82 = arith.constant 0 : index
    %c0_83 = arith.constant 0 : index
    %147 = vector.load %arg10[%c0_82, %c0_83] : memref<1x64xf32, #tpu.memory_space<vmem>>, vector<1x64xf32>
    %cst_84 = arith.constant dense<0.000000e+00> : vector<264xf32>
    %148 = vector.multi_reduction <add>, %145, %cst_84 [1] : vector<264x64xf32> to vector<264xf32>
    %149 = vector.shape_cast %148 : vector<264xf32> to vector<264x1xf32>
    %cst_85 = arith.constant 6.400000e+01 : f32
    %150 = vector.broadcast %cst_85 : f32 to vector<264x1xf32>
    %151 = arith.divf %149, %150 : vector<264x1xf32>
    %152 = vector.broadcast %151 : vector<264x1xf32> to vector<264x64xf32>
    %153 = arith.subf %145, %152 : vector<264x64xf32>
    %154 = arith.mulf %153, %153 : vector<264x64xf32>
    %cst_86 = arith.constant dense<0.000000e+00> : vector<264xf32>
    %155 = vector.multi_reduction <add>, %154, %cst_86 [1] : vector<264x64xf32> to vector<264xf32>
    %156 = vector.shape_cast %155 : vector<264xf32> to vector<264x1xf32>
    %cst_87 = arith.constant 6.400000e+01 : f32
    %157 = vector.broadcast %cst_87 : f32 to vector<264x1xf32>
    %158 = arith.divf %156, %157 : vector<264x1xf32>
    %159 = vector.broadcast %151 : vector<264x1xf32> to vector<264x64xf32>
    %160 = arith.subf %145, %159 : vector<264x64xf32>
    %cst_88 = arith.constant 9.99999974E-6 : f32
    %161 = vector.broadcast %cst_88 : f32 to vector<264x1xf32>
    %162 = arith.addf %158, %161 : vector<264x1xf32>
    %163 = math.rsqrt %162 : vector<264x1xf32>
    %164 = vector.broadcast %163 : vector<264x1xf32> to vector<264x64xf32>
    %165 = arith.mulf %160, %164 : vector<264x64xf32>
    %166 = vector.broadcast %146 : vector<1x64xf32> to vector<264x64xf32>
    %167 = arith.mulf %165, %166 : vector<264x64xf32>
    %168 = vector.broadcast %147 : vector<1x64xf32> to vector<264x64xf32>
    %169 = arith.addf %167, %168 : vector<264x64xf32>
    %170 = vector.extract_strided_slice %169 {offsets = [8, 0], sizes = [256, 64], strides = [1, 1]} : vector<264x64xf32> to vector<256x64xf32>
    %171 = arith.truncf %170 : vector<256x64xf32> to vector<256x64xbf16>
    %c0_89 = arith.constant 0 : index
    %c0_90 = arith.constant 0 : index
    %172 = vector.load %arg11[%c0_89, %c0_90] : memref<64x64xbf16, #tpu.memory_space<vmem>>, vector<64x64xbf16>
    %cst_91 = arith.constant dense<0.000000e+00> : vector<256x64xf32>
    %173 = tpu.matmul %171, %172, %cst_91 {dimension_numbers = #tpu.dot_dimension_numbers<[1], [0], [0], [1], [0, 0, 1, 1], [], []>} : vector<256x64xbf16>, vector<64x64xbf16>, vector<256x64xf32> -> vector<256x64xf32>
    %c0_92 = arith.constant 0 : index
    %c0_93 = arith.constant 0 : index
    %174 = vector.load %arg12[%c0_92, %c0_93] : memref<1x64xf32, #tpu.memory_space<vmem>>, vector<1x64xf32>
    %175 = vector.broadcast %174 : vector<1x64xf32> to vector<256x64xf32>
    %176 = arith.addf %173, %175 : vector<256x64xf32>
    %177 = arith.mulf %176, %176 : vector<256x64xf32>
    %178 = arith.mulf %176, %177 : vector<256x64xf32>
    %cst_94 = arith.constant 4.471500e-02 : f32
    %179 = vector.broadcast %cst_94 : f32 to vector<256x64xf32>
    %180 = arith.mulf %179, %178 : vector<256x64xf32>
    %181 = arith.addf %176, %180 : vector<256x64xf32>
    %cst_95 = arith.constant 0.797884583 : f32
    %182 = vector.broadcast %cst_95 : f32 to vector<256x64xf32>
    %183 = arith.mulf %182, %181 : vector<256x64xf32>
    %184 = math.tanh %183 : vector<256x64xf32>
    %cst_96 = arith.constant 1.000000e+00 : f32
    %185 = vector.broadcast %cst_96 : f32 to vector<256x64xf32>
    %186 = arith.addf %185, %184 : vector<256x64xf32>
    %cst_97 = arith.constant 5.000000e-01 : f32
    %187 = vector.broadcast %cst_97 : f32 to vector<256x64xf32>
    %188 = arith.mulf %187, %186 : vector<256x64xf32>
    %189 = arith.mulf %176, %188 : vector<256x64xf32>
    %190 = arith.truncf %189 : vector<256x64xf32> to vector<256x64xbf16>
    %c0_98 = arith.constant 0 : index
    %c0_99 = arith.constant 0 : index
    %191 = vector.load %arg13[%c0_98, %c0_99] : memref<64x64xbf16, #tpu.memory_space<vmem>>, vector<64x64xbf16>
    %cst_100 = arith.constant dense<0.000000e+00> : vector<256x64xf32>
    %192 = tpu.matmul %190, %191, %cst_100 {dimension_numbers = #tpu.dot_dimension_numbers<[1], [0], [0], [1], [0, 0, 1, 1], [], []>} : vector<256x64xbf16>, vector<64x64xbf16>, vector<256x64xf32> -> vector<256x64xf32>
    %c0_101 = arith.constant 0 : index
    %c0_102 = arith.constant 0 : index
    %193 = vector.load %arg14[%c0_101, %c0_102] : memref<1x64xf32, #tpu.memory_space<vmem>>, vector<1x64xf32>
    %194 = vector.broadcast %193 : vector<1x64xf32> to vector<256x64xf32>
    %195 = arith.addf %192, %194 : vector<256x64xf32>
    %c0_103 = arith.constant 0 : index
    %c0_104 = arith.constant 0 : index
    %196 = vector.load %arg2[%c0_103, %c0_104] : memref<8x64xf32, #tpu.memory_space<vmem>>, vector<8x64xf32>
    %197 = arith.truncf %196 : vector<8x64xf32> to vector<8x64xbf16>
    %198 = arith.truncf %195 : vector<256x64xf32> to vector<256x64xbf16>
    %cst_105 = arith.constant dense<0.000000e+00> : vector<8x256xf32>
    %199 = tpu.matmul %197, %198, %cst_105 {dimension_numbers = #tpu.dot_dimension_numbers<[1], [1], [0], [0], [0, 0, 1, 0], [], []>} : vector<8x64xbf16>, vector<256x64xbf16>, vector<8x256xf32> -> vector<8x256xf32>
    %cst_106 = arith.constant dense<0.000000e+00> : vector<256xf32>
    %200 = vector.multi_reduction <add>, %199, %cst_106 [0] : vector<8x256xf32> to vector<256xf32>
    %201 = vector.shape_cast %200 : vector<256xf32> to vector<1x256xf32>
    %cst_107 = arith.constant 8.000000e+00 : f32
    %202 = vector.broadcast %cst_107 : f32 to vector<1x256xf32>
    %203 = arith.divf %201, %202 : vector<1x256xf32>
    %204 = vector.broadcast %203 : vector<1x256xf32> to vector<8x256xf32>
    %205 = arith.subf %199, %204 : vector<8x256xf32>
    %206 = arith.mulf %205, %205 : vector<8x256xf32>
    %cst_108 = arith.constant dense<0.000000e+00> : vector<256xf32>
    %207 = vector.multi_reduction <add>, %206, %cst_108 [0] : vector<8x256xf32> to vector<256xf32>
    %208 = vector.shape_cast %207 : vector<256xf32> to vector<1x256xf32>
    %cst_109 = arith.constant 8.000000e+00 : f32
    %209 = vector.broadcast %cst_109 : f32 to vector<1x256xf32>
    %210 = arith.divf %208, %209 : vector<1x256xf32>
    %211 = vector.broadcast %203 : vector<1x256xf32> to vector<8x256xf32>
    %212 = arith.subf %199, %211 : vector<8x256xf32>
    %cst_110 = arith.constant 9.99999974E-6 : f32
    %213 = vector.broadcast %cst_110 : f32 to vector<1x256xf32>
    %214 = arith.addf %210, %213 : vector<1x256xf32>
    %215 = math.rsqrt %214 : vector<1x256xf32>
    %216 = vector.broadcast %215 : vector<1x256xf32> to vector<8x256xf32>
    %217 = arith.mulf %212, %216 : vector<8x256xf32>
    %c0_111 = arith.constant 0 : index
    %c0_112 = arith.constant 0 : index
    %218 = vector.load %arg15[%c0_111, %c0_112] : memref<8x1xf32, #tpu.memory_space<vmem>>, vector<8x1xf32>
    %219 = vector.broadcast %218 : vector<8x1xf32> to vector<8x256xf32>
    %220 = arith.mulf %217, %219 : vector<8x256xf32>
    %c0_113 = arith.constant 0 : index
    %c0_114 = arith.constant 0 : index
    %221 = vector.load %arg16[%c0_113, %c0_114] : memref<8x1xf32, #tpu.memory_space<vmem>>, vector<8x1xf32>
    %222 = vector.broadcast %221 : vector<8x1xf32> to vector<8x256xf32>
    %223 = arith.addf %220, %222 : vector<8x256xf32>
    %c0_115 = arith.constant 0 : index
    %c0_116 = arith.constant 0 : index
    %c0_117 = arith.constant 0 : index
    %224 = vector.load %arg17[%c0_115, %c0_116, %c0_117] : memref<1x8x256xf32, #tpu.memory_space<vmem>>, vector<1x8x256xf32>
    %225 = vector.shape_cast %224 : vector<1x8x256xf32> to vector<8x256xf32>
    %226 = vector.shape_cast %223 : vector<8x256xf32> to vector<1x8x256xf32>
    tpu.vector_store %arg17[%c0_115, %c0_116, %c0_117], %226 {strides = array<i32>} : memref<1x8x256xf32, #tpu.memory_space<vmem>>, vector<1x8x256xf32>,
    return
  }
  func.func @transform_0(%arg0: i32) -> (i32, i32, i32) {
    %c0_i32 = arith.constant 0 : i32
    %c0_i32_0 = arith.constant 0 : i32
    %c0_i32_1 = arith.constant 0 : i32
    return %arg0, %c0_i32, %c0_i32_0 : i32, i32, i32
  }
  func.func @transform_1(%arg0: i32) -> (i32, i32) {
    %c0_i32 = arith.constant 0 : i32
    %c0_i32_0 = arith.constant 0 : i32
    %c0_i32_1 = arith.constant 0 : i32
    return %c0_i32, %c0_i32_0 : i32, i32
  }
  func.func @transform_2(%arg0: i32) -> (i32, i32) {
    %c0_i32 = arith.constant 0 : i32
    %c0_i32_0 = arith.constant 0 : i32
    %c0_i32_1 = arith.constant 0 : i32
    return %c0_i32, %c0_i32_0 : i32, i32
  }
  func.func @transform_3(%arg0: i32) -> (i32, i32) {
    %c0_i32 = arith.constant 0 : i32
    %c0_i32_0 = arith.constant 0 : i32
    %c0_i32_1 = arith.constant 0 : i32
    return %c0_i32, %c0_i32_0 : i32, i32
  }
  func.func @transform_4(%arg0: i32) -> (i32, i32, i32) {
    %c0_i32 = arith.constant 0 : i32
    %c0_i32_0 = arith.constant 0 : i32
    %c0_i32_1 = arith.constant 0 : i32
    %c0_i32_2 = arith.constant 0 : i32
    return %c0_i32, %c0_i32_0, %c0_i32_1 : i32, i32, i32
  }
  func.func @transform_5(%arg0: i32) -> (i32, i32, i32) {
    %c0_i32 = arith.constant 0 : i32
    %c0_i32_0 = arith.constant 0 : i32
    %c0_i32_1 = arith.constant 0 : i32
    %c0_i32_2 = arith.constant 0 : i32
    return %c0_i32, %c0_i32_0, %c0_i32_1 : i32, i32, i32
  }
  func.func @transform_6(%arg0: i32) -> (i32, i32, i32) {
    %c0_i32 = arith.constant 0 : i32
    %c0_i32_0 = arith.constant 0 : i32
    %c0_i32_1 = arith.constant 0 : i32
    %c0_i32_2 = arith.constant 0 : i32
    return %c0_i32, %c0_i32_0, %c0_i32_1 : i32, i32, i32
  }
  func.func @transform_7(%arg0: i32) -> (i32, i32) {
    %c0_i32 = arith.constant 0 : i32
    %c0_i32_0 = arith.constant 0 : i32
    %c0_i32_1 = arith.constant 0 : i32
    return %c0_i32, %c0_i32_0 : i32, i32
  }
  func.func @transform_8(%arg0: i32) -> (i32, i32) {
    %c0_i32 = arith.constant 0 : i32
    %c0_i32_0 = arith.constant 0 : i32
    %c0_i32_1 = arith.constant 0 : i32
    return %c0_i32, %c0_i32_0 : i32, i32
  }
  func.func @transform_9(%arg0: i32) -> (i32, i32) {
    %c0_i32 = arith.constant 0 : i32
    %c0_i32_0 = arith.constant 0 : i32
    %c0_i32_1 = arith.constant 0 : i32
    return %c0_i32, %c0_i32_0 : i32, i32
  }
  func.func @transform_10(%arg0: i32) -> (i32, i32) {
    %c0_i32 = arith.constant 0 : i32
    %c0_i32_0 = arith.constant 0 : i32
    %c0_i32_1 = arith.constant 0 : i32
    return %c0_i32, %c0_i32_0 : i32, i32
  }
  func.func @transform_11(%arg0: i32) -> (i32, i32) {
    %c0_i32 = arith.constant 0 : i32
    %c0_i32_0 = arith.constant 0 : i32
    %c0_i32_1 = arith.constant 0 : i32
    return %c0_i32, %c0_i32_0 : i32, i32
  }
  func.func @transform_12(%arg0: i32) -> (i32, i32) {
    %c0_i32 = arith.constant 0 : i32
    %c0_i32_0 = arith.constant 0 : i32
    %c0_i32_1 = arith.constant 0 : i32
    return %c0_i32, %c0_i32_0 : i32, i32
  }
  func.func @transform_13(%arg0: i32) -> (i32, i32) {
    %c0_i32 = arith.constant 0 : i32
    %c0_i32_0 = arith.constant 0 : i32
    %c0_i32_1 = arith.constant 0 : i32
    return %c0_i32, %c0_i32_0 : i32, i32
  }
  func.func @transform_14(%arg0: i32) -> (i32, i32) {
    %c0_i32 = arith.constant 0 : i32
    %c0_i32_0 = arith.constant 0 : i32
    %c0_i32_1 = arith.constant 0 : i32
    return %c0_i32, %c0_i32_0 : i32, i32
  }
  func.func @transform_15(%arg0: i32) -> (i32, i32) {
    %c0_i32 = arith.constant 0 : i32
    %c0_i32_0 = arith.constant 0 : i32
    %c0_i32_1 = arith.constant 0 : i32
    return %c0_i32, %c0_i32_0 : i32, i32
  }
  func.func @transform_16(%arg0: i32) -> (i32, i32, i32) {
    %c0_i32 = arith.constant 0 : i32
    %c0_i32_0 = arith.constant 0 : i32
    %c0_i32_1 = arith.constant 0 : i32
    return %arg0, %c0_i32, %c0_i32_0 : i32, i32, i32
  }
}

</mosaic_0001>

<llo_original>
// kernel: transformer_segmentation_head.1
$region0: #{transformer_segmentation_head.1}
  #allocation0 [shape = 'u32[]', space=smem, size = 0x4, offset = 0x4, fixed_abs, tag = 'smem constant byte address 0x4 - core index']
  #allocation1 [shape = 'u32[72,128]{1,0:T(1,128)}', space=vmem, size = 0x9000, scoped, tag = 'internal scratch']
  %s0 = inlined_call_operand.vmem [shape: f32[2,256,64], index: 0, kind: input, shape index: {}]
  %s1 = inlined_call_operand.vmem [shape: f32[8,64], index: 1, kind: input, shape index: {}]
  %s2 = inlined_call_operand.vmem [shape: f32[1,64], index: 2, kind: input, shape index: {}]
  %s3 = inlined_call_operand.vmem [shape: f32[1,64], index: 3, kind: input, shape index: {}]
  %s4 = inlined_call_operand.vmem [shape: bf16[4,64,16], index: 4, kind: input, shape index: {}]
  %s5 = inlined_call_operand.vmem [shape: bf16[4,64,16], index: 5, kind: input, shape index: {}]
  %s6 = inlined_call_operand.vmem [shape: bf16[4,16,64], index: 6, kind: input, shape index: {}]
  %s7 = inlined_call_operand.vmem [shape: f32[1,64], index: 7, kind: input, shape index: {}]
  %s8 = inlined_call_operand.vmem [shape: f32[1,64], index: 8, kind: input, shape index: {}]
  %s9 = inlined_call_operand.vmem [shape: f32[1,64], index: 9, kind: input, shape index: {}]
  %s10 = inlined_call_operand.vmem [shape: bf16[64,64], index: 10, kind: input, shape index: {}]
  %s11 = inlined_call_operand.vmem [shape: f32[1,64], index: 11, kind: input, shape index: {}]
  %s12 = inlined_call_operand.vmem [shape: bf16[64,64], index: 12, kind: input, shape index: {}]
  %s13 = inlined_call_operand.vmem [shape: f32[1,64], index: 13, kind: input, shape index: {}]
  %s14 = inlined_call_operand.vmem [shape: f32[8,1], index: 14, kind: input, shape index: {}]
  %s15 = inlined_call_operand.vmem [shape: f32[8,1], index: 15, kind: input, shape index: {}]
  %s16 = inlined_call_operand.vmem [shape: f32[2,8,256], index: 16, kind: output, shape index: {}]
  %s17 = sld [smem:[#allocation0]]
  $region97: #{transformer_segmentation_head.1} parent=0
    _
  %s19 = ssub.s32 1, %s17
  %s20 = scalar_select 0, %s19, %s17
  loop: start=0, step=1, limit=4
  $region2: #{transformer_segmentation_head.1} parent=0 // loop_pre_header
    _
  $region3: #{transformer_segmentation_head.1} parent=0 // loop_header
    %s22 = sphi 0, %s26
    %p23 = scmp.ge.s32.totalorder %s22, 4
    %s32 = sphi 0, %s34
    %s35 = sphi 0, %s32
    %s36 = sphi 0, %s35
    %s52 = sphi 0, %s36
    %s56 = sphi 0, %s56
    %s58 = sphi 0, %s56
    %s59 = sphi 0, %s58
    %s73 = sphi 0, %s59
    %s77 = sphi 0, %s77
    %s79 = sphi 0, %s77
    %s80 = sphi 0, %s79
    %s94 = sphi 0, %s80
    %s98 = sphi 0, %s98
    %s100 = sphi 0, %s98
    %s101 = sphi 0, %s100
    %s115 = sphi 0, %s101
    %s119 = sphi 0, %s119
    %s121 = sphi 0, %s119
    %s122 = sphi 0, %s121
    %s136 = sphi 0, %s122
    %s140 = sphi 0, %s140
    %s142 = sphi 0, %s140
    %s143 = sphi 0, %s142
    %s157 = sphi 0, %s143
    %s161 = sphi 0, %s161
    %s163 = sphi 0, %s161
    %s164 = sphi 0, %s163
    %s178 = sphi 0, %s164
    %s182 = sphi 0, %s182
    %s184 = sphi 0, %s182
    %s185 = sphi 0, %s184
    %s199 = sphi 0, %s185
    %s203 = sphi 0, %s203
    %s205 = sphi 0, %s203
    %s206 = sphi 0, %s205
    %s220 = sphi 0, %s206
    %s224 = sphi 0, %s224
    %s226 = sphi 0, %s224
    %s227 = sphi 0, %s226
    %s241 = sphi 0, %s227
    %s245 = sphi 0, %s245
    %s247 = sphi 0, %s245
    %s248 = sphi 0, %s247
    %s262 = sphi 0, %s248
    %s266 = sphi 0, %s266
    %s268 = sphi 0, %s266
    %s269 = sphi 0, %s268
    %s283 = sphi 0, %s269
    %s287 = sphi 0, %s287
    %s289 = sphi 0, %s287
    %s290 = sphi 0, %s289
    %s304 = sphi 0, %s290
    %s308 = sphi 0, %s308
    %s310 = sphi 0, %s308
    %s311 = sphi 0, %s310
    %s325 = sphi 0, %s311
    %s329 = sphi 0, %s329
    %s331 = sphi 0, %s329
    %s332 = sphi 0, %s331
    %s346 = sphi 0, %s332
    %s350 = sphi 0, %s350
    %s352 = sphi 0, %s350
    %s353 = sphi 0, %s352
    %s367 = sphi 0, %s353
    %s373 = sphi 0, %s375
    %s376 = sphi 0, %s373
    %s377 = sphi 0, %s376
    %s393 = sphi 0, %s377
  $region4: #{transformer_segmentation_head.1} parent=0 // loop_header_branch
    %25 = sbr.rel (%p23) target = $region8
  $region5: #{transformer_segmentation_head.1} parent=0 // loop_body
    %s27 = ssub.s32 %s22, 1
    %s28 = ssub.s32 %s22, 2
    %s29 = sadd.s32 %s22, 1
    %s30 = ssub.s32 %s22, %s29
    %p31 = scmp.eq.s32.totalorder %s30, 0
    %s33 = sadd.s32 %s32, 1
    %s34 = scalar_select %p31, %s32, %s33
    %p37 = pneg %p31
    %p38 = scmp.eq.s32.totalorder %s22, 1
    %p39 = por %p37, %p38
    %p40 = scmp.ne.s32.totalorder %s32, %s35
    %p41 = scmp.eq.s32.totalorder %s22, 0
    %p42 = por %p40, %p41
    %p43 = scmp.ne.s32.totalorder %s32, %s35
    %p44 = scmp.eq.s32.totalorder %s27, 1
    %p45 = por %p43, %p44
    %p46 = scmp.ne.s32.totalorder %s35, %s36
    %p47 = scmp.eq.s32.totalorder %s27, 0
    %p48 = por %p46, %p47
    %p49 = scmp.ne.s32.totalorder %s35, %s36
    %p50 = scmp.eq.s32.totalorder %s28, 1
    %p51 = por %p49, %p50
    %p53 = scmp.ne.s32.totalorder %s36, %s52
    %p54 = scmp.eq.s32.totalorder %s28, 0
    %p55 = por %p53, %p54
    %s57 = sadd.s32 %s56, 1
    %p60 = scmp.eq.s32.totalorder %s22, 1
    %p61 = scmp.ne.s32.totalorder %s56, %s58
    %p62 = scmp.eq.s32.totalorder %s22, 0
    %p63 = por %p61, %p62
    %p64 = scmp.ne.s32.totalorder %s56, %s58
    %p65 = scmp.eq.s32.totalorder %s27, 1
    %p66 = por %p64, %p65
    %p67 = scmp.ne.s32.totalorder %s58, %s59
    %p68 = scmp.eq.s32.totalorder %s27, 0
    %p69 = por %p67, %p68
    %p70 = scmp.ne.s32.totalorder %s58, %s59
    %p71 = scmp.eq.s32.totalorder %s28, 1
    %p72 = por %p70, %p71
    %p74 = scmp.ne.s32.totalorder %s59, %s73
    %p75 = scmp.eq.s32.totalorder %s28, 0
    %p76 = por %p74, %p75
    %s78 = sadd.s32 %s77, 1
    %p81 = scmp.eq.s32.totalorder %s22, 1
    %p82 = scmp.ne.s32.totalorder %s77, %s79
    %p83 = scmp.eq.s32.totalorder %s22, 0
    %p84 = por %p82, %p83
    %p85 = scmp.ne.s32.totalorder %s77, %s79
    %p86 = scmp.eq.s32.totalorder %s27, 1
    %p87 = por %p85, %p86
    %p88 = scmp.ne.s32.totalorder %s79, %s80
    %p89 = scmp.eq.s32.totalorder %s27, 0
    %p90 = por %p88, %p89
    %p91 = scmp.ne.s32.totalorder %s79, %s80
    %p92 = scmp.eq.s32.totalorder %s28, 1
    %p93 = por %p91, %p92
    %p95 = scmp.ne.s32.totalorder %s80, %s94
    %p96 = scmp.eq.s32.totalorder %s28, 0
    %p97 = por %p95, %p96
    %s99 = sadd.s32 %s98, 1
    %p102 = scmp.eq.s32.totalorder %s22, 1
    %p103 = scmp.ne.s32.totalorder %s98, %s100
    %p104 = scmp.eq.s32.totalorder %s22, 0
    %p105 = por %p103, %p104
    %p106 = scmp.ne.s32.totalorder %s98, %s100
    %p107 = scmp.eq.s32.totalorder %s27, 1
    %p108 = por %p106, %p107
    %p109 = scmp.ne.s32.totalorder %s100, %s101
    %p110 = scmp.eq.s32.totalorder %s27, 0
    %p111 = por %p109, %p110
    %p112 = scmp.ne.s32.totalorder %s100, %s101
    %p113 = scmp.eq.s32.totalorder %s28, 1
    %p114 = por %p112, %p113
    %p116 = scmp.ne.s32.totalorder %s101, %s115
    %p117 = scmp.eq.s32.totalorder %s28, 0
    %p118 = por %p116, %p117
    %s120 = sadd.s32 %s119, 1
    %p123 = scmp.eq.s32.totalorder %s22, 1
    %p124 = scmp.ne.s32.totalorder %s119, %s121
    %p125 = scmp.eq.s32.totalorder %s22, 0
    %p126 = por %p124, %p125
    %p127 = scmp.ne.s32.totalorder %s119, %s121
    %p128 = scmp.eq.s32.totalorder %s27, 1
    %p129 = por %p127, %p128
    %p130 = scmp.ne.s32.totalorder %s121, %s122
    %p131 = scmp.eq.s32.totalorder %s27, 0
    %p132 = por %p130, %p131
    %p133 = scmp.ne.s32.totalorder %s121, %s122
    %p134 = scmp.eq.s32.totalorder %s28, 1
    %p135 = por %p133, %p134
    %p137 = scmp.ne.s32.totalorder %s122, %s136
    %p138 = scmp.eq.s32.totalorder %s28, 0
    %p139 = por %p137, %p138
    %s141 = sadd.s32 %s140, 1
    %p144 = scmp.eq.s32.totalorder %s22, 1
    %p145 = scmp.ne.s32.totalorder %s140, %s142
    %p146 = scmp.eq.s32.totalorder %s22, 0
    %p147 = por %p145, %p146
    %p148 = scmp.ne.s32.totalorder %s140, %s142
    %p149 = scmp.eq.s32.totalorder %s27, 1
    %p150 = por %p148, %p149
    %p151 = scmp.ne.s32.totalorder %s142, %s143
    %p152 = scmp.eq.s32.totalorder %s27, 0
    %p153 = por %p151, %p152
    %p154 = scmp.ne.s32.totalorder %s142, %s143
    %p155 = scmp.eq.s32.totalorder %s28, 1
    %p156 = por %p154, %p155
    %p158 = scmp.ne.s32.totalorder %s143, %s157
    %p159 = scmp.eq.s32.totalorder %s28, 0
    %p160 = por %p158, %p159
    %s162 = sadd.s32 %s161, 1
    %p165 = scmp.eq.s32.totalorder %s22, 1
    %p166 = scmp.ne.s32.totalorder %s161, %s163
    %p167 = scmp.eq.s32.totalorder %s22, 0
    %p168 = por %p166, %p167
    %p169 = scmp.ne.s32.totalorder %s161, %s163
    %p170 = scmp.eq.s32.totalorder %s27, 1
    %p171 = por %p169, %p170
    %p172 = scmp.ne.s32.totalorder %s163, %s164
    %p173 = scmp.eq.s32.totalorder %s27, 0
    %p174 = por %p172, %p173
    %p175 = scmp.ne.s32.totalorder %s163, %s164
    %p176 = scmp.eq.s32.totalorder %s28, 1
    %p177 = por %p175, %p176
    %p179 = scmp.ne.s32.totalorder %s164, %s178
    %p180 = scmp.eq.s32.totalorder %s28, 0
    %p181 = por %p179, %p180
    %s183 = sadd.s32 %s182, 1
    %p186 = scmp.eq.s32.totalorder %s22, 1
    %p187 = scmp.ne.s32.totalorder %s182, %s184
    %p188 = scmp.eq.s32.totalorder %s22, 0
    %p189 = por %p187, %p188
    %p190 = scmp.ne.s32.totalorder %s182, %s184
    %p191 = scmp.eq.s32.totalorder %s27, 1
    %p192 = por %p190, %p191
    %p193 = scmp.ne.s32.totalorder %s184, %s185
    %p194 = scmp.eq.s32.totalorder %s27, 0
    %p195 = por %p193, %p194
    %p196 = scmp.ne.s32.totalorder %s184, %s185
    %p197 = scmp.eq.s32.totalorder %s28, 1
    %p198 = por %p196, %p197
    %p200 = scmp.ne.s32.totalorder %s185, %s199
    %p201 = scmp.eq.s32.totalorder %s28, 0
    %p202 = por %p200, %p201
    %s204 = sadd.s32 %s203, 1
    %p207 = scmp.eq.s32.totalorder %s22, 1
    %p208 = scmp.ne.s32.totalorder %s203, %s205
    %p209 = scmp.eq.s32.totalorder %s22, 0
    %p210 = por %p208, %p209
    %p211 = scmp.ne.s32.totalorder %s203, %s205
    %p212 = scmp.eq.s32.totalorder %s27, 1
    %p213 = por %p211, %p212
    %p214 = scmp.ne.s32.totalorder %s205, %s206
    %p215 = scmp.eq.s32.totalorder %s27, 0
    %p216 = por %p214, %p215
    %p217 = scmp.ne.s32.totalorder %s205, %s206
    %p218 = scmp.eq.s32.totalorder %s28, 1
    %p219 = por %p217, %p218
    %p221 = scmp.ne.s32.totalorder %s206, %s220
    %p222 = scmp.eq.s32.totalorder %s28, 0
    %p223 = por %p221, %p222
    %s225 = sadd.s32 %s224, 1
    %p228 = scmp.eq.s32.totalorder %s22, 1
    %p229 = scmp.ne.s32.totalorder %s224, %s226
    %p230 = scmp.eq.s32.totalorder %s22, 0
    %p231 = por %p229, %p230
    %p232 = scmp.ne.s32.totalorder %s224, %s226
    %p233 = scmp.eq.s32.totalorder %s27, 1
    %p234 = por %p232, %p233
    %p235 = scmp.ne.s32.totalorder %s226, %s227
    %p236 = scmp.eq.s32.totalorder %s27, 0
    %p237 = por %p235, %p236
    %p238 = scmp.ne.s32.totalorder %s226, %s227
    %p239 = scmp.eq.s32.totalorder %s28, 1
    %p240 = por %p238, %p239
    %p242 = scmp.ne.s32.totalorder %s227, %s241
    %p243 = scmp.eq.s32.totalorder %s28, 0
    %p244 = por %p242, %p243
    %s246 = sadd.s32 %s245, 1
    %p249 = scmp.eq.s32.totalorder %s22, 1
    %p250 = scmp.ne.s32.totalorder %s245, %s247
    %p251 = scmp.eq.s32.totalorder %s22, 0
    %p252 = por %p250, %p251
    %p253 = scmp.ne.s32.totalorder %s245, %s247
    %p254 = scmp.eq.s32.totalorder %s27, 1
    %p255 = por %p253, %p254
    %p256 = scmp.ne.s32.totalorder %s247, %s248
    %p257 = scmp.eq.s32.totalorder %s27, 0
    %p258 = por %p256, %p257
    %p259 = scmp.ne.s32.totalorder %s247, %s248
    %p260 = scmp.eq.s32.totalorder %s28, 1
    %p261 = por %p259, %p260
    %p263 = scmp.ne.s32.totalorder %s248, %s262
    %p264 = scmp.eq.s32.totalorder %s28, 0
    %p265 = por %p263, %p264
    %s267 = sadd.s32 %s266, 1
    %p270 = scmp.eq.s32.totalorder %s22, 1
    %p271 = scmp.ne.s32.totalorder %s266, %s268
    %p272 = scmp.eq.s32.totalorder %s22, 0
    %p273 = por %p271, %p272
    %p274 = scmp.ne.s32.totalorder %s266, %s268
    %p275 = scmp.eq.s32.totalorder %s27, 1
    %p276 = por %p274, %p275
    %p277 = scmp.ne.s32.totalorder %s268, %s269
    %p278 = scmp.eq.s32.totalorder %s27, 0
    %p279 = por %p277, %p278
    %p280 = scmp.ne.s32.totalorder %s268, %s269
    %p281 = scmp.eq.s32.totalorder %s28, 1
    %p282 = por %p280, %p281
    %p284 = scmp.ne.s32.totalorder %s269, %s283
    %p285 = scmp.eq.s32.totalorder %s28, 0
    %p286 = por %p284, %p285
    %s288 = sadd.s32 %s287, 1
    %p291 = scmp.eq.s32.totalorder %s22, 1
    %p292 = scmp.ne.s32.totalorder %s287, %s289
    %p293 = scmp.eq.s32.totalorder %s22, 0
    %p294 = por %p292, %p293
    %p295 = scmp.ne.s32.totalorder %s287, %s289
    %p296 = scmp.eq.s32.totalorder %s27, 1
    %p297 = por %p295, %p296
    %p298 = scmp.ne.s32.totalorder %s289, %s290
    %p299 = scmp.eq.s32.totalorder %s27, 0
    %p300 = por %p298, %p299
    %p301 = scmp.ne.s32.totalorder %s289, %s290
    %p302 = scmp.eq.s32.totalorder %s28, 1
    %p303 = por %p301, %p302
    %p305 = scmp.ne.s32.totalorder %s290, %s304
    %p306 = scmp.eq.s32.totalorder %s28, 0
    %p307 = por %p305, %p306
    %s309 = sadd.s32 %s308, 1
    %p312 = scmp.eq.s32.totalorder %s22, 1
    %p313 = scmp.ne.s32.totalorder %s308, %s310
    %p314 = scmp.eq.s32.totalorder %s22, 0
    %p315 = por %p313, %p314
    %p316 = scmp.ne.s32.totalorder %s308, %s310
    %p317 = scmp.eq.s32.totalorder %s27, 1
    %p318 = por %p316, %p317
    %p319 = scmp.ne.s32.totalorder %s310, %s311
    %p320 = scmp.eq.s32.totalorder %s27, 0
    %p321 = por %p319, %p320
    %p322 = scmp.ne.s32.totalorder %s310, %s311
    %p323 = scmp.eq.s32.totalorder %s28, 1
    %p324 = por %p322, %p323
    %p326 = scmp.ne.s32.totalorder %s311, %s325
    %p327 = scmp.eq.s32.totalorder %s28, 0
    %p328 = por %p326, %p327
    %s330 = sadd.s32 %s329, 1
    %p333 = scmp.eq.s32.totalorder %s22, 1
    %p334 = scmp.ne.s32.totalorder %s329, %s331
    %p335 = scmp.eq.s32.totalorder %s22, 0
    %p336 = por %p334, %p335
    %p337 = scmp.ne.s32.totalorder %s329, %s331
    %p338 = scmp.eq.s32.totalorder %s27, 1
    %p339 = por %p337, %p338
    %p340 = scmp.ne.s32.totalorder %s331, %s332
    %p341 = scmp.eq.s32.totalorder %s27, 0
    %p342 = por %p340, %p341
    %p343 = scmp.ne.s32.totalorder %s331, %s332
    %p344 = scmp.eq.s32.totalorder %s28, 1
    %p345 = por %p343, %p344
    %p347 = scmp.ne.s32.totalorder %s332, %s346
    %p348 = scmp.eq.s32.totalorder %s28, 0
    %p349 = por %p347, %p348
    %s351 = sadd.s32 %s350, 1
    %p354 = scmp.eq.s32.totalorder %s22, 1
    %p355 = scmp.ne.s32.totalorder %s350, %s352
    %p356 = scmp.eq.s32.totalorder %s22, 0
    %p357 = por %p355, %p356
    %p358 = scmp.ne.s32.totalorder %s350, %s352
    %p359 = scmp.eq.s32.totalorder %s27, 1
    %p360 = por %p358, %p359
    %p361 = scmp.ne.s32.totalorder %s352, %s353
    %p362 = scmp.eq.s32.totalorder %s27, 0
    %p363 = por %p361, %p362
    %p364 = scmp.ne.s32.totalorder %s352, %s353
    %p365 = scmp.eq.s32.totalorder %s28, 1
    %p366 = por %p364, %p365
    %p368 = scmp.ne.s32.totalorder %s353, %s367
    %p369 = scmp.eq.s32.totalorder %s28, 0
    %p370 = por %p368, %p369
    %s371 = ssub.s32 %s22, %s29
    %p372 = scmp.eq.s32.totalorder %s371, 0
    %s374 = sadd.s32 %s373, 1
    %s375 = scalar_select %p372, %s373, %s374
    %p378 = pneg %p372
    %p379 = scmp.eq.s32.totalorder %s22, 1
    %p380 = por %p378, %p379
    %p381 = scmp.ne.s32.totalorder %s373, %s376
    %p382 = scmp.eq.s32.totalorder %s22, 0
    %p383 = por %p381, %p382
    %p384 = scmp.ne.s32.totalorder %s373, %s376
    %p385 = scmp.eq.s32.totalorder %s27, 1
    %p386 = por %p384, %p385
    %p387 = scmp.ne.s32.totalorder %s376, %s377
    %p388 = scmp.eq.s32.totalorder %s27, 0
    %p389 = por %p387, %p388
    %p390 = scmp.ne.s32.totalorder %s376, %s377
    %p391 = scmp.eq.s32.totalorder %s28, 1
    %p392 = por %p390, %p391
    %p394 = scmp.ne.s32.totalorder %s377, %s393
    %p395 = scmp.eq.s32.totalorder %s28, 0
    %p396 = por %p394, %p395
    %p397 = scmp.le.s32.totalorder 1, %s22
    %p398 = scmp.lt.s32.totalorder %s22, 3
    %p399 = pnand %p397, %p398
    %p400 = pneg %p399
    // Predicated region
    $region9: #{transformer_segmentation_head.1} parent=5 // pred_check
      _
    $region10: #{transformer_segmentation_head.1} parent=5 // pred_check_branch
      %402 = sbr.rel (%p399) target = $region12
    $region11: #{transformer_segmentation_head.1} parent=5 // pred_region
      %s403 = ssub.s32 %s22, 1
      // Predicated region
      $region13: #{transformer_segmentation_head.1} parent=11 // pred_check
        %p404 = pneg %p69
      $region14: #{transformer_segmentation_head.1} parent=11 // pred_check_branch
        %406 = sbr.rel (%p404) target = $region16
      $region15: #{transformer_segmentation_head.1} parent=11 // pred_region
        _
      $region16: #{transformer_segmentation_head.1} parent=11 // pred_fallthru
        _
      // Predicated region
      $region17: #{transformer_segmentation_head.1} parent=11 // pred_check
        %p407 = pneg %p90
      $region18: #{transformer_segmentation_head.1} parent=11 // pred_check_branch
        %409 = sbr.rel (%p407) target = $region20
      $region19: #{transformer_segmentation_head.1} parent=11 // pred_region
        _
      $region20: #{transformer_segmentation_head.1} parent=11 // pred_fallthru
        _
      // Predicated region
      $region21: #{transformer_segmentation_head.1} parent=11 // pred_check
        %p410 = pneg %p111
      $region22: #{transformer_segmentation_head.1} parent=11 // pred_check_branch
        %412 = sbr.rel (%p410) target = $region24
      $region23: #{transformer_segmentation_head.1} parent=11 // pred_region
        _
      $region24: #{transformer_segmentation_head.1} parent=11 // pred_fallthru
        _
      // Predicated region
      $region25: #{transformer_segmentation_head.1} parent=11 // pred_check
        %p413 = pneg %p132
      $region26: #{transformer_segmentation_head.1} parent=11 // pred_check_branch
        %415 = sbr.rel (%p413) target = $region28
      $region27: #{transformer_segmentation_head.1} parent=11 // pred_region
        _
      $region28: #{transformer_segmentation_head.1} parent=11 // pred_fallthru
        _
      // Predicated region
      $region29: #{transformer_segmentation_head.1} parent=11 // pred_check
        %p416 = pneg %p153
      $region30: #{transformer_segmentation_head.1} parent=11 // pred_check_branch
        %418 = sbr.rel (%p416) target = $region32
      $region31: #{transformer_segmentation_head.1} parent=11 // pred_region
        _
      $region32: #{transformer_segmentation_head.1} parent=11 // pred_fallthru
        _
      // Predicated region
      $region33: #{transformer_segmentation_head.1} parent=11 // pred_check
        %p419 = pneg %p174
      $region34: #{transformer_segmentation_head.1} parent=11 // pred_check_branch
        %421 = sbr.rel (%p419) target = $region36
      $region35: #{transformer_segmentation_head.1} parent=11 // pred_region
        _
      $region36: #{transformer_segmentation_head.1} parent=11 // pred_fallthru
        _
      // Predicated region
      $region37: #{transformer_segmentation_head.1} parent=11 // pred_check
        %p422 = pneg %p195
      $region38: #{transformer_segmentation_head.1} parent=11 // pred_check_branch
        %424 = sbr.rel (%p422) target = $region40
      $region39: #{transformer_segmentation_head.1} parent=11 // pred_region
        _
      $region40: #{transformer_segmentation_head.1} parent=11 // pred_fallthru
        _
      // Predicated region
      $region41: #{transformer_segmentation_head.1} parent=11 // pred_check
        %p425 = pneg %p216
      $region42: #{transformer_segmentation_head.1} parent=11 // pred_check_branch
        %427 = sbr.rel (%p425) target = $region44
      $region43: #{transformer_segmentation_head.1} parent=11 // pred_region
        _
      $region44: #{transformer_segmentation_head.1} parent=11 // pred_fallthru
        _
      // Predicated region
      $region45: #{transformer_segmentation_head.1} parent=11 // pred_check
        %p428 = pneg %p237
      $region46: #{transformer_segmentation_head.1} parent=11 // pred_check_branch
        %430 = sbr.rel (%p428) target = $region48
      $region47: #{transformer_segmentation_head.1} parent=11 // pred_region
        _
      $region48: #{transformer_segmentation_head.1} parent=11 // pred_fallthru
        _
      // Predicated region
      $region49: #{transformer_segmentation_head.1} parent=11 // pred_check
        %p431 = pneg %p258
      $region50: #{transformer_segmentation_head.1} parent=11 // pred_check_branch
        %433 = sbr.rel (%p431) target = $region52
      $region51: #{transformer_segmentation_head.1} parent=11 // pred_region
        _
      $region52: #{transformer_segmentation_head.1} parent=11 // pred_fallthru
        _
      // Predicated region
      $region53: #{transformer_segmentation_head.1} parent=11 // pred_check
        %p434 = pneg %p279
      $region54: #{transformer_segmentation_head.1} parent=11 // pred_check_branch
        %436 = sbr.rel (%p434) target = $region56
      $region55: #{transformer_segmentation_head.1} parent=11 // pred_region
        _
      $region56: #{transformer_segmentation_head.1} parent=11 // pred_fallthru
        _
      // Predicated region
      $region57: #{transformer_segmentation_head.1} parent=11 // pred_check
        %p437 = pneg %p300
      $region58: #{transformer_segmentation_head.1} parent=11 // pred_check_branch
        %439 = sbr.rel (%p437) target = $region60
      $region59: #{transformer_segmentation_head.1} parent=11 // pred_region
        _
      $region60: #{transformer_segmentation_head.1} parent=11 // pred_fallthru
        _
      // Predicated region
      $region61: #{transformer_segmentation_head.1} parent=11 // pred_check
        %p440 = pneg %p321
      $region62: #{transformer_segmentation_head.1} parent=11 // pred_check_branch
        %442 = sbr.rel (%p440) target = $region64
      $region63: #{transformer_segmentation_head.1} parent=11 // pred_region
        _
      $region64: #{transformer_segmentation_head.1} parent=11 // pred_fallthru
        _
      // Predicated region
      $region65: #{transformer_segmentation_head.1} parent=11 // pred_check
        %p443 = pneg %p342
      $region66: #{transformer_segmentation_head.1} parent=11 // pred_check_branch
        %445 = sbr.rel (%p443) target = $region68
      $region67: #{transformer_segmentation_head.1} parent=11 // pred_region
        _
      $region68: #{transformer_segmentation_head.1} parent=11 // pred_fallthru
        _
      // Predicated region
      $region69: #{transformer_segmentation_head.1} parent=11 // pred_check
        %p446 = pneg %p363
      $region70: #{transformer_segmentation_head.1} parent=11 // pred_check_branch
        %448 = sbr.rel (%p446) target = $region72
      $region71: #{transformer_segmentation_head.1} parent=11 // pred_region
        _
      $region72: #{transformer_segmentation_head.1} parent=11 // pred_fallthru
        _
    $region12: #{transformer_segmentation_head.1} parent=5 // pred_fallthru
      _
    %p449 = scmp.lt.s32.totalorder %s22, 2
    // Predicated region
    $region73: #{transformer_segmentation_head.1} parent=5 // pred_check
      %p450 = pneg %p449
    $region74: #{transformer_segmentation_head.1} parent=5 // pred_check_branch
      %452 = sbr.rel (%p450) target = $region76
    $region75: #{transformer_segmentation_head.1} parent=5 // pred_region
      // Predicated region
      $region77: #{transformer_segmentation_head.1} parent=75 // pred_check
        %p453 = pneg %p42
      $region78: #{transformer_segmentation_head.1} parent=75 // pred_check_branch
        %455 = sbr.rel (%p453) target = $region80
      $region79: #{transformer_segmentation_head.1} parent=75 // pred_region
        %p456 = scmp.lt.s32.totalorder %s22, 1
        %s457 = scalar_select %p456, %s22, 1
        %s458 = smul.addr %s457, 32
        %s459 = smul.addr %s458, 8
        %s460 = scalar_lea.vmem %s0, %s459
      $region80: #{transformer_segmentation_head.1} parent=75 // pred_fallthru
        _
    $region76: #{transformer_segmentation_head.1} parent=5 // pred_fallthru
      _
    %p461 = scmp.le.s32.totalorder 1, %s22
    %p462 = scmp.lt.s32.totalorder %s22, 3
    %p463 = pnand %p461, %p462
    %p464 = pneg %p463
    // Predicated region
    $region81: #{transformer_segmentation_head.1} parent=5 // pred_check
      _
    $region82: #{transformer_segmentation_head.1} parent=5 // pred_check_branch
      %466 = sbr.rel (%p463) target = $region84
    $region83: #{transformer_segmentation_head.1} parent=5 // pred_region
      %s467 = ssub.s32 %s22, 1
      %p468 = scmp.lt.s32.totalorder %s27, 1
      %s469 = scalar_select %p468, %s27, 1
      %s470 = smul.addr %s469, 32
      %s471 = smul.addr %s470, 8
      %s472 = scalar_lea.vmem %s0, %s471
      %p473 = pneg %p48
      %p474 = pneg %p45
      %p475 = pneg %p69
      %p476 = pneg %p66
      %p477 = pneg %p90
      %p478 = pneg %p87
      %p479 = pneg %p111
      %p480 = pneg %p108
      %p481 = pneg %p132
      %p482 = pneg %p129
      %p483 = pneg %p153
      %p484 = pneg %p150
      %p485 = pneg %p174
      %p486 = pneg %p171
      %p487 = pneg %p195
      %p488 = pneg %p192
      %p489 = pneg %p216
      %p490 = pneg %p213
      %p491 = pneg %p237
      %p492 = pneg %p234
      %p493 = pneg %p258
      %p494 = pneg %p255
      %p495 = pneg %p279
      %p496 = pneg %p276
      %p497 = pneg %p300
      %p498 = pneg %p297
      %p499 = pneg %p321
      %p500 = pneg %p318
      %p501 = pneg %p342
      %p502 = pneg %p339
      %p503 = pneg %p363
      %p504 = pneg %p360
      %p505 = pneg %p389
      %p506 = pneg %p386
      %p507 = scmp.lt.s32.totalorder %s27, 1
      %s508 = scalar_select %p507, %s27, 1
      %s509 = smul.addr %s508, 2
      %s510 = smul.addr %s509, 8
      %s511 = scalar_lea.vmem %s16, %s510
      %p512 = scmp.lt.s32.totalorder %s27, 1
      %s513 = scalar_select %p512, %s27, 1
      %s514 = smul.addr %s513, 32
      %s515 = smul.addr %s514, 8
      %s516 = scalar_lea.vmem %s0, %s515
      %p517 = scmp.lt.s32.totalorder %s27, 1
      %s518 = scalar_select %p517, %s27, 1
      %s519 = smul.addr %s518, 2
      %s520 = smul.addr %s519, 8
      %s521 = scalar_lea.vmem %s16, %s520
      %v523 = vld [vmem:[%s1] sm:$0xff]
      %v524 = vld [vmem:[%s516] sm:$0xff]
      %v525 = vld [vmem:[%s516 + $0x8] sm:$0xff]
      %v526 = vld [vmem:[%s516 + $0x10] sm:$0xff]
      %v527 = vld [vmem:[%s516 + $0x18] sm:$0xff]
      %v528 = vld [vmem:[%s516 + $0x20] sm:$0xff]
      %v529 = vld [vmem:[%s516 + $0x28] sm:$0xff]
      %v530 = vld [vmem:[%s516 + $0x30] sm:$0xff]
      %v531 = vld [vmem:[%s516 + $0x38] sm:$0xff]
      %v532 = vld [vmem:[%s516 + $0x40] sm:$0xff]
      %v533 = vld [vmem:[%s516 + $0x48] sm:$0xff]
      %v534 = vld [vmem:[%s516 + $0x50] sm:$0xff]
      %v535 = vld [vmem:[%s516 + $0x58] sm:$0xff]
      %v536 = vld [vmem:[%s516 + $0x60] sm:$0xff]
      %v537 = vld [vmem:[%s516 + $0x68] sm:$0xff]
      %v538 = vld [vmem:[%s516 + $0x70] sm:$0xff]
      %v539 = vld [vmem:[%s516 + $0x78] sm:$0xff]
      %v540 = vld [vmem:[%s516 + $0x80] sm:$0xff]
      %v541 = vld [vmem:[%s516 + $0x88] sm:$0xff]
      %v542 = vld [vmem:[%s516 + $0x90] sm:$0xff]
      %v543 = vld [vmem:[%s516 + $0x98] sm:$0xff]
      %v544 = vld [vmem:[%s516 + $0xa0] sm:$0xff]
      %v545 = vld [vmem:[%s516 + $0xa8] sm:$0xff]
      %v546 = vld [vmem:[%s516 + $0xb0] sm:$0xff]
      %v547 = vld [vmem:[%s516 + $0xb8] sm:$0xff]
      %v548 = vld [vmem:[%s516 + $0xc0] sm:$0xff]
      %v549 = vld [vmem:[%s516 + $0xc8] sm:$0xff]
      %v550 = vld [vmem:[%s516 + $0xd0] sm:$0xff]
      %v551 = vld [vmem:[%s516 + $0xd8] sm:$0xff]
      %v552 = vld [vmem:[%s516 + $0xe0] sm:$0xff]
      %v553 = vld [vmem:[%s516 + $0xe8] sm:$0xff]
      %v554 = vld [vmem:[%s516 + $0xf0] sm:$0xff]
      %v555 = vld [vmem:[%s516 + $0xf8] sm:$0xff]
      %v556 = vld [vmem:[%s2] sm:$0x1]
      %v557 = vld [vmem:[%s3] sm:$0x1]
      %vm558 = vcmask 523264
      %v559 = vsel %vm558, %v523, 0.0
      %560 = vadd.xlane.f32.xlu0 %v559
      %v561 = vpop.xlane.xlu0 %560
      %v562 = vsel %vm558, %v524, 0.0
      %563 = vadd.xlane.f32.xlu0 %v562
      %v564 = vpop.xlane.xlu0 %563
      %v565 = vsel %vm558, %v525, 0.0
      %566 = vadd.xlane.f32.xlu0 %v565
      %v567 = vpop.xlane.xlu0 %566
      %v568 = vsel %vm558, %v526, 0.0
      %569 = vadd.xlane.f32.xlu0 %v568
      %v570 = vpop.xlane.xlu0 %569
      %v571 = vsel %vm558, %v527, 0.0
      %572 = vadd.xlane.f32.xlu0 %v571
      %v573 = vpop.xlane.xlu0 %572
      %v574 = vsel %vm558, %v528, 0.0
      %575 = vadd.xlane.f32.xlu0 %v574
      %v576 = vpop.xlane.xlu0 %575
      %v577 = vsel %vm558, %v529, 0.0
      %578 = vadd.xlane.f32.xlu0 %v577
      %v579 = vpop.xlane.xlu0 %578
      %v580 = vsel %vm558, %v530, 0.0
      %581 = vadd.xlane.f32.xlu0 %v580
      %v582 = vpop.xlane.xlu0 %581
      %v583 = vsel %vm558, %v531, 0.0
      %584 = vadd.xlane.f32.xlu0 %v583
      %v585 = vpop.xlane.xlu0 %584
      %v586 = vsel %vm558, %v532, 0.0
      %587 = vadd.xlane.f32.xlu0 %v586
      %v588 = vpop.xlane.xlu0 %587
      %v589 = vsel %vm558, %v533, 0.0
      %590 = vadd.xlane.f32.xlu0 %v589
      %v591 = vpop.xlane.xlu0 %590
      %v592 = vsel %vm558, %v534, 0.0
      %593 = vadd.xlane.f32.xlu0 %v592
      %v594 = vpop.xlane.xlu0 %593
      %v595 = vsel %vm558, %v535, 0.0
      %596 = vadd.xlane.f32.xlu0 %v595
      %v597 = vpop.xlane.xlu0 %596
      %v598 = vsel %vm558, %v536, 0.0
      %599 = vadd.xlane.f32.xlu0 %v598
      %v600 = vpop.xlane.xlu0 %599
      %v601 = vsel %vm558, %v537, 0.0
      %602 = vadd.xlane.f32.xlu0 %v601
      %v603 = vpop.xlane.xlu0 %602
      %v604 = vsel %vm558, %v538, 0.0
      %605 = vadd.xlane.f32.xlu0 %v604
      %v606 = vpop.xlane.xlu0 %605
      %v607 = vsel %vm558, %v539, 0.0
      %608 = vadd.xlane.f32.xlu0 %v607
      %v609 = vpop.xlane.xlu0 %608
      %v610 = vsel %vm558, %v540, 0.0
      %611 = vadd.xlane.f32.xlu0 %v610
      %v612 = vpop.xlane.xlu0 %611
      %v613 = vsel %vm558, %v541, 0.0
      %614 = vadd.xlane.f32.xlu0 %v613
      %v615 = vpop.xlane.xlu0 %614
      %v616 = vsel %vm558, %v542, 0.0
      %617 = vadd.xlane.f32.xlu0 %v616
      %v618 = vpop.xlane.xlu0 %617
      %v619 = vsel %vm558, %v543, 0.0
      %620 = vadd.xlane.f32.xlu0 %v619
      %v621 = vpop.xlane.xlu0 %620
      %v622 = vsel %vm558, %v544, 0.0
      %623 = vadd.xlane.f32.xlu0 %v622
      %v624 = vpop.xlane.xlu0 %623
      %v625 = vsel %vm558, %v545, 0.0
      %626 = vadd.xlane.f32.xlu0 %v625
      %v627 = vpop.xlane.xlu0 %626
      %v628 = vsel %vm558, %v546, 0.0
      %629 = vadd.xlane.f32.xlu0 %v628
      %v630 = vpop.xlane.xlu0 %629
      %v631 = vsel %vm558, %v547, 0.0
      %632 = vadd.xlane.f32.xlu0 %v631
      %v633 = vpop.xlane.xlu0 %632
      %v634 = vsel %vm558, %v548, 0.0
      %635 = vadd.xlane.f32.xlu0 %v634
      %v636 = vpop.xlane.xlu0 %635
      %v637 = vsel %vm558, %v549, 0.0
      %638 = vadd.xlane.f32.xlu0 %v637
      %v639 = vpop.xlane.xlu0 %638
      %v640 = vsel %vm558, %v550, 0.0
      %641 = vadd.xlane.f32.xlu0 %v640
      %v642 = vpop.xlane.xlu0 %641
      %v643 = vsel %vm558, %v551, 0.0
      %644 = vadd.xlane.f32.xlu0 %v643
      %v645 = vpop.xlane.xlu0 %644
      %v646 = vsel %vm558, %v552, 0.0
      %647 = vadd.xlane.f32.xlu0 %v646
      %v648 = vpop.xlane.xlu0 %647
      %v649 = vsel %vm558, %v553, 0.0
      %650 = vadd.xlane.f32.xlu0 %v649
      %v651 = vpop.xlane.xlu0 %650
      %v652 = vsel %vm558, %v554, 0.0
      %653 = vadd.xlane.f32.xlu0 %v652
      %v654 = vpop.xlane.xlu0 %653
      %v655 = vsel %vm558, %v555, 0.0
      %656 = vadd.xlane.f32.xlu0 %v655
      %v657 = vpop.xlane.xlu0 %656
      %v658 = vrcp.pop 64.0
      %v659 = vmul.f32 64.0, %v658
      %v660 = vsub.f32 1.0, %v659
      %v661 = vmul.f32 %v658, %v660
      %v662 = vadd.f32 %v658, %v661
      %vm663 = vweird.f32 %v658
      %v664 = vsel %vm663, %v658, %v662
      %v665 = vmul.f32 %v561, %v664
      %v666 = vmul.f32 %v564, %v664
      %v667 = vmul.f32 %v567, %v664
      %v668 = vmul.f32 %v570, %v664
      %v669 = vmul.f32 %v573, %v664
      %v670 = vmul.f32 %v576, %v664
      %v671 = vmul.f32 %v579, %v664
      %v672 = vmul.f32 %v582, %v664
      %v673 = vmul.f32 %v585, %v664
      %v674 = vmul.f32 %v588, %v664
      %v675 = vmul.f32 %v591, %v664
      %v676 = vmul.f32 %v594, %v664
      %v677 = vmul.f32 %v597, %v664
      %v678 = vmul.f32 %v600, %v664
      %v679 = vmul.f32 %v603, %v664
      %v680 = vmul.f32 %v606, %v664
      %v681 = vmul.f32 %v609, %v664
      %v682 = vmul.f32 %v612, %v664
      %v683 = vmul.f32 %v615, %v664
      %v684 = vmul.f32 %v618, %v664
      %v685 = vmul.f32 %v621, %v664
      %v686 = vmul.f32 %v624, %v664
      %v687 = vmul.f32 %v627, %v664
      %v688 = vmul.f32 %v630, %v664
      %v689 = vmul.f32 %v633, %v664
      %v690 = vmul.f32 %v636, %v664
      %v691 = vmul.f32 %v639, %v664
      %v692 = vmul.f32 %v642, %v664
      %v693 = vmul.f32 %v645, %v664
      %v694 = vmul.f32 %v648, %v664
      %v695 = vmul.f32 %v651, %v664
      %v696 = vmul.f32 %v654, %v664
      %v697 = vmul.f32 %v657, %v664
      %v698 = vsub.f32 %v523, %v665
      %v699 = vsub.f32 %v524, %v666
      %v700 = vsub.f32 %v525, %v667
      %v701 = vsub.f32 %v526, %v668
      %v702 = vsub.f32 %v527, %v669
      %v703 = vsub.f32 %v528, %v670
      %v704 = vsub.f32 %v529, %v671
      %v705 = vsub.f32 %v530, %v672
      %v706 = vsub.f32 %v531, %v673
      %v707 = vsub.f32 %v532, %v674
      %v708 = vsub.f32 %v533, %v675
      %v709 = vsub.f32 %v534, %v676
      %v710 = vsub.f32 %v535, %v677
      %v711 = vsub.f32 %v536, %v678
      %v712 = vsub.f32 %v537, %v679
      %v713 = vsub.f32 %v538, %v680
      %v714 = vsub.f32 %v539, %v681
      %v715 = vsub.f32 %v540, %v682
      %v716 = vsub.f32 %v541, %v683
      %v717 = vsub.f32 %v542, %v684
      %v718 = vsub.f32 %v543, %v685
      %v719 = vsub.f32 %v544, %v686
      %v720 = vsub.f32 %v545, %v687
      %v721 = vsub.f32 %v546, %v688
      %v722 = vsub.f32 %v547, %v689
      %v723 = vsub.f32 %v548, %v690
      %v724 = vsub.f32 %v549, %v691
      %v725 = vsub.f32 %v550, %v692
      %v726 = vsub.f32 %v551, %v693
      %v727 = vsub.f32 %v552, %v694
      %v728 = vsub.f32 %v553, %v695
      %v729 = vsub.f32 %v554, %v696
      %v730 = vsub.f32 %v555, %v697
      %v731 = vmul.f32 %v698, %v698
      %v732 = vmul.f32 %v699, %v699
      %v733 = vmul.f32 %v700, %v700
      %v734 = vmul.f32 %v701, %v701
      %v735 = vmul.f32 %v702, %v702
      %v736 = vmul.f32 %v703, %v703
      %v737 = vmul.f32 %v704, %v704
      %v738 = vmul.f32 %v705, %v705
      %v739 = vmul.f32 %v706, %v706
      %v740 = vmul.f32 %v707, %v707
      %v741 = vmul.f32 %v708, %v708
      %v742 = vmul.f32 %v709, %v709
      %v743 = vmul.f32 %v710, %v710
      %v744 = vmul.f32 %v711, %v711
      %v745 = vmul.f32 %v712, %v712
      %v746 = vmul.f32 %v713, %v713
      %v747 = vmul.f32 %v714, %v714
      %v748 = vmul.f32 %v715, %v715
      %v749 = vmul.f32 %v716, %v716
      %v750 = vmul.f32 %v717, %v717
      %v751 = vmul.f32 %v718, %v718
      %v752 = vmul.f32 %v719, %v719
      %v753 = vmul.f32 %v720, %v720
      %v754 = vmul.f32 %v721, %v721
      %v755 = vmul.f32 %v722, %v722
      %v756 = vmul.f32 %v723, %v723
      %v757 = vmul.f32 %v724, %v724
      %v758 = vmul.f32 %v725, %v725
      %v759 = vmul.f32 %v726, %v726
      %v760 = vmul.f32 %v727, %v727
      %v761 = vmul.f32 %v728, %v728
      %v762 = vmul.f32 %v729, %v729
      %v763 = vmul.f32 %v730, %v730
      %v764 = vsel %vm558, %v731, 0.0
      %765 = vadd.xlane.f32.xlu0 %v764
      %v766 = vpop.xlane.xlu0 %765
      %v767 = vsel %vm558, %v732, 0.0
      %768 = vadd.xlane.f32.xlu0 %v767
      %v769 = vpop.xlane.xlu0 %768
      %v770 = vsel %vm558, %v733, 0.0
      %771 = vadd.xlane.f32.xlu0 %v770
      %v772 = vpop.xlane.xlu0 %771
      %v773 = vsel %vm558, %v734, 0.0
      %774 = vadd.xlane.f32.xlu0 %v773
      %v775 = vpop.xlane.xlu0 %774
      %v776 = vsel %vm558, %v735, 0.0
      %777 = vadd.xlane.f32.xlu0 %v776
      %v778 = vpop.xlane.xlu0 %777
      %v779 = vsel %vm558, %v736, 0.0
      %780 = vadd.xlane.f32.xlu0 %v779
      %v781 = vpop.xlane.xlu0 %780
      %v782 = vsel %vm558, %v737, 0.0
      %783 = vadd.xlane.f32.xlu0 %v782
      %v784 = vpop.xlane.xlu0 %783
      %v785 = vsel %vm558, %v738, 0.0
      %786 = vadd.xlane.f32.xlu0 %v785
      %v787 = vpop.xlane.xlu0 %786
      %v788 = vsel %vm558, %v739, 0.0
      %789 = vadd.xlane.f32.xlu0 %v788
      %v790 = vpop.xlane.xlu0 %789
      %v791 = vsel %vm558, %v740, 0.0
      %792 = vadd.xlane.f32.xlu0 %v791
      %v793 = vpop.xlane.xlu0 %792
      %v794 = vsel %vm558, %v741, 0.0
      %795 = vadd.xlane.f32.xlu0 %v794
      %v796 = vpop.xlane.xlu0 %795
      %v797 = vsel %vm558, %v742, 0.0
      %798 = vadd.xlane.f32.xlu0 %v797
      %v799 = vpop.xlane.xlu0 %798
      %v800 = vsel %vm558, %v743, 0.0
      %801 = vadd.xlane.f32.xlu0 %v800
      %v802 = vpop.xlane.xlu0 %801
      %v803 = vsel %vm558, %v744, 0.0
      %804 = vadd.xlane.f32.xlu0 %v803
      %v805 = vpop.xlane.xlu0 %804
      %v806 = vsel %vm558, %v745, 0.0
      %807 = vadd.xlane.f32.xlu0 %v806
      %v808 = vpop.xlane.xlu0 %807
      %v809 = vsel %vm558, %v746, 0.0
      %810 = vadd.xlane.f32.xlu0 %v809
      %v811 = vpop.xlane.xlu0 %810
      %v812 = vsel %vm558, %v747, 0.0
      %813 = vadd.xlane.f32.xlu0 %v812
      %v814 = vpop.xlane.xlu0 %813
      %v815 = vsel %vm558, %v748, 0.0
      %816 = vadd.xlane.f32.xlu0 %v815
      %v817 = vpop.xlane.xlu0 %816
      %v818 = vsel %vm558, %v749, 0.0
      %819 = vadd.xlane.f32.xlu0 %v818
      %v820 = vpop.xlane.xlu0 %819
      %v821 = vsel %vm558, %v750, 0.0
      %822 = vadd.xlane.f32.xlu0 %v821
      %v823 = vpop.xlane.xlu0 %822
      %v824 = vsel %vm558, %v751, 0.0
      %825 = vadd.xlane.f32.xlu0 %v824
      %v826 = vpop.xlane.xlu0 %825
      %v827 = vsel %vm558, %v752, 0.0
      %828 = vadd.xlane.f32.xlu0 %v827
      %v829 = vpop.xlane.xlu0 %828
      %v830 = vsel %vm558, %v753, 0.0
      %831 = vadd.xlane.f32.xlu0 %v830
      %v832 = vpop.xlane.xlu0 %831
      %v833 = vsel %vm558, %v754, 0.0
      %834 = vadd.xlane.f32.xlu0 %v833
      %v835 = vpop.xlane.xlu0 %834
      %v836 = vsel %vm558, %v755, 0.0
      %837 = vadd.xlane.f32.xlu0 %v836
      %v838 = vpop.xlane.xlu0 %837
      %v839 = vsel %vm558, %v756, 0.0
      %840 = vadd.xlane.f32.xlu0 %v839
      %v841 = vpop.xlane.xlu0 %840
      %v842 = vsel %vm558, %v757, 0.0
      %843 = vadd.xlane.f32.xlu0 %v842
      %v844 = vpop.xlane.xlu0 %843
      %v845 = vsel %vm558, %v758, 0.0
      %846 = vadd.xlane.f32.xlu0 %v845
      %v847 = vpop.xlane.xlu0 %846
      %v848 = vsel %vm558, %v759, 0.0
      %849 = vadd.xlane.f32.xlu0 %v848
      %v850 = vpop.xlane.xlu0 %849
      %v851 = vsel %vm558, %v760, 0.0
      %852 = vadd.xlane.f32.xlu0 %v851
      %v853 = vpop.xlane.xlu0 %852
      %v854 = vsel %vm558, %v761, 0.0
      %855 = vadd.xlane.f32.xlu0 %v854
      %v856 = vpop.xlane.xlu0 %855
      %v857 = vsel %vm558, %v762, 0.0
      %858 = vadd.xlane.f32.xlu0 %v857
      %v859 = vpop.xlane.xlu0 %858
      %v860 = vsel %vm558, %v763, 0.0
      %861 = vadd.xlane.f32.xlu0 %v860
      %v862 = vpop.xlane.xlu0 %861
      %v863 = vmul.f32 %v766, %v664
      %v864 = vmul.f32 %v769, %v664
      %v865 = vmul.f32 %v772, %v664
      %v866 = vmul.f32 %v775, %v664
      %v867 = vmul.f32 %v778, %v664
      %v868 = vmul.f32 %v781, %v664
      %v869 = vmul.f32 %v784, %v664
      %v870 = vmul.f32 %v787, %v664
      %v871 = vmul.f32 %v790, %v664
      %v872 = vmul.f32 %v793, %v664
      %v873 = vmul.f32 %v796, %v664
      %v874 = vmul.f32 %v799, %v664
      %v875 = vmul.f32 %v802, %v664
      %v876 = vmul.f32 %v805, %v664
      %v877 = vmul.f32 %v808, %v664
      %v878 = vmul.f32 %v811, %v664
      %v879 = vmul.f32 %v814, %v664
      %v880 = vmul.f32 %v817, %v664
      %v881 = vmul.f32 %v820, %v664
      %v882 = vmul.f32 %v823, %v664
      %v883 = vmul.f32 %v826, %v664
      %v884 = vmul.f32 %v829, %v664
      %v885 = vmul.f32 %v832, %v664
      %v886 = vmul.f32 %v835, %v664
      %v887 = vmul.f32 %v838, %v664
      %v888 = vmul.f32 %v841, %v664
      %v889 = vmul.f32 %v844, %v664
      %v890 = vmul.f32 %v847, %v664
      %v891 = vmul.f32 %v850, %v664
      %v892 = vmul.f32 %v853, %v664
      %v893 = vmul.f32 %v856, %v664
      %v894 = vmul.f32 %v859, %v664
      %v895 = vmul.f32 %v862, %v664
      %v896 = vadd.f32 %v863, 1e-05
      %v897 = vadd.f32 %v864, 1e-05
      %v898 = vadd.f32 %v865, 1e-05
      %v899 = vadd.f32 %v866, 1e-05
      %v900 = vadd.f32 %v867, 1e-05
      %v901 = vadd.f32 %v868, 1e-05
      %v902 = vadd.f32 %v869, 1e-05
      %v903 = vadd.f32 %v870, 1e-05
      %v904 = vadd.f32 %v871, 1e-05
      %v905 = vadd.f32 %v872, 1e-05
      %v906 = vadd.f32 %v873, 1e-05
      %v907 = vadd.f32 %v874, 1e-05
      %v908 = vadd.f32 %v875, 1e-05
      %v909 = vadd.f32 %v876, 1e-05
      %v910 = vadd.f32 %v877, 1e-05
      %v911 = vadd.f32 %v878, 1e-05
      %v912 = vadd.f32 %v879, 1e-05
      %v913 = vadd.f32 %v880, 1e-05
      %v914 = vadd.f32 %v881, 1e-05
      %v915 = vadd.f32 %v882, 1e-05
      %v916 = vadd.f32 %v883, 1e-05
      %v917 = vadd.f32 %v884, 1e-05
      %v918 = vadd.f32 %v885, 1e-05
      %v919 = vadd.f32 %v886, 1e-05
      %v920 = vadd.f32 %v887, 1e-05
      %v921 = vadd.f32 %v888, 1e-05
      %v922 = vadd.f32 %v889, 1e-05
      %v923 = vadd.f32 %v890, 1e-05
      %v924 = vadd.f32 %v891, 1e-05
      %v925 = vadd.f32 %v892, 1e-05
      %v926 = vadd.f32 %v893, 1e-05
      %v927 = vadd.f32 %v894, 1e-05
      %v928 = vadd.f32 %v895, 1e-05
      %v929 = vrsqrt.pop %v896
      %v930 = vmul.f32 %v929, %v896
      %v931 = vmul.f32 %v930, %v929
      %v932 = vmul.f32 0.5, %v931
      %v933 = vsub.f32 1.5, %v932
      %v934 = vmul.f32 %v929, %v933
      %vm935 = vweird.f32 %v896
      %vm936 = vweird.f32 %v929
      %vm937 = vmor %vm935, %vm936
      %v938 = vsel %vm937, %v929, %v934
      %v939 = vrsqrt.pop %v897
      %v940 = vmul.f32 %v939, %v897
      %v941 = vmul.f32 %v940, %v939
      %v942 = vmul.f32 0.5, %v941
      %v943 = vsub.f32 1.5, %v942
      %v944 = vmul.f32 %v939, %v943
      %vm945 = vweird.f32 %v897
      %vm946 = vweird.f32 %v939
      %vm947 = vmor %vm945, %vm946
      %v948 = vsel %vm947, %v939, %v944
      %v949 = vrsqrt.pop %v898
      %v950 = vmul.f32 %v949, %v898
      %v951 = vmul.f32 %v950, %v949
      %v952 = vmul.f32 0.5, %v951
      %v953 = vsub.f32 1.5, %v952
      %v954 = vmul.f32 %v949, %v953
      %vm955 = vweird.f32 %v898
      %vm956 = vweird.f32 %v949
      %vm957 = vmor %vm955, %vm956
      %v958 = vsel %vm957, %v949, %v954
      %v959 = vrsqrt.pop %v899
      %v960 = vmul.f32 %v959, %v899
      %v961 = vmul.f32 %v960, %v959
      %v962 = vmul.f32 0.5, %v961
      %v963 = vsub.f32 1.5, %v962
      %v964 = vmul.f32 %v959, %v963
      %vm965 = vweird.f32 %v899
      %vm966 = vweird.f32 %v959
      %vm967 = vmor %vm965, %vm966
      %v968 = vsel %vm967, %v959, %v964
      %v969 = vrsqrt.pop %v900
      %v970 = vmul.f32 %v969, %v900
      %v971 = vmul.f32 %v970, %v969
      %v972 = vmul.f32 0.5, %v971
      %v973 = vsub.f32 1.5, %v972
      %v974 = vmul.f32 %v969, %v973
      %vm975 = vweird.f32 %v900
      %vm976 = vweird.f32 %v969
      %vm977 = vmor %vm975, %vm976
      %v978 = vsel %vm977, %v969, %v974
      %v979 = vrsqrt.pop %v901
      %v980 = vmul.f32 %v979, %v901
      %v981 = vmul.f32 %v980, %v979
      %v982 = vmul.f32 0.5, %v981
      %v983 = vsub.f32 1.5, %v982
      %v984 = vmul.f32 %v979, %v983
      %vm985 = vweird.f32 %v901
      %vm986 = vweird.f32 %v979
      %vm987 = vmor %vm985, %vm986
      %v988 = vsel %vm987, %v979, %v984
      %v989 = vrsqrt.pop %v902
      %v990 = vmul.f32 %v989, %v902
      %v991 = vmul.f32 %v990, %v989
      %v992 = vmul.f32 0.5, %v991
      %v993 = vsub.f32 1.5, %v992
      %v994 = vmul.f32 %v989, %v993
      %vm995 = vweird.f32 %v902
      %vm996 = vweird.f32 %v989
      %vm997 = vmor %vm995, %vm996
      %v998 = vsel %vm997, %v989, %v994
      %v999 = vrsqrt.pop %v903
      %v1000 = vmul.f32 %v999, %v903
      %v1001 = vmul.f32 %v1000, %v999
      %v1002 = vmul.f32 0.5, %v1001
      %v1003 = vsub.f32 1.5, %v1002
      %v1004 = vmul.f32 %v999, %v1003
      %vm1005 = vweird.f32 %v903
      %vm1006 = vweird.f32 %v999
      %vm1007 = vmor %vm1005, %vm1006
      %v1008 = vsel %vm1007, %v999, %v1004
      %v1009 = vrsqrt.pop %v904
      %v1010 = vmul.f32 %v1009, %v904
      %v1011 = vmul.f32 %v1010, %v1009
      %v1012 = vmul.f32 0.5, %v1011
      %v1013 = vsub.f32 1.5, %v1012
      %v1014 = vmul.f32 %v1009, %v1013
      %vm1015 = vweird.f32 %v904
      %vm1016 = vweird.f32 %v1009
      %vm1017 = vmor %vm1015, %vm1016
      %v1018 = vsel %vm1017, %v1009, %v1014
      %v1019 = vrsqrt.pop %v905
      %v1020 = vmul.f32 %v1019, %v905
      %v1021 = vmul.f32 %v1020, %v1019
      %v1022 = vmul.f32 0.5, %v1021
      %v1023 = vsub.f32 1.5, %v1022
      %v1024 = vmul.f32 %v1019, %v1023
      %vm1025 = vweird.f32 %v905
      %vm1026 = vweird.f32 %v1019
      %vm1027 = vmor %vm1025, %vm1026
      %v1028 = vsel %vm1027, %v1019, %v1024
      %v1029 = vrsqrt.pop %v906
      %v1030 = vmul.f32 %v1029, %v906
      %v1031 = vmul.f32 %v1030, %v1029
      %v1032 = vmul.f32 0.5, %v1031
      %v1033 = vsub.f32 1.5, %v1032
      %v1034 = vmul.f32 %v1029, %v1033
      %vm1035 = vweird.f32 %v906
      %vm1036 = vweird.f32 %v1029
      %vm1037 = vmor %vm1035, %vm1036
      %v1038 = vsel %vm1037, %v1029, %v1034
      %v1039 = vrsqrt.pop %v907
      %v1040 = vmul.f32 %v1039, %v907
      %v1041 = vmul.f32 %v1040, %v1039
      %v1042 = vmul.f32 0.5, %v1041
      %v1043 = vsub.f32 1.5, %v1042
      %v1044 = vmul.f32 %v1039, %v1043
      %vm1045 = vweird.f32 %v907
      %vm1046 = vweird.f32 %v1039
      %vm1047 = vmor %vm1045, %vm1046
      %v1048 = vsel %vm1047, %v1039, %v1044
      %v1049 = vrsqrt.pop %v908
      %v1050 = vmul.f32 %v1049, %v908
      %v1051 = vmul.f32 %v1050, %v1049
      %v1052 = vmul.f32 0.5, %v1051
      %v1053 = vsub.f32 1.5, %v1052
      %v1054 = vmul.f32 %v1049, %v1053
      %vm1055 = vweird.f32 %v908
      %vm1056 = vweird.f32 %v1049
      %vm1057 = vmor %vm1055, %vm1056
      %v1058 = vsel %vm1057, %v1049, %v1054
      %v1059 = vrsqrt.pop %v909
      %v1060 = vmul.f32 %v1059, %v909
      %v1061 = vmul.f32 %v1060, %v1059
      %v1062 = vmul.f32 0.5, %v1061
      %v1063 = vsub.f32 1.5, %v1062
      %v1064 = vmul.f32 %v1059, %v1063
      %vm1065 = vweird.f32 %v909
      %vm1066 = vweird.f32 %v1059
      %vm1067 = vmor %vm1065, %vm1066
      %v1068 = vsel %vm1067, %v1059, %v1064
      %v1069 = vrsqrt.pop %v910
      %v1070 = vmul.f32 %v1069, %v910
      %v1071 = vmul.f32 %v1070, %v1069
      %v1072 = vmul.f32 0.5, %v1071
      %v1073 = vsub.f32 1.5, %v1072
      %v1074 = vmul.f32 %v1069, %v1073
      %vm1075 = vweird.f32 %v910
      %vm1076 = vweird.f32 %v1069
      %vm1077 = vmor %vm1075, %vm1076
      %v1078 = vsel %vm1077, %v1069, %v1074
      %v1079 = vrsqrt.pop %v911
      %v1080 = vmul.f32 %v1079, %v911
      %v1081 = vmul.f32 %v1080, %v1079
      %v1082 = vmul.f32 0.5, %v1081
      %v1083 = vsub.f32 1.5, %v1082
      %v1084 = vmul.f32 %v1079, %v1083
      %vm1085 = vweird.f32 %v911
      %vm1086 = vweird.f32 %v1079
      %vm1087 = vmor %vm1085, %vm1086
      %v1088 = vsel %vm1087, %v1079, %v1084
      %v1089 = vrsqrt.pop %v912
      %v1090 = vmul.f32 %v1089, %v912
      %v1091 = vmul.f32 %v1090, %v1089
      %v1092 = vmul.f32 0.5, %v1091
      %v1093 = vsub.f32 1.5, %v1092
      %v1094 = vmul.f32 %v1089, %v1093
      %vm1095 = vweird.f32 %v912
      %vm1096 = vweird.f32 %v1089
      %vm1097 = vmor %vm1095, %vm1096
      %v1098 = vsel %vm1097, %v1089, %v1094
      %v1099 = vrsqrt.pop %v913
      %v1100 = vmul.f32 %v1099, %v913
      %v1101 = vmul.f32 %v1100, %v1099
      %v1102 = vmul.f32 0.5, %v1101
      %v1103 = vsub.f32 1.5, %v1102
      %v1104 = vmul.f32 %v1099, %v1103
      %vm1105 = vweird.f32 %v913
      %vm1106 = vweird.f32 %v1099
      %vm1107 = vmor %vm1105, %vm1106
      %v1108 = vsel %vm1107, %v1099, %v1104
      %v1109 = vrsqrt.pop %v914
      %v1110 = vmul.f32 %v1109, %v914
      %v1111 = vmul.f32 %v1110, %v1109
      %v1112 = vmul.f32 0.5, %v1111
      %v1113 = vsub.f32 1.5, %v1112
      %v1114 = vmul.f32 %v1109, %v1113
      %vm1115 = vweird.f32 %v914
      %vm1116 = vweird.f32 %v1109
      %vm1117 = vmor %vm1115, %vm1116
      %v1118 = vsel %vm1117, %v1109, %v1114
      %v1119 = vrsqrt.pop %v915
      %v1120 = vmul.f32 %v1119, %v915
      %v1121 = vmul.f32 %v1120, %v1119
      %v1122 = vmul.f32 0.5, %v1121
      %v1123 = vsub.f32 1.5, %v1122
      %v1124 = vmul.f32 %v1119, %v1123
      %vm1125 = vweird.f32 %v915
      %vm1126 = vweird.f32 %v1119
      %vm1127 = vmor %vm1125, %vm1126
      %v1128 = vsel %vm1127, %v1119, %v1124
      %v1129 = vrsqrt.pop %v916
      %v1130 = vmul.f32 %v1129, %v916
      %v1131 = vmul.f32 %v1130, %v1129
      %v1132 = vmul.f32 0.5, %v1131
      %v1133 = vsub.f32 1.5, %v1132
      %v1134 = vmul.f32 %v1129, %v1133
      %vm1135 = vweird.f32 %v916
      %vm1136 = vweird.f32 %v1129
      %vm1137 = vmor %vm1135, %vm1136
      %v1138 = vsel %vm1137, %v1129, %v1134
      %v1139 = vrsqrt.pop %v917
      %v1140 = vmul.f32 %v1139, %v917
      %v1141 = vmul.f32 %v1140, %v1139
      %v1142 = vmul.f32 0.5, %v1141
      %v1143 = vsub.f32 1.5, %v1142
      %v1144 = vmul.f32 %v1139, %v1143
      %vm1145 = vweird.f32 %v917
      %vm1146 = vweird.f32 %v1139
      %vm1147 = vmor %vm1145, %vm1146
      %v1148 = vsel %vm1147, %v1139, %v1144
      %v1149 = vrsqrt.pop %v918
      %v1150 = vmul.f32 %v1149, %v918
      %v1151 = vmul.f32 %v1150, %v1149
      %v1152 = vmul.f32 0.5, %v1151
      %v1153 = vsub.f32 1.5, %v1152
      %v1154 = vmul.f32 %v1149, %v1153
      %vm1155 = vweird.f32 %v918
      %vm1156 = vweird.f32 %v1149
      %vm1157 = vmor %vm1155, %vm1156
      %v1158 = vsel %vm1157, %v1149, %v1154
      %v1159 = vrsqrt.pop %v919
      %v1160 = vmul.f32 %v1159, %v919
      %v1161 = vmul.f32 %v1160, %v1159
      %v1162 = vmul.f32 0.5, %v1161
      %v1163 = vsub.f32 1.5, %v1162
      %v1164 = vmul.f32 %v1159, %v1163
      %vm1165 = vweird.f32 %v919
      %vm1166 = vweird.f32 %v1159
      %vm1167 = vmor %vm1165, %vm1166
      %v1168 = vsel %vm1167, %v1159, %v1164
      %v1169 = vrsqrt.pop %v920
      %v1170 = vmul.f32 %v1169, %v920
      %v1171 = vmul.f32 %v1170, %v1169
      %v1172 = vmul.f32 0.5, %v1171
      %v1173 = vsub.f32 1.5, %v1172
      %v1174 = vmul.f32 %v1169, %v1173
      %vm1175 = vweird.f32 %v920
      %vm1176 = vweird.f32 %v1169
      %vm1177 = vmor %vm1175, %vm1176
      %v1178 = vsel %vm1177, %v1169, %v1174
      %v1179 = vrsqrt.pop %v921
      %v1180 = vmul.f32 %v1179, %v921
      %v1181 = vmul.f32 %v1180, %v1179
      %v1182 = vmul.f32 0.5, %v1181
      %v1183 = vsub.f32 1.5, %v1182
      %v1184 = vmul.f32 %v1179, %v1183
      %vm1185 = vweird.f32 %v921
      %vm1186 = vweird.f32 %v1179
      %vm1187 = vmor %vm1185, %vm1186
      %v1188 = vsel %vm1187, %v1179, %v1184
      %v1189 = vrsqrt.pop %v922
      %v1190 = vmul.f32 %v1189, %v922
      %v1191 = vmul.f32 %v1190, %v1189
      %v1192 = vmul.f32 0.5, %v1191
      %v1193 = vsub.f32 1.5, %v1192
      %v1194 = vmul.f32 %v1189, %v1193
      %vm1195 = vweird.f32 %v922
      %vm1196 = vweird.f32 %v1189
      %vm1197 = vmor %vm1195, %vm1196
      %v1198 = vsel %vm1197, %v1189, %v1194
      %v1199 = vrsqrt.pop %v923
      %v1200 = vmul.f32 %v1199, %v923
      %v1201 = vmul.f32 %v1200, %v1199
      %v1202 = vmul.f32 0.5, %v1201
      %v1203 = vsub.f32 1.5, %v1202
      %v1204 = vmul.f32 %v1199, %v1203
      %vm1205 = vweird.f32 %v923
      %vm1206 = vweird.f32 %v1199
      %vm1207 = vmor %vm1205, %vm1206
      %v1208 = vsel %vm1207, %v1199, %v1204
      %v1209 = vrsqrt.pop %v924
      %v1210 = vmul.f32 %v1209, %v924
      %v1211 = vmul.f32 %v1210, %v1209
      %v1212 = vmul.f32 0.5, %v1211
      %v1213 = vsub.f32 1.5, %v1212
      %v1214 = vmul.f32 %v1209, %v1213
      %vm1215 = vweird.f32 %v924
      %vm1216 = vweird.f32 %v1209
      %vm1217 = vmor %vm1215, %vm1216
      %v1218 = vsel %vm1217, %v1209, %v1214
      %v1219 = vrsqrt.pop %v925
      %v1220 = vmul.f32 %v1219, %v925
      %v1221 = vmul.f32 %v1220, %v1219
      %v1222 = vmul.f32 0.5, %v1221
      %v1223 = vsub.f32 1.5, %v1222
      %v1224 = vmul.f32 %v1219, %v1223
      %vm1225 = vweird.f32 %v925
      %vm1226 = vweird.f32 %v1219
      %vm1227 = vmor %vm1225, %vm1226
      %v1228 = vsel %vm1227, %v1219, %v1224
      %v1229 = vrsqrt.pop %v926
      %v1230 = vmul.f32 %v1229, %v926
      %v1231 = vmul.f32 %v1230, %v1229
      %v1232 = vmul.f32 0.5, %v1231
      %v1233 = vsub.f32 1.5, %v1232
      %v1234 = vmul.f32 %v1229, %v1233
      %vm1235 = vweird.f32 %v926
      %vm1236 = vweird.f32 %v1229
      %vm1237 = vmor %vm1235, %vm1236
      %v1238 = vsel %vm1237, %v1229, %v1234
      %v1239 = vrsqrt.pop %v927
      %v1240 = vmul.f32 %v1239, %v927
      %v1241 = vmul.f32 %v1240, %v1239
      %v1242 = vmul.f32 0.5, %v1241
      %v1243 = vsub.f32 1.5, %v1242
      %v1244 = vmul.f32 %v1239, %v1243
      %vm1245 = vweird.f32 %v927
      %vm1246 = vweird.f32 %v1239
      %vm1247 = vmor %vm1245, %vm1246
      %v1248 = vsel %vm1247, %v1239, %v1244
      %v1249 = vrsqrt.pop %v928
      %v1250 = vmul.f32 %v1249, %v928
      %v1251 = vmul.f32 %v1250, %v1249
      %v1252 = vmul.f32 0.5, %v1251
      %v1253 = vsub.f32 1.5, %v1252
      %v1254 = vmul.f32 %v1249, %v1253
      %vm1255 = vweird.f32 %v928
      %vm1256 = vweird.f32 %v1249
      %vm1257 = vmor %vm1255, %vm1256
      %v1258 = vsel %vm1257, %v1249, %v1254
      %v1259 = vmul.f32 %v698, %v938
      %v1260 = vmul.f32 %v699, %v948
      %v1261 = vmul.f32 %v700, %v958
      %v1262 = vmul.f32 %v701, %v968
      %v1263 = vmul.f32 %v702, %v978
      %v1264 = vmul.f32 %v703, %v988
      %v1265 = vmul.f32 %v704, %v998
      %v1266 = vmul.f32 %v705, %v1008
      %v1267 = vmul.f32 %v706, %v1018
      %v1268 = vmul.f32 %v707, %v1028
      %v1269 = vmul.f32 %v708, %v1038
      %v1270 = vmul.f32 %v709, %v1048
      %v1271 = vmul.f32 %v710, %v1058
      %v1272 = vmul.f32 %v711, %v1068
      %v1273 = vmul.f32 %v712, %v1078
      %v1274 = vmul.f32 %v713, %v1088
      %v1275 = vmul.f32 %v714, %v1098
      %v1276 = vmul.f32 %v715, %v1108
      %v1277 = vmul.f32 %v716, %v1118
      %v1278 = vmul.f32 %v717, %v1128
      %v1279 = vmul.f32 %v718, %v1138
      %v1280 = vmul.f32 %v719, %v1148
      %v1281 = vmul.f32 %v720, %v1158
      %v1282 = vmul.f32 %v721, %v1168
      %v1283 = vmul.f32 %v722, %v1178
      %v1284 = vmul.f32 %v723, %v1188
      %v1285 = vmul.f32 %v724, %v1198
      %v1286 = vmul.f32 %v725, %v1208
      %v1287 = vmul.f32 %v726, %v1218
      %v1288 = vmul.f32 %v727, %v1228
      %v1289 = vmul.f32 %v728, %v1238
      %v1290 = vmul.f32 %v729, %v1248
      %v1291 = vmul.f32 %v730, %v1258
      %v1293 = vperm.slane %v556, 0
      %v1295 = vmul.f32 %v1259, %v1293
      %v1296 = vmul.f32 %v1260, %v1293
      %v1297 = vmul.f32 %v1261, %v1293
      %v1298 = vmul.f32 %v1262, %v1293
      %v1299 = vmul.f32 %v1263, %v1293
      %v1300 = vmul.f32 %v1264, %v1293
      %v1301 = vmul.f32 %v1265, %v1293
      %v1302 = vmul.f32 %v1266, %v1293
      %v1303 = vmul.f32 %v1267, %v1293
      %v1304 = vmul.f32 %v1268, %v1293
      %v1305 = vmul.f32 %v1269, %v1293
      %v1306 = vmul.f32 %v1270, %v1293
      %v1307 = vmul.f32 %v1271, %v1293
      %v1308 = vmul.f32 %v1272, %v1293
      %v1309 = vmul.f32 %v1273, %v1293
      %v1310 = vmul.f32 %v1274, %v1293
      %v1311 = vmul.f32 %v1275, %v1293
      %v1312 = vmul.f32 %v1276, %v1293
      %v1313 = vmul.f32 %v1277, %v1293
      %v1314 = vmul.f32 %v1278, %v1293
      %v1315 = vmul.f32 %v1279, %v1293
      %v1316 = vmul.f32 %v1280, %v1293
      %v1317 = vmul.f32 %v1281, %v1293
      %v1318 = vmul.f32 %v1282, %v1293
      %v1319 = vmul.f32 %v1283, %v1293
      %v1320 = vmul.f32 %v1284, %v1293
      %v1321 = vmul.f32 %v1285, %v1293
      %v1322 = vmul.f32 %v1286, %v1293
      %v1323 = vmul.f32 %v1287, %v1293
      %v1324 = vmul.f32 %v1288, %v1293
      %v1325 = vmul.f32 %v1289, %v1293
      %v1326 = vmul.f32 %v1290, %v1293
      %v1327 = vmul.f32 %v1291, %v1293
      %v1329 = vperm.slane %v557, 0
      %v1331 = vadd.f32 %v1295, %v1329
      %v1332 = vadd.f32 %v1296, %v1329
      %v1333 = vadd.f32 %v1297, %v1329
      %v1334 = vadd.f32 %v1298, %v1329
      %v1335 = vadd.f32 %v1299, %v1329
      %v1336 = vadd.f32 %v1300, %v1329
      %v1337 = vadd.f32 %v1301, %v1329
      %v1338 = vadd.f32 %v1302, %v1329
      %v1339 = vadd.f32 %v1303, %v1329
      %v1340 = vadd.f32 %v1304, %v1329
      %v1341 = vadd.f32 %v1305, %v1329
      %v1342 = vadd.f32 %v1306, %v1329
      %v1343 = vadd.f32 %v1307, %v1329
      %v1344 = vadd.f32 %v1308, %v1329
      %v1345 = vadd.f32 %v1309, %v1329
      %v1346 = vadd.f32 %v1310, %v1329
      %v1347 = vadd.f32 %v1311, %v1329
      %v1348 = vadd.f32 %v1312, %v1329
      %v1349 = vadd.f32 %v1313, %v1329
      %v1350 = vadd.f32 %v1314, %v1329
      %v1351 = vadd.f32 %v1315, %v1329
      %v1352 = vadd.f32 %v1316, %v1329
      %v1353 = vadd.f32 %v1317, %v1329
      %v1354 = vadd.f32 %v1318, %v1329
      %v1355 = vadd.f32 %v1319, %v1329
      %v1356 = vadd.f32 %v1320, %v1329
      %v1357 = vadd.f32 %v1321, %v1329
      %v1358 = vadd.f32 %v1322, %v1329
      %v1359 = vadd.f32 %v1323, %v1329
      %v1360 = vadd.f32 %v1324, %v1329
      %v1361 = vadd.f32 %v1325, %v1329
      %v1362 = vadd.f32 %v1326, %v1329
      %v1363 = vadd.f32 %v1327, %v1329
      %v1364 = vpack.c.bf16 %v1332, %v1331
      %v1365 = vpack.c.bf16 %v1334, %v1333
      %v1366 = vpack.c.bf16 %v1336, %v1335
      %v1367 = vpack.c.bf16 %v1338, %v1337
      %v1368 = vpack.c.bf16 %v1340, %v1339
      %v1369 = vpack.c.bf16 %v1342, %v1341
      %v1370 = vpack.c.bf16 %v1344, %v1343
      %v1371 = vpack.c.bf16 %v1346, %v1345
      %v1372 = vpack.c.bf16 %v1348, %v1347
      %v1373 = vpack.c.bf16 %v1350, %v1349
      %v1374 = vpack.c.bf16 %v1352, %v1351
      %v1375 = vpack.c.bf16 %v1354, %v1353
      %v1376 = vpack.c.bf16 %v1356, %v1355
      %v1377 = vpack.c.bf16 %v1358, %v1357
      %v1378 = vpack.c.bf16 %v1360, %v1359
      %v1379 = vpack.c.bf16 %v1362, %v1361
      %v1380 = vpack.c.bf16 %v1363, %v1363
      %v1381 = vld [vmem:[%s4] sm:$0xf]
      %v1382 = vld [vmem:[%s4 + $0x4] sm:$0xf]
      %v1383 = vld [vmem:[%s4 + $0x8] sm:$0xf]
      %v1384 = vld [vmem:[%s4 + $0xc] sm:$0xf]
      %v1385 = vld [vmem:[%s4 + $0x10] sm:$0xf]
      %v1386 = vld [vmem:[%s4 + $0x14] sm:$0xf]
      %v1387 = vld [vmem:[%s4 + $0x18] sm:$0xf]
      %v1388 = vld [vmem:[%s4 + $0x1c] sm:$0xf]
      %v1397 = vunpack.c.l.b16 %v1381
      %v1398 = vunpack.c.l.b16 %v1382
      %v1399 = vunpack.c.l.b16 %v1383
      %v1400 = vunpack.c.l.b16 %v1384
      %v1401 = vunpack.c.l.b16 %v1385
      %v1402 = vunpack.c.l.b16 %v1386
      %v1403 = vunpack.c.l.b16 %v1387
      %v1404 = vunpack.c.l.b16 %v1388
      %v1405 = vpack.c.b16 %v1398, %v1397
      %v1406 = vpack.c.b16 %v1400, %v1399
      %v1407 = vpack.c.b16 %v1402, %v1401
      %v1408 = vpack.c.b16 %v1404, %v1403
      %v1414 = vsel %vm558, %v1364, 0
      %v1417 = vsel %vm558, %v1365, 0
      %v1420 = vsel %vm558, %v1366, 0
      %v1423 = vsel %vm558, %v1367, 0
      %v1426 = vsel %vm558, %v1368, 0
      %v1429 = vsel %vm558, %v1369, 0
      %v1432 = vsel %vm558, %v1370, 0
      %v1435 = vsel %vm558, %v1371, 0
      %v1438 = vsel %vm558, %v1372, 0
      %v1441 = vsel %vm558, %v1373, 0
      %v1444 = vsel %vm558, %v1374, 0
      %v1447 = vsel %vm558, %v1375, 0
      %v1450 = vsel %vm558, %v1376, 0
      %v1453 = vsel %vm558, %v1377, 0
      %v1456 = vsel %vm558, %v1378, 0
      %v1459 = vsel %vm558, %v1379, 0
      %v1462 = vsel %vm558, %v1380, 0
      %1464 = vmatpush.bf16.msra.mxu0 0
      %1465 = vmatpush.bf16.msra.mxu0 0
      %1466 = vmatpush.bf16.msra.mxu0 0
      %1467 = vmatpush.bf16.msra.mxu0 0
      %1468 = vmatpush.bf16.msra.mxu0 %v1408
      %1469 = vmatpush.bf16.msra.mxu0 %v1407
      %1470 = vmatpush.bf16.msra.mxu0 %v1406
      %1471 = vmatpush.bf16.msra.mxu0 %v1405
      %1472 = vmatmul.bf16.gmra.mxu0 %v1414
      %v1473 = vpop.f32.mrf.mxu0
      %v1474 = vadd.f32 0.0, %v1473
      %v1475 = vpop.f32.mrf.mxu0
      %v1476 = vadd.f32 0.0, %v1475
      %1477 = vmatmul.bf16.gmra.mxu0 %v1417
      %v1478 = vpop.f32.mrf.mxu0
      %v1479 = vadd.f32 0.0, %v1478
      %v1480 = vpop.f32.mrf.mxu0
      %v1481 = vadd.f32 0.0, %v1480
      %1482 = vmatmul.bf16.gmra.mxu0 %v1420
      %v1483 = vpop.f32.mrf.mxu0
      %v1484 = vadd.f32 0.0, %v1483
      %v1485 = vpop.f32.mrf.mxu0
      %v1486 = vadd.f32 0.0, %v1485
      %1487 = vmatmul.bf16.gmra.mxu0 %v1423
      %v1488 = vpop.f32.mrf.mxu0
      %v1489 = vadd.f32 0.0, %v1488
      %v1490 = vpop.f32.mrf.mxu0
      %v1491 = vadd.f32 0.0, %v1490
      %1492 = vmatmul.bf16.gmra.mxu0 %v1426
      %v1493 = vpop.f32.mrf.mxu0
      %v1494 = vadd.f32 0.0, %v1493
      %v1495 = vpop.f32.mrf.mxu0
      %v1496 = vadd.f32 0.0, %v1495
      %1497 = vmatmul.bf16.gmra.mxu0 %v1429
      %v1498 = vpop.f32.mrf.mxu0
      %v1499 = vadd.f32 0.0, %v1498
      %v1500 = vpop.f32.mrf.mxu0
      %v1501 = vadd.f32 0.0, %v1500
      %1502 = vmatmul.bf16.gmra.mxu0 %v1432
      %v1503 = vpop.f32.mrf.mxu0
      %v1504 = vadd.f32 0.0, %v1503
      %v1505 = vpop.f32.mrf.mxu0
      %v1506 = vadd.f32 0.0, %v1505
      %1507 = vmatmul.bf16.gmra.mxu0 %v1435
      %v1508 = vpop.f32.mrf.mxu0
      %v1509 = vadd.f32 0.0, %v1508
      %v1510 = vpop.f32.mrf.mxu0
      %v1511 = vadd.f32 0.0, %v1510
      %1512 = vmatmul.bf16.gmra.mxu0 %v1438
      %v1513 = vpop.f32.mrf.mxu0
      %v1514 = vadd.f32 0.0, %v1513
      %v1515 = vpop.f32.mrf.mxu0
      %v1516 = vadd.f32 0.0, %v1515
      %1517 = vmatmul.bf16.gmra.mxu0 %v1441
      %v1518 = vpop.f32.mrf.mxu0
      %v1519 = vadd.f32 0.0, %v1518
      %v1520 = vpop.f32.mrf.mxu0
      %v1521 = vadd.f32 0.0, %v1520
      %1522 = vmatmul.bf16.gmra.mxu0 %v1444
      %v1523 = vpop.f32.mrf.mxu0
      %v1524 = vadd.f32 0.0, %v1523
      %v1525 = vpop.f32.mrf.mxu0
      %v1526 = vadd.f32 0.0, %v1525
      %1527 = vmatmul.bf16.gmra.mxu0 %v1447
      %v1528 = vpop.f32.mrf.mxu0
      %v1529 = vadd.f32 0.0, %v1528
      %v1530 = vpop.f32.mrf.mxu0
      %v1531 = vadd.f32 0.0, %v1530
      %1532 = vmatmul.bf16.gmra.mxu0 %v1450
      %v1533 = vpop.f32.mrf.mxu0
      %v1534 = vadd.f32 0.0, %v1533
      %v1535 = vpop.f32.mrf.mxu0
      %v1536 = vadd.f32 0.0, %v1535
      %1537 = vmatmul.bf16.gmra.mxu0 %v1453
      %v1538 = vpop.f32.mrf.mxu0
      %v1539 = vadd.f32 0.0, %v1538
      %v1540 = vpop.f32.mrf.mxu0
      %v1541 = vadd.f32 0.0, %v1540
      %1542 = vmatmul.bf16.gmra.mxu0 %v1456
      %v1543 = vpop.f32.mrf.mxu0
      %v1544 = vadd.f32 0.0, %v1543
      %v1545 = vpop.f32.mrf.mxu0
      %v1546 = vadd.f32 0.0, %v1545
      %1547 = vmatmul.bf16.gmra.mxu0 %v1459
      %v1548 = vpop.f32.mrf.mxu0
      %v1549 = vadd.f32 0.0, %v1548
      %v1550 = vpop.f32.mrf.mxu0
      %v1551 = vadd.f32 0.0, %v1550
      %1552 = vmatmul.bf16.gmra.mxu0 %v1462
      %v1553 = vpop.f32.mrf.mxu0
      %v1554 = vadd.f32 0.0, %v1553
      %v1555 = vpop.f32.mrf.mxu0
      %1556 = vdwg.mxu0
      %v1557 = vld [vmem:[%s5] sm:$0xf]
      %v1558 = vld [vmem:[%s5 + $0x4] sm:$0xf]
      %v1559 = vld [vmem:[%s5 + $0x8] sm:$0xf]
      %v1560 = vld [vmem:[%s5 + $0xc] sm:$0xf]
      %v1561 = vld [vmem:[%s5 + $0x10] sm:$0xf]
      %v1562 = vld [vmem:[%s5 + $0x14] sm:$0xf]
      %v1563 = vld [vmem:[%s5 + $0x18] sm:$0xf]
      %v1564 = vld [vmem:[%s5 + $0x1c] sm:$0xf]
      %v1573 = vunpack.c.l.b16 %v1557
      %v1574 = vunpack.c.l.b16 %v1558
      %v1575 = vunpack.c.l.b16 %v1559
      %v1576 = vunpack.c.l.b16 %v1560
      %v1577 = vunpack.c.l.b16 %v1561
      %v1578 = vunpack.c.l.b16 %v1562
      %v1579 = vunpack.c.l.b16 %v1563
      %v1580 = vunpack.c.l.b16 %v1564
      %v1581 = vpack.c.b16 %v1574, %v1573
      %v1582 = vpack.c.b16 %v1576, %v1575
      %v1583 = vpack.c.b16 %v1578, %v1577
      %v1584 = vpack.c.b16 %v1580, %v1579
      %1589 = vmatpush.bf16.msra.mxu0 0
      %1590 = vmatpush.bf16.msra.mxu0 0
      %1591 = vmatpush.bf16.msra.mxu0 0
      %1592 = vmatpush.bf16.msra.mxu0 0
      %1593 = vmatpush.bf16.msra.mxu0 %v1584
      %1594 = vmatpush.bf16.msra.mxu0 %v1583
      %1595 = vmatpush.bf16.msra.mxu0 %v1582
      %1596 = vmatpush.bf16.msra.mxu0 %v1581
      %1597 = vmatmul.bf16.gmra.mxu0 %v1414
      %v1598 = vpop.f32.mrf.mxu0
      %v1599 = vadd.f32 0.0, %v1598
      %v1600 = vpop.f32.mrf.mxu0
      %v1601 = vadd.f32 0.0, %v1600
      %1602 = vmatmul.bf16.gmra.mxu0 %v1417
      %v1603 = vpop.f32.mrf.mxu0
      %v1604 = vadd.f32 0.0, %v1603
      %v1605 = vpop.f32.mrf.mxu0
      %v1606 = vadd.f32 0.0, %v1605
      %1607 = vmatmul.bf16.gmra.mxu0 %v1420
      %v1608 = vpop.f32.mrf.mxu0
      %v1609 = vadd.f32 0.0, %v1608
      %v1610 = vpop.f32.mrf.mxu0
      %v1611 = vadd.f32 0.0, %v1610
      %1612 = vmatmul.bf16.gmra.mxu0 %v1423
      %v1613 = vpop.f32.mrf.mxu0
      %v1614 = vadd.f32 0.0, %v1613
      %v1615 = vpop.f32.mrf.mxu0
      %v1616 = vadd.f32 0.0, %v1615
      %1617 = vmatmul.bf16.gmra.mxu0 %v1426
      %v1618 = vpop.f32.mrf.mxu0
      %v1619 = vadd.f32 0.0, %v1618
      %v1620 = vpop.f32.mrf.mxu0
      %v1621 = vadd.f32 0.0, %v1620
      %1622 = vmatmul.bf16.gmra.mxu0 %v1429
      %v1623 = vpop.f32.mrf.mxu0
      %v1624 = vadd.f32 0.0, %v1623
      %v1625 = vpop.f32.mrf.mxu0
      %v1626 = vadd.f32 0.0, %v1625
      %1627 = vmatmul.bf16.gmra.mxu0 %v1432
      %v1628 = vpop.f32.mrf.mxu0
      %v1629 = vadd.f32 0.0, %v1628
      %v1630 = vpop.f32.mrf.mxu0
      %v1631 = vadd.f32 0.0, %v1630
      %1632 = vmatmul.bf16.gmra.mxu0 %v1435
      %v1633 = vpop.f32.mrf.mxu0
      %v1634 = vadd.f32 0.0, %v1633
      %v1635 = vpop.f32.mrf.mxu0
      %v1636 = vadd.f32 0.0, %v1635
      %1637 = vmatmul.bf16.gmra.mxu0 %v1438
      %v1638 = vpop.f32.mrf.mxu0
      %v1639 = vadd.f32 0.0, %v1638
      %v1640 = vpop.f32.mrf.mxu0
      %v1641 = vadd.f32 0.0, %v1640
      %1642 = vmatmul.bf16.gmra.mxu0 %v1441
      %v1643 = vpop.f32.mrf.mxu0
      %v1644 = vadd.f32 0.0, %v1643
      %v1645 = vpop.f32.mrf.mxu0
      %v1646 = vadd.f32 0.0, %v1645
      %1647 = vmatmul.bf16.gmra.mxu0 %v1444
      %v1648 = vpop.f32.mrf.mxu0
      %v1649 = vadd.f32 0.0, %v1648
      %v1650 = vpop.f32.mrf.mxu0
      %v1651 = vadd.f32 0.0, %v1650
      %1652 = vmatmul.bf16.gmra.mxu0 %v1447
      %v1653 = vpop.f32.mrf.mxu0
      %v1654 = vadd.f32 0.0, %v1653
      %v1655 = vpop.f32.mrf.mxu0
      %v1656 = vadd.f32 0.0, %v1655
      %1657 = vmatmul.bf16.gmra.mxu0 %v1450
      %v1658 = vpop.f32.mrf.mxu0
      %v1659 = vadd.f32 0.0, %v1658
      %v1660 = vpop.f32.mrf.mxu0
      %v1661 = vadd.f32 0.0, %v1660
      %1662 = vmatmul.bf16.gmra.mxu0 %v1453
      %v1663 = vpop.f32.mrf.mxu0
      %v1664 = vadd.f32 0.0, %v1663
      %v1665 = vpop.f32.mrf.mxu0
      %v1666 = vadd.f32 0.0, %v1665
      %1667 = vmatmul.bf16.gmra.mxu0 %v1456
      %v1668 = vpop.f32.mrf.mxu0
      %v1669 = vadd.f32 0.0, %v1668
      %v1670 = vpop.f32.mrf.mxu0
      %v1671 = vadd.f32 0.0, %v1670
      %1672 = vmatmul.bf16.gmra.mxu0 %v1459
      %v1673 = vpop.f32.mrf.mxu0
      %v1674 = vadd.f32 0.0, %v1673
      %v1675 = vpop.f32.mrf.mxu0
      %v1676 = vadd.f32 0.0, %v1675
      %1677 = vmatmul.bf16.gmra.mxu0 %v1462
      %v1678 = vpop.f32.mrf.mxu0
      %v1679 = vadd.f32 0.0, %v1678
      %v1680 = vpop.f32.mrf.mxu0
      %1681 = vdwg.mxu0
      %v1682 = vmul.f32 %v1474, 0.5
      %v1683 = vmul.f32 %v1476, 0.5
      %v1684 = vmul.f32 %v1479, 0.5
      %v1685 = vmul.f32 %v1481, 0.5
      %v1686 = vmul.f32 %v1484, 0.5
      %v1687 = vmul.f32 %v1486, 0.5
      %v1688 = vmul.f32 %v1489, 0.5
      %v1689 = vmul.f32 %v1491, 0.5
      %v1690 = vmul.f32 %v1494, 0.5
      %v1691 = vmul.f32 %v1496, 0.5
      %v1692 = vmul.f32 %v1499, 0.5
      %v1693 = vmul.f32 %v1501, 0.5
      %v1694 = vmul.f32 %v1504, 0.5
      %v1695 = vmul.f32 %v1506, 0.5
      %v1696 = vmul.f32 %v1509, 0.5
      %v1697 = vmul.f32 %v1511, 0.5
      %v1698 = vmul.f32 %v1514, 0.5
      %v1699 = vmul.f32 %v1516, 0.5
      %v1700 = vmul.f32 %v1519, 0.5
      %v1701 = vmul.f32 %v1521, 0.5
      %v1702 = vmul.f32 %v1524, 0.5
      %v1703 = vmul.f32 %v1526, 0.5
      %v1704 = vmul.f32 %v1529, 0.5
      %v1705 = vmul.f32 %v1531, 0.5
      %v1706 = vmul.f32 %v1534, 0.5
      %v1707 = vmul.f32 %v1536, 0.5
      %v1708 = vmul.f32 %v1539, 0.5
      %v1709 = vmul.f32 %v1541, 0.5
      %v1710 = vmul.f32 %v1544, 0.5
      %v1711 = vmul.f32 %v1546, 0.5
      %v1712 = vmul.f32 %v1549, 0.5
      %v1713 = vmul.f32 %v1551, 0.5
      %v1714 = vmul.f32 %v1554, 0.5
      %v1715 = vpack.c.bf16 %v1683, %v1682
      %v1716 = vpack.c.bf16 %v1685, %v1684
      %v1717 = vpack.c.bf16 %v1687, %v1686
      %v1718 = vpack.c.bf16 %v1689, %v1688
      %v1719 = vpack.c.bf16 %v1691, %v1690
      %v1720 = vpack.c.bf16 %v1693, %v1692
      %v1721 = vpack.c.bf16 %v1695, %v1694
      %v1722 = vpack.c.bf16 %v1697, %v1696
      %v1723 = vpack.c.bf16 %v1699, %v1698
      %v1724 = vpack.c.bf16 %v1701, %v1700
      %v1725 = vpack.c.bf16 %v1703, %v1702
      %v1726 = vpack.c.bf16 %v1705, %v1704
      %v1727 = vpack.c.bf16 %v1707, %v1706
      %v1728 = vpack.c.bf16 %v1709, %v1708
      %v1729 = vpack.c.bf16 %v1711, %v1710
      %v1730 = vpack.c.bf16 %v1713, %v1712
      %v1731 = vpack.c.bf16 %v1714, %v1714
      %v1732 = vpack.c.bf16 %v1601, %v1599
      %v1733 = vpack.c.bf16 %v1606, %v1604
      %v1734 = vpack.c.bf16 %v1611, %v1609
      %v1735 = vpack.c.bf16 %v1616, %v1614
      %v1736 = vpack.c.bf16 %v1621, %v1619
      %v1737 = vpack.c.bf16 %v1626, %v1624
      %v1738 = vpack.c.bf16 %v1631, %v1629
      %v1739 = vpack.c.bf16 %v1636, %v1634
      %v1740 = vpack.c.bf16 %v1641, %v1639
      %v1741 = vpack.c.bf16 %v1646, %v1644
      %v1742 = vpack.c.bf16 %v1651, %v1649
      %v1743 = vpack.c.bf16 %v1656, %v1654
      %v1744 = vpack.c.bf16 %v1661, %v1659
      %v1745 = vpack.c.bf16 %v1666, %v1664
      %v1746 = vpack.c.bf16 %v1671, %v1669
      %v1747 = vpack.c.bf16 %v1676, %v1674
      %v1748 = vpack.c.bf16 %v1679, %v1679
      %vm1749 = vcmask 130048
      %v1751 = vsel %vm1749, %v1715, 0
      %v1754 = vsel %vm1749, %v1716, 0
      %v1757 = vsel %vm1749, %v1717, 0
      %v1760 = vsel %vm1749, %v1718, 0
      %v1763 = vsel %vm1749, %v1719, 0
      %v1766 = vsel %vm1749, %v1720, 0
      %v1769 = vsel %vm1749, %v1721, 0
      %v1772 = vsel %vm1749, %v1722, 0
      %v1775 = vsel %vm1749, %v1723, 0
      %v1778 = vsel %vm1749, %v1724, 0
      %v1781 = vsel %vm1749, %v1725, 0
      %v1784 = vsel %vm1749, %v1726, 0
      %v1787 = vsel %vm1749, %v1727, 0
      %v1790 = vsel %vm1749, %v1728, 0
      %v1793 = vsel %vm1749, %v1729, 0
      %v1796 = vsel %vm1749, %v1730, 0
      %v1799 = vsel %vm1749, %v1731, 0
      %1801 = vmatpush.bf16.xpose.msra.mxu0 %v1772
      %1802 = vmatpush.bf16.xpose.msra.mxu0 %v1769
      %1803 = vmatpush.bf16.xpose.msra.mxu0 %v1766
      %1804 = vmatpush.bf16.xpose.msra.mxu0 %v1763
      %1805 = vmatpush.bf16.xpose.msra.mxu0 %v1760
      %1806 = vmatpush.bf16.xpose.msra.mxu0 %v1757
      %1807 = vmatpush.bf16.xpose.msra.mxu0 %v1754
      %1808 = vmatpush.bf16.xpose.msra.mxu0 %v1751
      %1809 = vmatmul.bf16.gmra.mxu0 %v1751
      %v1810 = vpop.f32.mrf.mxu0
      %v1811 = vadd.f32 0.0, %v1810
      %v1812 = vpop.f32.mrf.mxu0
      %v1813 = vadd.f32 0.0, %v1812
      %1814 = vmatmul.bf16.gmra.mxu0 %v1754
      %v1815 = vpop.f32.mrf.mxu0
      %v1816 = vadd.f32 0.0, %v1815
      %v1817 = vpop.f32.mrf.mxu0
      %v1818 = vadd.f32 0.0, %v1817
      %1819 = vmatmul.bf16.gmra.mxu0 %v1757
      %v1820 = vpop.f32.mrf.mxu0
      %v1821 = vadd.f32 0.0, %v1820
      %v1822 = vpop.f32.mrf.mxu0
      %v1823 = vadd.f32 0.0, %v1822
      %1824 = vmatmul.bf16.gmra.mxu0 %v1760
      %v1825 = vpop.f32.mrf.mxu0
      %v1826 = vadd.f32 0.0, %v1825
      %v1827 = vpop.f32.mrf.mxu0
      %v1828 = vadd.f32 0.0, %v1827
      %1829 = vmatmul.bf16.gmra.mxu0 %v1763
      %v1830 = vpop.f32.mrf.mxu0
      %v1831 = vadd.f32 0.0, %v1830
      %v1832 = vpop.f32.mrf.mxu0
      %v1833 = vadd.f32 0.0, %v1832
      %1834 = vmatmul.bf16.gmra.mxu0 %v1766
      %v1835 = vpop.f32.mrf.mxu0
      %v1836 = vadd.f32 0.0, %v1835
      %v1837 = vpop.f32.mrf.mxu0
      %v1838 = vadd.f32 0.0, %v1837
      %1839 = vmatmul.bf16.gmra.mxu0 %v1769
      %v1840 = vpop.f32.mrf.mxu0
      %v1841 = vadd.f32 0.0, %v1840
      %v1842 = vpop.f32.mrf.mxu0
      %v1843 = vadd.f32 0.0, %v1842
      %1844 = vmatmul.bf16.gmra.mxu0 %v1772
      %v1845 = vpop.f32.mrf.mxu0
      %v1846 = vadd.f32 0.0, %v1845
      %v1847 = vpop.f32.mrf.mxu0
      %v1848 = vadd.f32 0.0, %v1847
      %1849 = vmatmul.bf16.gmra.mxu0 %v1775
      %v1850 = vpop.f32.mrf.mxu0
      %v1851 = vadd.f32 0.0, %v1850
      %v1852 = vpop.f32.mrf.mxu0
      %v1853 = vadd.f32 0.0, %v1852
      %1854 = vmatmul.bf16.gmra.mxu0 %v1778
      %v1855 = vpop.f32.mrf.mxu0
      %v1856 = vadd.f32 0.0, %v1855
      %v1857 = vpop.f32.mrf.mxu0
      %v1858 = vadd.f32 0.0, %v1857
      %1859 = vmatmul.bf16.gmra.mxu0 %v1781
      %v1860 = vpop.f32.mrf.mxu0
      %v1861 = vadd.f32 0.0, %v1860
      %v1862 = vpop.f32.mrf.mxu0
      %v1863 = vadd.f32 0.0, %v1862
      %1864 = vmatmul.bf16.gmra.mxu0 %v1784
      %v1865 = vpop.f32.mrf.mxu0
      %v1866 = vadd.f32 0.0, %v1865
      %v1867 = vpop.f32.mrf.mxu0
      %v1868 = vadd.f32 0.0, %v1867
      %1869 = vmatmul.bf16.gmra.mxu0 %v1787
      %v1870 = vpop.f32.mrf.mxu0
      %v1871 = vadd.f32 0.0, %v1870
      %v1872 = vpop.f32.mrf.mxu0
      %v1873 = vadd.f32 0.0, %v1872
      %1874 = vmatmul.bf16.gmra.mxu0 %v1790
      %v1875 = vpop.f32.mrf.mxu0
      %v1876 = vadd.f32 0.0, %v1875
      %v1877 = vpop.f32.mrf.mxu0
      %v1878 = vadd.f32 0.0, %v1877
      %1879 = vmatmul.bf16.gmra.mxu0 %v1793
      %v1880 = vpop.f32.mrf.mxu0
      %v1881 = vadd.f32 0.0, %v1880
      %v1882 = vpop.f32.mrf.mxu0
      %v1883 = vadd.f32 0.0, %v1882
      %1884 = vmatmul.bf16.gmra.mxu0 %v1796
      %v1885 = vpop.f32.mrf.mxu0
      %v1886 = vadd.f32 0.0, %v1885
      %v1887 = vpop.f32.mrf.mxu0
      %v1888 = vadd.f32 0.0, %v1887
      %1889 = vmatmul.bf16.gmra.mxu0 %v1799
      %v1890 = vpop.f32.mrf.mxu0
      %v1891 = vadd.f32 0.0, %v1890
      %v1892 = vpop.f32.mrf.mxu0
      %1893 = vdwg.mxu0
      %1894 = vmatpush.bf16.xpose.msra.mxu0 %v1796
      %1895 = vmatpush.bf16.xpose.msra.mxu0 %v1793
      %1896 = vmatpush.bf16.xpose.msra.mxu0 %v1790
      %1897 = vmatpush.bf16.xpose.msra.mxu0 %v1787
      %1898 = vmatpush.bf16.xpose.msra.mxu0 %v1784
      %1899 = vmatpush.bf16.xpose.msra.mxu0 %v1781
      %1900 = vmatpush.bf16.xpose.msra.mxu0 %v1778
      %1901 = vmatpush.bf16.xpose.msra.mxu0 %v1775
      %1902 = vmatmul.bf16.gmra.mxu0 %v1751
      %v1903 = vpop.f32.mrf.mxu0
      %v1904 = vadd.f32 0.0, %v1903
      %v1905 = vpop.f32.mrf.mxu0
      %v1906 = vadd.f32 0.0, %v1905
      %1907 = vmatmul.bf16.gmra.mxu0 %v1754
      %v1908 = vpop.f32.mrf.mxu0
      %v1909 = vadd.f32 0.0, %v1908
      %v1910 = vpop.f32.mrf.mxu0
      %v1911 = vadd.f32 0.0, %v1910
      %1912 = vmatmul.bf16.gmra.mxu0 %v1757
      %v1913 = vpop.f32.mrf.mxu0
      %v1914 = vadd.f32 0.0, %v1913
      %v1915 = vpop.f32.mrf.mxu0
      %v1916 = vadd.f32 0.0, %v1915
      %1917 = vmatmul.bf16.gmra.mxu0 %v1760
      %v1918 = vpop.f32.mrf.mxu0
      %v1919 = vadd.f32 0.0, %v1918
      %v1920 = vpop.f32.mrf.mxu0
      %v1921 = vadd.f32 0.0, %v1920
      %1922 = vmatmul.bf16.gmra.mxu0 %v1763
      %v1923 = vpop.f32.mrf.mxu0
      %v1924 = vadd.f32 0.0, %v1923
      %v1925 = vpop.f32.mrf.mxu0
      %v1926 = vadd.f32 0.0, %v1925
      %1927 = vmatmul.bf16.gmra.mxu0 %v1766
      %v1928 = vpop.f32.mrf.mxu0
      %v1929 = vadd.f32 0.0, %v1928
      %v1930 = vpop.f32.mrf.mxu0
      %v1931 = vadd.f32 0.0, %v1930
      %1932 = vmatmul.bf16.gmra.mxu0 %v1769
      %v1933 = vpop.f32.mrf.mxu0
      %v1934 = vadd.f32 0.0, %v1933
      %v1935 = vpop.f32.mrf.mxu0
      %v1936 = vadd.f32 0.0, %v1935
      %1937 = vmatmul.bf16.gmra.mxu0 %v1772
      %v1938 = vpop.f32.mrf.mxu0
      %v1939 = vadd.f32 0.0, %v1938
      %v1940 = vpop.f32.mrf.mxu0
      %v1941 = vadd.f32 0.0, %v1940
      %1942 = vmatmul.bf16.gmra.mxu0 %v1775
      %v1943 = vpop.f32.mrf.mxu0
      %v1944 = vadd.f32 0.0, %v1943
      %v1945 = vpop.f32.mrf.mxu0
      %v1946 = vadd.f32 0.0, %v1945
      %1947 = vmatmul.bf16.gmra.mxu0 %v1778
      %v1948 = vpop.f32.mrf.mxu0
      %v1949 = vadd.f32 0.0, %v1948
      %v1950 = vpop.f32.mrf.mxu0
      %v1951 = vadd.f32 0.0, %v1950
      %1952 = vmatmul.bf16.gmra.mxu0 %v1781
      %v1953 = vpop.f32.mrf.mxu0
      %v1954 = vadd.f32 0.0, %v1953
      %v1955 = vpop.f32.mrf.mxu0
      %v1956 = vadd.f32 0.0, %v1955
      %1957 = vmatmul.bf16.gmra.mxu0 %v1784
      %v1958 = vpop.f32.mrf.mxu0
      %v1959 = vadd.f32 0.0, %v1958
      %v1960 = vpop.f32.mrf.mxu0
      %v1961 = vadd.f32 0.0, %v1960
      %1962 = vmatmul.bf16.gmra.mxu0 %v1787
      %v1963 = vpop.f32.mrf.mxu0
      %v1964 = vadd.f32 0.0, %v1963
      %v1965 = vpop.f32.mrf.mxu0
      %v1966 = vadd.f32 0.0, %v1965
      %1967 = vmatmul.bf16.gmra.mxu0 %v1790
      %v1968 = vpop.f32.mrf.mxu0
      %v1969 = vadd.f32 0.0, %v1968
      %v1970 = vpop.f32.mrf.mxu0
      %v1971 = vadd.f32 0.0, %v1970
      %1972 = vmatmul.bf16.gmra.mxu0 %v1793
      %v1973 = vpop.f32.mrf.mxu0
      %v1974 = vadd.f32 0.0, %v1973
      %v1975 = vpop.f32.mrf.mxu0
      %v1976 = vadd.f32 0.0, %v1975
      %1977 = vmatmul.bf16.gmra.mxu0 %v1796
      %v1978 = vpop.f32.mrf.mxu0
      %v1979 = vadd.f32 0.0, %v1978
      %v1980 = vpop.f32.mrf.mxu0
      %v1981 = vadd.f32 0.0, %v1980
      %1982 = vmatmul.bf16.gmra.mxu0 %v1799
      %v1983 = vpop.f32.mrf.mxu0
      %v1984 = vadd.f32 0.0, %v1983
      %v1985 = vpop.f32.mrf.mxu0
      %1986 = vdwg.mxu0
      %1987 = vmatpush.bf16.xpose.msra.mxu0 0
      %1988 = vmatpush.bf16.xpose.msra.mxu0 0
      %1989 = vmatpush.bf16.xpose.msra.mxu0 0
      %1990 = vmatpush.bf16.xpose.msra.mxu0 0
      %1991 = vmatpush.bf16.xpose.msra.mxu0 0
      %1992 = vmatpush.bf16.xpose.msra.mxu0 0
      %1993 = vmatpush.bf16.xpose.msra.mxu0 0
      %1994 = vmatpush.bf16.xpose.msra.mxu0 %v1799
      %1995 = vmatmul.bf16.gmra.mxu0 %v1751
      %v1996 = vpop.f32.mrf.mxu0
      %v1997 = vadd.f32 0.0, %v1996
      %v1998 = vpop.f32.mrf.mxu0
      %v1999 = vadd.f32 0.0, %v1998
      %2000 = vmatmul.bf16.gmra.mxu0 %v1754
      %v2001 = vpop.f32.mrf.mxu0
      %v2002 = vadd.f32 0.0, %v2001
      %v2003 = vpop.f32.mrf.mxu0
      %v2004 = vadd.f32 0.0, %v2003
      %2005 = vmatmul.bf16.gmra.mxu0 %v1757
      %v2006 = vpop.f32.mrf.mxu0
      %v2007 = vadd.f32 0.0, %v2006
      %v2008 = vpop.f32.mrf.mxu0
      %v2009 = vadd.f32 0.0, %v2008
      %2010 = vmatmul.bf16.gmra.mxu0 %v1760
      %v2011 = vpop.f32.mrf.mxu0
      %v2012 = vadd.f32 0.0, %v2011
      %v2013 = vpop.f32.mrf.mxu0
      %v2014 = vadd.f32 0.0, %v2013
      %2015 = vmatmul.bf16.gmra.mxu0 %v1763
      %v2016 = vpop.f32.mrf.mxu0
      %v2017 = vadd.f32 0.0, %v2016
      %v2018 = vpop.f32.mrf.mxu0
      %v2019 = vadd.f32 0.0, %v2018
      %2020 = vmatmul.bf16.gmra.mxu0 %v1766
      %v2021 = vpop.f32.mrf.mxu0
      %v2022 = vadd.f32 0.0, %v2021
      %v2023 = vpop.f32.mrf.mxu0
      %v2024 = vadd.f32 0.0, %v2023
      %2025 = vmatmul.bf16.gmra.mxu0 %v1769
      %v2026 = vpop.f32.mrf.mxu0
      %v2027 = vadd.f32 0.0, %v2026
      %v2028 = vpop.f32.mrf.mxu0
      %v2029 = vadd.f32 0.0, %v2028
      %2030 = vmatmul.bf16.gmra.mxu0 %v1772
      %v2031 = vpop.f32.mrf.mxu0
      %v2032 = vadd.f32 0.0, %v2031
      %v2033 = vpop.f32.mrf.mxu0
      %v2034 = vadd.f32 0.0, %v2033
      %2035 = vmatmul.bf16.gmra.mxu0 %v1775
      %v2036 = vpop.f32.mrf.mxu0
      %v2037 = vadd.f32 0.0, %v2036
      %v2038 = vpop.f32.mrf.mxu0
      %v2039 = vadd.f32 0.0, %v2038
      %2040 = vmatmul.bf16.gmra.mxu0 %v1778
      %v2041 = vpop.f32.mrf.mxu0
      %v2042 = vadd.f32 0.0, %v2041
      %v2043 = vpop.f32.mrf.mxu0
      %v2044 = vadd.f32 0.0, %v2043
      %2045 = vmatmul.bf16.gmra.mxu0 %v1781
      %v2046 = vpop.f32.mrf.mxu0
      %v2047 = vadd.f32 0.0, %v2046
      %v2048 = vpop.f32.mrf.mxu0
      %v2049 = vadd.f32 0.0, %v2048
      %2050 = vmatmul.bf16.gmra.mxu0 %v1784
      %v2051 = vpop.f32.mrf.mxu0
      %v2052 = vadd.f32 0.0, %v2051
      %v2053 = vpop.f32.mrf.mxu0
      %v2054 = vadd.f32 0.0, %v2053
      %2055 = vmatmul.bf16.gmra.mxu0 %v1787
      %v2056 = vpop.f32.mrf.mxu0
      %v2057 = vadd.f32 0.0, %v2056
      %v2058 = vpop.f32.mrf.mxu0
      %v2059 = vadd.f32 0.0, %v2058
      %2060 = vmatmul.bf16.gmra.mxu0 %v1790
      %v2061 = vpop.f32.mrf.mxu0
      %v2062 = vadd.f32 0.0, %v2061
      %v2063 = vpop.f32.mrf.mxu0
      %v2064 = vadd.f32 0.0, %v2063
      %2065 = vmatmul.bf16.gmra.mxu0 %v1793
      %v2066 = vpop.f32.mrf.mxu0
      %v2067 = vadd.f32 0.0, %v2066
      %v2068 = vpop.f32.mrf.mxu0
      %v2069 = vadd.f32 0.0, %v2068
      %2070 = vmatmul.bf16.gmra.mxu0 %v1796
      %v2071 = vpop.f32.mrf.mxu0
      %v2072 = vadd.f32 0.0, %v2071
      %v2073 = vpop.f32.mrf.mxu0
      %v2074 = vadd.f32 0.0, %v2073
      %2075 = vmatmul.bf16.gmra.mxu0 %v1799
      %v2076 = vpop.f32.mrf.mxu0
      %v2077 = vadd.f32 0.0, %v2076
      %v2078 = vpop.f32.mrf.mxu0
      %2079 = vdwg.mxu0
      %v2080 = vmax.f32 %v1811, %v1904
      %vm2081 = vcmask 64512
      %v2082 = vsel %vm2081, %v1997, -inf
      %v2083 = vmax.f32 %v2080, %v2082
      %2084 = vmax.xlane.f32.xlu0 %v2083
      %v2085 = vpop.xlane.xlu0 %2084
      %v2086 = vmax.f32 %v1813, %v1906
      %v2087 = vsel %vm2081, %v1999, -inf
      %v2088 = vmax.f32 %v2086, %v2087
      %2089 = vmax.xlane.f32.xlu0 %v2088
      %v2090 = vpop.xlane.xlu0 %2089
      %v2091 = vmax.f32 %v1816, %v1909
      %v2092 = vsel %vm2081, %v2002, -inf
      %v2093 = vmax.f32 %v2091, %v2092
      %2094 = vmax.xlane.f32.xlu0 %v2093
      %v2095 = vpop.xlane.xlu0 %2094
      %v2096 = vmax.f32 %v1818, %v1911
      %v2097 = vsel %vm2081, %v2004, -inf
      %v2098 = vmax.f32 %v2096, %v2097
      %2099 = vmax.xlane.f32.xlu0 %v2098
      %v2100 = vpop.xlane.xlu0 %2099
      %v2101 = vmax.f32 %v1821, %v1914
      %v2102 = vsel %vm2081, %v2007, -inf
      %v2103 = vmax.f32 %v2101, %v2102
      %2104 = vmax.xlane.f32.xlu0 %v2103
      %v2105 = vpop.xlane.xlu0 %2104
      %v2106 = vmax.f32 %v1823, %v1916
      %v2107 = vsel %vm2081, %v2009, -inf
      %v2108 = vmax.f32 %v2106, %v2107
      %2109 = vmax.xlane.f32.xlu0 %v2108
      %v2110 = vpop.xlane.xlu0 %2109
      %v2111 = vmax.f32 %v1826, %v1919
      %v2112 = vsel %vm2081, %v2012, -inf
      %v2113 = vmax.f32 %v2111, %v2112
      %2114 = vmax.xlane.f32.xlu0 %v2113
      %v2115 = vpop.xlane.xlu0 %2114
      %v2116 = vmax.f32 %v1828, %v1921
      %v2117 = vsel %vm2081, %v2014, -inf
      %v2118 = vmax.f32 %v2116, %v2117
      %2119 = vmax.xlane.f32.xlu0 %v2118
      %v2120 = vpop.xlane.xlu0 %2119
      %v2121 = vmax.f32 %v1831, %v1924
      %v2122 = vsel %vm2081, %v2017, -inf
      %v2123 = vmax.f32 %v2121, %v2122
      %2124 = vmax.xlane.f32.xlu0 %v2123
      %v2125 = vpop.xlane.xlu0 %2124
      %v2126 = vmax.f32 %v1833, %v1926
      %v2127 = vsel %vm2081, %v2019, -inf
      %v2128 = vmax.f32 %v2126, %v2127
      %2129 = vmax.xlane.f32.xlu0 %v2128
      %v2130 = vpop.xlane.xlu0 %2129
      %v2131 = vmax.f32 %v1836, %v1929
      %v2132 = vsel %vm2081, %v2022, -inf
      %v2133 = vmax.f32 %v2131, %v2132
      %2134 = vmax.xlane.f32.xlu0 %v2133
      %v2135 = vpop.xlane.xlu0 %2134
      %v2136 = vmax.f32 %v1838, %v1931
      %v2137 = vsel %vm2081, %v2024, -inf
      %v2138 = vmax.f32 %v2136, %v2137
      %2139 = vmax.xlane.f32.xlu0 %v2138
      %v2140 = vpop.xlane.xlu0 %2139
      %v2141 = vmax.f32 %v1841, %v1934
      %v2142 = vsel %vm2081, %v2027, -inf
      %v2143 = vmax.f32 %v2141, %v2142
      %2144 = vmax.xlane.f32.xlu0 %v2143
      %v2145 = vpop.xlane.xlu0 %2144
      %v2146 = vmax.f32 %v1843, %v1936
      %v2147 = vsel %vm2081, %v2029, -inf
      %v2148 = vmax.f32 %v2146, %v2147
      %2149 = vmax.xlane.f32.xlu0 %v2148
      %v2150 = vpop.xlane.xlu0 %2149
      %v2151 = vmax.f32 %v1846, %v1939
      %v2152 = vsel %vm2081, %v2032, -inf
      %v2153 = vmax.f32 %v2151, %v2152
      %2154 = vmax.xlane.f32.xlu0 %v2153
      %v2155 = vpop.xlane.xlu0 %2154
      %v2156 = vmax.f32 %v1848, %v1941
      %v2157 = vsel %vm2081, %v2034, -inf
      %v2158 = vmax.f32 %v2156, %v2157
      %2159 = vmax.xlane.f32.xlu0 %v2158
      %v2160 = vpop.xlane.xlu0 %2159
      %v2161 = vmax.f32 %v1851, %v1944
      %v2162 = vsel %vm2081, %v2037, -inf
      %v2163 = vmax.f32 %v2161, %v2162
      %2164 = vmax.xlane.f32.xlu0 %v2163
      %v2165 = vpop.xlane.xlu0 %2164
      %v2166 = vmax.f32 %v1853, %v1946
      %v2167 = vsel %vm2081, %v2039, -inf
      %v2168 = vmax.f32 %v2166, %v2167
      %2169 = vmax.xlane.f32.xlu0 %v2168
      %v2170 = vpop.xlane.xlu0 %2169
      %v2171 = vmax.f32 %v1856, %v1949
      %v2172 = vsel %vm2081, %v2042, -inf
      %v2173 = vmax.f32 %v2171, %v2172
      %2174 = vmax.xlane.f32.xlu0 %v2173
      %v2175 = vpop.xlane.xlu0 %2174
      %v2176 = vmax.f32 %v1858, %v1951
      %v2177 = vsel %vm2081, %v2044, -inf
      %v2178 = vmax.f32 %v2176, %v2177
      %2179 = vmax.xlane.f32.xlu0 %v2178
      %v2180 = vpop.xlane.xlu0 %2179
      %v2181 = vmax.f32 %v1861, %v1954
      %v2182 = vsel %vm2081, %v2047, -inf
      %v2183 = vmax.f32 %v2181, %v2182
      %2184 = vmax.xlane.f32.xlu0 %v2183
      %v2185 = vpop.xlane.xlu0 %2184
      %v2186 = vmax.f32 %v1863, %v1956
      %v2187 = vsel %vm2081, %v2049, -inf
      %v2188 = vmax.f32 %v2186, %v2187
      %2189 = vmax.xlane.f32.xlu0 %v2188
      %v2190 = vpop.xlane.xlu0 %2189
      %v2191 = vmax.f32 %v1866, %v1959
      %v2192 = vsel %vm2081, %v2052, -inf
      %v2193 = vmax.f32 %v2191, %v2192
      %2194 = vmax.xlane.f32.xlu0 %v2193
      %v2195 = vpop.xlane.xlu0 %2194
      %v2196 = vmax.f32 %v1868, %v1961
      %v2197 = vsel %vm2081, %v2054, -inf
      %v2198 = vmax.f32 %v2196, %v2197
      %2199 = vmax.xlane.f32.xlu0 %v2198
      %v2200 = vpop.xlane.xlu0 %2199
      %v2201 = vmax.f32 %v1871, %v1964
      %v2202 = vsel %vm2081, %v2057, -inf
      %v2203 = vmax.f32 %v2201, %v2202
      %2204 = vmax.xlane.f32.xlu0 %v2203
      %v2205 = vpop.xlane.xlu0 %2204
      %v2206 = vmax.f32 %v1873, %v1966
      %v2207 = vsel %vm2081, %v2059, -inf
      %v2208 = vmax.f32 %v2206, %v2207
      %2209 = vmax.xlane.f32.xlu0 %v2208
      %v2210 = vpop.xlane.xlu0 %2209
      %v2211 = vmax.f32 %v1876, %v1969
      %v2212 = vsel %vm2081, %v2062, -inf
      %v2213 = vmax.f32 %v2211, %v2212
      %2214 = vmax.xlane.f32.xlu0 %v2213
      %v2215 = vpop.xlane.xlu0 %2214
      %v2216 = vmax.f32 %v1878, %v1971
      %v2217 = vsel %vm2081, %v2064, -inf
      %v2218 = vmax.f32 %v2216, %v2217
      %2219 = vmax.xlane.f32.xlu0 %v2218
      %v2220 = vpop.xlane.xlu0 %2219
      %v2221 = vmax.f32 %v1881, %v1974
      %v2222 = vsel %vm2081, %v2067, -inf
      %v2223 = vmax.f32 %v2221, %v2222
      %2224 = vmax.xlane.f32.xlu0 %v2223
      %v2225 = vpop.xlane.xlu0 %2224
      %v2226 = vmax.f32 %v1883, %v1976
      %v2227 = vsel %vm2081, %v2069, -inf
      %v2228 = vmax.f32 %v2226, %v2227
      %2229 = vmax.xlane.f32.xlu0 %v2228
      %v2230 = vpop.xlane.xlu0 %2229
      %v2231 = vmax.f32 %v1886, %v1979
      %v2232 = vsel %vm2081, %v2072, -inf
      %v2233 = vmax.f32 %v2231, %v2232
      %2234 = vmax.xlane.f32.xlu0 %v2233
      %v2235 = vpop.xlane.xlu0 %2234
      %v2236 = vmax.f32 %v1888, %v1981
      %v2237 = vsel %vm2081, %v2074, -inf
      %v2238 = vmax.f32 %v2236, %v2237
      %2239 = vmax.xlane.f32.xlu0 %v2238
      %v2240 = vpop.xlane.xlu0 %2239
      %v2241 = vmax.f32 %v1891, %v1984
      %v2242 = vsel %vm2081, %v2077, -inf
      %v2243 = vmax.f32 %v2241, %v2242
      %2244 = vmax.xlane.f32.xlu0 %v2243
      %v2245 = vpop.xlane.xlu0 %2244
      %v2246 = vsub.f32 %v1811, %v2085
      %v2247 = vsub.f32 %v1904, %v2085
      %v2248 = vsub.f32 %v1997, %v2085
      %v2249 = vsub.f32 %v1813, %v2090
      %v2250 = vsub.f32 %v1906, %v2090
      %v2251 = vsub.f32 %v1999, %v2090
      %v2252 = vsub.f32 %v1816, %v2095
      %v2253 = vsub.f32 %v1909, %v2095
      %v2254 = vsub.f32 %v2002, %v2095
      %v2255 = vsub.f32 %v1818, %v2100
      %v2256 = vsub.f32 %v1911, %v2100
      %v2257 = vsub.f32 %v2004, %v2100
      %v2258 = vsub.f32 %v1821, %v2105
      %v2259 = vsub.f32 %v1914, %v2105
      %v2260 = vsub.f32 %v2007, %v2105
      %v2261 = vsub.f32 %v1823, %v2110
      %v2262 = vsub.f32 %v1916, %v2110
      %v2263 = vsub.f32 %v2009, %v2110
      %v2264 = vsub.f32 %v1826, %v2115
      %v2265 = vsub.f32 %v1919, %v2115
      %v2266 = vsub.f32 %v2012, %v2115
      %v2267 = vsub.f32 %v1828, %v2120
      %v2268 = vsub.f32 %v1921, %v2120
      %v2269 = vsub.f32 %v2014, %v2120
      %v2270 = vsub.f32 %v1831, %v2125
      %v2271 = vsub.f32 %v1924, %v2125
      %v2272 = vsub.f32 %v2017, %v2125
      %v2273 = vsub.f32 %v1833, %v2130
      %v2274 = vsub.f32 %v1926, %v2130
      %v2275 = vsub.f32 %v2019, %v2130
      %v2276 = vsub.f32 %v1836, %v2135
      %v2277 = vsub.f32 %v1929, %v2135
      %v2278 = vsub.f32 %v2022, %v2135
      %v2279 = vsub.f32 %v1838, %v2140
      %v2280 = vsub.f32 %v1931, %v2140
      %v2281 = vsub.f32 %v2024, %v2140
      %v2282 = vsub.f32 %v1841, %v2145
      %v2283 = vsub.f32 %v1934, %v2145
      %v2284 = vsub.f32 %v2027, %v2145
      %v2285 = vsub.f32 %v1843, %v2150
      %v2286 = vsub.f32 %v1936, %v2150
      %v2287 = vsub.f32 %v2029, %v2150
      %v2288 = vsub.f32 %v1846, %v2155
      %v2289 = vsub.f32 %v1939, %v2155
      %v2290 = vsub.f32 %v2032, %v2155
      %v2291 = vsub.f32 %v1848, %v2160
      %v2292 = vsub.f32 %v1941, %v2160
      %v2293 = vsub.f32 %v2034, %v2160
      %v2294 = vsub.f32 %v1851, %v2165
      %v2295 = vsub.f32 %v1944, %v2165
      %v2296 = vsub.f32 %v2037, %v2165
      %v2297 = vsub.f32 %v1853, %v2170
      %v2298 = vsub.f32 %v1946, %v2170
      %v2299 = vsub.f32 %v2039, %v2170
      %v2300 = vsub.f32 %v1856, %v2175
      %v2301 = vsub.f32 %v1949, %v2175
      %v2302 = vsub.f32 %v2042, %v2175
      %v2303 = vsub.f32 %v1858, %v2180
      %v2304 = vsub.f32 %v1951, %v2180
      %v2305 = vsub.f32 %v2044, %v2180
      %v2306 = vsub.f32 %v1861, %v2185
      %v2307 = vsub.f32 %v1954, %v2185
      %v2308 = vsub.f32 %v2047, %v2185
      %v2309 = vsub.f32 %v1863, %v2190
      %v2310 = vsub.f32 %v1956, %v2190
      %v2311 = vsub.f32 %v2049, %v2190
      %v2312 = vsub.f32 %v1866, %v2195
      %v2313 = vsub.f32 %v1959, %v2195
      %v2314 = vsub.f32 %v2052, %v2195
      %v2315 = vsub.f32 %v1868, %v2200
      %v2316 = vsub.f32 %v1961, %v2200
      %v2317 = vsub.f32 %v2054, %v2200
      %v2318 = vsub.f32 %v1871, %v2205
      %v2319 = vsub.f32 %v1964, %v2205
      %v2320 = vsub.f32 %v2057, %v2205
      %v2321 = vsub.f32 %v1873, %v2210
      %v2322 = vsub.f32 %v1966, %v2210
      %v2323 = vsub.f32 %v2059, %v2210
      %v2324 = vsub.f32 %v1876, %v2215
      %v2325 = vsub.f32 %v1969, %v2215
      %v2326 = vsub.f32 %v2062, %v2215
      %v2327 = vsub.f32 %v1878, %v2220
      %v2328 = vsub.f32 %v1971, %v2220
      %v2329 = vsub.f32 %v2064, %v2220
      %v2330 = vsub.f32 %v1881, %v2225
      %v2331 = vsub.f32 %v1974, %v2225
      %v2332 = vsub.f32 %v2067, %v2225
      %v2333 = vsub.f32 %v1883, %v2230
      %v2334 = vsub.f32 %v1976, %v2230
      %v2335 = vsub.f32 %v2069, %v2230
      %v2336 = vsub.f32 %v1886, %v2235
      %v2337 = vsub.f32 %v1979, %v2235
      %v2338 = vsub.f32 %v2072, %v2235
      %v2339 = vsub.f32 %v1888, %v2240
      %v2340 = vsub.f32 %v1981, %v2240
      %v2341 = vsub.f32 %v2074, %v2240
      %v2342 = vsub.f32 %v1891, %v2245
      %v2343 = vsub.f32 %v1984, %v2245
      %v2344 = vsub.f32 %v2077, %v2245
      %v2345 = vmul.f32 %v2246, 1.442695
      %v2346 = vpow.pop %v2345
      %v2347 = vmul.f32 %v2247, 1.442695
      %v2348 = vpow.pop %v2347
      %v2349 = vmul.f32 %v2248, 1.442695
      %v2350 = vpow.pop %v2349
      %v2351 = vmul.f32 %v2249, 1.442695
      %v2352 = vpow.pop %v2351
      %v2353 = vmul.f32 %v2250, 1.442695
      %v2354 = vpow.pop %v2353
      %v2355 = vmul.f32 %v2251, 1.442695
      %v2356 = vpow.pop %v2355
      %v2357 = vmul.f32 %v2252, 1.442695
      %v2358 = vpow.pop %v2357
      %v2359 = vmul.f32 %v2253, 1.442695
      %v2360 = vpow.pop %v2359
      %v2361 = vmul.f32 %v2254, 1.442695
      %v2362 = vpow.pop %v2361
      %v2363 = vmul.f32 %v2255, 1.442695
      %v2364 = vpow.pop %v2363
      %v2365 = vmul.f32 %v2256, 1.442695
      %v2366 = vpow.pop %v2365
      %v2367 = vmul.f32 %v2257, 1.442695
      %v2368 = vpow.pop %v2367
      %v2369 = vmul.f32 %v2258, 1.442695
      %v2370 = vpow.pop %v2369
      %v2371 = vmul.f32 %v2259, 1.442695
      %v2372 = vpow.pop %v2371
      %v2373 = vmul.f32 %v2260, 1.442695
      %v2374 = vpow.pop %v2373
      %v2375 = vmul.f32 %v2261, 1.442695
      %v2376 = vpow.pop %v2375
      %v2377 = vmul.f32 %v2262, 1.442695
      %v2378 = vpow.pop %v2377
      %v2379 = vmul.f32 %v2263, 1.442695
      %v2380 = vpow.pop %v2379
      %v2381 = vmul.f32 %v2264, 1.442695
      %v2382 = vpow.pop %v2381
      %v2383 = vmul.f32 %v2265, 1.442695
      %v2384 = vpow.pop %v2383
      %v2385 = vmul.f32 %v2266, 1.442695
      %v2386 = vpow.pop %v2385
      %v2387 = vmul.f32 %v2267, 1.442695
      %v2388 = vpow.pop %v2387
      %v2389 = vmul.f32 %v2268, 1.442695
      %v2390 = vpow.pop %v2389
      %v2391 = vmul.f32 %v2269, 1.442695
      %v2392 = vpow.pop %v2391
      %v2393 = vmul.f32 %v2270, 1.442695
      %v2394 = vpow.pop %v2393
      %v2395 = vmul.f32 %v2271, 1.442695
      %v2396 = vpow.pop %v2395
      %v2397 = vmul.f32 %v2272, 1.442695
      %v2398 = vpow.pop %v2397
      %v2399 = vmul.f32 %v2273, 1.442695
      %v2400 = vpow.pop %v2399
      %v2401 = vmul.f32 %v2274, 1.442695
      %v2402 = vpow.pop %v2401
      %v2403 = vmul.f32 %v2275, 1.442695
      %v2404 = vpow.pop %v2403
      %v2405 = vmul.f32 %v2276, 1.442695
      %v2406 = vpow.pop %v2405
      %v2407 = vmul.f32 %v2277, 1.442695
      %v2408 = vpow.pop %v2407
      %v2409 = vmul.f32 %v2278, 1.442695
      %v2410 = vpow.pop %v2409
      %v2411 = vmul.f32 %v2279, 1.442695
      %v2412 = vpow.pop %v2411
      %v2413 = vmul.f32 %v2280, 1.442695
      %v2414 = vpow.pop %v2413
      %v2415 = vmul.f32 %v2281, 1.442695
      %v2416 = vpow.pop %v2415
      %v2417 = vmul.f32 %v2282, 1.442695
      %v2418 = vpow.pop %v2417
      %v2419 = vmul.f32 %v2283, 1.442695
      %v2420 = vpow.pop %v2419
      %v2421 = vmul.f32 %v2284, 1.442695
      %v2422 = vpow.pop %v2421
      %v2423 = vmul.f32 %v2285, 1.442695
      %v2424 = vpow.pop %v2423
      %v2425 = vmul.f32 %v2286, 1.442695
      %v2426 = vpow.pop %v2425
      %v2427 = vmul.f32 %v2287, 1.442695
      %v2428 = vpow.pop %v2427
      %v2429 = vmul.f32 %v2288, 1.442695
      %v2430 = vpow.pop %v2429
      %v2431 = vmul.f32 %v2289, 1.442695
      %v2432 = vpow.pop %v2431
      %v2433 = vmul.f32 %v2290, 1.442695
      %v2434 = vpow.pop %v2433
      %v2435 = vmul.f32 %v2291, 1.442695
      %v2436 = vpow.pop %v2435
      %v2437 = vmul.f32 %v2292, 1.442695
      %v2438 = vpow.pop %v2437
      %v2439 = vmul.f32 %v2293, 1.442695
      %v2440 = vpow.pop %v2439
      %v2441 = vmul.f32 %v2294, 1.442695
      %v2442 = vpow.pop %v2441
      %v2443 = vmul.f32 %v2295, 1.442695
      %v2444 = vpow.pop %v2443
      %v2445 = vmul.f32 %v2296, 1.442695
      %v2446 = vpow.pop %v2445
      %v2447 = vmul.f32 %v2297, 1.442695
      %v2448 = vpow.pop %v2447
      %v2449 = vmul.f32 %v2298, 1.442695
      %v2450 = vpow.pop %v2449
      %v2451 = vmul.f32 %v2299, 1.442695
      %v2452 = vpow.pop %v2451
      %v2453 = vmul.f32 %v2300, 1.442695
      %v2454 = vpow.pop %v2453
      %v2455 = vmul.f32 %v2301, 1.442695
      %v2456 = vpow.pop %v2455
      %v2457 = vmul.f32 %v2302, 1.442695
      %v2458 = vpow.pop %v2457
      %v2459 = vmul.f32 %v2303, 1.442695
      %v2460 = vpow.pop %v2459
      %v2461 = vmul.f32 %v2304, 1.442695
      %v2462 = vpow.pop %v2461
      %v2463 = vmul.f32 %v2305, 1.442695
      %v2464 = vpow.pop %v2463
      %v2465 = vmul.f32 %v2306, 1.442695
      %v2466 = vpow.pop %v2465
      %v2467 = vmul.f32 %v2307, 1.442695
      %v2468 = vpow.pop %v2467
      %v2469 = vmul.f32 %v2308, 1.442695
      %v2470 = vpow.pop %v2469
      %v2471 = vmul.f32 %v2309, 1.442695
      %v2472 = vpow.pop %v2471
      %v2473 = vmul.f32 %v2310, 1.442695
      %v2474 = vpow.pop %v2473
      %v2475 = vmul.f32 %v2311, 1.442695
      %v2476 = vpow.pop %v2475
      %v2477 = vmul.f32 %v2312, 1.442695
      %v2478 = vpow.pop %v2477
      %v2479 = vmul.f32 %v2313, 1.442695
      %v2480 = vpow.pop %v2479
      %v2481 = vmul.f32 %v2314, 1.442695
      %v2482 = vpow.pop %v2481
      %v2483 = vmul.f32 %v2315, 1.442695
      %v2484 = vpow.pop %v2483
      %v2485 = vmul.f32 %v2316, 1.442695
      %v2486 = vpow.pop %v2485
      %v2487 = vmul.f32 %v2317, 1.442695
      %v2488 = vpow.pop %v2487
      %v2489 = vmul.f32 %v2318, 1.442695
      %v2490 = vpow.pop %v2489
      %v2491 = vmul.f32 %v2319, 1.442695
      %v2492 = vpow.pop %v2491
      %v2493 = vmul.f32 %v2320, 1.442695
      %v2494 = vpow.pop %v2493
      %v2495 = vmul.f32 %v2321, 1.442695
      %v2496 = vpow.pop %v2495
      %v2497 = vmul.f32 %v2322, 1.442695
      %v2498 = vpow.pop %v2497
      %v2499 = vmul.f32 %v2323, 1.442695
      %v2500 = vpow.pop %v2499
      %v2501 = vmul.f32 %v2324, 1.442695
      %v2502 = vpow.pop %v2501
      %v2503 = vmul.f32 %v2325, 1.442695
      %v2504 = vpow.pop %v2503
      %v2505 = vmul.f32 %v2326, 1.442695
      %v2506 = vpow.pop %v2505
      %v2507 = vmul.f32 %v2327, 1.442695
      %v2508 = vpow.pop %v2507
      %v2509 = vmul.f32 %v2328, 1.442695
      %v2510 = vpow.pop %v2509
      %v2511 = vmul.f32 %v2329, 1.442695
      %v2512 = vpow.pop %v2511
      %v2513 = vmul.f32 %v2330, 1.442695
      %v2514 = vpow.pop %v2513
      %v2515 = vmul.f32 %v2331, 1.442695
      %v2516 = vpow.pop %v2515
      %v2517 = vmul.f32 %v2332, 1.442695
      %v2518 = vpow.pop %v2517
      %v2519 = vmul.f32 %v2333, 1.442695
      %v2520 = vpow.pop %v2519
      %v2521 = vmul.f32 %v2334, 1.442695
      %v2522 = vpow.pop %v2521
      %v2523 = vmul.f32 %v2335, 1.442695
      %v2524 = vpow.pop %v2523
      %v2525 = vmul.f32 %v2336, 1.442695
      %v2526 = vpow.pop %v2525
      %v2527 = vmul.f32 %v2337, 1.442695
      %v2528 = vpow.pop %v2527
      %v2529 = vmul.f32 %v2338, 1.442695
      %v2530 = vpow.pop %v2529
      %v2531 = vmul.f32 %v2339, 1.442695
      %v2532 = vpow.pop %v2531
      %v2533 = vmul.f32 %v2340, 1.442695
      %v2534 = vpow.pop %v2533
      %v2535 = vmul.f32 %v2341, 1.442695
      %v2536 = vpow.pop %v2535
      %v2537 = vmul.f32 %v2342, 1.442695
      %v2538 = vpow.pop %v2537
      %v2539 = vmul.f32 %v2343, 1.442695
      %v2540 = vpow.pop %v2539
      %v2541 = vmul.f32 %v2344, 1.442695
      %v2542 = vpow.pop %v2541
      %v2543 = vadd.f32 %v2346, %v2348
      %v2544 = vsel %vm2081, %v2350, 0.0
      %v2545 = vadd.f32 %v2543, %v2544
      %2546 = vadd.xlane.f32.xlu0 %v2545
      %v2547 = vpop.xlane.xlu0 %2546
      %v2548 = vadd.f32 %v2352, %v2354
      %v2549 = vsel %vm2081, %v2356, 0.0
      %v2550 = vadd.f32 %v2548, %v2549
      %2551 = vadd.xlane.f32.xlu0 %v2550
      %v2552 = vpop.xlane.xlu0 %2551
      %v2553 = vadd.f32 %v2358, %v2360
      %v2554 = vsel %vm2081, %v2362, 0.0
      %v2555 = vadd.f32 %v2553, %v2554
      %2556 = vadd.xlane.f32.xlu0 %v2555
      %v2557 = vpop.xlane.xlu0 %2556
      %v2558 = vadd.f32 %v2364, %v2366
      %v2559 = vsel %vm2081, %v2368, 0.0
      %v2560 = vadd.f32 %v2558, %v2559
      %2561 = vadd.xlane.f32.xlu0 %v2560
      %v2562 = vpop.xlane.xlu0 %2561
      %v2563 = vadd.f32 %v2370, %v2372
      %v2564 = vsel %vm2081, %v2374, 0.0
      %v2565 = vadd.f32 %v2563, %v2564
      %2566 = vadd.xlane.f32.xlu0 %v2565
      %v2567 = vpop.xlane.xlu0 %2566
      %v2568 = vadd.f32 %v2376, %v2378
      %v2569 = vsel %vm2081, %v2380, 0.0
      %v2570 = vadd.f32 %v2568, %v2569
      %2571 = vadd.xlane.f32.xlu0 %v2570
      %v2572 = vpop.xlane.xlu0 %2571
      %v2573 = vadd.f32 %v2382, %v2384
      %v2574 = vsel %vm2081, %v2386, 0.0
      %v2575 = vadd.f32 %v2573, %v2574
      %2576 = vadd.xlane.f32.xlu0 %v2575
      %v2577 = vpop.xlane.xlu0 %2576
      %v2578 = vadd.f32 %v2388, %v2390
      %v2579 = vsel %vm2081, %v2392, 0.0
      %v2580 = vadd.f32 %v2578, %v2579
      %2581 = vadd.xlane.f32.xlu0 %v2580
      %v2582 = vpop.xlane.xlu0 %2581
      %v2583 = vadd.f32 %v2394, %v2396
      %v2584 = vsel %vm2081, %v2398, 0.0
      %v2585 = vadd.f32 %v2583, %v2584
      %2586 = vadd.xlane.f32.xlu0 %v2585
      %v2587 = vpop.xlane.xlu0 %2586
      %v2588 = vadd.f32 %v2400, %v2402
      %v2589 = vsel %vm2081, %v2404, 0.0
      %v2590 = vadd.f32 %v2588, %v2589
      %2591 = vadd.xlane.f32.xlu0 %v2590
      %v2592 = vpop.xlane.xlu0 %2591
      %v2593 = vadd.f32 %v2406, %v2408
      %v2594 = vsel %vm2081, %v2410, 0.0
      %v2595 = vadd.f32 %v2593, %v2594
      %2596 = vadd.xlane.f32.xlu0 %v2595
      %v2597 = vpop.xlane.xlu0 %2596
      %v2598 = vadd.f32 %v2412, %v2414
      %v2599 = vsel %vm2081, %v2416, 0.0
      %v2600 = vadd.f32 %v2598, %v2599
      %2601 = vadd.xlane.f32.xlu0 %v2600
      %v2602 = vpop.xlane.xlu0 %2601
      %v2603 = vadd.f32 %v2418, %v2420
      %v2604 = vsel %vm2081, %v2422, 0.0
      %v2605 = vadd.f32 %v2603, %v2604
      %2606 = vadd.xlane.f32.xlu0 %v2605
      %v2607 = vpop.xlane.xlu0 %2606
      %v2608 = vadd.f32 %v2424, %v2426
      %v2609 = vsel %vm2081, %v2428, 0.0
      %v2610 = vadd.f32 %v2608, %v2609
      %2611 = vadd.xlane.f32.xlu0 %v2610
      %v2612 = vpop.xlane.xlu0 %2611
      %v2613 = vadd.f32 %v2430, %v2432
      %v2614 = vsel %vm2081, %v2434, 0.0
      %v2615 = vadd.f32 %v2613, %v2614
      %2616 = vadd.xlane.f32.xlu0 %v2615
      %v2617 = vpop.xlane.xlu0 %2616
      %v2618 = vadd.f32 %v2436, %v2438
      %v2619 = vsel %vm2081, %v2440, 0.0
      %v2620 = vadd.f32 %v2618, %v2619
      %2621 = vadd.xlane.f32.xlu0 %v2620
      %v2622 = vpop.xlane.xlu0 %2621
      %v2623 = vadd.f32 %v2442, %v2444
      %v2624 = vsel %vm2081, %v2446, 0.0
      %v2625 = vadd.f32 %v2623, %v2624
      %2626 = vadd.xlane.f32.xlu0 %v2625
      %v2627 = vpop.xlane.xlu0 %2626
      %v2628 = vadd.f32 %v2448, %v2450
      %v2629 = vsel %vm2081, %v2452, 0.0
      %v2630 = vadd.f32 %v2628, %v2629
      %2631 = vadd.xlane.f32.xlu0 %v2630
      %v2632 = vpop.xlane.xlu0 %2631
      %v2633 = vadd.f32 %v2454, %v2456
      %v2634 = vsel %vm2081, %v2458, 0.0
      %v2635 = vadd.f32 %v2633, %v2634
      %2636 = vadd.xlane.f32.xlu0 %v2635
      %v2637 = vpop.xlane.xlu0 %2636
      %v2638 = vadd.f32 %v2460, %v2462
      %v2639 = vsel %vm2081, %v2464, 0.0
      %v2640 = vadd.f32 %v2638, %v2639
      %2641 = vadd.xlane.f32.xlu0 %v2640
      %v2642 = vpop.xlane.xlu0 %2641
      %v2643 = vadd.f32 %v2466, %v2468
      %v2644 = vsel %vm2081, %v2470, 0.0
      %v2645 = vadd.f32 %v2643, %v2644
      %2646 = vadd.xlane.f32.xlu0 %v2645
      %v2647 = vpop.xlane.xlu0 %2646
      %v2648 = vadd.f32 %v2472, %v2474
      %v2649 = vsel %vm2081, %v2476, 0.0
      %v2650 = vadd.f32 %v2648, %v2649
      %2651 = vadd.xlane.f32.xlu0 %v2650
      %v2652 = vpop.xlane.xlu0 %2651
      %v2653 = vadd.f32 %v2478, %v2480
      %v2654 = vsel %vm2081, %v2482, 0.0
      %v2655 = vadd.f32 %v2653, %v2654
      %2656 = vadd.xlane.f32.xlu0 %v2655
      %v2657 = vpop.xlane.xlu0 %2656
      %v2658 = vadd.f32 %v2484, %v2486
      %v2659 = vsel %vm2081, %v2488, 0.0
      %v2660 = vadd.f32 %v2658, %v2659
      %2661 = vadd.xlane.f32.xlu0 %v2660
      %v2662 = vpop.xlane.xlu0 %2661
      %v2663 = vadd.f32 %v2490, %v2492
      %v2664 = vsel %vm2081, %v2494, 0.0
      %v2665 = vadd.f32 %v2663, %v2664
      %2666 = vadd.xlane.f32.xlu0 %v2665
      %v2667 = vpop.xlane.xlu0 %2666
      %v2668 = vadd.f32 %v2496, %v2498
      %v2669 = vsel %vm2081, %v2500, 0.0
      %v2670 = vadd.f32 %v2668, %v2669
      %2671 = vadd.xlane.f32.xlu0 %v2670
      %v2672 = vpop.xlane.xlu0 %2671
      %v2673 = vadd.f32 %v2502, %v2504
      %v2674 = vsel %vm2081, %v2506, 0.0
      %v2675 = vadd.f32 %v2673, %v2674
      %2676 = vadd.xlane.f32.xlu0 %v2675
      %v2677 = vpop.xlane.xlu0 %2676
      %v2678 = vadd.f32 %v2508, %v2510
      %v2679 = vsel %vm2081, %v2512, 0.0
      %v2680 = vadd.f32 %v2678, %v2679
      %2681 = vadd.xlane.f32.xlu0 %v2680
      %v2682 = vpop.xlane.xlu0 %2681
      %v2683 = vadd.f32 %v2514, %v2516
      %v2684 = vsel %vm2081, %v2518, 0.0
      %v2685 = vadd.f32 %v2683, %v2684
      %2686 = vadd.xlane.f32.xlu0 %v2685
      %v2687 = vpop.xlane.xlu0 %2686
      %v2688 = vadd.f32 %v2520, %v2522
      %v2689 = vsel %vm2081, %v2524, 0.0
      %v2690 = vadd.f32 %v2688, %v2689
      %2691 = vadd.xlane.f32.xlu0 %v2690
      %v2692 = vpop.xlane.xlu0 %2691
      %v2693 = vadd.f32 %v2526, %v2528
      %v2694 = vsel %vm2081, %v2530, 0.0
      %v2695 = vadd.f32 %v2693, %v2694
      %2696 = vadd.xlane.f32.xlu0 %v2695
      %v2697 = vpop.xlane.xlu0 %2696
      %v2698 = vadd.f32 %v2532, %v2534
      %v2699 = vsel %vm2081, %v2536, 0.0
      %v2700 = vadd.f32 %v2698, %v2699
      %2701 = vadd.xlane.f32.xlu0 %v2700
      %v2702 = vpop.xlane.xlu0 %2701
      %v2703 = vadd.f32 %v2538, %v2540
      %v2704 = vsel %vm2081, %v2542, 0.0
      %v2705 = vadd.f32 %v2703, %v2704
      %2706 = vadd.xlane.f32.xlu0 %v2705
      %v2707 = vpop.xlane.xlu0 %2706
      %v2708 = vrcp.pop %v2547
      %v2709 = vrcp.pop %v2552
      %v2710 = vrcp.pop %v2557
      %v2711 = vrcp.pop %v2562
      %v2712 = vrcp.pop %v2567
      %v2713 = vrcp.pop %v2572
      %v2714 = vrcp.pop %v2577
      %v2715 = vrcp.pop %v2582
      %v2716 = vrcp.pop %v2587
      %v2717 = vrcp.pop %v2592
      %v2718 = vrcp.pop %v2597
      %v2719 = vrcp.pop %v2602
      %v2720 = vrcp.pop %v2607
      %v2721 = vrcp.pop %v2612
      %v2722 = vrcp.pop %v2617
      %v2723 = vrcp.pop %v2622
      %v2724 = vrcp.pop %v2627
      %v2725 = vrcp.pop %v2632
      %v2726 = vrcp.pop %v2637
      %v2727 = vrcp.pop %v2642
      %v2728 = vrcp.pop %v2647
      %v2729 = vrcp.pop %v2652
      %v2730 = vrcp.pop %v2657
      %v2731 = vrcp.pop %v2662
      %v2732 = vrcp.pop %v2667
      %v2733 = vrcp.pop %v2672
      %v2734 = vrcp.pop %v2677
      %v2735 = vrcp.pop %v2682
      %v2736 = vrcp.pop %v2687
      %v2737 = vrcp.pop %v2692
      %v2738 = vrcp.pop %v2697
      %v2739 = vrcp.pop %v2702
      %v2740 = vrcp.pop %v2707
      %v2741 = vmul.f32 %v2346, %v2708
      %v2742 = vmul.f32 %v2348, %v2708
      %v2743 = vmul.f32 %v2350, %v2708
      %v2744 = vmul.f32 %v2352, %v2709
      %v2745 = vmul.f32 %v2354, %v2709
      %v2746 = vmul.f32 %v2356, %v2709
      %v2747 = vmul.f32 %v2358, %v2710
      %v2748 = vmul.f32 %v2360, %v2710
      %v2749 = vmul.f32 %v2362, %v2710
      %v2750 = vmul.f32 %v2364, %v2711
      %v2751 = vmul.f32 %v2366, %v2711
      %v2752 = vmul.f32 %v2368, %v2711
      %v2753 = vmul.f32 %v2370, %v2712
      %v2754 = vmul.f32 %v2372, %v2712
      %v2755 = vmul.f32 %v2374, %v2712
      %v2756 = vmul.f32 %v2376, %v2713
      %v2757 = vmul.f32 %v2378, %v2713
      %v2758 = vmul.f32 %v2380, %v2713
      %v2759 = vmul.f32 %v2382, %v2714
      %v2760 = vmul.f32 %v2384, %v2714
      %v2761 = vmul.f32 %v2386, %v2714
      %v2762 = vmul.f32 %v2388, %v2715
      %v2763 = vmul.f32 %v2390, %v2715
      %v2764 = vmul.f32 %v2392, %v2715
      %v2765 = vmul.f32 %v2394, %v2716
      %v2766 = vmul.f32 %v2396, %v2716
      %v2767 = vmul.f32 %v2398, %v2716
      %v2768 = vmul.f32 %v2400, %v2717
      %v2769 = vmul.f32 %v2402, %v2717
      %v2770 = vmul.f32 %v2404, %v2717
      %v2771 = vmul.f32 %v2406, %v2718
      %v2772 = vmul.f32 %v2408, %v2718
      %v2773 = vmul.f32 %v2410, %v2718
      %v2774 = vmul.f32 %v2412, %v2719
      %v2775 = vmul.f32 %v2414, %v2719
      %v2776 = vmul.f32 %v2416, %v2719
      %v2777 = vmul.f32 %v2418, %v2720
      %v2778 = vmul.f32 %v2420, %v2720
      %v2779 = vmul.f32 %v2422, %v2720
      %v2780 = vmul.f32 %v2424, %v2721
      %v2781 = vmul.f32 %v2426, %v2721
      %v2782 = vmul.f32 %v2428, %v2721
      %v2783 = vmul.f32 %v2430, %v2722
      %v2784 = vmul.f32 %v2432, %v2722
      %v2785 = vmul.f32 %v2434, %v2722
      %v2786 = vmul.f32 %v2436, %v2723
      %v2787 = vmul.f32 %v2438, %v2723
      %v2788 = vmul.f32 %v2440, %v2723
      %v2789 = vmul.f32 %v2442, %v2724
      %v2790 = vmul.f32 %v2444, %v2724
      %v2791 = vmul.f32 %v2446, %v2724
      %v2792 = vmul.f32 %v2448, %v2725
      %v2793 = vmul.f32 %v2450, %v2725
      %v2794 = vmul.f32 %v2452, %v2725
      %v2795 = vmul.f32 %v2454, %v2726
      %v2796 = vmul.f32 %v2456, %v2726
      %v2797 = vmul.f32 %v2458, %v2726
      %v2798 = vmul.f32 %v2460, %v2727
      %v2799 = vmul.f32 %v2462, %v2727
      %v2800 = vmul.f32 %v2464, %v2727
      %v2801 = vmul.f32 %v2466, %v2728
      %v2802 = vmul.f32 %v2468, %v2728
      %v2803 = vmul.f32 %v2470, %v2728
      %v2804 = vmul.f32 %v2472, %v2729
      %v2805 = vmul.f32 %v2474, %v2729
      %v2806 = vmul.f32 %v2476, %v2729
      %v2807 = vmul.f32 %v2478, %v2730
      %v2808 = vmul.f32 %v2480, %v2730
      %v2809 = vmul.f32 %v2482, %v2730
      %v2810 = vmul.f32 %v2484, %v2731
      %v2811 = vmul.f32 %v2486, %v2731
      %v2812 = vmul.f32 %v2488, %v2731
      %v2813 = vmul.f32 %v2490, %v2732
      %v2814 = vmul.f32 %v2492, %v2732
      %v2815 = vmul.f32 %v2494, %v2732
      %v2816 = vmul.f32 %v2496, %v2733
      %v2817 = vmul.f32 %v2498, %v2733
      %v2818 = vmul.f32 %v2500, %v2733
      %v2819 = vmul.f32 %v2502, %v2734
      %v2820 = vmul.f32 %v2504, %v2734
      %v2821 = vmul.f32 %v2506, %v2734
      %v2822 = vmul.f32 %v2508, %v2735
      %v2823 = vmul.f32 %v2510, %v2735
      %v2824 = vmul.f32 %v2512, %v2735
      %v2825 = vmul.f32 %v2514, %v2736
      %v2826 = vmul.f32 %v2516, %v2736
      %v2827 = vmul.f32 %v2518, %v2736
      %v2828 = vmul.f32 %v2520, %v2737
      %v2829 = vmul.f32 %v2522, %v2737
      %v2830 = vmul.f32 %v2524, %v2737
      %v2831 = vmul.f32 %v2526, %v2738
      %v2832 = vmul.f32 %v2528, %v2738
      %v2833 = vmul.f32 %v2530, %v2738
      %v2834 = vmul.f32 %v2532, %v2739
      %v2835 = vmul.f32 %v2534, %v2739
      %v2836 = vmul.f32 %v2536, %v2739
      %v2837 = vmul.f32 %v2538, %v2740
      %v2838 = vmul.f32 %v2540, %v2740
      %v2839 = vmul.f32 %v2542, %v2740
      %v2840 = vpack.c.bf16 %v2744, %v2741
      %v2841 = vpack.c.bf16 %v2745, %v2742
      %v2842 = vpack.c.bf16 %v2746, %v2743
      %v2843 = vpack.c.bf16 %v2750, %v2747
      %v2844 = vpack.c.bf16 %v2751, %v2748
      %v2845 = vpack.c.bf16 %v2752, %v2749
      %v2846 = vpack.c.bf16 %v2756, %v2753
      %v2847 = vpack.c.bf16 %v2757, %v2754
      %v2848 = vpack.c.bf16 %v2758, %v2755
      %v2849 = vpack.c.bf16 %v2762, %v2759
      %v2850 = vpack.c.bf16 %v2763, %v2760
      %v2851 = vpack.c.bf16 %v2764, %v2761
      %v2852 = vpack.c.bf16 %v2768, %v2765
      %v2853 = vpack.c.bf16 %v2769, %v2766
      %v2854 = vpack.c.bf16 %v2770, %v2767
      %v2855 = vpack.c.bf16 %v2774, %v2771
      %v2856 = vpack.c.bf16 %v2775, %v2772
      %v2857 = vpack.c.bf16 %v2776, %v2773
      %v2858 = vpack.c.bf16 %v2780, %v2777
      %v2859 = vpack.c.bf16 %v2781, %v2778
      %v2860 = vpack.c.bf16 %v2782, %v2779
      %v2861 = vpack.c.bf16 %v2786, %v2783
      %v2862 = vpack.c.bf16 %v2787, %v2784
      %v2863 = vpack.c.bf16 %v2788, %v2785
      %v2864 = vpack.c.bf16 %v2792, %v2789
      %v2865 = vpack.c.bf16 %v2793, %v2790
      %v2866 = vpack.c.bf16 %v2794, %v2791
      %v2867 = vpack.c.bf16 %v2798, %v2795
      %v2868 = vpack.c.bf16 %v2799, %v2796
      %v2869 = vpack.c.bf16 %v2800, %v2797
      %v2870 = vpack.c.bf16 %v2804, %v2801
      %v2871 = vpack.c.bf16 %v2805, %v2802
      %v2872 = vpack.c.bf16 %v2806, %v2803
      %v2873 = vpack.c.bf16 %v2810, %v2807
      %v2874 = vpack.c.bf16 %v2811, %v2808
      %v2875 = vpack.c.bf16 %v2812, %v2809
      %v2876 = vpack.c.bf16 %v2816, %v2813
      %v2877 = vpack.c.bf16 %v2817, %v2814
      %v2878 = vpack.c.bf16 %v2818, %v2815
      %v2879 = vpack.c.bf16 %v2822, %v2819
      %v2880 = vpack.c.bf16 %v2823, %v2820
      %v2881 = vpack.c.bf16 %v2824, %v2821
      %v2882 = vpack.c.bf16 %v2828, %v2825
      %v2883 = vpack.c.bf16 %v2829, %v2826
      %v2884 = vpack.c.bf16 %v2830, %v2827
      %v2885 = vpack.c.bf16 %v2834, %v2831
      %v2886 = vpack.c.bf16 %v2835, %v2832
      %v2887 = vpack.c.bf16 %v2836, %v2833
      %v2888 = vpack.c.bf16 %v2837, %v2837
      %v2889 = vpack.c.bf16 %v2838, %v2838
      %v2890 = vpack.c.bf16 %v2839, %v2839
      %v2892 = vsel %vm2081, %v2842, 0
      %v2895 = vsel %vm2081, %v2845, 0
      %v2898 = vsel %vm2081, %v2848, 0
      %v2901 = vsel %vm2081, %v2851, 0
      %v2904 = vsel %vm2081, %v2854, 0
      %v2907 = vsel %vm2081, %v2857, 0
      %v2910 = vsel %vm2081, %v2860, 0
      %v2913 = vsel %vm2081, %v2863, 0
      %v2916 = vsel %vm2081, %v2866, 0
      %v2919 = vsel %vm2081, %v2869, 0
      %v2922 = vsel %vm2081, %v2872, 0
      %v2925 = vsel %vm2081, %v2875, 0
      %v2928 = vsel %vm2081, %v2878, 0
      %v2931 = vsel %vm2081, %v2881, 0
      %v2934 = vsel %vm2081, %v2884, 0
      %v2937 = vsel %vm2081, %v2887, 0
      %v2940 = vsel %vm2081, %v2890, 0
      %vm2942 = vcmask 1043456
      %v2944 = vsel %vm2942, %v1748, 0
      %2946 = vmatpush.bf16.msra.mxu0 %v1739
      %2947 = vmatpush.bf16.msra.mxu0 %v1738
      %2948 = vmatpush.bf16.msra.mxu0 %v1737
      %2949 = vmatpush.bf16.msra.mxu0 %v1736
      %2950 = vmatpush.bf16.msra.mxu0 %v1735
      %2951 = vmatpush.bf16.msra.mxu0 %v1734
      %2952 = vmatpush.bf16.msra.mxu0 %v1733
      %2953 = vmatpush.bf16.msra.mxu0 %v1732
      %2954 = vmatmul.bf16.gmra.mxu0 %v2840
      %v2955 = vpop.f32.mrf.mxu0
      %v2956 = vadd.f32 0.0, %v2955
      %v2957 = vpop.f32.mrf.mxu0
      %v2958 = vadd.f32 0.0, %v2957
      %2959 = vmatmul.bf16.gmra.mxu0 %v2843
      %v2960 = vpop.f32.mrf.mxu0
      %v2961 = vadd.f32 0.0, %v2960
      %v2962 = vpop.f32.mrf.mxu0
      %v2963 = vadd.f32 0.0, %v2962
      %2964 = vmatmul.bf16.gmra.mxu0 %v2846
      %v2965 = vpop.f32.mrf.mxu0
      %v2966 = vadd.f32 0.0, %v2965
      %v2967 = vpop.f32.mrf.mxu0
      %v2968 = vadd.f32 0.0, %v2967
      %2969 = vmatmul.bf16.gmra.mxu0 %v2849
      %v2970 = vpop.f32.mrf.mxu0
      %v2971 = vadd.f32 0.0, %v2970
      %v2972 = vpop.f32.mrf.mxu0
      %v2973 = vadd.f32 0.0, %v2972
      %2974 = vmatmul.bf16.gmra.mxu0 %v2852
      %v2975 = vpop.f32.mrf.mxu0
      %v2976 = vadd.f32 0.0, %v2975
      %v2977 = vpop.f32.mrf.mxu0
      %v2978 = vadd.f32 0.0, %v2977
      %2979 = vmatmul.bf16.gmra.mxu0 %v2855
      %v2980 = vpop.f32.mrf.mxu0
      %v2981 = vadd.f32 0.0, %v2980
      %v2982 = vpop.f32.mrf.mxu0
      %v2983 = vadd.f32 0.0, %v2982
      %2984 = vmatmul.bf16.gmra.mxu0 %v2858
      %v2985 = vpop.f32.mrf.mxu0
      %v2986 = vadd.f32 0.0, %v2985
      %v2987 = vpop.f32.mrf.mxu0
      %v2988 = vadd.f32 0.0, %v2987
      %2989 = vmatmul.bf16.gmra.mxu0 %v2861
      %v2990 = vpop.f32.mrf.mxu0
      %v2991 = vadd.f32 0.0, %v2990
      %v2992 = vpop.f32.mrf.mxu0
      %v2993 = vadd.f32 0.0, %v2992
      %2994 = vmatmul.bf16.gmra.mxu0 %v2864
      %v2995 = vpop.f32.mrf.mxu0
      %v2996 = vadd.f32 0.0, %v2995
      %v2997 = vpop.f32.mrf.mxu0
      %v2998 = vadd.f32 0.0, %v2997
      %2999 = vmatmul.bf16.gmra.mxu0 %v2867
      %v3000 = vpop.f32.mrf.mxu0
      %v3001 = vadd.f32 0.0, %v3000
      %v3002 = vpop.f32.mrf.mxu0
      %v3003 = vadd.f32 0.0, %v3002
      %3004 = vmatmul.bf16.gmra.mxu0 %v2870
      %v3005 = vpop.f32.mrf.mxu0
      %v3006 = vadd.f32 0.0, %v3005
      %v3007 = vpop.f32.mrf.mxu0
      %v3008 = vadd.f32 0.0, %v3007
      %3009 = vmatmul.bf16.gmra.mxu0 %v2873
      %v3010 = vpop.f32.mrf.mxu0
      %v3011 = vadd.f32 0.0, %v3010
      %v3012 = vpop.f32.mrf.mxu0
      %v3013 = vadd.f32 0.0, %v3012
      %3014 = vmatmul.bf16.gmra.mxu0 %v2876
      %v3015 = vpop.f32.mrf.mxu0
      %v3016 = vadd.f32 0.0, %v3015
      %v3017 = vpop.f32.mrf.mxu0
      %v3018 = vadd.f32 0.0, %v3017
      %3019 = vmatmul.bf16.gmra.mxu0 %v2879
      %v3020 = vpop.f32.mrf.mxu0
      %v3021 = vadd.f32 0.0, %v3020
      %v3022 = vpop.f32.mrf.mxu0
      %v3023 = vadd.f32 0.0, %v3022
      %3024 = vmatmul.bf16.gmra.mxu0 %v2882
      %v3025 = vpop.f32.mrf.mxu0
      %v3026 = vadd.f32 0.0, %v3025
      %v3027 = vpop.f32.mrf.mxu0
      %v3028 = vadd.f32 0.0, %v3027
      %3029 = vmatmul.bf16.gmra.mxu0 %v2885
      %v3030 = vpop.f32.mrf.mxu0
      %v3031 = vadd.f32 0.0, %v3030
      %v3032 = vpop.f32.mrf.mxu0
      %v3033 = vadd.f32 0.0, %v3032
      %3034 = vmatmul.bf16.gmra.mxu0 %v2888
      %v3035 = vpop.f32.mrf.mxu0
      %v3036 = vadd.f32 0.0, %v3035
      %v3037 = vpop.f32.mrf.mxu0
      %3038 = vdwg.mxu0
      %3039 = vmatpush.bf16.msra.mxu0 %v1747
      %3040 = vmatpush.bf16.msra.mxu0 %v1746
      %3041 = vmatpush.bf16.msra.mxu0 %v1745
      %3042 = vmatpush.bf16.msra.mxu0 %v1744
      %3043 = vmatpush.bf16.msra.mxu0 %v1743
      %3044 = vmatpush.bf16.msra.mxu0 %v1742
      %3045 = vmatpush.bf16.msra.mxu0 %v1741
      %3046 = vmatpush.bf16.msra.mxu0 %v1740
      %3047 = vmatmul.bf16.gmra.mxu0 %v2841
      %v3048 = vpop.f32.mrf.mxu0
      %v3049 = vadd.f32 %v2956, %v3048
      %v3050 = vpop.f32.mrf.mxu0
      %v3051 = vadd.f32 %v2958, %v3050
      %3052 = vmatmul.bf16.gmra.mxu0 %v2844
      %v3053 = vpop.f32.mrf.mxu0
      %v3054 = vadd.f32 %v2961, %v3053
      %v3055 = vpop.f32.mrf.mxu0
      %v3056 = vadd.f32 %v2963, %v3055
      %3057 = vmatmul.bf16.gmra.mxu0 %v2847
      %v3058 = vpop.f32.mrf.mxu0
      %v3059 = vadd.f32 %v2966, %v3058
      %v3060 = vpop.f32.mrf.mxu0
      %v3061 = vadd.f32 %v2968, %v3060
      %3062 = vmatmul.bf16.gmra.mxu0 %v2850
      %v3063 = vpop.f32.mrf.mxu0
      %v3064 = vadd.f32 %v2971, %v3063
      %v3065 = vpop.f32.mrf.mxu0
      %v3066 = vadd.f32 %v2973, %v3065
      %3067 = vmatmul.bf16.gmra.mxu0 %v2853
      %v3068 = vpop.f32.mrf.mxu0
      %v3069 = vadd.f32 %v2976, %v3068
      %v3070 = vpop.f32.mrf.mxu0
      %v3071 = vadd.f32 %v2978, %v3070
      %3072 = vmatmul.bf16.gmra.mxu0 %v2856
      %v3073 = vpop.f32.mrf.mxu0
      %v3074 = vadd.f32 %v2981, %v3073
      %v3075 = vpop.f32.mrf.mxu0
      %v3076 = vadd.f32 %v2983, %v3075
      %3077 = vmatmul.bf16.gmra.mxu0 %v2859
      %v3078 = vpop.f32.mrf.mxu0
      %v3079 = vadd.f32 %v2986, %v3078
      %v3080 = vpop.f32.mrf.mxu0
      %v3081 = vadd.f32 %v2988, %v3080
      %3082 = vmatmul.bf16.gmra.mxu0 %v2862
      %v3083 = vpop.f32.mrf.mxu0
      %v3084 = vadd.f32 %v2991, %v3083
      %v3085 = vpop.f32.mrf.mxu0
      %v3086 = vadd.f32 %v2993, %v3085
      %3087 = vmatmul.bf16.gmra.mxu0 %v2865
      %v3088 = vpop.f32.mrf.mxu0
      %v3089 = vadd.f32 %v2996, %v3088
      %v3090 = vpop.f32.mrf.mxu0
      %v3091 = vadd.f32 %v2998, %v3090
      %3092 = vmatmul.bf16.gmra.mxu0 %v2868
      %v3093 = vpop.f32.mrf.mxu0
      %v3094 = vadd.f32 %v3001, %v3093
      %v3095 = vpop.f32.mrf.mxu0
      %v3096 = vadd.f32 %v3003, %v3095
      %3097 = vmatmul.bf16.gmra.mxu0 %v2871
      %v3098 = vpop.f32.mrf.mxu0
      %v3099 = vadd.f32 %v3006, %v3098
      %v3100 = vpop.f32.mrf.mxu0
      %v3101 = vadd.f32 %v3008, %v3100
      %3102 = vmatmul.bf16.gmra.mxu0 %v2874
      %v3103 = vpop.f32.mrf.mxu0
      %v3104 = vadd.f32 %v3011, %v3103
      %v3105 = vpop.f32.mrf.mxu0
      %v3106 = vadd.f32 %v3013, %v3105
      %3107 = vmatmul.bf16.gmra.mxu0 %v2877
      %v3108 = vpop.f32.mrf.mxu0
      %v3109 = vadd.f32 %v3016, %v3108
      %v3110 = vpop.f32.mrf.mxu0
      %v3111 = vadd.f32 %v3018, %v3110
      %3112 = vmatmul.bf16.gmra.mxu0 %v2880
      %v3113 = vpop.f32.mrf.mxu0
      %v3114 = vadd.f32 %v3021, %v3113
      %v3115 = vpop.f32.mrf.mxu0
      %v3116 = vadd.f32 %v3023, %v3115
      %3117 = vmatmul.bf16.gmra.mxu0 %v2883
      %v3118 = vpop.f32.mrf.mxu0
      %v3119 = vadd.f32 %v3026, %v3118
      %v3120 = vpop.f32.mrf.mxu0
      %v3121 = vadd.f32 %v3028, %v3120
      %3122 = vmatmul.bf16.gmra.mxu0 %v2886
      %v3123 = vpop.f32.mrf.mxu0
      %v3124 = vadd.f32 %v3031, %v3123
      %v3125 = vpop.f32.mrf.mxu0
      %v3126 = vadd.f32 %v3033, %v3125
      %3127 = vmatmul.bf16.gmra.mxu0 %v2889
      %v3128 = vpop.f32.mrf.mxu0
      %v3129 = vadd.f32 %v3036, %v3128
      %v3130 = vpop.f32.mrf.mxu0
      %3131 = vdwg.mxu0
      %3132 = vmatpush.bf16.msra.mxu0 0
      %3133 = vmatpush.bf16.msra.mxu0 0
      %3134 = vmatpush.bf16.msra.mxu0 0
      %3135 = vmatpush.bf16.msra.mxu0 0
      %3136 = vmatpush.bf16.msra.mxu0 0
      %3137 = vmatpush.bf16.msra.mxu0 0
      %3138 = vmatpush.bf16.msra.mxu0 0
      %3139 = vmatpush.bf16.msra.mxu0 %v2944
      %3140 = vmatmul.bf16.gmra.mxu0 %v2892
      %v3141 = vpop.f32.mrf.mxu0
      %v3142 = vadd.f32 %v3049, %v3141
      %v3143 = vpop.f32.mrf.mxu0
      %v3144 = vadd.f32 %v3051, %v3143
      %3145 = vmatmul.bf16.gmra.mxu0 %v2895
      %v3146 = vpop.f32.mrf.mxu0
      %v3147 = vadd.f32 %v3054, %v3146
      %v3148 = vpop.f32.mrf.mxu0
      %v3149 = vadd.f32 %v3056, %v3148
      %3150 = vmatmul.bf16.gmra.mxu0 %v2898
      %v3151 = vpop.f32.mrf.mxu0
      %v3152 = vadd.f32 %v3059, %v3151
      %v3153 = vpop.f32.mrf.mxu0
      %v3154 = vadd.f32 %v3061, %v3153
      %3155 = vmatmul.bf16.gmra.mxu0 %v2901
      %v3156 = vpop.f32.mrf.mxu0
      %v3157 = vadd.f32 %v3064, %v3156
      %v3158 = vpop.f32.mrf.mxu0
      %v3159 = vadd.f32 %v3066, %v3158
      %3160 = vmatmul.bf16.gmra.mxu0 %v2904
      %v3161 = vpop.f32.mrf.mxu0
      %v3162 = vadd.f32 %v3069, %v3161
      %v3163 = vpop.f32.mrf.mxu0
      %v3164 = vadd.f32 %v3071, %v3163
      %3165 = vmatmul.bf16.gmra.mxu0 %v2907
      %v3166 = vpop.f32.mrf.mxu0
      %v3167 = vadd.f32 %v3074, %v3166
      %v3168 = vpop.f32.mrf.mxu0
      %v3169 = vadd.f32 %v3076, %v3168
      %3170 = vmatmul.bf16.gmra.mxu0 %v2910
      %v3171 = vpop.f32.mrf.mxu0
      %v3172 = vadd.f32 %v3079, %v3171
      %v3173 = vpop.f32.mrf.mxu0
      %v3174 = vadd.f32 %v3081, %v3173
      %3175 = vmatmul.bf16.gmra.mxu0 %v2913
      %v3176 = vpop.f32.mrf.mxu0
      %v3177 = vadd.f32 %v3084, %v3176
      %v3178 = vpop.f32.mrf.mxu0
      %v3179 = vadd.f32 %v3086, %v3178
      %3180 = vmatmul.bf16.gmra.mxu0 %v2916
      %v3181 = vpop.f32.mrf.mxu0
      %v3182 = vadd.f32 %v3089, %v3181
      %v3183 = vpop.f32.mrf.mxu0
      %v3184 = vadd.f32 %v3091, %v3183
      %3185 = vmatmul.bf16.gmra.mxu0 %v2919
      %v3186 = vpop.f32.mrf.mxu0
      %v3187 = vadd.f32 %v3094, %v3186
      %v3188 = vpop.f32.mrf.mxu0
      %v3189 = vadd.f32 %v3096, %v3188
      %3190 = vmatmul.bf16.gmra.mxu0 %v2922
      %v3191 = vpop.f32.mrf.mxu0
      %v3192 = vadd.f32 %v3099, %v3191
      %v3193 = vpop.f32.mrf.mxu0
      %v3194 = vadd.f32 %v3101, %v3193
      %3195 = vmatmul.bf16.gmra.mxu0 %v2925
      %v3196 = vpop.f32.mrf.mxu0
      %v3197 = vadd.f32 %v3104, %v3196
      %v3198 = vpop.f32.mrf.mxu0
      %v3199 = vadd.f32 %v3106, %v3198
      %3200 = vmatmul.bf16.gmra.mxu0 %v2928
      %v3201 = vpop.f32.mrf.mxu0
      %v3202 = vadd.f32 %v3109, %v3201
      %v3203 = vpop.f32.mrf.mxu0
      %v3204 = vadd.f32 %v3111, %v3203
      %3205 = vmatmul.bf16.gmra.mxu0 %v2931
      %v3206 = vpop.f32.mrf.mxu0
      %v3207 = vadd.f32 %v3114, %v3206
      %v3208 = vpop.f32.mrf.mxu0
      %v3209 = vadd.f32 %v3116, %v3208
      %3210 = vmatmul.bf16.gmra.mxu0 %v2934
      %v3211 = vpop.f32.mrf.mxu0
      %v3212 = vadd.f32 %v3119, %v3211
      %v3213 = vpop.f32.mrf.mxu0
      %v3214 = vadd.f32 %v3121, %v3213
      %3215 = vmatmul.bf16.gmra.mxu0 %v2937
      %v3216 = vpop.f32.mrf.mxu0
      %v3217 = vadd.f32 %v3124, %v3216
      %v3218 = vpop.f32.mrf.mxu0
      %v3219 = vadd.f32 %v3126, %v3218
      %3220 = vmatmul.bf16.gmra.mxu0 %v2940
      %v3221 = vpop.f32.mrf.mxu0
      %v3222 = vadd.f32 %v3129, %v3221
      %v3223 = vpop.f32.mrf.mxu0
      %3224 = vdwg.mxu0
      %v3225 = vpack.c.bf16 %v3144, %v3142
      %v3226 = vpack.c.bf16 %v3149, %v3147
      %v3227 = vpack.c.bf16 %v3154, %v3152
      %v3228 = vpack.c.bf16 %v3159, %v3157
      %v3229 = vpack.c.bf16 %v3164, %v3162
      %v3230 = vpack.c.bf16 %v3169, %v3167
      %v3231 = vpack.c.bf16 %v3174, %v3172
      %v3232 = vpack.c.bf16 %v3179, %v3177
      %v3233 = vpack.c.bf16 %v3184, %v3182
      %v3234 = vpack.c.bf16 %v3189, %v3187
      %v3235 = vpack.c.bf16 %v3194, %v3192
      %v3236 = vpack.c.bf16 %v3199, %v3197
      %v3237 = vpack.c.bf16 %v3204, %v3202
      %v3238 = vpack.c.bf16 %v3209, %v3207
      %v3239 = vpack.c.bf16 %v3214, %v3212
      %v3240 = vpack.c.bf16 %v3219, %v3217
      %v3241 = vpack.c.bf16 %v3222, %v3222
      %v3242 = vld [vmem:[%s6] sm:$0xf]
      %v3243 = vld [vmem:[%s6 + $0x4] sm:$0xf]
      %s3244 = scalar_lea.vmem %s4, 32
      %v3245 = vld [vmem:[%s3244] sm:$0xf]
      %v3246 = vld [vmem:[%s3244 + $0x4] sm:$0xf]
      %v3247 = vld [vmem:[%s3244 + $0x8] sm:$0xf]
      %v3248 = vld [vmem:[%s3244 + $0xc] sm:$0xf]
      %v3249 = vld [vmem:[%s3244 + $0x10] sm:$0xf]
      %v3250 = vld [vmem:[%s3244 + $0x14] sm:$0xf]
      %v3251 = vld [vmem:[%s3244 + $0x18] sm:$0xf]
      %v3252 = vld [vmem:[%s3244 + $0x1c] sm:$0xf]
      %v3261 = vunpack.c.l.b16 %v3245
      %v3262 = vunpack.c.l.b16 %v3246
      %v3263 = vunpack.c.l.b16 %v3247
      %v3264 = vunpack.c.l.b16 %v3248
      %v3265 = vunpack.c.l.b16 %v3249
      %v3266 = vunpack.c.l.b16 %v3250
      %v3267 = vunpack.c.l.b16 %v3251
      %v3268 = vunpack.c.l.b16 %v3252
      %v3269 = vpack.c.b16 %v3262, %v3261
      %v3270 = vpack.c.b16 %v3264, %v3263
      %v3271 = vpack.c.b16 %v3266, %v3265
      %v3272 = vpack.c.b16 %v3268, %v3267
      %3277 = vmatpush.bf16.msra.mxu0 0
      %3278 = vmatpush.bf16.msra.mxu0 0
      %3279 = vmatpush.bf16.msra.mxu0 0
      %3280 = vmatpush.bf16.msra.mxu0 0
      %3281 = vmatpush.bf16.msra.mxu0 %v3272
      %3282 = vmatpush.bf16.msra.mxu0 %v3271
      %3283 = vmatpush.bf16.msra.mxu0 %v3270
      %3284 = vmatpush.bf16.msra.mxu0 %v3269
      %3285 = vmatmul.bf16.gmra.mxu0 %v1414
      %v3286 = vpop.f32.mrf.mxu0
      %v3287 = vadd.f32 0.0, %v3286
      %v3288 = vpop.f32.mrf.mxu0
      %v3289 = vadd.f32 0.0, %v3288
      %3290 = vmatmul.bf16.gmra.mxu0 %v1417
      %v3291 = vpop.f32.mrf.mxu0
      %v3292 = vadd.f32 0.0, %v3291
      %v3293 = vpop.f32.mrf.mxu0
      %v3294 = vadd.f32 0.0, %v3293
      %3295 = vmatmul.bf16.gmra.mxu0 %v1420
      %v3296 = vpop.f32.mrf.mxu0
      %v3297 = vadd.f32 0.0, %v3296
      %v3298 = vpop.f32.mrf.mxu0
      %v3299 = vadd.f32 0.0, %v3298
      %3300 = vmatmul.bf16.gmra.mxu0 %v1423
      %v3301 = vpop.f32.mrf.mxu0
      %v3302 = vadd.f32 0.0, %v3301
      %v3303 = vpop.f32.mrf.mxu0
      %v3304 = vadd.f32 0.0, %v3303
      %3305 = vmatmul.bf16.gmra.mxu0 %v1426
      %v3306 = vpop.f32.mrf.mxu0
      %v3307 = vadd.f32 0.0, %v3306
      %v3308 = vpop.f32.mrf.mxu0
      %v3309 = vadd.f32 0.0, %v3308
      %3310 = vmatmul.bf16.gmra.mxu0 %v1429
      %v3311 = vpop.f32.mrf.mxu0
      %v3312 = vadd.f32 0.0, %v3311
      %v3313 = vpop.f32.mrf.mxu0
      %v3314 = vadd.f32 0.0, %v3313
      %3315 = vmatmul.bf16.gmra.mxu0 %v1432
      %v3316 = vpop.f32.mrf.mxu0
      %v3317 = vadd.f32 0.0, %v3316
      %v3318 = vpop.f32.mrf.mxu0
      %v3319 = vadd.f32 0.0, %v3318
      %3320 = vmatmul.bf16.gmra.mxu0 %v1435
      %v3321 = vpop.f32.mrf.mxu0
      %v3322 = vadd.f32 0.0, %v3321
      %v3323 = vpop.f32.mrf.mxu0
      %v3324 = vadd.f32 0.0, %v3323
      %3325 = vmatmul.bf16.gmra.mxu0 %v1438
      %v3326 = vpop.f32.mrf.mxu0
      %v3327 = vadd.f32 0.0, %v3326
      %v3328 = vpop.f32.mrf.mxu0
      %v3329 = vadd.f32 0.0, %v3328
      %3330 = vmatmul.bf16.gmra.mxu0 %v1441
      %v3331 = vpop.f32.mrf.mxu0
      %v3332 = vadd.f32 0.0, %v3331
      %v3333 = vpop.f32.mrf.mxu0
      %v3334 = vadd.f32 0.0, %v3333
      %3335 = vmatmul.bf16.gmra.mxu0 %v1444
      %v3336 = vpop.f32.mrf.mxu0
      %v3337 = vadd.f32 0.0, %v3336
      %v3338 = vpop.f32.mrf.mxu0
      %v3339 = vadd.f32 0.0, %v3338
      %3340 = vmatmul.bf16.gmra.mxu0 %v1447
      %v3341 = vpop.f32.mrf.mxu0
      %v3342 = vadd.f32 0.0, %v3341
      %v3343 = vpop.f32.mrf.mxu0
      %v3344 = vadd.f32 0.0, %v3343
      %3345 = vmatmul.bf16.gmra.mxu0 %v1450
      %v3346 = vpop.f32.mrf.mxu0
      %v3347 = vadd.f32 0.0, %v3346
      %v3348 = vpop.f32.mrf.mxu0
      %v3349 = vadd.f32 0.0, %v3348
      %3350 = vmatmul.bf16.gmra.mxu0 %v1453
      %v3351 = vpop.f32.mrf.mxu0
      %v3352 = vadd.f32 0.0, %v3351
      %v3353 = vpop.f32.mrf.mxu0
      %v3354 = vadd.f32 0.0, %v3353
      %3355 = vmatmul.bf16.gmra.mxu0 %v1456
      %v3356 = vpop.f32.mrf.mxu0
      %v3357 = vadd.f32 0.0, %v3356
      %v3358 = vpop.f32.mrf.mxu0
      %v3359 = vadd.f32 0.0, %v3358
      %3360 = vmatmul.bf16.gmra.mxu0 %v1459
      %v3361 = vpop.f32.mrf.mxu0
      %v3362 = vadd.f32 0.0, %v3361
      %v3363 = vpop.f32.mrf.mxu0
      %v3364 = vadd.f32 0.0, %v3363
      %3365 = vmatmul.bf16.gmra.mxu0 %v1462
      %v3366 = vpop.f32.mrf.mxu0
      %v3367 = vadd.f32 0.0, %v3366
      %v3368 = vpop.f32.mrf.mxu0
      %3369 = vdwg.mxu0
      %s3370 = scalar_lea.vmem %s5, 32
      %v3371 = vld [vmem:[%s3370] sm:$0xf]
      %v3372 = vld [vmem:[%s3370 + $0x4] sm:$0xf]
      %v3373 = vld [vmem:[%s3370 + $0x8] sm:$0xf]
      %v3374 = vld [vmem:[%s3370 + $0xc] sm:$0xf]
      %v3375 = vld [vmem:[%s3370 + $0x10] sm:$0xf]
      %v3376 = vld [vmem:[%s3370 + $0x14] sm:$0xf]
      %v3377 = vld [vmem:[%s3370 + $0x18] sm:$0xf]
      %v3378 = vld [vmem:[%s3370 + $0x1c] sm:$0xf]
      %v3387 = vunpack.c.l.b16 %v3371
      %v3388 = vunpack.c.l.b16 %v3372
      %v3389 = vunpack.c.l.b16 %v3373
      %v3390 = vunpack.c.l.b16 %v3374
      %v3391 = vunpack.c.l.b16 %v3375
      %v3392 = vunpack.c.l.b16 %v3376
      %v3393 = vunpack.c.l.b16 %v3377
      %v3394 = vunpack.c.l.b16 %v3378
      %v3395 = vpack.c.b16 %v3388, %v3387
      %v3396 = vpack.c.b16 %v3390, %v3389
      %v3397 = vpack.c.b16 %v3392, %v3391
      %v3398 = vpack.c.b16 %v3394, %v3393
      %3403 = vmatpush.bf16.msra.mxu0 0
      %3404 = vmatpush.bf16.msra.mxu0 0
      %3405 = vmatpush.bf16.msra.mxu0 0
      %3406 = vmatpush.bf16.msra.mxu0 0
      %3407 = vmatpush.bf16.msra.mxu0 %v3398
      %3408 = vmatpush.bf16.msra.mxu0 %v3397
      %3409 = vmatpush.bf16.msra.mxu0 %v3396
      %3410 = vmatpush.bf16.msra.mxu0 %v3395
      %3411 = vmatmul.bf16.gmra.mxu0 %v1414
      %v3412 = vpop.f32.mrf.mxu0
      %v3413 = vadd.f32 0.0, %v3412
      %v3414 = vpop.f32.mrf.mxu0
      %v3415 = vadd.f32 0.0, %v3414
      %3416 = vmatmul.bf16.gmra.mxu0 %v1417
      %v3417 = vpop.f32.mrf.mxu0
      %v3418 = vadd.f32 0.0, %v3417
      %v3419 = vpop.f32.mrf.mxu0
      %v3420 = vadd.f32 0.0, %v3419
      %3421 = vmatmul.bf16.gmra.mxu0 %v1420
      %v3422 = vpop.f32.mrf.mxu0
      %v3423 = vadd.f32 0.0, %v3422
      %v3424 = vpop.f32.mrf.mxu0
      %v3425 = vadd.f32 0.0, %v3424
      %3426 = vmatmul.bf16.gmra.mxu0 %v1423
      %v3427 = vpop.f32.mrf.mxu0
      %v3428 = vadd.f32 0.0, %v3427
      %v3429 = vpop.f32.mrf.mxu0
      %v3430 = vadd.f32 0.0, %v3429
      %3431 = vmatmul.bf16.gmra.mxu0 %v1426
      %v3432 = vpop.f32.mrf.mxu0
      %v3433 = vadd.f32 0.0, %v3432
      %v3434 = vpop.f32.mrf.mxu0
      %v3435 = vadd.f32 0.0, %v3434
      %3436 = vmatmul.bf16.gmra.mxu0 %v1429
      %v3437 = vpop.f32.mrf.mxu0
      %v3438 = vadd.f32 0.0, %v3437
      %v3439 = vpop.f32.mrf.mxu0
      %v3440 = vadd.f32 0.0, %v3439
      %3441 = vmatmul.bf16.gmra.mxu0 %v1432
      %v3442 = vpop.f32.mrf.mxu0
      %v3443 = vadd.f32 0.0, %v3442
      %v3444 = vpop.f32.mrf.mxu0
      %v3445 = vadd.f32 0.0, %v3444
      %3446 = vmatmul.bf16.gmra.mxu0 %v1435
      %v3447 = vpop.f32.mrf.mxu0
      %v3448 = vadd.f32 0.0, %v3447
      %v3449 = vpop.f32.mrf.mxu0
      %v3450 = vadd.f32 0.0, %v3449
      %3451 = vmatmul.bf16.gmra.mxu0 %v1438
      %v3452 = vpop.f32.mrf.mxu0
      %v3453 = vadd.f32 0.0, %v3452
      %v3454 = vpop.f32.mrf.mxu0
      %v3455 = vadd.f32 0.0, %v3454
      %3456 = vmatmul.bf16.gmra.mxu0 %v1441
      %v3457 = vpop.f32.mrf.mxu0
      %v3458 = vadd.f32 0.0, %v3457
      %v3459 = vpop.f32.mrf.mxu0
      %v3460 = vadd.f32 0.0, %v3459
      %3461 = vmatmul.bf16.gmra.mxu0 %v1444
      %v3462 = vpop.f32.mrf.mxu0
      %v3463 = vadd.f32 0.0, %v3462
      %v3464 = vpop.f32.mrf.mxu0
      %v3465 = vadd.f32 0.0, %v3464
      %3466 = vmatmul.bf16.gmra.mxu0 %v1447
      %v3467 = vpop.f32.mrf.mxu0
      %v3468 = vadd.f32 0.0, %v3467
      %v3469 = vpop.f32.mrf.mxu0
      %v3470 = vadd.f32 0.0, %v3469
      %3471 = vmatmul.bf16.gmra.mxu0 %v1450
      %v3472 = vpop.f32.mrf.mxu0
      %v3473 = vadd.f32 0.0, %v3472
      %v3474 = vpop.f32.mrf.mxu0
      %v3475 = vadd.f32 0.0, %v3474
      %3476 = vmatmul.bf16.gmra.mxu0 %v1453
      %v3477 = vpop.f32.mrf.mxu0
      %v3478 = vadd.f32 0.0, %v3477
      %v3479 = vpop.f32.mrf.mxu0
      %v3480 = vadd.f32 0.0, %v3479
      %3481 = vmatmul.bf16.gmra.mxu0 %v1456
      %v3482 = vpop.f32.mrf.mxu0
      %v3483 = vadd.f32 0.0, %v3482
      %v3484 = vpop.f32.mrf.mxu0
      %v3485 = vadd.f32 0.0, %v3484
      %3486 = vmatmul.bf16.gmra.mxu0 %v1459
      %v3487 = vpop.f32.mrf.mxu0
      %v3488 = vadd.f32 0.0, %v3487
      %v3489 = vpop.f32.mrf.mxu0
      %v3490 = vadd.f32 0.0, %v3489
      %3491 = vmatmul.bf16.gmra.mxu0 %v1462
      %v3492 = vpop.f32.mrf.mxu0
      %v3493 = vadd.f32 0.0, %v3492
      %v3494 = vpop.f32.mrf.mxu0
      %3495 = vdwg.mxu0
      %v3496 = vmul.f32 %v3287, 0.5
      %v3497 = vmul.f32 %v3289, 0.5
      %v3498 = vmul.f32 %v3292, 0.5
      %v3499 = vmul.f32 %v3294, 0.5
      %v3500 = vmul.f32 %v3297, 0.5
      %v3501 = vmul.f32 %v3299, 0.5
      %v3502 = vmul.f32 %v3302, 0.5
      %v3503 = vmul.f32 %v3304, 0.5
      %v3504 = vmul.f32 %v3307, 0.5
      %v3505 = vmul.f32 %v3309, 0.5
      %v3506 = vmul.f32 %v3312, 0.5
      %v3507 = vmul.f32 %v3314, 0.5
      %v3508 = vmul.f32 %v3317, 0.5
      %v3509 = vmul.f32 %v3319, 0.5
      %v3510 = vmul.f32 %v3322, 0.5
      %v3511 = vmul.f32 %v3324, 0.5
      %v3512 = vmul.f32 %v3327, 0.5
      %v3513 = vmul.f32 %v3329, 0.5
      %v3514 = vmul.f32 %v3332, 0.5
      %v3515 = vmul.f32 %v3334, 0.5
      %v3516 = vmul.f32 %v3337, 0.5
      %v3517 = vmul.f32 %v3339, 0.5
      %v3518 = vmul.f32 %v3342, 0.5
      %v3519 = vmul.f32 %v3344, 0.5
      %v3520 = vmul.f32 %v3347, 0.5
      %v3521 = vmul.f32 %v3349, 0.5
      %v3522 = vmul.f32 %v3352, 0.5
      %v3523 = vmul.f32 %v3354, 0.5
      %v3524 = vmul.f32 %v3357, 0.5
      %v3525 = vmul.f32 %v3359, 0.5
      %v3526 = vmul.f32 %v3362, 0.5
      %v3527 = vmul.f32 %v3364, 0.5
      %v3528 = vmul.f32 %v3367, 0.5
      %v3529 = vpack.c.bf16 %v3497, %v3496
      %v3530 = vpack.c.bf16 %v3499, %v3498
      %v3531 = vpack.c.bf16 %v3501, %v3500
      %v3532 = vpack.c.bf16 %v3503, %v3502
      %v3533 = vpack.c.bf16 %v3505, %v3504
      %v3534 = vpack.c.bf16 %v3507, %v3506
      %v3535 = vpack.c.bf16 %v3509, %v3508
      %v3536 = vpack.c.bf16 %v3511, %v3510
      %v3537 = vpack.c.bf16 %v3513, %v3512
      %v3538 = vpack.c.bf16 %v3515, %v3514
      %v3539 = vpack.c.bf16 %v3517, %v3516
      %v3540 = vpack.c.bf16 %v3519, %v3518
      %v3541 = vpack.c.bf16 %v3521, %v3520
      %v3542 = vpack.c.bf16 %v3523, %v3522
      %v3543 = vpack.c.bf16 %v3525, %v3524
      %v3544 = vpack.c.bf16 %v3527, %v3526
      %v3545 = vpack.c.bf16 %v3528, %v3528
      %v3546 = vpack.c.bf16 %v3415, %v3413
      %v3547 = vpack.c.bf16 %v3420, %v3418
      %v3548 = vpack.c.bf16 %v3425, %v3423
      %v3549 = vpack.c.bf16 %v3430, %v3428
      %v3550 = vpack.c.bf16 %v3435, %v3433
      %v3551 = vpack.c.bf16 %v3440, %v3438
      %v3552 = vpack.c.bf16 %v3445, %v3443
      %v3553 = vpack.c.bf16 %v3450, %v3448
      %v3554 = vpack.c.bf16 %v3455, %v3453
      %v3555 = vpack.c.bf16 %v3460, %v3458
      %v3556 = vpack.c.bf16 %v3465, %v3463
      %v3557 = vpack.c.bf16 %v3470, %v3468
      %v3558 = vpack.c.bf16 %v3475, %v3473
      %v3559 = vpack.c.bf16 %v3480, %v3478
      %v3560 = vpack.c.bf16 %v3485, %v3483
      %v3561 = vpack.c.bf16 %v3490, %v3488
      %v3562 = vpack.c.bf16 %v3493, %v3493
      %v3564 = vsel %vm1749, %v3529, 0
      %v3567 = vsel %vm1749, %v3530, 0
      %v3570 = vsel %vm1749, %v3531, 0
      %v3573 = vsel %vm1749, %v3532, 0
      %v3576 = vsel %vm1749, %v3533, 0
      %v3579 = vsel %vm1749, %v3534, 0
      %v3582 = vsel %vm1749, %v3535, 0
      %v3585 = vsel %vm1749, %v3536, 0
      %v3588 = vsel %vm1749, %v3537, 0
      %v3591 = vsel %vm1749, %v3538, 0
      %v3594 = vsel %vm1749, %v3539, 0
      %v3597 = vsel %vm1749, %v3540, 0
      %v3600 = vsel %vm1749, %v3541, 0
      %v3603 = vsel %vm1749, %v3542, 0
      %v3606 = vsel %vm1749, %v3543, 0
      %v3609 = vsel %vm1749, %v3544, 0
      %v3612 = vsel %vm1749, %v3545, 0
      %3614 = vmatpush.bf16.xpose.msra.mxu0 %v3585
      %3615 = vmatpush.bf16.xpose.msra.mxu0 %v3582
      %3616 = vmatpush.bf16.xpose.msra.mxu0 %v3579
      %3617 = vmatpush.bf16.xpose.msra.mxu0 %v3576
      %3618 = vmatpush.bf16.xpose.msra.mxu0 %v3573
      %3619 = vmatpush.bf16.xpose.msra.mxu0 %v3570
      %3620 = vmatpush.bf16.xpose.msra.mxu0 %v3567
      %3621 = vmatpush.bf16.xpose.msra.mxu0 %v3564
      %3622 = vmatmul.bf16.gmra.mxu0 %v3564
      %v3623 = vpop.f32.mrf.mxu0
      %v3624 = vadd.f32 0.0, %v3623
      %v3625 = vpop.f32.mrf.mxu0
      %v3626 = vadd.f32 0.0, %v3625
      %3627 = vmatmul.bf16.gmra.mxu0 %v3567
      %v3628 = vpop.f32.mrf.mxu0
      %v3629 = vadd.f32 0.0, %v3628
      %v3630 = vpop.f32.mrf.mxu0
      %v3631 = vadd.f32 0.0, %v3630
      %3632 = vmatmul.bf16.gmra.mxu0 %v3570
      %v3633 = vpop.f32.mrf.mxu0
      %v3634 = vadd.f32 0.0, %v3633
      %v3635 = vpop.f32.mrf.mxu0
      %v3636 = vadd.f32 0.0, %v3635
      %3637 = vmatmul.bf16.gmra.mxu0 %v3573
      %v3638 = vpop.f32.mrf.mxu0
      %v3639 = vadd.f32 0.0, %v3638
      %v3640 = vpop.f32.mrf.mxu0
      %v3641 = vadd.f32 0.0, %v3640
      %3642 = vmatmul.bf16.gmra.mxu0 %v3576
      %v3643 = vpop.f32.mrf.mxu0
      %v3644 = vadd.f32 0.0, %v3643
      %v3645 = vpop.f32.mrf.mxu0
      %v3646 = vadd.f32 0.0, %v3645
      %3647 = vmatmul.bf16.gmra.mxu0 %v3579
      %v3648 = vpop.f32.mrf.mxu0
      %v3649 = vadd.f32 0.0, %v3648
      %v3650 = vpop.f32.mrf.mxu0
      %v3651 = vadd.f32 0.0, %v3650
      %3652 = vmatmul.bf16.gmra.mxu0 %v3582
      %v3653 = vpop.f32.mrf.mxu0
      %v3654 = vadd.f32 0.0, %v3653
      %v3655 = vpop.f32.mrf.mxu0
      %v3656 = vadd.f32 0.0, %v3655
      %3657 = vmatmul.bf16.gmra.mxu0 %v3585
      %v3658 = vpop.f32.mrf.mxu0
      %v3659 = vadd.f32 0.0, %v3658
      %v3660 = vpop.f32.mrf.mxu0
      %v3661 = vadd.f32 0.0, %v3660
      %3662 = vmatmul.bf16.gmra.mxu0 %v3588
      %v3663 = vpop.f32.mrf.mxu0
      %v3664 = vadd.f32 0.0, %v3663
      %v3665 = vpop.f32.mrf.mxu0
      %v3666 = vadd.f32 0.0, %v3665
      %3667 = vmatmul.bf16.gmra.mxu0 %v3591
      %v3668 = vpop.f32.mrf.mxu0
      %v3669 = vadd.f32 0.0, %v3668
      %v3670 = vpop.f32.mrf.mxu0
      %v3671 = vadd.f32 0.0, %v3670
      %3672 = vmatmul.bf16.gmra.mxu0 %v3594
      %v3673 = vpop.f32.mrf.mxu0
      %v3674 = vadd.f32 0.0, %v3673
      %v3675 = vpop.f32.mrf.mxu0
      %v3676 = vadd.f32 0.0, %v3675
      %3677 = vmatmul.bf16.gmra.mxu0 %v3597
      %v3678 = vpop.f32.mrf.mxu0
      %v3679 = vadd.f32 0.0, %v3678
      %v3680 = vpop.f32.mrf.mxu0
      %v3681 = vadd.f32 0.0, %v3680
      %3682 = vmatmul.bf16.gmra.mxu0 %v3600
      %v3683 = vpop.f32.mrf.mxu0
      %v3684 = vadd.f32 0.0, %v3683
      %v3685 = vpop.f32.mrf.mxu0
      %v3686 = vadd.f32 0.0, %v3685
      %3687 = vmatmul.bf16.gmra.mxu0 %v3603
      %v3688 = vpop.f32.mrf.mxu0
      %v3689 = vadd.f32 0.0, %v3688
      %v3690 = vpop.f32.mrf.mxu0
      %v3691 = vadd.f32 0.0, %v3690
      %3692 = vmatmul.bf16.gmra.mxu0 %v3606
      %v3693 = vpop.f32.mrf.mxu0
      %v3694 = vadd.f32 0.0, %v3693
      %v3695 = vpop.f32.mrf.mxu0
      %v3696 = vadd.f32 0.0, %v3695
      %3697 = vmatmul.bf16.gmra.mxu0 %v3609
      %v3698 = vpop.f32.mrf.mxu0
      %v3699 = vadd.f32 0.0, %v3698
      %v3700 = vpop.f32.mrf.mxu0
      %v3701 = vadd.f32 0.0, %v3700
      %3702 = vmatmul.bf16.gmra.mxu0 %v3612
      %v3703 = vpop.f32.mrf.mxu0
      %v3704 = vadd.f32 0.0, %v3703
      %v3705 = vpop.f32.mrf.mxu0
      %3706 = vdwg.mxu0
      %3707 = vmatpush.bf16.xpose.msra.mxu0 %v3609
      %3708 = vmatpush.bf16.xpose.msra.mxu0 %v3606
      %3709 = vmatpush.bf16.xpose.msra.mxu0 %v3603
      %3710 = vmatpush.bf16.xpose.msra.mxu0 %v3600
      %3711 = vmatpush.bf16.xpose.msra.mxu0 %v3597
      %3712 = vmatpush.bf16.xpose.msra.mxu0 %v3594
      %3713 = vmatpush.bf16.xpose.msra.mxu0 %v3591
      %3714 = vmatpush.bf16.xpose.msra.mxu0 %v3588
      %3715 = vmatmul.bf16.gmra.mxu0 %v3564
      %v3716 = vpop.f32.mrf.mxu0
      %v3717 = vadd.f32 0.0, %v3716
      %v3718 = vpop.f32.mrf.mxu0
      %v3719 = vadd.f32 0.0, %v3718
      %3720 = vmatmul.bf16.gmra.mxu0 %v3567
      %v3721 = vpop.f32.mrf.mxu0
      %v3722 = vadd.f32 0.0, %v3721
      %v3723 = vpop.f32.mrf.mxu0
      %v3724 = vadd.f32 0.0, %v3723
      %3725 = vmatmul.bf16.gmra.mxu0 %v3570
      %v3726 = vpop.f32.mrf.mxu0
      %v3727 = vadd.f32 0.0, %v3726
      %v3728 = vpop.f32.mrf.mxu0
      %v3729 = vadd.f32 0.0, %v3728
      %3730 = vmatmul.bf16.gmra.mxu0 %v3573
      %v3731 = vpop.f32.mrf.mxu0
      %v3732 = vadd.f32 0.0, %v3731
      %v3733 = vpop.f32.mrf.mxu0
      %v3734 = vadd.f32 0.0, %v3733
      %3735 = vmatmul.bf16.gmra.mxu0 %v3576
      %v3736 = vpop.f32.mrf.mxu0
      %v3737 = vadd.f32 0.0, %v3736
      %v3738 = vpop.f32.mrf.mxu0
      %v3739 = vadd.f32 0.0, %v3738
      %3740 = vmatmul.bf16.gmra.mxu0 %v3579
      %v3741 = vpop.f32.mrf.mxu0
      %v3742 = vadd.f32 0.0, %v3741
      %v3743 = vpop.f32.mrf.mxu0
      %v3744 = vadd.f32 0.0, %v3743
      %3745 = vmatmul.bf16.gmra.mxu0 %v3582
      %v3746 = vpop.f32.mrf.mxu0
      %v3747 = vadd.f32 0.0, %v3746
      %v3748 = vpop.f32.mrf.mxu0
      %v3749 = vadd.f32 0.0, %v3748
      %3750 = vmatmul.bf16.gmra.mxu0 %v3585
      %v3751 = vpop.f32.mrf.mxu0
      %v3752 = vadd.f32 0.0, %v3751
      %v3753 = vpop.f32.mrf.mxu0
      %v3754 = vadd.f32 0.0, %v3753
      %3755 = vmatmul.bf16.gmra.mxu0 %v3588
      %v3756 = vpop.f32.mrf.mxu0
      %v3757 = vadd.f32 0.0, %v3756
      %v3758 = vpop.f32.mrf.mxu0
      %v3759 = vadd.f32 0.0, %v3758
      %3760 = vmatmul.bf16.gmra.mxu0 %v3591
      %v3761 = vpop.f32.mrf.mxu0
      %v3762 = vadd.f32 0.0, %v3761
      %v3763 = vpop.f32.mrf.mxu0
      %v3764 = vadd.f32 0.0, %v3763
      %3765 = vmatmul.bf16.gmra.mxu0 %v3594
      %v3766 = vpop.f32.mrf.mxu0
      %v3767 = vadd.f32 0.0, %v3766
      %v3768 = vpop.f32.mrf.mxu0
      %v3769 = vadd.f32 0.0, %v3768
      %3770 = vmatmul.bf16.gmra.mxu0 %v3597
      %v3771 = vpop.f32.mrf.mxu0
      %v3772 = vadd.f32 0.0, %v3771
      %v3773 = vpop.f32.mrf.mxu0
      %v3774 = vadd.f32 0.0, %v3773
      %3775 = vmatmul.bf16.gmra.mxu0 %v3600
      %v3776 = vpop.f32.mrf.mxu0
      %v3777 = vadd.f32 0.0, %v3776
      %v3778 = vpop.f32.mrf.mxu0
      %v3779 = vadd.f32 0.0, %v3778
      %3780 = vmatmul.bf16.gmra.mxu0 %v3603
      %v3781 = vpop.f32.mrf.mxu0
      %v3782 = vadd.f32 0.0, %v3781
      %v3783 = vpop.f32.mrf.mxu0
      %v3784 = vadd.f32 0.0, %v3783
      %3785 = vmatmul.bf16.gmra.mxu0 %v3606
      %v3786 = vpop.f32.mrf.mxu0
      %v3787 = vadd.f32 0.0, %v3786
      %v3788 = vpop.f32.mrf.mxu0
      %v3789 = vadd.f32 0.0, %v3788
      %3790 = vmatmul.bf16.gmra.mxu0 %v3609
      %v3791 = vpop.f32.mrf.mxu0
      %v3792 = vadd.f32 0.0, %v3791
      %v3793 = vpop.f32.mrf.mxu0
      %v3794 = vadd.f32 0.0, %v3793
      %3795 = vmatmul.bf16.gmra.mxu0 %v3612
      %v3796 = vpop.f32.mrf.mxu0
      %v3797 = vadd.f32 0.0, %v3796
      %v3798 = vpop.f32.mrf.mxu0
      %3799 = vdwg.mxu0
      %3800 = vmatpush.bf16.xpose.msra.mxu0 0
      %3801 = vmatpush.bf16.xpose.msra.mxu0 0
      %3802 = vmatpush.bf16.xpose.msra.mxu0 0
      %3803 = vmatpush.bf16.xpose.msra.mxu0 0
      %3804 = vmatpush.bf16.xpose.msra.mxu0 0
      %3805 = vmatpush.bf16.xpose.msra.mxu0 0
      %3806 = vmatpush.bf16.xpose.msra.mxu0 0
      %3807 = vmatpush.bf16.xpose.msra.mxu0 %v3612
      %3808 = vmatmul.bf16.gmra.mxu0 %v3564
      %v3809 = vpop.f32.mrf.mxu0
      %v3810 = vadd.f32 0.0, %v3809
      %v3811 = vpop.f32.mrf.mxu0
      %v3812 = vadd.f32 0.0, %v3811
      %3813 = vmatmul.bf16.gmra.mxu0 %v3567
      %v3814 = vpop.f32.mrf.mxu0
      %v3815 = vadd.f32 0.0, %v3814
      %v3816 = vpop.f32.mrf.mxu0
      %v3817 = vadd.f32 0.0, %v3816
      %3818 = vmatmul.bf16.gmra.mxu0 %v3570
      %v3819 = vpop.f32.mrf.mxu0
      %v3820 = vadd.f32 0.0, %v3819
      %v3821 = vpop.f32.mrf.mxu0
      %v3822 = vadd.f32 0.0, %v3821
      %3823 = vmatmul.bf16.gmra.mxu0 %v3573
      %v3824 = vpop.f32.mrf.mxu0
      %v3825 = vadd.f32 0.0, %v3824
      %v3826 = vpop.f32.mrf.mxu0
      %v3827 = vadd.f32 0.0, %v3826
      %3828 = vmatmul.bf16.gmra.mxu0 %v3576
      %v3829 = vpop.f32.mrf.mxu0
      %v3830 = vadd.f32 0.0, %v3829
      %v3831 = vpop.f32.mrf.mxu0
      %v3832 = vadd.f32 0.0, %v3831
      %3833 = vmatmul.bf16.gmra.mxu0 %v3579
      %v3834 = vpop.f32.mrf.mxu0
      %v3835 = vadd.f32 0.0, %v3834
      %v3836 = vpop.f32.mrf.mxu0
      %v3837 = vadd.f32 0.0, %v3836
      %3838 = vmatmul.bf16.gmra.mxu0 %v3582
      %v3839 = vpop.f32.mrf.mxu0
      %v3840 = vadd.f32 0.0, %v3839
      %v3841 = vpop.f32.mrf.mxu0
      %v3842 = vadd.f32 0.0, %v3841
      %3843 = vmatmul.bf16.gmra.mxu0 %v3585
      %v3844 = vpop.f32.mrf.mxu0
      %v3845 = vadd.f32 0.0, %v3844
      %v3846 = vpop.f32.mrf.mxu0
      %v3847 = vadd.f32 0.0, %v3846
      %3848 = vmatmul.bf16.gmra.mxu0 %v3588
      %v3849 = vpop.f32.mrf.mxu0
      %v3850 = vadd.f32 0.0, %v3849
      %v3851 = vpop.f32.mrf.mxu0
      %v3852 = vadd.f32 0.0, %v3851
      %3853 = vmatmul.bf16.gmra.mxu0 %v3591
      %v3854 = vpop.f32.mrf.mxu0
      %v3855 = vadd.f32 0.0, %v3854
      %v3856 = vpop.f32.mrf.mxu0
      %v3857 = vadd.f32 0.0, %v3856
      %3858 = vmatmul.bf16.gmra.mxu0 %v3594
      %v3859 = vpop.f32.mrf.mxu0
      %v3860 = vadd.f32 0.0, %v3859
      %v3861 = vpop.f32.mrf.mxu0
      %v3862 = vadd.f32 0.0, %v3861
      %3863 = vmatmul.bf16.gmra.mxu0 %v3597
      %v3864 = vpop.f32.mrf.mxu0
      %v3865 = vadd.f32 0.0, %v3864
      %v3866 = vpop.f32.mrf.mxu0
      %v3867 = vadd.f32 0.0, %v3866
      %3868 = vmatmul.bf16.gmra.mxu0 %v3600
      %v3869 = vpop.f32.mrf.mxu0
      %v3870 = vadd.f32 0.0, %v3869
      %v3871 = vpop.f32.mrf.mxu0
      %v3872 = vadd.f32 0.0, %v3871
      %3873 = vmatmul.bf16.gmra.mxu0 %v3603
      %v3874 = vpop.f32.mrf.mxu0
      %v3875 = vadd.f32 0.0, %v3874
      %v3876 = vpop.f32.mrf.mxu0
      %v3877 = vadd.f32 0.0, %v3876
      %3878 = vmatmul.bf16.gmra.mxu0 %v3606
      %v3879 = vpop.f32.mrf.mxu0
      %v3880 = vadd.f32 0.0, %v3879
      %v3881 = vpop.f32.mrf.mxu0
      %v3882 = vadd.f32 0.0, %v3881
      %3883 = vmatmul.bf16.gmra.mxu0 %v3609
      %v3884 = vpop.f32.mrf.mxu0
      %v3885 = vadd.f32 0.0, %v3884
      %v3886 = vpop.f32.mrf.mxu0
      %v3887 = vadd.f32 0.0, %v3886
      %3888 = vmatmul.bf16.gmra.mxu0 %v3612
      %v3889 = vpop.f32.mrf.mxu0
      %v3890 = vadd.f32 0.0, %v3889
      %v3891 = vpop.f32.mrf.mxu0
      %3892 = vdwg.mxu0
      %v3893 = vmax.f32 %v3624, %v3717
      %v3894 = vsel %vm2081, %v3810, -inf
      %v3895 = vmax.f32 %v3893, %v3894
      %3896 = vmax.xlane.f32.xlu0 %v3895
      %v3897 = vpop.xlane.xlu0 %3896
      %v3898 = vmax.f32 %v3626, %v3719
      %v3899 = vsel %vm2081, %v3812, -inf
      %v3900 = vmax.f32 %v3898, %v3899
      %3901 = vmax.xlane.f32.xlu0 %v3900
      %v3902 = vpop.xlane.xlu0 %3901
      %v3903 = vmax.f32 %v3629, %v3722
      %v3904 = vsel %vm2081, %v3815, -inf
      %v3905 = vmax.f32 %v3903, %v3904
      %3906 = vmax.xlane.f32.xlu0 %v3905
      %v3907 = vpop.xlane.xlu0 %3906
      %v3908 = vmax.f32 %v3631, %v3724
      %v3909 = vsel %vm2081, %v3817, -inf
      %v3910 = vmax.f32 %v3908, %v3909
      %3911 = vmax.xlane.f32.xlu0 %v3910
      %v3912 = vpop.xlane.xlu0 %3911
      %v3913 = vmax.f32 %v3634, %v3727
      %v3914 = vsel %vm2081, %v3820, -inf
      %v3915 = vmax.f32 %v3913, %v3914
      %3916 = vmax.xlane.f32.xlu0 %v3915
      %v3917 = vpop.xlane.xlu0 %3916
      %v3918 = vmax.f32 %v3636, %v3729
      %v3919 = vsel %vm2081, %v3822, -inf
      %v3920 = vmax.f32 %v3918, %v3919
      %3921 = vmax.xlane.f32.xlu0 %v3920
      %v3922 = vpop.xlane.xlu0 %3921
      %v3923 = vmax.f32 %v3639, %v3732
      %v3924 = vsel %vm2081, %v3825, -inf
      %v3925 = vmax.f32 %v3923, %v3924
      %3926 = vmax.xlane.f32.xlu0 %v3925
      %v3927 = vpop.xlane.xlu0 %3926
      %v3928 = vmax.f32 %v3641, %v3734
      %v3929 = vsel %vm2081, %v3827, -inf
      %v3930 = vmax.f32 %v3928, %v3929
      %3931 = vmax.xlane.f32.xlu0 %v3930
      %v3932 = vpop.xlane.xlu0 %3931
      %v3933 = vmax.f32 %v3644, %v3737
      %v3934 = vsel %vm2081, %v3830, -inf
      %v3935 = vmax.f32 %v3933, %v3934
      %3936 = vmax.xlane.f32.xlu0 %v3935
      %v3937 = vpop.xlane.xlu0 %3936
      %v3938 = vmax.f32 %v3646, %v3739
      %v3939 = vsel %vm2081, %v3832, -inf
      %v3940 = vmax.f32 %v3938, %v3939
      %3941 = vmax.xlane.f32.xlu0 %v3940
      %v3942 = vpop.xlane.xlu0 %3941
      %v3943 = vmax.f32 %v3649, %v3742
      %v3944 = vsel %vm2081, %v3835, -inf
      %v3945 = vmax.f32 %v3943, %v3944
      %3946 = vmax.xlane.f32.xlu0 %v3945
      %v3947 = vpop.xlane.xlu0 %3946
      %v3948 = vmax.f32 %v3651, %v3744
      %v3949 = vsel %vm2081, %v3837, -inf
      %v3950 = vmax.f32 %v3948, %v3949
      %3951 = vmax.xlane.f32.xlu0 %v3950
      %v3952 = vpop.xlane.xlu0 %3951
      %v3953 = vmax.f32 %v3654, %v3747
      %v3954 = vsel %vm2081, %v3840, -inf
      %v3955 = vmax.f32 %v3953, %v3954
      %3956 = vmax.xlane.f32.xlu0 %v3955
      %v3957 = vpop.xlane.xlu0 %3956
      %v3958 = vmax.f32 %v3656, %v3749
      %v3959 = vsel %vm2081, %v3842, -inf
      %v3960 = vmax.f32 %v3958, %v3959
      %3961 = vmax.xlane.f32.xlu0 %v3960
      %v3962 = vpop.xlane.xlu0 %3961
      %v3963 = vmax.f32 %v3659, %v3752
      %v3964 = vsel %vm2081, %v3845, -inf
      %v3965 = vmax.f32 %v3963, %v3964
      %3966 = vmax.xlane.f32.xlu0 %v3965
      %v3967 = vpop.xlane.xlu0 %3966
      %v3968 = vmax.f32 %v3661, %v3754
      %v3969 = vsel %vm2081, %v3847, -inf
      %v3970 = vmax.f32 %v3968, %v3969
      %3971 = vmax.xlane.f32.xlu0 %v3970
      %v3972 = vpop.xlane.xlu0 %3971
      %v3973 = vmax.f32 %v3664, %v3757
      %v3974 = vsel %vm2081, %v3850, -inf
      %v3975 = vmax.f32 %v3973, %v3974
      %3976 = vmax.xlane.f32.xlu0 %v3975
      %v3977 = vpop.xlane.xlu0 %3976
      %v3978 = vmax.f32 %v3666, %v3759
      %v3979 = vsel %vm2081, %v3852, -inf
      %v3980 = vmax.f32 %v3978, %v3979
      %3981 = vmax.xlane.f32.xlu0 %v3980
      %v3982 = vpop.xlane.xlu0 %3981
      %v3983 = vmax.f32 %v3669, %v3762
      %v3984 = vsel %vm2081, %v3855, -inf
      %v3985 = vmax.f32 %v3983, %v3984
      %3986 = vmax.xlane.f32.xlu0 %v3985
      %v3987 = vpop.xlane.xlu0 %3986
      %v3988 = vmax.f32 %v3671, %v3764
      %v3989 = vsel %vm2081, %v3857, -inf
      %v3990 = vmax.f32 %v3988, %v3989
      %3991 = vmax.xlane.f32.xlu0 %v3990
      %v3992 = vpop.xlane.xlu0 %3991
      %v3993 = vmax.f32 %v3674, %v3767
      %v3994 = vsel %vm2081, %v3860, -inf
      %v3995 = vmax.f32 %v3993, %v3994
      %3996 = vmax.xlane.f32.xlu0 %v3995
      %v3997 = vpop.xlane.xlu0 %3996
      %v3998 = vmax.f32 %v3676, %v3769
      %v3999 = vsel %vm2081, %v3862, -inf
      %v4000 = vmax.f32 %v3998, %v3999
      %4001 = vmax.xlane.f32.xlu0 %v4000
      %v4002 = vpop.xlane.xlu0 %4001
      %v4003 = vmax.f32 %v3679, %v3772
      %v4004 = vsel %vm2081, %v3865, -inf
      %v4005 = vmax.f32 %v4003, %v4004
      %4006 = vmax.xlane.f32.xlu0 %v4005
      %v4007 = vpop.xlane.xlu0 %4006
      %v4008 = vmax.f32 %v3681, %v3774
      %v4009 = vsel %vm2081, %v3867, -inf
      %v4010 = vmax.f32 %v4008, %v4009
      %4011 = vmax.xlane.f32.xlu0 %v4010
      %v4012 = vpop.xlane.xlu0 %4011
      %v4013 = vmax.f32 %v3684, %v3777
      %v4014 = vsel %vm2081, %v3870, -inf
      %v4015 = vmax.f32 %v4013, %v4014
      %4016 = vmax.xlane.f32.xlu0 %v4015
      %v4017 = vpop.xlane.xlu0 %4016
      %v4018 = vmax.f32 %v3686, %v3779
      %v4019 = vsel %vm2081, %v3872, -inf
      %v4020 = vmax.f32 %v4018, %v4019
      %4021 = vmax.xlane.f32.xlu0 %v4020
      %v4022 = vpop.xlane.xlu0 %4021
      %v4023 = vmax.f32 %v3689, %v3782
      %v4024 = vsel %vm2081, %v3875, -inf
      %v4025 = vmax.f32 %v4023, %v4024
      %4026 = vmax.xlane.f32.xlu0 %v4025
      %v4027 = vpop.xlane.xlu0 %4026
      %v4028 = vmax.f32 %v3691, %v3784
      %v4029 = vsel %vm2081, %v3877, -inf
      %v4030 = vmax.f32 %v4028, %v4029
      %4031 = vmax.xlane.f32.xlu0 %v4030
      %v4032 = vpop.xlane.xlu0 %4031
      %v4033 = vmax.f32 %v3694, %v3787
      %v4034 = vsel %vm2081, %v3880, -inf
      %v4035 = vmax.f32 %v4033, %v4034
      %4036 = vmax.xlane.f32.xlu0 %v4035
      %v4037 = vpop.xlane.xlu0 %4036
      %v4038 = vmax.f32 %v3696, %v3789
      %v4039 = vsel %vm2081, %v3882, -inf
      %v4040 = vmax.f32 %v4038, %v4039
      %4041 = vmax.xlane.f32.xlu0 %v4040
      %v4042 = vpop.xlane.xlu0 %4041
      %v4043 = vmax.f32 %v3699, %v3792
      %v4044 = vsel %vm2081, %v3885, -inf
      %v4045 = vmax.f32 %v4043, %v4044
      %4046 = vmax.xlane.f32.xlu0 %v4045
      %v4047 = vpop.xlane.xlu0 %4046
      %v4048 = vmax.f32 %v3701, %v3794
      %v4049 = vsel %vm2081, %v3887, -inf
      %v4050 = vmax.f32 %v4048, %v4049
      %4051 = vmax.xlane.f32.xlu0 %v4050
      %v4052 = vpop.xlane.xlu0 %4051
      %v4053 = vmax.f32 %v3704, %v3797
      %v4054 = vsel %vm2081, %v3890, -inf
      %v4055 = vmax.f32 %v4053, %v4054
      %4056 = vmax.xlane.f32.xlu0 %v4055
      %v4057 = vpop.xlane.xlu0 %4056
      %v4058 = vsub.f32 %v3624, %v3897
      %v4059 = vsub.f32 %v3717, %v3897
      %v4060 = vsub.f32 %v3810, %v3897
      %v4061 = vsub.f32 %v3626, %v3902
      %v4062 = vsub.f32 %v3719, %v3902
      %v4063 = vsub.f32 %v3812, %v3902
      %v4064 = vsub.f32 %v3629, %v3907
      %v4065 = vsub.f32 %v3722, %v3907
      %v4066 = vsub.f32 %v3815, %v3907
      %v4067 = vsub.f32 %v3631, %v3912
      %v4068 = vsub.f32 %v3724, %v3912
      %v4069 = vsub.f32 %v3817, %v3912
      %v4070 = vsub.f32 %v3634, %v3917
      %v4071 = vsub.f32 %v3727, %v3917
      %v4072 = vsub.f32 %v3820, %v3917
      %v4073 = vsub.f32 %v3636, %v3922
      %v4074 = vsub.f32 %v3729, %v3922
      %v4075 = vsub.f32 %v3822, %v3922
      %v4076 = vsub.f32 %v3639, %v3927
      %v4077 = vsub.f32 %v3732, %v3927
      %v4078 = vsub.f32 %v3825, %v3927
      %v4079 = vsub.f32 %v3641, %v3932
      %v4080 = vsub.f32 %v3734, %v3932
      %v4081 = vsub.f32 %v3827, %v3932
      %v4082 = vsub.f32 %v3644, %v3937
      %v4083 = vsub.f32 %v3737, %v3937
      %v4084 = vsub.f32 %v3830, %v3937
      %v4085 = vsub.f32 %v3646, %v3942
      %v4086 = vsub.f32 %v3739, %v3942
      %v4087 = vsub.f32 %v3832, %v3942
      %v4088 = vsub.f32 %v3649, %v3947
      %v4089 = vsub.f32 %v3742, %v3947
      %v4090 = vsub.f32 %v3835, %v3947
      %v4091 = vsub.f32 %v3651, %v3952
      %v4092 = vsub.f32 %v3744, %v3952
      %v4093 = vsub.f32 %v3837, %v3952
      %v4094 = vsub.f32 %v3654, %v3957
      %v4095 = vsub.f32 %v3747, %v3957
      %v4096 = vsub.f32 %v3840, %v3957
      %v4097 = vsub.f32 %v3656, %v3962
      %v4098 = vsub.f32 %v3749, %v3962
      %v4099 = vsub.f32 %v3842, %v3962
      %v4100 = vsub.f32 %v3659, %v3967
      %v4101 = vsub.f32 %v3752, %v3967
      %v4102 = vsub.f32 %v3845, %v3967
      %v4103 = vsub.f32 %v3661, %v3972
      %v4104 = vsub.f32 %v3754, %v3972
      %v4105 = vsub.f32 %v3847, %v3972
      %v4106 = vsub.f32 %v3664, %v3977
      %v4107 = vsub.f32 %v3757, %v3977
      %v4108 = vsub.f32 %v3850, %v3977
      %v4109 = vsub.f32 %v3666, %v3982
      %v4110 = vsub.f32 %v3759, %v3982
      %v4111 = vsub.f32 %v3852, %v3982
      %v4112 = vsub.f32 %v3669, %v3987
      %v4113 = vsub.f32 %v3762, %v3987
      %v4114 = vsub.f32 %v3855, %v3987
      %v4115 = vsub.f32 %v3671, %v3992
      %v4116 = vsub.f32 %v3764, %v3992
      %v4117 = vsub.f32 %v3857, %v3992
      %v4118 = vsub.f32 %v3674, %v3997
      %v4119 = vsub.f32 %v3767, %v3997
      %v4120 = vsub.f32 %v3860, %v3997
      %v4121 = vsub.f32 %v3676, %v4002
      %v4122 = vsub.f32 %v3769, %v4002
      %v4123 = vsub.f32 %v3862, %v4002
      %v4124 = vsub.f32 %v3679, %v4007
      %v4125 = vsub.f32 %v3772, %v4007
      %v4126 = vsub.f32 %v3865, %v4007
      %v4127 = vsub.f32 %v3681, %v4012
      %v4128 = vsub.f32 %v3774, %v4012
      %v4129 = vsub.f32 %v3867, %v4012
      %v4130 = vsub.f32 %v3684, %v4017
      %v4131 = vsub.f32 %v3777, %v4017
      %v4132 = vsub.f32 %v3870, %v4017
      %v4133 = vsub.f32 %v3686, %v4022
      %v4134 = vsub.f32 %v3779, %v4022
      %v4135 = vsub.f32 %v3872, %v4022
      %v4136 = vsub.f32 %v3689, %v4027
      %v4137 = vsub.f32 %v3782, %v4027
      %v4138 = vsub.f32 %v3875, %v4027
      %v4139 = vsub.f32 %v3691, %v4032
      %v4140 = vsub.f32 %v3784, %v4032
      %v4141 = vsub.f32 %v3877, %v4032
      %v4142 = vsub.f32 %v3694, %v4037
      %v4143 = vsub.f32 %v3787, %v4037
      %v4144 = vsub.f32 %v3880, %v4037
      %v4145 = vsub.f32 %v3696, %v4042
      %v4146 = vsub.f32 %v3789, %v4042
      %v4147 = vsub.f32 %v3882, %v4042
      %v4148 = vsub.f32 %v3699, %v4047
      %v4149 = vsub.f32 %v3792, %v4047
      %v4150 = vsub.f32 %v3885, %v4047
      %v4151 = vsub.f32 %v3701, %v4052
      %v4152 = vsub.f32 %v3794, %v4052
      %v4153 = vsub.f32 %v3887, %v4052
      %v4154 = vsub.f32 %v3704, %v4057
      %v4155 = vsub.f32 %v3797, %v4057
      %v4156 = vsub.f32 %v3890, %v4057
      %v4157 = vmul.f32 %v4058, 1.442695
      %v4158 = vpow.pop %v4157
      %v4159 = vmul.f32 %v4059, 1.442695
      %v4160 = vpow.pop %v4159
      %v4161 = vmul.f32 %v4060, 1.442695
      %v4162 = vpow.pop %v4161
      %v4163 = vmul.f32 %v4061, 1.442695
      %v4164 = vpow.pop %v4163
      %v4165 = vmul.f32 %v4062, 1.442695
      %v4166 = vpow.pop %v4165
      %v4167 = vmul.f32 %v4063, 1.442695
      %v4168 = vpow.pop %v4167
      %v4169 = vmul.f32 %v4064, 1.442695
      %v4170 = vpow.pop %v4169
      %v4171 = vmul.f32 %v4065, 1.442695
      %v4172 = vpow.pop %v4171
      %v4173 = vmul.f32 %v4066, 1.442695
      %v4174 = vpow.pop %v4173
      %v4175 = vmul.f32 %v4067, 1.442695
      %v4176 = vpow.pop %v4175
      %v4177 = vmul.f32 %v4068, 1.442695
      %v4178 = vpow.pop %v4177
      %v4179 = vmul.f32 %v4069, 1.442695
      %v4180 = vpow.pop %v4179
      %v4181 = vmul.f32 %v4070, 1.442695
      %v4182 = vpow.pop %v4181
      %v4183 = vmul.f32 %v4071, 1.442695
      %v4184 = vpow.pop %v4183
      %v4185 = vmul.f32 %v4072, 1.442695
      %v4186 = vpow.pop %v4185
      %v4187 = vmul.f32 %v4073, 1.442695
      %v4188 = vpow.pop %v4187
      %v4189 = vmul.f32 %v4074, 1.442695
      %v4190 = vpow.pop %v4189
      %v4191 = vmul.f32 %v4075, 1.442695
      %v4192 = vpow.pop %v4191
      %v4193 = vmul.f32 %v4076, 1.442695
      %v4194 = vpow.pop %v4193
      %v4195 = vmul.f32 %v4077, 1.442695
      %v4196 = vpow.pop %v4195
      %v4197 = vmul.f32 %v4078, 1.442695
      %v4198 = vpow.pop %v4197
      %v4199 = vmul.f32 %v4079, 1.442695
      %v4200 = vpow.pop %v4199
      %v4201 = vmul.f32 %v4080, 1.442695
      %v4202 = vpow.pop %v4201
      %v4203 = vmul.f32 %v4081, 1.442695
      %v4204 = vpow.pop %v4203
      %v4205 = vmul.f32 %v4082, 1.442695
      %v4206 = vpow.pop %v4205
      %v4207 = vmul.f32 %v4083, 1.442695
      %v4208 = vpow.pop %v4207
      %v4209 = vmul.f32 %v4084, 1.442695
      %v4210 = vpow.pop %v4209
      %v4211 = vmul.f32 %v4085, 1.442695
      %v4212 = vpow.pop %v4211
      %v4213 = vmul.f32 %v4086, 1.442695
      %v4214 = vpow.pop %v4213
      %v4215 = vmul.f32 %v4087, 1.442695
      %v4216 = vpow.pop %v4215
      %v4217 = vmul.f32 %v4088, 1.442695
      %v4218 = vpow.pop %v4217
      %v4219 = vmul.f32 %v4089, 1.442695
      %v4220 = vpow.pop %v4219
      %v4221 = vmul.f32 %v4090, 1.442695
      %v4222 = vpow.pop %v4221
      %v4223 = vmul.f32 %v4091, 1.442695
      %v4224 = vpow.pop %v4223
      %v4225 = vmul.f32 %v4092, 1.442695
      %v4226 = vpow.pop %v4225
      %v4227 = vmul.f32 %v4093, 1.442695
      %v4228 = vpow.pop %v4227
      %v4229 = vmul.f32 %v4094, 1.442695
      %v4230 = vpow.pop %v4229
      %v4231 = vmul.f32 %v4095, 1.442695
      %v4232 = vpow.pop %v4231
      %v4233 = vmul.f32 %v4096, 1.442695
      %v4234 = vpow.pop %v4233
      %v4235 = vmul.f32 %v4097, 1.442695
      %v4236 = vpow.pop %v4235
      %v4237 = vmul.f32 %v4098, 1.442695
      %v4238 = vpow.pop %v4237
      %v4239 = vmul.f32 %v4099, 1.442695
      %v4240 = vpow.pop %v4239
      %v4241 = vmul.f32 %v4100, 1.442695
      %v4242 = vpow.pop %v4241
      %v4243 = vmul.f32 %v4101, 1.442695
      %v4244 = vpow.pop %v4243
      %v4245 = vmul.f32 %v4102, 1.442695
      %v4246 = vpow.pop %v4245
      %v4247 = vmul.f32 %v4103, 1.442695
      %v4248 = vpow.pop %v4247
      %v4249 = vmul.f32 %v4104, 1.442695
      %v4250 = vpow.pop %v4249
      %v4251 = vmul.f32 %v4105, 1.442695
      %v4252 = vpow.pop %v4251
      %v4253 = vmul.f32 %v4106, 1.442695
      %v4254 = vpow.pop %v4253
      %v4255 = vmul.f32 %v4107, 1.442695
      %v4256 = vpow.pop %v4255
      %v4257 = vmul.f32 %v4108, 1.442695
      %v4258 = vpow.pop %v4257
      %v4259 = vmul.f32 %v4109, 1.442695
      %v4260 = vpow.pop %v4259
      %v4261 = vmul.f32 %v4110, 1.442695
      %v4262 = vpow.pop %v4261
      %v4263 = vmul.f32 %v4111, 1.442695
      %v4264 = vpow.pop %v4263
      %v4265 = vmul.f32 %v4112, 1.442695
      %v4266 = vpow.pop %v4265
      %v4267 = vmul.f32 %v4113, 1.442695
      %v4268 = vpow.pop %v4267
      %v4269 = vmul.f32 %v4114, 1.442695
      %v4270 = vpow.pop %v4269
      %v4271 = vmul.f32 %v4115, 1.442695
      %v4272 = vpow.pop %v4271
      %v4273 = vmul.f32 %v4116, 1.442695
      %v4274 = vpow.pop %v4273
      %v4275 = vmul.f32 %v4117, 1.442695
      %v4276 = vpow.pop %v4275
      %v4277 = vmul.f32 %v4118, 1.442695
      %v4278 = vpow.pop %v4277
      %v4279 = vmul.f32 %v4119, 1.442695
      %v4280 = vpow.pop %v4279
      %v4281 = vmul.f32 %v4120, 1.442695
      %v4282 = vpow.pop %v4281
      %v4283 = vmul.f32 %v4121, 1.442695
      %v4284 = vpow.pop %v4283
      %v4285 = vmul.f32 %v4122, 1.442695
      %v4286 = vpow.pop %v4285
      %v4287 = vmul.f32 %v4123, 1.442695
      %v4288 = vpow.pop %v4287
      %v4289 = vmul.f32 %v4124, 1.442695
      %v4290 = vpow.pop %v4289
      %v4291 = vmul.f32 %v4125, 1.442695
      %v4292 = vpow.pop %v4291
      %v4293 = vmul.f32 %v4126, 1.442695
      %v4294 = vpow.pop %v4293
      %v4295 = vmul.f32 %v4127, 1.442695
      %v4296 = vpow.pop %v4295
      %v4297 = vmul.f32 %v4128, 1.442695
      %v4298 = vpow.pop %v4297
      %v4299 = vmul.f32 %v4129, 1.442695
      %v4300 = vpow.pop %v4299
      %v4301 = vmul.f32 %v4130, 1.442695
      %v4302 = vpow.pop %v4301
      %v4303 = vmul.f32 %v4131, 1.442695
      %v4304 = vpow.pop %v4303
      %v4305 = vmul.f32 %v4132, 1.442695
      %v4306 = vpow.pop %v4305
      %v4307 = vmul.f32 %v4133, 1.442695
      %v4308 = vpow.pop %v4307
      %v4309 = vmul.f32 %v4134, 1.442695
      %v4310 = vpow.pop %v4309
      %v4311 = vmul.f32 %v4135, 1.442695
      %v4312 = vpow.pop %v4311
      %v4313 = vmul.f32 %v4136, 1.442695
      %v4314 = vpow.pop %v4313
      %v4315 = vmul.f32 %v4137, 1.442695
      %v4316 = vpow.pop %v4315
      %v4317 = vmul.f32 %v4138, 1.442695
      %v4318 = vpow.pop %v4317
      %v4319 = vmul.f32 %v4139, 1.442695
      %v4320 = vpow.pop %v4319
      %v4321 = vmul.f32 %v4140, 1.442695
      %v4322 = vpow.pop %v4321
      %v4323 = vmul.f32 %v4141, 1.442695
      %v4324 = vpow.pop %v4323
      %v4325 = vmul.f32 %v4142, 1.442695
      %v4326 = vpow.pop %v4325
      %v4327 = vmul.f32 %v4143, 1.442695
      %v4328 = vpow.pop %v4327
      %v4329 = vmul.f32 %v4144, 1.442695
      %v4330 = vpow.pop %v4329
      %v4331 = vmul.f32 %v4145, 1.442695
      %v4332 = vpow.pop %v4331
      %v4333 = vmul.f32 %v4146, 1.442695
      %v4334 = vpow.pop %v4333
      %v4335 = vmul.f32 %v4147, 1.442695
      %v4336 = vpow.pop %v4335
      %v4337 = vmul.f32 %v4148, 1.442695
      %v4338 = vpow.pop %v4337
      %v4339 = vmul.f32 %v4149, 1.442695
      %v4340 = vpow.pop %v4339
      %v4341 = vmul.f32 %v4150, 1.442695
      %v4342 = vpow.pop %v4341
      %v4343 = vmul.f32 %v4151, 1.442695
      %v4344 = vpow.pop %v4343
      %v4345 = vmul.f32 %v4152, 1.442695
      %v4346 = vpow.pop %v4345
      %v4347 = vmul.f32 %v4153, 1.442695
      %v4348 = vpow.pop %v4347
      %v4349 = vmul.f32 %v4154, 1.442695
      %v4350 = vpow.pop %v4349
      %v4351 = vmul.f32 %v4155, 1.442695
      %v4352 = vpow.pop %v4351
      %v4353 = vmul.f32 %v4156, 1.442695
      %v4354 = vpow.pop %v4353
      %v4355 = vadd.f32 %v4158, %v4160
      %v4356 = vsel %vm2081, %v4162, 0.0
      %v4357 = vadd.f32 %v4355, %v4356
      %4358 = vadd.xlane.f32.xlu0 %v4357
      %v4359 = vpop.xlane.xlu0 %4358
      %v4360 = vadd.f32 %v4164, %v4166
      %v4361 = vsel %vm2081, %v4168, 0.0
      %v4362 = vadd.f32 %v4360, %v4361
      %4363 = vadd.xlane.f32.xlu0 %v4362
      %v4364 = vpop.xlane.xlu0 %4363
      %v4365 = vadd.f32 %v4170, %v4172
      %v4366 = vsel %vm2081, %v4174, 0.0
      %v4367 = vadd.f32 %v4365, %v4366
      %4368 = vadd.xlane.f32.xlu0 %v4367
      %v4369 = vpop.xlane.xlu0 %4368
      %v4370 = vadd.f32 %v4176, %v4178
      %v4371 = vsel %vm2081, %v4180, 0.0
      %v4372 = vadd.f32 %v4370, %v4371
      %4373 = vadd.xlane.f32.xlu0 %v4372
      %v4374 = vpop.xlane.xlu0 %4373
      %v4375 = vadd.f32 %v4182, %v4184
      %v4376 = vsel %vm2081, %v4186, 0.0
      %v4377 = vadd.f32 %v4375, %v4376
      %4378 = vadd.xlane.f32.xlu0 %v4377
      %v4379 = vpop.xlane.xlu0 %4378
      %v4380 = vadd.f32 %v4188, %v4190
      %v4381 = vsel %vm2081, %v4192, 0.0
      %v4382 = vadd.f32 %v4380, %v4381
      %4383 = vadd.xlane.f32.xlu0 %v4382
      %v4384 = vpop.xlane.xlu0 %4383
      %v4385 = vadd.f32 %v4194, %v4196
      %v4386 = vsel %vm2081, %v4198, 0.0
      %v4387 = vadd.f32 %v4385, %v4386
      %4388 = vadd.xlane.f32.xlu0 %v4387
      %v4389 = vpop.xlane.xlu0 %4388
      %v4390 = vadd.f32 %v4200, %v4202
      %v4391 = vsel %vm2081, %v4204, 0.0
      %v4392 = vadd.f32 %v4390, %v4391
      %4393 = vadd.xlane.f32.xlu0 %v4392
      %v4394 = vpop.xlane.xlu0 %4393
      %v4395 = vadd.f32 %v4206, %v4208
      %v4396 = vsel %vm2081, %v4210, 0.0
      %v4397 = vadd.f32 %v4395, %v4396
      %4398 = vadd.xlane.f32.xlu0 %v4397
      %v4399 = vpop.xlane.xlu0 %4398
      %v4400 = vadd.f32 %v4212, %v4214
      %v4401 = vsel %vm2081, %v4216, 0.0
      %v4402 = vadd.f32 %v4400, %v4401
      %4403 = vadd.xlane.f32.xlu0 %v4402
      %v4404 = vpop.xlane.xlu0 %4403
      %v4405 = vadd.f32 %v4218, %v4220
      %v4406 = vsel %vm2081, %v4222, 0.0
      %v4407 = vadd.f32 %v4405, %v4406
      %4408 = vadd.xlane.f32.xlu0 %v4407
      %v4409 = vpop.xlane.xlu0 %4408
      %v4410 = vadd.f32 %v4224, %v4226
      %v4411 = vsel %vm2081, %v4228, 0.0
      %v4412 = vadd.f32 %v4410, %v4411
      %4413 = vadd.xlane.f32.xlu0 %v4412
      %v4414 = vpop.xlane.xlu0 %4413
      %v4415 = vadd.f32 %v4230, %v4232
      %v4416 = vsel %vm2081, %v4234, 0.0
      %v4417 = vadd.f32 %v4415, %v4416
      %4418 = vadd.xlane.f32.xlu0 %v4417
      %v4419 = vpop.xlane.xlu0 %4418
      %v4420 = vadd.f32 %v4236, %v4238
      %v4421 = vsel %vm2081, %v4240, 0.0
      %v4422 = vadd.f32 %v4420, %v4421
      %4423 = vadd.xlane.f32.xlu0 %v4422
      %v4424 = vpop.xlane.xlu0 %4423
      %v4425 = vadd.f32 %v4242, %v4244
      %v4426 = vsel %vm2081, %v4246, 0.0
      %v4427 = vadd.f32 %v4425, %v4426
      %4428 = vadd.xlane.f32.xlu0 %v4427
      %v4429 = vpop.xlane.xlu0 %4428
      %v4430 = vadd.f32 %v4248, %v4250
      %v4431 = vsel %vm2081, %v4252, 0.0
      %v4432 = vadd.f32 %v4430, %v4431
      %4433 = vadd.xlane.f32.xlu0 %v4432
      %v4434 = vpop.xlane.xlu0 %4433
      %v4435 = vadd.f32 %v4254, %v4256
      %v4436 = vsel %vm2081, %v4258, 0.0
      %v4437 = vadd.f32 %v4435, %v4436
      %4438 = vadd.xlane.f32.xlu0 %v4437
      %v4439 = vpop.xlane.xlu0 %4438
      %v4440 = vadd.f32 %v4260, %v4262
      %v4441 = vsel %vm2081, %v4264, 0.0
      %v4442 = vadd.f32 %v4440, %v4441
      %4443 = vadd.xlane.f32.xlu0 %v4442
      %v4444 = vpop.xlane.xlu0 %4443
      %v4445 = vadd.f32 %v4266, %v4268
      %v4446 = vsel %vm2081, %v4270, 0.0
      %v4447 = vadd.f32 %v4445, %v4446
      %4448 = vadd.xlane.f32.xlu0 %v4447
      %v4449 = vpop.xlane.xlu0 %4448
      %v4450 = vadd.f32 %v4272, %v4274
      %v4451 = vsel %vm2081, %v4276, 0.0
      %v4452 = vadd.f32 %v4450, %v4451
      %4453 = vadd.xlane.f32.xlu0 %v4452
      %v4454 = vpop.xlane.xlu0 %4453
      %v4455 = vadd.f32 %v4278, %v4280
      %v4456 = vsel %vm2081, %v4282, 0.0
      %v4457 = vadd.f32 %v4455, %v4456
      %4458 = vadd.xlane.f32.xlu0 %v4457
      %v4459 = vpop.xlane.xlu0 %4458
      %v4460 = vadd.f32 %v4284, %v4286
      %v4461 = vsel %vm2081, %v4288, 0.0
      %v4462 = vadd.f32 %v4460, %v4461
      %4463 = vadd.xlane.f32.xlu0 %v4462
      %v4464 = vpop.xlane.xlu0 %4463
      %v4465 = vadd.f32 %v4290, %v4292
      %v4466 = vsel %vm2081, %v4294, 0.0
      %v4467 = vadd.f32 %v4465, %v4466
      %4468 = vadd.xlane.f32.xlu0 %v4467
      %v4469 = vpop.xlane.xlu0 %4468
      %v4470 = vadd.f32 %v4296, %v4298
      %v4471 = vsel %vm2081, %v4300, 0.0
      %v4472 = vadd.f32 %v4470, %v4471
      %4473 = vadd.xlane.f32.xlu0 %v4472
      %v4474 = vpop.xlane.xlu0 %4473
      %v4475 = vadd.f32 %v4302, %v4304
      %v4476 = vsel %vm2081, %v4306, 0.0
      %v4477 = vadd.f32 %v4475, %v4476
      %4478 = vadd.xlane.f32.xlu0 %v4477
      %v4479 = vpop.xlane.xlu0 %4478
      %v4480 = vadd.f32 %v4308, %v4310
      %v4481 = vsel %vm2081, %v4312, 0.0
      %v4482 = vadd.f32 %v4480, %v4481
      %4483 = vadd.xlane.f32.xlu0 %v4482
      %v4484 = vpop.xlane.xlu0 %4483
      %v4485 = vadd.f32 %v4314, %v4316
      %v4486 = vsel %vm2081, %v4318, 0.0
      %v4487 = vadd.f32 %v4485, %v4486
      %4488 = vadd.xlane.f32.xlu0 %v4487
      %v4489 = vpop.xlane.xlu0 %4488
      %v4490 = vadd.f32 %v4320, %v4322
      %v4491 = vsel %vm2081, %v4324, 0.0
      %v4492 = vadd.f32 %v4490, %v4491
      %4493 = vadd.xlane.f32.xlu0 %v4492
      %v4494 = vpop.xlane.xlu0 %4493
      %v4495 = vadd.f32 %v4326, %v4328
      %v4496 = vsel %vm2081, %v4330, 0.0
      %v4497 = vadd.f32 %v4495, %v4496
      %4498 = vadd.xlane.f32.xlu0 %v4497
      %v4499 = vpop.xlane.xlu0 %4498
      %v4500 = vadd.f32 %v4332, %v4334
      %v4501 = vsel %vm2081, %v4336, 0.0
      %v4502 = vadd.f32 %v4500, %v4501
      %4503 = vadd.xlane.f32.xlu0 %v4502
      %v4504 = vpop.xlane.xlu0 %4503
      %v4505 = vadd.f32 %v4338, %v4340
      %v4506 = vsel %vm2081, %v4342, 0.0
      %v4507 = vadd.f32 %v4505, %v4506
      %4508 = vadd.xlane.f32.xlu0 %v4507
      %v4509 = vpop.xlane.xlu0 %4508
      %v4510 = vadd.f32 %v4344, %v4346
      %v4511 = vsel %vm2081, %v4348, 0.0
      %v4512 = vadd.f32 %v4510, %v4511
      %4513 = vadd.xlane.f32.xlu0 %v4512
      %v4514 = vpop.xlane.xlu0 %4513
      %v4515 = vadd.f32 %v4350, %v4352
      %v4516 = vsel %vm2081, %v4354, 0.0
      %v4517 = vadd.f32 %v4515, %v4516
      %4518 = vadd.xlane.f32.xlu0 %v4517
      %v4519 = vpop.xlane.xlu0 %4518
      %v4520 = vrcp.pop %v4359
      %v4521 = vrcp.pop %v4364
      %v4522 = vrcp.pop %v4369
      %v4523 = vrcp.pop %v4374
      %v4524 = vrcp.pop %v4379
      %v4525 = vrcp.pop %v4384
      %v4526 = vrcp.pop %v4389
      %v4527 = vrcp.pop %v4394
      %v4528 = vrcp.pop %v4399
      %v4529 = vrcp.pop %v4404
      %v4530 = vrcp.pop %v4409
      %v4531 = vrcp.pop %v4414
      %v4532 = vrcp.pop %v4419
      %v4533 = vrcp.pop %v4424
      %v4534 = vrcp.pop %v4429
      %v4535 = vrcp.pop %v4434
      %v4536 = vrcp.pop %v4439
      %v4537 = vrcp.pop %v4444
      %v4538 = vrcp.pop %v4449
      %v4539 = vrcp.pop %v4454
      %v4540 = vrcp.pop %v4459
      %v4541 = vrcp.pop %v4464
      %v4542 = vrcp.pop %v4469
      %v4543 = vrcp.pop %v4474
      %v4544 = vrcp.pop %v4479
      %v4545 = vrcp.pop %v4484
      %v4546 = vrcp.pop %v4489
      %v4547 = vrcp.pop %v4494
      %v4548 = vrcp.pop %v4499
      %v4549 = vrcp.pop %v4504
      %v4550 = vrcp.pop %v4509
      %v4551 = vrcp.pop %v4514
      %v4552 = vrcp.pop %v4519
      %v4553 = vmul.f32 %v4158, %v4520
      %v4554 = vmul.f32 %v4160, %v4520
      %v4555 = vmul.f32 %v4162, %v4520
      %v4556 = vmul.f32 %v4164, %v4521
      %v4557 = vmul.f32 %v4166, %v4521
      %v4558 = vmul.f32 %v4168, %v4521
      %v4559 = vmul.f32 %v4170, %v4522
      %v4560 = vmul.f32 %v4172, %v4522
      %v4561 = vmul.f32 %v4174, %v4522
      %v4562 = vmul.f32 %v4176, %v4523
      %v4563 = vmul.f32 %v4178, %v4523
      %v4564 = vmul.f32 %v4180, %v4523
      %v4565 = vmul.f32 %v4182, %v4524
      %v4566 = vmul.f32 %v4184, %v4524
      %v4567 = vmul.f32 %v4186, %v4524
      %v4568 = vmul.f32 %v4188, %v4525
      %v4569 = vmul.f32 %v4190, %v4525
      %v4570 = vmul.f32 %v4192, %v4525
      %v4571 = vmul.f32 %v4194, %v4526
      %v4572 = vmul.f32 %v4196, %v4526
      %v4573 = vmul.f32 %v4198, %v4526
      %v4574 = vmul.f32 %v4200, %v4527
      %v4575 = vmul.f32 %v4202, %v4527
      %v4576 = vmul.f32 %v4204, %v4527
      %v4577 = vmul.f32 %v4206, %v4528
      %v4578 = vmul.f32 %v4208, %v4528
      %v4579 = vmul.f32 %v4210, %v4528
      %v4580 = vmul.f32 %v4212, %v4529
      %v4581 = vmul.f32 %v4214, %v4529
      %v4582 = vmul.f32 %v4216, %v4529
      %v4583 = vmul.f32 %v4218, %v4530
      %v4584 = vmul.f32 %v4220, %v4530
      %v4585 = vmul.f32 %v4222, %v4530
      %v4586 = vmul.f32 %v4224, %v4531
      %v4587 = vmul.f32 %v4226, %v4531
      %v4588 = vmul.f32 %v4228, %v4531
      %v4589 = vmul.f32 %v4230, %v4532
      %v4590 = vmul.f32 %v4232, %v4532
      %v4591 = vmul.f32 %v4234, %v4532
      %v4592 = vmul.f32 %v4236, %v4533
      %v4593 = vmul.f32 %v4238, %v4533
      %v4594 = vmul.f32 %v4240, %v4533
      %v4595 = vmul.f32 %v4242, %v4534
      %v4596 = vmul.f32 %v4244, %v4534
      %v4597 = vmul.f32 %v4246, %v4534
      %v4598 = vmul.f32 %v4248, %v4535
      %v4599 = vmul.f32 %v4250, %v4535
      %v4600 = vmul.f32 %v4252, %v4535
      %v4601 = vmul.f32 %v4254, %v4536
      %v4602 = vmul.f32 %v4256, %v4536
      %v4603 = vmul.f32 %v4258, %v4536
      %v4604 = vmul.f32 %v4260, %v4537
      %v4605 = vmul.f32 %v4262, %v4537
      %v4606 = vmul.f32 %v4264, %v4537
      %v4607 = vmul.f32 %v4266, %v4538
      %v4608 = vmul.f32 %v4268, %v4538
      %v4609 = vmul.f32 %v4270, %v4538
      %v4610 = vmul.f32 %v4272, %v4539
      %v4611 = vmul.f32 %v4274, %v4539
      %v4612 = vmul.f32 %v4276, %v4539
      %v4613 = vmul.f32 %v4278, %v4540
      %v4614 = vmul.f32 %v4280, %v4540
      %v4615 = vmul.f32 %v4282, %v4540
      %v4616 = vmul.f32 %v4284, %v4541
      %v4617 = vmul.f32 %v4286, %v4541
      %v4618 = vmul.f32 %v4288, %v4541
      %v4619 = vmul.f32 %v4290, %v4542
      %v4620 = vmul.f32 %v4292, %v4542
      %v4621 = vmul.f32 %v4294, %v4542
      %v4622 = vmul.f32 %v4296, %v4543
      %v4623 = vmul.f32 %v4298, %v4543
      %v4624 = vmul.f32 %v4300, %v4543
      %v4625 = vmul.f32 %v4302, %v4544
      %v4626 = vmul.f32 %v4304, %v4544
      %v4627 = vmul.f32 %v4306, %v4544
      %v4628 = vmul.f32 %v4308, %v4545
      %v4629 = vmul.f32 %v4310, %v4545
      %v4630 = vmul.f32 %v4312, %v4545
      %v4631 = vmul.f32 %v4314, %v4546
      %v4632 = vmul.f32 %v4316, %v4546
      %v4633 = vmul.f32 %v4318, %v4546
      %v4634 = vmul.f32 %v4320, %v4547
      %v4635 = vmul.f32 %v4322, %v4547
      %v4636 = vmul.f32 %v4324, %v4547
      %v4637 = vmul.f32 %v4326, %v4548
      %v4638 = vmul.f32 %v4328, %v4548
      %v4639 = vmul.f32 %v4330, %v4548
      %v4640 = vmul.f32 %v4332, %v4549
      %v4641 = vmul.f32 %v4334, %v4549
      %v4642 = vmul.f32 %v4336, %v4549
      %v4643 = vmul.f32 %v4338, %v4550
      %v4644 = vmul.f32 %v4340, %v4550
      %v4645 = vmul.f32 %v4342, %v4550
      %v4646 = vmul.f32 %v4344, %v4551
      %v4647 = vmul.f32 %v4346, %v4551
      %v4648 = vmul.f32 %v4348, %v4551
      %v4649 = vmul.f32 %v4350, %v4552
      %v4650 = vmul.f32 %v4352, %v4552
      %v4651 = vmul.f32 %v4354, %v4552
      %v4652 = vpack.c.bf16 %v4556, %v4553
      %v4653 = vpack.c.bf16 %v4557, %v4554
      %v4654 = vpack.c.bf16 %v4558, %v4555
      %v4655 = vpack.c.bf16 %v4562, %v4559
      %v4656 = vpack.c.bf16 %v4563, %v4560
      %v4657 = vpack.c.bf16 %v4564, %v4561
      %v4658 = vpack.c.bf16 %v4568, %v4565
      %v4659 = vpack.c.bf16 %v4569, %v4566
      %v4660 = vpack.c.bf16 %v4570, %v4567
      %v4661 = vpack.c.bf16 %v4574, %v4571
      %v4662 = vpack.c.bf16 %v4575, %v4572
      %v4663 = vpack.c.bf16 %v4576, %v4573
      %v4664 = vpack.c.bf16 %v4580, %v4577
      %v4665 = vpack.c.bf16 %v4581, %v4578
      %v4666 = vpack.c.bf16 %v4582, %v4579
      %v4667 = vpack.c.bf16 %v4586, %v4583
      %v4668 = vpack.c.bf16 %v4587, %v4584
      %v4669 = vpack.c.bf16 %v4588, %v4585
      %v4670 = vpack.c.bf16 %v4592, %v4589
      %v4671 = vpack.c.bf16 %v4593, %v4590
      %v4672 = vpack.c.bf16 %v4594, %v4591
      %v4673 = vpack.c.bf16 %v4598, %v4595
      %v4674 = vpack.c.bf16 %v4599, %v4596
      %v4675 = vpack.c.bf16 %v4600, %v4597
      %v4676 = vpack.c.bf16 %v4604, %v4601
      %v4677 = vpack.c.bf16 %v4605, %v4602
      %v4678 = vpack.c.bf16 %v4606, %v4603
      %v4679 = vpack.c.bf16 %v4610, %v4607
      %v4680 = vpack.c.bf16 %v4611, %v4608
      %v4681 = vpack.c.bf16 %v4612, %v4609
      %v4682 = vpack.c.bf16 %v4616, %v4613
      %v4683 = vpack.c.bf16 %v4617, %v4614
      %v4684 = vpack.c.bf16 %v4618, %v4615
      %v4685 = vpack.c.bf16 %v4622, %v4619
      %v4686 = vpack.c.bf16 %v4623, %v4620
      %v4687 = vpack.c.bf16 %v4624, %v4621
      %v4688 = vpack.c.bf16 %v4628, %v4625
      %v4689 = vpack.c.bf16 %v4629, %v4626
      %v4690 = vpack.c.bf16 %v4630, %v4627
      %v4691 = vpack.c.bf16 %v4634, %v4631
      %v4692 = vpack.c.bf16 %v4635, %v4632
      %v4693 = vpack.c.bf16 %v4636, %v4633
      %v4694 = vpack.c.bf16 %v4640, %v4637
      %v4695 = vpack.c.bf16 %v4641, %v4638
      %v4696 = vpack.c.bf16 %v4642, %v4639
      %v4697 = vpack.c.bf16 %v4646, %v4643
      %v4698 = vpack.c.bf16 %v4647, %v4644
      %v4699 = vpack.c.bf16 %v4648, %v4645
      %v4700 = vpack.c.bf16 %v4649, %v4649
      %v4701 = vpack.c.bf16 %v4650, %v4650
      %v4702 = vpack.c.bf16 %v4651, %v4651
      %v4704 = vsel %vm2081, %v4654, 0
      %v4707 = vsel %vm2081, %v4657, 0
      %v4710 = vsel %vm2081, %v4660, 0
      %v4713 = vsel %vm2081, %v4663, 0
      %v4716 = vsel %vm2081, %v4666, 0
      %v4719 = vsel %vm2081, %v4669, 0
      %v4722 = vsel %vm2081, %v4672, 0
      %v4725 = vsel %vm2081, %v4675, 0
      %v4728 = vsel %vm2081, %v4678, 0
      %v4731 = vsel %vm2081, %v4681, 0
      %v4734 = vsel %vm2081, %v4684, 0
      %v4737 = vsel %vm2081, %v4687, 0
      %v4740 = vsel %vm2081, %v4690, 0
      %v4743 = vsel %vm2081, %v4693, 0
      %v4746 = vsel %vm2081, %v4696, 0
      %v4749 = vsel %vm2081, %v4699, 0
      %v4752 = vsel %vm2081, %v4702, 0
      %v4755 = vsel %vm2942, %v3562, 0
      %4757 = vmatpush.bf16.msra.mxu0 %v3553
      %4758 = vmatpush.bf16.msra.mxu0 %v3552
      %4759 = vmatpush.bf16.msra.mxu0 %v3551
      %4760 = vmatpush.bf16.msra.mxu0 %v3550
      %4761 = vmatpush.bf16.msra.mxu0 %v3549
      %4762 = vmatpush.bf16.msra.mxu0 %v3548
      %4763 = vmatpush.bf16.msra.mxu0 %v3547
      %4764 = vmatpush.bf16.msra.mxu0 %v3546
      %4765 = vmatmul.bf16.gmra.mxu0 %v4652
      %v4766 = vpop.f32.mrf.mxu0
      %v4767 = vadd.f32 0.0, %v4766
      %v4768 = vpop.f32.mrf.mxu0
      %v4769 = vadd.f32 0.0, %v4768
      %4770 = vmatmul.bf16.gmra.mxu0 %v4655
      %v4771 = vpop.f32.mrf.mxu0
      %v4772 = vadd.f32 0.0, %v4771
      %v4773 = vpop.f32.mrf.mxu0
      %v4774 = vadd.f32 0.0, %v4773
      %4775 = vmatmul.bf16.gmra.mxu0 %v4658
      %v4776 = vpop.f32.mrf.mxu0
      %v4777 = vadd.f32 0.0, %v4776
      %v4778 = vpop.f32.mrf.mxu0
      %v4779 = vadd.f32 0.0, %v4778
      %4780 = vmatmul.bf16.gmra.mxu0 %v4661
      %v4781 = vpop.f32.mrf.mxu0
      %v4782 = vadd.f32 0.0, %v4781
      %v4783 = vpop.f32.mrf.mxu0
      %v4784 = vadd.f32 0.0, %v4783
      %4785 = vmatmul.bf16.gmra.mxu0 %v4664
      %v4786 = vpop.f32.mrf.mxu0
      %v4787 = vadd.f32 0.0, %v4786
      %v4788 = vpop.f32.mrf.mxu0
      %v4789 = vadd.f32 0.0, %v4788
      %4790 = vmatmul.bf16.gmra.mxu0 %v4667
      %v4791 = vpop.f32.mrf.mxu0
      %v4792 = vadd.f32 0.0, %v4791
      %v4793 = vpop.f32.mrf.mxu0
      %v4794 = vadd.f32 0.0, %v4793
      %4795 = vmatmul.bf16.gmra.mxu0 %v4670
      %v4796 = vpop.f32.mrf.mxu0
      %v4797 = vadd.f32 0.0, %v4796
      %v4798 = vpop.f32.mrf.mxu0
      %v4799 = vadd.f32 0.0, %v4798
      %4800 = vmatmul.bf16.gmra.mxu0 %v4673
      %v4801 = vpop.f32.mrf.mxu0
      %v4802 = vadd.f32 0.0, %v4801
      %v4803 = vpop.f32.mrf.mxu0
      %v4804 = vadd.f32 0.0, %v4803
      %4805 = vmatmul.bf16.gmra.mxu0 %v4676
      %v4806 = vpop.f32.mrf.mxu0
      %v4807 = vadd.f32 0.0, %v4806
      %v4808 = vpop.f32.mrf.mxu0
      %v4809 = vadd.f32 0.0, %v4808
      %4810 = vmatmul.bf16.gmra.mxu0 %v4679
      %v4811 = vpop.f32.mrf.mxu0
      %v4812 = vadd.f32 0.0, %v4811
      %v4813 = vpop.f32.mrf.mxu0
      %v4814 = vadd.f32 0.0, %v4813
      %4815 = vmatmul.bf16.gmra.mxu0 %v4682
      %v4816 = vpop.f32.mrf.mxu0
      %v4817 = vadd.f32 0.0, %v4816
      %v4818 = vpop.f32.mrf.mxu0
      %v4819 = vadd.f32 0.0, %v4818
      %4820 = vmatmul.bf16.gmra.mxu0 %v4685
      %v4821 = vpop.f32.mrf.mxu0
      %v4822 = vadd.f32 0.0, %v4821
      %v4823 = vpop.f32.mrf.mxu0
      %v4824 = vadd.f32 0.0, %v4823
      %4825 = vmatmul.bf16.gmra.mxu0 %v4688
      %v4826 = vpop.f32.mrf.mxu0
      %v4827 = vadd.f32 0.0, %v4826
      %v4828 = vpop.f32.mrf.mxu0
      %v4829 = vadd.f32 0.0, %v4828
      %4830 = vmatmul.bf16.gmra.mxu0 %v4691
      %v4831 = vpop.f32.mrf.mxu0
      %v4832 = vadd.f32 0.0, %v4831
      %v4833 = vpop.f32.mrf.mxu0
      %v4834 = vadd.f32 0.0, %v4833
      %4835 = vmatmul.bf16.gmra.mxu0 %v4694
      %v4836 = vpop.f32.mrf.mxu0
      %v4837 = vadd.f32 0.0, %v4836
      %v4838 = vpop.f32.mrf.mxu0
      %v4839 = vadd.f32 0.0, %v4838
      %4840 = vmatmul.bf16.gmra.mxu0 %v4697
      %v4841 = vpop.f32.mrf.mxu0
      %v4842 = vadd.f32 0.0, %v4841
      %v4843 = vpop.f32.mrf.mxu0
      %v4844 = vadd.f32 0.0, %v4843
      %4845 = vmatmul.bf16.gmra.mxu0 %v4700
      %v4846 = vpop.f32.mrf.mxu0
      %v4847 = vadd.f32 0.0, %v4846
      %v4848 = vpop.f32.mrf.mxu0
      %4849 = vdwg.mxu0
      %4850 = vmatpush.bf16.msra.mxu0 %v3561
      %4851 = vmatpush.bf16.msra.mxu0 %v3560
      %4852 = vmatpush.bf16.msra.mxu0 %v3559
      %4853 = vmatpush.bf16.msra.mxu0 %v3558
      %4854 = vmatpush.bf16.msra.mxu0 %v3557
      %4855 = vmatpush.bf16.msra.mxu0 %v3556
      %4856 = vmatpush.bf16.msra.mxu0 %v3555
      %4857 = vmatpush.bf16.msra.mxu0 %v3554
      %4858 = vmatmul.bf16.gmra.mxu0 %v4653
      %v4859 = vpop.f32.mrf.mxu0
      %v4860 = vadd.f32 %v4767, %v4859
      %v4861 = vpop.f32.mrf.mxu0
      %v4862 = vadd.f32 %v4769, %v4861
      %4863 = vmatmul.bf16.gmra.mxu0 %v4656
      %v4864 = vpop.f32.mrf.mxu0
      %v4865 = vadd.f32 %v4772, %v4864
      %v4866 = vpop.f32.mrf.mxu0
      %v4867 = vadd.f32 %v4774, %v4866
      %4868 = vmatmul.bf16.gmra.mxu0 %v4659
      %v4869 = vpop.f32.mrf.mxu0
      %v4870 = vadd.f32 %v4777, %v4869
      %v4871 = vpop.f32.mrf.mxu0
      %v4872 = vadd.f32 %v4779, %v4871
      %4873 = vmatmul.bf16.gmra.mxu0 %v4662
      %v4874 = vpop.f32.mrf.mxu0
      %v4875 = vadd.f32 %v4782, %v4874
      %v4876 = vpop.f32.mrf.mxu0
      %v4877 = vadd.f32 %v4784, %v4876
      %4878 = vmatmul.bf16.gmra.mxu0 %v4665
      %v4879 = vpop.f32.mrf.mxu0
      %v4880 = vadd.f32 %v4787, %v4879
      %v4881 = vpop.f32.mrf.mxu0
      %v4882 = vadd.f32 %v4789, %v4881
      %4883 = vmatmul.bf16.gmra.mxu0 %v4668
      %v4884 = vpop.f32.mrf.mxu0
      %v4885 = vadd.f32 %v4792, %v4884
      %v4886 = vpop.f32.mrf.mxu0
      %v4887 = vadd.f32 %v4794, %v4886
      %4888 = vmatmul.bf16.gmra.mxu0 %v4671
      %v4889 = vpop.f32.mrf.mxu0
      %v4890 = vadd.f32 %v4797, %v4889
      %v4891 = vpop.f32.mrf.mxu0
      %v4892 = vadd.f32 %v4799, %v4891
      %4893 = vmatmul.bf16.gmra.mxu0 %v4674
      %v4894 = vpop.f32.mrf.mxu0
      %v4895 = vadd.f32 %v4802, %v4894
      %v4896 = vpop.f32.mrf.mxu0
      %v4897 = vadd.f32 %v4804, %v4896
      %4898 = vmatmul.bf16.gmra.mxu0 %v4677
      %v4899 = vpop.f32.mrf.mxu0
      %v4900 = vadd.f32 %v4807, %v4899
      %v4901 = vpop.f32.mrf.mxu0
      %v4902 = vadd.f32 %v4809, %v4901
      %4903 = vmatmul.bf16.gmra.mxu0 %v4680
      %v4904 = vpop.f32.mrf.mxu0
      %v4905 = vadd.f32 %v4812, %v4904
      %v4906 = vpop.f32.mrf.mxu0
      %v4907 = vadd.f32 %v4814, %v4906
      %4908 = vmatmul.bf16.gmra.mxu0 %v4683
      %v4909 = vpop.f32.mrf.mxu0
      %v4910 = vadd.f32 %v4817, %v4909
      %v4911 = vpop.f32.mrf.mxu0
      %v4912 = vadd.f32 %v4819, %v4911
      %4913 = vmatmul.bf16.gmra.mxu0 %v4686
      %v4914 = vpop.f32.mrf.mxu0
      %v4915 = vadd.f32 %v4822, %v4914
      %v4916 = vpop.f32.mrf.mxu0
      %v4917 = vadd.f32 %v4824, %v4916
      %4918 = vmatmul.bf16.gmra.mxu0 %v4689
      %v4919 = vpop.f32.mrf.mxu0
      %v4920 = vadd.f32 %v4827, %v4919
      %v4921 = vpop.f32.mrf.mxu0
      %v4922 = vadd.f32 %v4829, %v4921
      %4923 = vmatmul.bf16.gmra.mxu0 %v4692
      %v4924 = vpop.f32.mrf.mxu0
      %v4925 = vadd.f32 %v4832, %v4924
      %v4926 = vpop.f32.mrf.mxu0
      %v4927 = vadd.f32 %v4834, %v4926
      %4928 = vmatmul.bf16.gmra.mxu0 %v4695
      %v4929 = vpop.f32.mrf.mxu0
      %v4930 = vadd.f32 %v4837, %v4929
      %v4931 = vpop.f32.mrf.mxu0
      %v4932 = vadd.f32 %v4839, %v4931
      %4933 = vmatmul.bf16.gmra.mxu0 %v4698
      %v4934 = vpop.f32.mrf.mxu0
      %v4935 = vadd.f32 %v4842, %v4934
      %v4936 = vpop.f32.mrf.mxu0
      %v4937 = vadd.f32 %v4844, %v4936
      %4938 = vmatmul.bf16.gmra.mxu0 %v4701
      %v4939 = vpop.f32.mrf.mxu0
      %v4940 = vadd.f32 %v4847, %v4939
      %v4941 = vpop.f32.mrf.mxu0
      %4942 = vdwg.mxu0
      %4943 = vmatpush.bf16.msra.mxu0 0
      %4944 = vmatpush.bf16.msra.mxu0 0
      %4945 = vmatpush.bf16.msra.mxu0 0
      %4946 = vmatpush.bf16.msra.mxu0 0
      %4947 = vmatpush.bf16.msra.mxu0 0
      %4948 = vmatpush.bf16.msra.mxu0 0
      %4949 = vmatpush.bf16.msra.mxu0 0
      %4950 = vmatpush.bf16.msra.mxu0 %v4755
      %4951 = vmatmul.bf16.gmra.mxu0 %v4704
      %v4952 = vpop.f32.mrf.mxu0
      %v4953 = vadd.f32 %v4860, %v4952
      %v4954 = vpop.f32.mrf.mxu0
      %v4955 = vadd.f32 %v4862, %v4954
      %4956 = vmatmul.bf16.gmra.mxu0 %v4707
      %v4957 = vpop.f32.mrf.mxu0
      %v4958 = vadd.f32 %v4865, %v4957
      %v4959 = vpop.f32.mrf.mxu0
      %v4960 = vadd.f32 %v4867, %v4959
      %4961 = vmatmul.bf16.gmra.mxu0 %v4710
      %v4962 = vpop.f32.mrf.mxu0
      %v4963 = vadd.f32 %v4870, %v4962
      %v4964 = vpop.f32.mrf.mxu0
      %v4965 = vadd.f32 %v4872, %v4964
      %4966 = vmatmul.bf16.gmra.mxu0 %v4713
      %v4967 = vpop.f32.mrf.mxu0
      %v4968 = vadd.f32 %v4875, %v4967
      %v4969 = vpop.f32.mrf.mxu0
      %v4970 = vadd.f32 %v4877, %v4969
      %4971 = vmatmul.bf16.gmra.mxu0 %v4716
      %v4972 = vpop.f32.mrf.mxu0
      %v4973 = vadd.f32 %v4880, %v4972
      %v4974 = vpop.f32.mrf.mxu0
      %v4975 = vadd.f32 %v4882, %v4974
      %4976 = vmatmul.bf16.gmra.mxu0 %v4719
      %v4977 = vpop.f32.mrf.mxu0
      %v4978 = vadd.f32 %v4885, %v4977
      %v4979 = vpop.f32.mrf.mxu0
      %v4980 = vadd.f32 %v4887, %v4979
      %4981 = vmatmul.bf16.gmra.mxu0 %v4722
      %v4982 = vpop.f32.mrf.mxu0
      %v4983 = vadd.f32 %v4890, %v4982
      %v4984 = vpop.f32.mrf.mxu0
      %v4985 = vadd.f32 %v4892, %v4984
      %4986 = vmatmul.bf16.gmra.mxu0 %v4725
      %v4987 = vpop.f32.mrf.mxu0
      %v4988 = vadd.f32 %v4895, %v4987
      %v4989 = vpop.f32.mrf.mxu0
      %v4990 = vadd.f32 %v4897, %v4989
      %4991 = vmatmul.bf16.gmra.mxu0 %v4728
      %v4992 = vpop.f32.mrf.mxu0
      %v4993 = vadd.f32 %v4900, %v4992
      %v4994 = vpop.f32.mrf.mxu0
      %v4995 = vadd.f32 %v4902, %v4994
      %4996 = vmatmul.bf16.gmra.mxu0 %v4731
      %v4997 = vpop.f32.mrf.mxu0
      %v4998 = vadd.f32 %v4905, %v4997
      %v4999 = vpop.f32.mrf.mxu0
      %v5000 = vadd.f32 %v4907, %v4999
      %5001 = vmatmul.bf16.gmra.mxu0 %v4734
      %v5002 = vpop.f32.mrf.mxu0
      %v5003 = vadd.f32 %v4910, %v5002
      %v5004 = vpop.f32.mrf.mxu0
      %v5005 = vadd.f32 %v4912, %v5004
      %5006 = vmatmul.bf16.gmra.mxu0 %v4737
      %v5007 = vpop.f32.mrf.mxu0
      %v5008 = vadd.f32 %v4915, %v5007
      %v5009 = vpop.f32.mrf.mxu0
      %v5010 = vadd.f32 %v4917, %v5009
      %5011 = vmatmul.bf16.gmra.mxu0 %v4740
      %v5012 = vpop.f32.mrf.mxu0
      %v5013 = vadd.f32 %v4920, %v5012
      %v5014 = vpop.f32.mrf.mxu0
      %v5015 = vadd.f32 %v4922, %v5014
      %5016 = vmatmul.bf16.gmra.mxu0 %v4743
      %v5017 = vpop.f32.mrf.mxu0
      %v5018 = vadd.f32 %v4925, %v5017
      %v5019 = vpop.f32.mrf.mxu0
      %v5020 = vadd.f32 %v4927, %v5019
      %5021 = vmatmul.bf16.gmra.mxu0 %v4746
      %v5022 = vpop.f32.mrf.mxu0
      %v5023 = vadd.f32 %v4930, %v5022
      %v5024 = vpop.f32.mrf.mxu0
      %v5025 = vadd.f32 %v4932, %v5024
      %5026 = vmatmul.bf16.gmra.mxu0 %v4749
      %v5027 = vpop.f32.mrf.mxu0
      %v5028 = vadd.f32 %v4935, %v5027
      %v5029 = vpop.f32.mrf.mxu0
      %v5030 = vadd.f32 %v4937, %v5029
      %5031 = vmatmul.bf16.gmra.mxu0 %v4752
      %v5032 = vpop.f32.mrf.mxu0
      %v5033 = vadd.f32 %v4940, %v5032
      %v5034 = vpop.f32.mrf.mxu0
      %5035 = vdwg.mxu0
      %v5036 = vpack.c.bf16 %v4955, %v4953
      %v5037 = vpack.c.bf16 %v4960, %v4958
      %v5038 = vpack.c.bf16 %v4965, %v4963
      %v5039 = vpack.c.bf16 %v4970, %v4968
      %v5040 = vpack.c.bf16 %v4975, %v4973
      %v5041 = vpack.c.bf16 %v4980, %v4978
      %v5042 = vpack.c.bf16 %v4985, %v4983
      %v5043 = vpack.c.bf16 %v4990, %v4988
      %v5044 = vpack.c.bf16 %v4995, %v4993
      %v5045 = vpack.c.bf16 %v5000, %v4998
      %v5046 = vpack.c.bf16 %v5005, %v5003
      %v5047 = vpack.c.bf16 %v5010, %v5008
      %v5048 = vpack.c.bf16 %v5015, %v5013
      %v5049 = vpack.c.bf16 %v5020, %v5018
      %v5050 = vpack.c.bf16 %v5025, %v5023
      %v5051 = vpack.c.bf16 %v5030, %v5028
      %v5052 = vpack.c.bf16 %v5033, %v5033
      %s5053 = scalar_lea.vmem %s6, 8
      %v5054 = vld [vmem:[%s5053] sm:$0xf]
      %v5055 = vld [vmem:[%s5053 + $0x4] sm:$0xf]
      %v5058 = vunpack.c.l.b16 %v5054
      %v5059 = vunpack.c.l.b16 %v5055
      %v5060 = vpack.c.b16 %v5059, %v5058
      %v5063 = vsel %vm1749, %v5036, 0
      %v5066 = vsel %vm1749, %v5037, 0
      %v5069 = vsel %vm1749, %v5038, 0
      %v5072 = vsel %vm1749, %v5039, 0
      %v5075 = vsel %vm1749, %v5040, 0
      %v5078 = vsel %vm1749, %v5041, 0
      %v5081 = vsel %vm1749, %v5042, 0
      %v5084 = vsel %vm1749, %v5043, 0
      %v5087 = vsel %vm1749, %v5044, 0
      %v5090 = vsel %vm1749, %v5045, 0
      %v5093 = vsel %vm1749, %v5046, 0
      %v5096 = vsel %vm1749, %v5047, 0
      %v5099 = vsel %vm1749, %v5048, 0
      %v5102 = vsel %vm1749, %v5049, 0
      %v5105 = vsel %vm1749, %v5050, 0
      %v5108 = vsel %vm1749, %v5051, 0
      %v5111 = vsel %vm1749, %v5052, 0
      %5113 = vmatpush.bf16.msra.mxu0 0
      %5114 = vmatpush.bf16.msra.mxu0 0
      %5115 = vmatpush.bf16.msra.mxu0 0
      %5116 = vmatpush.bf16.msra.mxu0 0
      %5117 = vmatpush.bf16.msra.mxu0 0
      %5118 = vmatpush.bf16.msra.mxu0 0
      %5119 = vmatpush.bf16.msra.mxu0 0
      %5120 = vmatpush.bf16.msra.mxu0 %v5060
      %5121 = vmatmul.bf16.gmra.mxu0 %v5063
      %v5122 = vpop.f32.mrf.mxu0
      %v5123 = vpop.f32.mrf.mxu0
      %v5124 = vadd.f32 0.0, %v5123
      %5125 = vmatmul.bf16.gmra.mxu0 %v5066
      %v5126 = vpop.f32.mrf.mxu0
      %v5127 = vadd.f32 0.0, %v5126
      %v5128 = vpop.f32.mrf.mxu0
      %v5129 = vadd.f32 0.0, %v5128
      %5130 = vmatmul.bf16.gmra.mxu0 %v5069
      %v5131 = vpop.f32.mrf.mxu0
      %v5132 = vadd.f32 0.0, %v5131
      %v5133 = vpop.f32.mrf.mxu0
      %v5134 = vadd.f32 0.0, %v5133
      %5135 = vmatmul.bf16.gmra.mxu0 %v5072
      %v5136 = vpop.f32.mrf.mxu0
      %v5137 = vadd.f32 0.0, %v5136
      %v5138 = vpop.f32.mrf.mxu0
      %v5139 = vadd.f32 0.0, %v5138
      %5140 = vmatmul.bf16.gmra.mxu0 %v5075
      %v5141 = vpop.f32.mrf.mxu0
      %v5142 = vadd.f32 0.0, %v5141
      %v5143 = vpop.f32.mrf.mxu0
      %v5144 = vadd.f32 0.0, %v5143
      %5145 = vmatmul.bf16.gmra.mxu0 %v5078
      %v5146 = vpop.f32.mrf.mxu0
      %v5147 = vadd.f32 0.0, %v5146
      %v5148 = vpop.f32.mrf.mxu0
      %v5149 = vadd.f32 0.0, %v5148
      %5150 = vmatmul.bf16.gmra.mxu0 %v5081
      %v5151 = vpop.f32.mrf.mxu0
      %v5152 = vadd.f32 0.0, %v5151
      %v5153 = vpop.f32.mrf.mxu0
      %v5154 = vadd.f32 0.0, %v5153
      %5155 = vmatmul.bf16.gmra.mxu0 %v5084
      %v5156 = vpop.f32.mrf.mxu0
      %v5157 = vadd.f32 0.0, %v5156
      %v5158 = vpop.f32.mrf.mxu0
      %v5159 = vadd.f32 0.0, %v5158
      %5160 = vmatmul.bf16.gmra.mxu0 %v5087
      %v5161 = vpop.f32.mrf.mxu0
      %v5162 = vadd.f32 0.0, %v5161
      %v5163 = vpop.f32.mrf.mxu0
      %v5164 = vadd.f32 0.0, %v5163
      %5165 = vmatmul.bf16.gmra.mxu0 %v5090
      %v5166 = vpop.f32.mrf.mxu0
      %v5167 = vadd.f32 0.0, %v5166
      %v5168 = vpop.f32.mrf.mxu0
      %v5169 = vadd.f32 0.0, %v5168
      %5170 = vmatmul.bf16.gmra.mxu0 %v5093
      %v5171 = vpop.f32.mrf.mxu0
      %v5172 = vadd.f32 0.0, %v5171
      %v5173 = vpop.f32.mrf.mxu0
      %v5174 = vadd.f32 0.0, %v5173
      %5175 = vmatmul.bf16.gmra.mxu0 %v5096
      %v5176 = vpop.f32.mrf.mxu0
      %v5177 = vadd.f32 0.0, %v5176
      %v5178 = vpop.f32.mrf.mxu0
      %v5179 = vadd.f32 0.0, %v5178
      %5180 = vmatmul.bf16.gmra.mxu0 %v5099
      %v5181 = vpop.f32.mrf.mxu0
      %v5182 = vadd.f32 0.0, %v5181
      %v5183 = vpop.f32.mrf.mxu0
      %v5184 = vadd.f32 0.0, %v5183
      %5185 = vmatmul.bf16.gmra.mxu0 %v5102
      %v5186 = vpop.f32.mrf.mxu0
      %v5187 = vadd.f32 0.0, %v5186
      %v5188 = vpop.f32.mrf.mxu0
      %v5189 = vadd.f32 0.0, %v5188
      %5190 = vmatmul.bf16.gmra.mxu0 %v5105
      %v5191 = vpop.f32.mrf.mxu0
      %v5192 = vadd.f32 0.0, %v5191
      %v5193 = vpop.f32.mrf.mxu0
      %v5194 = vadd.f32 0.0, %v5193
      %5195 = vmatmul.bf16.gmra.mxu0 %v5108
      %v5196 = vpop.f32.mrf.mxu0
      %v5197 = vadd.f32 0.0, %v5196
      %v5198 = vpop.f32.mrf.mxu0
      %v5199 = vadd.f32 0.0, %v5198
      %5200 = vmatmul.bf16.gmra.mxu0 %v5111
      %v5201 = vpop.f32.mrf.mxu0
      %v5202 = vadd.f32 0.0, %v5201
      %v5203 = vpop.f32.mrf.mxu0
      %5204 = vdwg.mxu0
      %v5207 = vunpack.c.l.b16 %v3242
      %v5208 = vunpack.c.l.b16 %v3243
      %v5209 = vpack.c.b16 %v5208, %v5207
      %v5212 = vsel %vm1749, %v3225, 0
      %v5215 = vsel %vm1749, %v3226, 0
      %v5218 = vsel %vm1749, %v3227, 0
      %v5221 = vsel %vm1749, %v3228, 0
      %v5224 = vsel %vm1749, %v3229, 0
      %v5227 = vsel %vm1749, %v3230, 0
      %v5230 = vsel %vm1749, %v3231, 0
      %v5233 = vsel %vm1749, %v3232, 0
      %v5236 = vsel %vm1749, %v3233, 0
      %v5239 = vsel %vm1749, %v3234, 0
      %v5242 = vsel %vm1749, %v3235, 0
      %v5245 = vsel %vm1749, %v3236, 0
      %v5248 = vsel %vm1749, %v3237, 0
      %v5251 = vsel %vm1749, %v3238, 0
      %v5254 = vsel %vm1749, %v3239, 0
      %v5257 = vsel %vm1749, %v3240, 0
      %v5260 = vsel %vm1749, %v3241, 0
      %5262 = vmatpush.bf16.msra.mxu0 0
      %5263 = vmatpush.bf16.msra.mxu0 0
      %5264 = vmatpush.bf16.msra.mxu0 0
      %5265 = vmatpush.bf16.msra.mxu0 0
      %5266 = vmatpush.bf16.msra.mxu0 0
      %5267 = vmatpush.bf16.msra.mxu0 0
      %5268 = vmatpush.bf16.msra.mxu0 0
      %5269 = vmatpush.bf16.msra.mxu0 %v5209
      %5270 = vmatmul.bf16.gmra.mxu0 %v5212
      %v5271 = vpop.f32.mrf.mxu0
      %v5272 = vpop.f32.mrf.mxu0
      %v5273 = vadd.f32 %v5124, %v5272
      %5274 = vmatmul.bf16.gmra.mxu0 %v5215
      %v5275 = vpop.f32.mrf.mxu0
      %v5276 = vadd.f32 %v5127, %v5275
      %v5277 = vpop.f32.mrf.mxu0
      %v5278 = vadd.f32 %v5129, %v5277
      %5279 = vmatmul.bf16.gmra.mxu0 %v5218
      %v5280 = vpop.f32.mrf.mxu0
      %v5281 = vadd.f32 %v5132, %v5280
      %v5282 = vpop.f32.mrf.mxu0
      %v5283 = vadd.f32 %v5134, %v5282
      %5284 = vmatmul.bf16.gmra.mxu0 %v5221
      %v5285 = vpop.f32.mrf.mxu0
      %v5286 = vadd.f32 %v5137, %v5285
      %v5287 = vpop.f32.mrf.mxu0
      %v5288 = vadd.f32 %v5139, %v5287
      %5289 = vmatmul.bf16.gmra.mxu0 %v5224
      %v5290 = vpop.f32.mrf.mxu0
      %v5291 = vadd.f32 %v5142, %v5290
      %v5292 = vpop.f32.mrf.mxu0
      %v5293 = vadd.f32 %v5144, %v5292
      %5294 = vmatmul.bf16.gmra.mxu0 %v5227
      %v5295 = vpop.f32.mrf.mxu0
      %v5296 = vadd.f32 %v5147, %v5295
      %v5297 = vpop.f32.mrf.mxu0
      %v5298 = vadd.f32 %v5149, %v5297
      %5299 = vmatmul.bf16.gmra.mxu0 %v5230
      %v5300 = vpop.f32.mrf.mxu0
      %v5301 = vadd.f32 %v5152, %v5300
      %v5302 = vpop.f32.mrf.mxu0
      %v5303 = vadd.f32 %v5154, %v5302
      %5304 = vmatmul.bf16.gmra.mxu0 %v5233
      %v5305 = vpop.f32.mrf.mxu0
      %v5306 = vadd.f32 %v5157, %v5305
      %v5307 = vpop.f32.mrf.mxu0
      %v5308 = vadd.f32 %v5159, %v5307
      %5309 = vmatmul.bf16.gmra.mxu0 %v5236
      %v5310 = vpop.f32.mrf.mxu0
      %v5311 = vadd.f32 %v5162, %v5310
      %v5312 = vpop.f32.mrf.mxu0
      %v5313 = vadd.f32 %v5164, %v5312
      %5314 = vmatmul.bf16.gmra.mxu0 %v5239
      %v5315 = vpop.f32.mrf.mxu0
      %v5316 = vadd.f32 %v5167, %v5315
      %v5317 = vpop.f32.mrf.mxu0
      %v5318 = vadd.f32 %v5169, %v5317
      %5319 = vmatmul.bf16.gmra.mxu0 %v5242
      %v5320 = vpop.f32.mrf.mxu0
      %v5321 = vadd.f32 %v5172, %v5320
      %v5322 = vpop.f32.mrf.mxu0
      %v5323 = vadd.f32 %v5174, %v5322
      %5324 = vmatmul.bf16.gmra.mxu0 %v5245
      %v5325 = vpop.f32.mrf.mxu0
      %v5326 = vadd.f32 %v5177, %v5325
      %v5327 = vpop.f32.mrf.mxu0
      %v5328 = vadd.f32 %v5179, %v5327
      %5329 = vmatmul.bf16.gmra.mxu0 %v5248
      %v5330 = vpop.f32.mrf.mxu0
      %v5331 = vadd.f32 %v5182, %v5330
      %v5332 = vpop.f32.mrf.mxu0
      %v5333 = vadd.f32 %v5184, %v5332
      %5334 = vmatmul.bf16.gmra.mxu0 %v5251
      %v5335 = vpop.f32.mrf.mxu0
      %v5336 = vadd.f32 %v5187, %v5335
      %v5337 = vpop.f32.mrf.mxu0
      %v5338 = vadd.f32 %v5189, %v5337
      %5339 = vmatmul.bf16.gmra.mxu0 %v5254
      %v5340 = vpop.f32.mrf.mxu0
      %v5341 = vadd.f32 %v5192, %v5340
      %v5342 = vpop.f32.mrf.mxu0
      %v5343 = vadd.f32 %v5194, %v5342
      %5344 = vmatmul.bf16.gmra.mxu0 %v5257
      %v5345 = vpop.f32.mrf.mxu0
      %v5346 = vadd.f32 %v5197, %v5345
      %v5347 = vpop.f32.mrf.mxu0
      %v5348 = vadd.f32 %v5199, %v5347
      %5349 = vmatmul.bf16.gmra.mxu0 %v5260
      %v5350 = vpop.f32.mrf.mxu0
      %v5351 = vadd.f32 %v5202, %v5350
      %v5352 = vpop.f32.mrf.mxu0
      %5353 = vdwg.mxu0
      %s5354 = scalar_lea.vmem %s4, 64
      %v5355 = vld [vmem:[%s5354] sm:$0xf]
      %v5356 = vld [vmem:[%s5354 + $0x4] sm:$0xf]
      %v5357 = vld [vmem:[%s5354 + $0x8] sm:$0xf]
      %v5358 = vld [vmem:[%s5354 + $0xc] sm:$0xf]
      %v5359 = vld [vmem:[%s5354 + $0x10] sm:$0xf]
      %v5360 = vld [vmem:[%s5354 + $0x14] sm:$0xf]
      %v5361 = vld [vmem:[%s5354 + $0x18] sm:$0xf]
      %v5362 = vld [vmem:[%s5354 + $0x1c] sm:$0xf]
      %v5371 = vunpack.c.l.b16 %v5355
      %v5372 = vunpack.c.l.b16 %v5356
      %v5373 = vunpack.c.l.b16 %v5357
      %v5374 = vunpack.c.l.b16 %v5358
      %v5375 = vunpack.c.l.b16 %v5359
      %v5376 = vunpack.c.l.b16 %v5360
      %v5377 = vunpack.c.l.b16 %v5361
      %v5378 = vunpack.c.l.b16 %v5362
      %v5379 = vpack.c.b16 %v5372, %v5371
      %v5380 = vpack.c.b16 %v5374, %v5373
      %v5381 = vpack.c.b16 %v5376, %v5375
      %v5382 = vpack.c.b16 %v5378, %v5377
      %5387 = vmatpush.bf16.msra.mxu0 0
      %5388 = vmatpush.bf16.msra.mxu0 0
      %5389 = vmatpush.bf16.msra.mxu0 0
      %5390 = vmatpush.bf16.msra.mxu0 0
      %5391 = vmatpush.bf16.msra.mxu0 %v5382
      %5392 = vmatpush.bf16.msra.mxu0 %v5381
      %5393 = vmatpush.bf16.msra.mxu0 %v5380
      %5394 = vmatpush.bf16.msra.mxu0 %v5379
      %5395 = vmatmul.bf16.gmra.mxu0 %v1414
      %v5396 = vpop.f32.mrf.mxu0
      %v5397 = vadd.f32 0.0, %v5396
      %v5398 = vpop.f32.mrf.mxu0
      %v5399 = vadd.f32 0.0, %v5398
      %5400 = vmatmul.bf16.gmra.mxu0 %v1417
      %v5401 = vpop.f32.mrf.mxu0
      %v5402 = vadd.f32 0.0, %v5401
      %v5403 = vpop.f32.mrf.mxu0
      %v5404 = vadd.f32 0.0, %v5403
      %5405 = vmatmul.bf16.gmra.mxu0 %v1420
      %v5406 = vpop.f32.mrf.mxu0
      %v5407 = vadd.f32 0.0, %v5406
      %v5408 = vpop.f32.mrf.mxu0
      %v5409 = vadd.f32 0.0, %v5408
      %5410 = vmatmul.bf16.gmra.mxu0 %v1423
      %v5411 = vpop.f32.mrf.mxu0
      %v5412 = vadd.f32 0.0, %v5411
      %v5413 = vpop.f32.mrf.mxu0
      %v5414 = vadd.f32 0.0, %v5413
      %5415 = vmatmul.bf16.gmra.mxu0 %v1426
      %v5416 = vpop.f32.mrf.mxu0
      %v5417 = vadd.f32 0.0, %v5416
      %v5418 = vpop.f32.mrf.mxu0
      %v5419 = vadd.f32 0.0, %v5418
      %5420 = vmatmul.bf16.gmra.mxu0 %v1429
      %v5421 = vpop.f32.mrf.mxu0
      %v5422 = vadd.f32 0.0, %v5421
      %v5423 = vpop.f32.mrf.mxu0
      %v5424 = vadd.f32 0.0, %v5423
      %5425 = vmatmul.bf16.gmra.mxu0 %v1432
      %v5426 = vpop.f32.mrf.mxu0
      %v5427 = vadd.f32 0.0, %v5426
      %v5428 = vpop.f32.mrf.mxu0
      %v5429 = vadd.f32 0.0, %v5428
      %5430 = vmatmul.bf16.gmra.mxu0 %v1435
      %v5431 = vpop.f32.mrf.mxu0
      %v5432 = vadd.f32 0.0, %v5431
      %v5433 = vpop.f32.mrf.mxu0
      %v5434 = vadd.f32 0.0, %v5433
      %5435 = vmatmul.bf16.gmra.mxu0 %v1438
      %v5436 = vpop.f32.mrf.mxu0
      %v5437 = vadd.f32 0.0, %v5436
      %v5438 = vpop.f32.mrf.mxu0
      %v5439 = vadd.f32 0.0, %v5438
      %5440 = vmatmul.bf16.gmra.mxu0 %v1441
      %v5441 = vpop.f32.mrf.mxu0
      %v5442 = vadd.f32 0.0, %v5441
      %v5443 = vpop.f32.mrf.mxu0
      %v5444 = vadd.f32 0.0, %v5443
      %5445 = vmatmul.bf16.gmra.mxu0 %v1444
      %v5446 = vpop.f32.mrf.mxu0
      %v5447 = vadd.f32 0.0, %v5446
      %v5448 = vpop.f32.mrf.mxu0
      %v5449 = vadd.f32 0.0, %v5448
      %5450 = vmatmul.bf16.gmra.mxu0 %v1447
      %v5451 = vpop.f32.mrf.mxu0
      %v5452 = vadd.f32 0.0, %v5451
      %v5453 = vpop.f32.mrf.mxu0
      %v5454 = vadd.f32 0.0, %v5453
      %5455 = vmatmul.bf16.gmra.mxu0 %v1450
      %v5456 = vpop.f32.mrf.mxu0
      %v5457 = vadd.f32 0.0, %v5456
      %v5458 = vpop.f32.mrf.mxu0
      %v5459 = vadd.f32 0.0, %v5458
      %5460 = vmatmul.bf16.gmra.mxu0 %v1453
      %v5461 = vpop.f32.mrf.mxu0
      %v5462 = vadd.f32 0.0, %v5461
      %v5463 = vpop.f32.mrf.mxu0
      %v5464 = vadd.f32 0.0, %v5463
      %5465 = vmatmul.bf16.gmra.mxu0 %v1456
      %v5466 = vpop.f32.mrf.mxu0
      %v5467 = vadd.f32 0.0, %v5466
      %v5468 = vpop.f32.mrf.mxu0
      %v5469 = vadd.f32 0.0, %v5468
      %5470 = vmatmul.bf16.gmra.mxu0 %v1459
      %v5471 = vpop.f32.mrf.mxu0
      %v5472 = vadd.f32 0.0, %v5471
      %v5473 = vpop.f32.mrf.mxu0
      %v5474 = vadd.f32 0.0, %v5473
      %5475 = vmatmul.bf16.gmra.mxu0 %v1462
      %v5476 = vpop.f32.mrf.mxu0
      %v5477 = vadd.f32 0.0, %v5476
      %v5478 = vpop.f32.mrf.mxu0
      %5479 = vdwg.mxu0
      %s5480 = scalar_lea.vmem %s5, 64
      %v5481 = vld [vmem:[%s5480] sm:$0xf]
      %v5482 = vld [vmem:[%s5480 + $0x4] sm:$0xf]
      %v5483 = vld [vmem:[%s5480 + $0x8] sm:$0xf]
      %v5484 = vld [vmem:[%s5480 + $0xc] sm:$0xf]
      %v5485 = vld [vmem:[%s5480 + $0x10] sm:$0xf]
      %v5486 = vld [vmem:[%s5480 + $0x14] sm:$0xf]
      %v5487 = vld [vmem:[%s5480 + $0x18] sm:$0xf]
      %v5488 = vld [vmem:[%s5480 + $0x1c] sm:$0xf]
      %v5497 = vunpack.c.l.b16 %v5481
      %v5498 = vunpack.c.l.b16 %v5482
      %v5499 = vunpack.c.l.b16 %v5483
      %v5500 = vunpack.c.l.b16 %v5484
      %v5501 = vunpack.c.l.b16 %v5485
      %v5502 = vunpack.c.l.b16 %v5486
      %v5503 = vunpack.c.l.b16 %v5487
      %v5504 = vunpack.c.l.b16 %v5488
      %v5505 = vpack.c.b16 %v5498, %v5497
      %v5506 = vpack.c.b16 %v5500, %v5499
      %v5507 = vpack.c.b16 %v5502, %v5501
      %v5508 = vpack.c.b16 %v5504, %v5503
      %5513 = vmatpush.bf16.msra.mxu0 0
      %5514 = vmatpush.bf16.msra.mxu0 0
      %5515 = vmatpush.bf16.msra.mxu0 0
      %5516 = vmatpush.bf16.msra.mxu0 0
      %5517 = vmatpush.bf16.msra.mxu0 %v5508
      %5518 = vmatpush.bf16.msra.mxu0 %v5507
      %5519 = vmatpush.bf16.msra.mxu0 %v5506
      %5520 = vmatpush.bf16.msra.mxu0 %v5505
      %5521 = vmatmul.bf16.gmra.mxu0 %v1414
      %v5522 = vpop.f32.mrf.mxu0
      %v5523 = vadd.f32 0.0, %v5522
      %v5524 = vpop.f32.mrf.mxu0
      %v5525 = vadd.f32 0.0, %v5524
      %5526 = vmatmul.bf16.gmra.mxu0 %v1417
      %v5527 = vpop.f32.mrf.mxu0
      %v5528 = vadd.f32 0.0, %v5527
      %v5529 = vpop.f32.mrf.mxu0
      %v5530 = vadd.f32 0.0, %v5529
      %5531 = vmatmul.bf16.gmra.mxu0 %v1420
      %v5532 = vpop.f32.mrf.mxu0
      %v5533 = vadd.f32 0.0, %v5532
      %v5534 = vpop.f32.mrf.mxu0
      %v5535 = vadd.f32 0.0, %v5534
      %5536 = vmatmul.bf16.gmra.mxu0 %v1423
      %v5537 = vpop.f32.mrf.mxu0
      %v5538 = vadd.f32 0.0, %v5537
      %v5539 = vpop.f32.mrf.mxu0
      %v5540 = vadd.f32 0.0, %v5539
      %5541 = vmatmul.bf16.gmra.mxu0 %v1426
      %v5542 = vpop.f32.mrf.mxu0
      %v5543 = vadd.f32 0.0, %v5542
      %v5544 = vpop.f32.mrf.mxu0
      %v5545 = vadd.f32 0.0, %v5544
      %5546 = vmatmul.bf16.gmra.mxu0 %v1429
      %v5547 = vpop.f32.mrf.mxu0
      %v5548 = vadd.f32 0.0, %v5547
      %v5549 = vpop.f32.mrf.mxu0
      %v5550 = vadd.f32 0.0, %v5549
      %5551 = vmatmul.bf16.gmra.mxu0 %v1432
      %v5552 = vpop.f32.mrf.mxu0
      %v5553 = vadd.f32 0.0, %v5552
      %v5554 = vpop.f32.mrf.mxu0
      %v5555 = vadd.f32 0.0, %v5554
      %5556 = vmatmul.bf16.gmra.mxu0 %v1435
      %v5557 = vpop.f32.mrf.mxu0
      %v5558 = vadd.f32 0.0, %v5557
      %v5559 = vpop.f32.mrf.mxu0
      %v5560 = vadd.f32 0.0, %v5559
      %5561 = vmatmul.bf16.gmra.mxu0 %v1438
      %v5562 = vpop.f32.mrf.mxu0
      %v5563 = vadd.f32 0.0, %v5562
      %v5564 = vpop.f32.mrf.mxu0
      %v5565 = vadd.f32 0.0, %v5564
      %5566 = vmatmul.bf16.gmra.mxu0 %v1441
      %v5567 = vpop.f32.mrf.mxu0
      %v5568 = vadd.f32 0.0, %v5567
      %v5569 = vpop.f32.mrf.mxu0
      %v5570 = vadd.f32 0.0, %v5569
      %5571 = vmatmul.bf16.gmra.mxu0 %v1444
      %v5572 = vpop.f32.mrf.mxu0
      %v5573 = vadd.f32 0.0, %v5572
      %v5574 = vpop.f32.mrf.mxu0
      %v5575 = vadd.f32 0.0, %v5574
      %5576 = vmatmul.bf16.gmra.mxu0 %v1447
      %v5577 = vpop.f32.mrf.mxu0
      %v5578 = vadd.f32 0.0, %v5577
      %v5579 = vpop.f32.mrf.mxu0
      %v5580 = vadd.f32 0.0, %v5579
      %5581 = vmatmul.bf16.gmra.mxu0 %v1450
      %v5582 = vpop.f32.mrf.mxu0
      %v5583 = vadd.f32 0.0, %v5582
      %v5584 = vpop.f32.mrf.mxu0
      %v5585 = vadd.f32 0.0, %v5584
      %5586 = vmatmul.bf16.gmra.mxu0 %v1453
      %v5587 = vpop.f32.mrf.mxu0
      %v5588 = vadd.f32 0.0, %v5587
      %v5589 = vpop.f32.mrf.mxu0
      %v5590 = vadd.f32 0.0, %v5589
      %5591 = vmatmul.bf16.gmra.mxu0 %v1456
      %v5592 = vpop.f32.mrf.mxu0
      %v5593 = vadd.f32 0.0, %v5592
      %v5594 = vpop.f32.mrf.mxu0
      %v5595 = vadd.f32 0.0, %v5594
      %5596 = vmatmul.bf16.gmra.mxu0 %v1459
      %v5597 = vpop.f32.mrf.mxu0
      %v5598 = vadd.f32 0.0, %v5597
      %v5599 = vpop.f32.mrf.mxu0
      %v5600 = vadd.f32 0.0, %v5599
      %5601 = vmatmul.bf16.gmra.mxu0 %v1462
      %v5602 = vpop.f32.mrf.mxu0
      %v5603 = vadd.f32 0.0, %v5602
      %v5604 = vpop.f32.mrf.mxu0
      %5605 = vdwg.mxu0
      %v5606 = vmul.f32 %v5397, 0.5
      %v5607 = vmul.f32 %v5399, 0.5
      %v5608 = vmul.f32 %v5402, 0.5
      %v5609 = vmul.f32 %v5404, 0.5
      %v5610 = vmul.f32 %v5407, 0.5
      %v5611 = vmul.f32 %v5409, 0.5
      %v5612 = vmul.f32 %v5412, 0.5
      %v5613 = vmul.f32 %v5414, 0.5
      %v5614 = vmul.f32 %v5417, 0.5
      %v5615 = vmul.f32 %v5419, 0.5
      %v5616 = vmul.f32 %v5422, 0.5
      %v5617 = vmul.f32 %v5424, 0.5
      %v5618 = vmul.f32 %v5427, 0.5
      %v5619 = vmul.f32 %v5429, 0.5
      %v5620 = vmul.f32 %v5432, 0.5
      %v5621 = vmul.f32 %v5434, 0.5
      %v5622 = vmul.f32 %v5437, 0.5
      %v5623 = vmul.f32 %v5439, 0.5
      %v5624 = vmul.f32 %v5442, 0.5
      %v5625 = vmul.f32 %v5444, 0.5
      %v5626 = vmul.f32 %v5447, 0.5
      %v5627 = vmul.f32 %v5449, 0.5
      %v5628 = vmul.f32 %v5452, 0.5
      %v5629 = vmul.f32 %v5454, 0.5
      %v5630 = vmul.f32 %v5457, 0.5
      %v5631 = vmul.f32 %v5459, 0.5
      %v5632 = vmul.f32 %v5462, 0.5
      %v5633 = vmul.f32 %v5464, 0.5
      %v5634 = vmul.f32 %v5467, 0.5
      %v5635 = vmul.f32 %v5469, 0.5
      %v5636 = vmul.f32 %v5472, 0.5
      %v5637 = vmul.f32 %v5474, 0.5
      %v5638 = vmul.f32 %v5477, 0.5
      %v5639 = vpack.c.bf16 %v5607, %v5606
      %v5640 = vpack.c.bf16 %v5609, %v5608
      %v5641 = vpack.c.bf16 %v5611, %v5610
      %v5642 = vpack.c.bf16 %v5613, %v5612
      %v5643 = vpack.c.bf16 %v5615, %v5614
      %v5644 = vpack.c.bf16 %v5617, %v5616
      %v5645 = vpack.c.bf16 %v5619, %v5618
      %v5646 = vpack.c.bf16 %v5621, %v5620
      %v5647 = vpack.c.bf16 %v5623, %v5622
      %v5648 = vpack.c.bf16 %v5625, %v5624
      %v5649 = vpack.c.bf16 %v5627, %v5626
      %v5650 = vpack.c.bf16 %v5629, %v5628
      %v5651 = vpack.c.bf16 %v5631, %v5630
      %v5652 = vpack.c.bf16 %v5633, %v5632
      %v5653 = vpack.c.bf16 %v5635, %v5634
      %v5654 = vpack.c.bf16 %v5637, %v5636
      %v5655 = vpack.c.bf16 %v5638, %v5638
      %v5656 = vpack.c.bf16 %v5525, %v5523
      %v5657 = vpack.c.bf16 %v5530, %v5528
      %v5658 = vpack.c.bf16 %v5535, %v5533
      %v5659 = vpack.c.bf16 %v5540, %v5538
      %v5660 = vpack.c.bf16 %v5545, %v5543
      %v5661 = vpack.c.bf16 %v5550, %v5548
      %v5662 = vpack.c.bf16 %v5555, %v5553
      %v5663 = vpack.c.bf16 %v5560, %v5558
      %v5664 = vpack.c.bf16 %v5565, %v5563
      %v5665 = vpack.c.bf16 %v5570, %v5568
      %v5666 = vpack.c.bf16 %v5575, %v5573
      %v5667 = vpack.c.bf16 %v5580, %v5578
      %v5668 = vpack.c.bf16 %v5585, %v5583
      %v5669 = vpack.c.bf16 %v5590, %v5588
      %v5670 = vpack.c.bf16 %v5595, %v5593
      %v5671 = vpack.c.bf16 %v5600, %v5598
      %v5672 = vpack.c.bf16 %v5603, %v5603
      %v5674 = vsel %vm1749, %v5639, 0
      %v5677 = vsel %vm1749, %v5640, 0
      %v5680 = vsel %vm1749, %v5641, 0
      %v5683 = vsel %vm1749, %v5642, 0
      %v5686 = vsel %vm1749, %v5643, 0
      %v5689 = vsel %vm1749, %v5644, 0
      %v5692 = vsel %vm1749, %v5645, 0
      %v5695 = vsel %vm1749, %v5646, 0
      %v5698 = vsel %vm1749, %v5647, 0
      %v5701 = vsel %vm1749, %v5648, 0
      %v5704 = vsel %vm1749, %v5649, 0
      %v5707 = vsel %vm1749, %v5650, 0
      %v5710 = vsel %vm1749, %v5651, 0
      %v5713 = vsel %vm1749, %v5652, 0
      %v5716 = vsel %vm1749, %v5653, 0
      %v5719 = vsel %vm1749, %v5654, 0
      %v5722 = vsel %vm1749, %v5655, 0
      %5724 = vmatpush.bf16.xpose.msra.mxu0 %v5695
      %5725 = vmatpush.bf16.xpose.msra.mxu0 %v5692
      %5726 = vmatpush.bf16.xpose.msra.mxu0 %v5689
      %5727 = vmatpush.bf16.xpose.msra.mxu0 %v5686
      %5728 = vmatpush.bf16.xpose.msra.mxu0 %v5683
      %5729 = vmatpush.bf16.xpose.msra.mxu0 %v5680
      %5730 = vmatpush.bf16.xpose.msra.mxu0 %v5677
      %5731 = vmatpush.bf16.xpose.msra.mxu0 %v5674
      %5732 = vmatmul.bf16.gmra.mxu0 %v5674
      %v5733 = vpop.f32.mrf.mxu0
      %v5734 = vadd.f32 0.0, %v5733
      %v5735 = vpop.f32.mrf.mxu0
      %v5736 = vadd.f32 0.0, %v5735
      %5737 = vmatmul.bf16.gmra.mxu0 %v5677
      %v5738 = vpop.f32.mrf.mxu0
      %v5739 = vadd.f32 0.0, %v5738
      %v5740 = vpop.f32.mrf.mxu0
      %v5741 = vadd.f32 0.0, %v5740
      %5742 = vmatmul.bf16.gmra.mxu0 %v5680
      %v5743 = vpop.f32.mrf.mxu0
      %v5744 = vadd.f32 0.0, %v5743
      %v5745 = vpop.f32.mrf.mxu0
      %v5746 = vadd.f32 0.0, %v5745
      %5747 = vmatmul.bf16.gmra.mxu0 %v5683
      %v5748 = vpop.f32.mrf.mxu0
      %v5749 = vadd.f32 0.0, %v5748
      %v5750 = vpop.f32.mrf.mxu0
      %v5751 = vadd.f32 0.0, %v5750
      %5752 = vmatmul.bf16.gmra.mxu0 %v5686
      %v5753 = vpop.f32.mrf.mxu0
      %v5754 = vadd.f32 0.0, %v5753
      %v5755 = vpop.f32.mrf.mxu0
      %v5756 = vadd.f32 0.0, %v5755
      %5757 = vmatmul.bf16.gmra.mxu0 %v5689
      %v5758 = vpop.f32.mrf.mxu0
      %v5759 = vadd.f32 0.0, %v5758
      %v5760 = vpop.f32.mrf.mxu0
      %v5761 = vadd.f32 0.0, %v5760
      %5762 = vmatmul.bf16.gmra.mxu0 %v5692
      %v5763 = vpop.f32.mrf.mxu0
      %v5764 = vadd.f32 0.0, %v5763
      %v5765 = vpop.f32.mrf.mxu0
      %v5766 = vadd.f32 0.0, %v5765
      %5767 = vmatmul.bf16.gmra.mxu0 %v5695
      %v5768 = vpop.f32.mrf.mxu0
      %v5769 = vadd.f32 0.0, %v5768
      %v5770 = vpop.f32.mrf.mxu0
      %v5771 = vadd.f32 0.0, %v5770
      %5772 = vmatmul.bf16.gmra.mxu0 %v5698
      %v5773 = vpop.f32.mrf.mxu0
      %v5774 = vadd.f32 0.0, %v5773
      %v5775 = vpop.f32.mrf.mxu0
      %v5776 = vadd.f32 0.0, %v5775
      %5777 = vmatmul.bf16.gmra.mxu0 %v5701
      %v5778 = vpop.f32.mrf.mxu0
      %v5779 = vadd.f32 0.0, %v5778
      %v5780 = vpop.f32.mrf.mxu0
      %v5781 = vadd.f32 0.0, %v5780
      %5782 = vmatmul.bf16.gmra.mxu0 %v5704
      %v5783 = vpop.f32.mrf.mxu0
      %v5784 = vadd.f32 0.0, %v5783
      %v5785 = vpop.f32.mrf.mxu0
      %v5786 = vadd.f32 0.0, %v5785
      %5787 = vmatmul.bf16.gmra.mxu0 %v5707
      %v5788 = vpop.f32.mrf.mxu0
      %v5789 = vadd.f32 0.0, %v5788
      %v5790 = vpop.f32.mrf.mxu0
      %v5791 = vadd.f32 0.0, %v5790
      %5792 = vmatmul.bf16.gmra.mxu0 %v5710
      %v5793 = vpop.f32.mrf.mxu0
      %v5794 = vadd.f32 0.0, %v5793
      %v5795 = vpop.f32.mrf.mxu0
      %v5796 = vadd.f32 0.0, %v5795
      %5797 = vmatmul.bf16.gmra.mxu0 %v5713
      %v5798 = vpop.f32.mrf.mxu0
      %v5799 = vadd.f32 0.0, %v5798
      %v5800 = vpop.f32.mrf.mxu0
      %v5801 = vadd.f32 0.0, %v5800
      %5802 = vmatmul.bf16.gmra.mxu0 %v5716
      %v5803 = vpop.f32.mrf.mxu0
      %v5804 = vadd.f32 0.0, %v5803
      %v5805 = vpop.f32.mrf.mxu0
      %v5806 = vadd.f32 0.0, %v5805
      %5807 = vmatmul.bf16.gmra.mxu0 %v5719
      %v5808 = vpop.f32.mrf.mxu0
      %v5809 = vadd.f32 0.0, %v5808
      %v5810 = vpop.f32.mrf.mxu0
      %v5811 = vadd.f32 0.0, %v5810
      %5812 = vmatmul.bf16.gmra.mxu0 %v5722
      %v5813 = vpop.f32.mrf.mxu0
      %v5814 = vadd.f32 0.0, %v5813
      %v5815 = vpop.f32.mrf.mxu0
      %5816 = vdwg.mxu0
      %5817 = vmatpush.bf16.xpose.msra.mxu0 %v5719
      %5818 = vmatpush.bf16.xpose.msra.mxu0 %v5716
      %5819 = vmatpush.bf16.xpose.msra.mxu0 %v5713
      %5820 = vmatpush.bf16.xpose.msra.mxu0 %v5710
      %5821 = vmatpush.bf16.xpose.msra.mxu0 %v5707
      %5822 = vmatpush.bf16.xpose.msra.mxu0 %v5704
      %5823 = vmatpush.bf16.xpose.msra.mxu0 %v5701
      %5824 = vmatpush.bf16.xpose.msra.mxu0 %v5698
      %5825 = vmatmul.bf16.gmra.mxu0 %v5674
      %v5826 = vpop.f32.mrf.mxu0
      %v5827 = vadd.f32 0.0, %v5826
      %v5828 = vpop.f32.mrf.mxu0
      %v5829 = vadd.f32 0.0, %v5828
      %5830 = vmatmul.bf16.gmra.mxu0 %v5677
      %v5831 = vpop.f32.mrf.mxu0
      %v5832 = vadd.f32 0.0, %v5831
      %v5833 = vpop.f32.mrf.mxu0
      %v5834 = vadd.f32 0.0, %v5833
      %5835 = vmatmul.bf16.gmra.mxu0 %v5680
      %v5836 = vpop.f32.mrf.mxu0
      %v5837 = vadd.f32 0.0, %v5836
      %v5838 = vpop.f32.mrf.mxu0
      %v5839 = vadd.f32 0.0, %v5838
      %5840 = vmatmul.bf16.gmra.mxu0 %v5683
      %v5841 = vpop.f32.mrf.mxu0
      %v5842 = vadd.f32 0.0, %v5841
      %v5843 = vpop.f32.mrf.mxu0
      %v5844 = vadd.f32 0.0, %v5843
      %5845 = vmatmul.bf16.gmra.mxu0 %v5686
      %v5846 = vpop.f32.mrf.mxu0
      %v5847 = vadd.f32 0.0, %v5846
      %v5848 = vpop.f32.mrf.mxu0
      %v5849 = vadd.f32 0.0, %v5848
      %5850 = vmatmul.bf16.gmra.mxu0 %v5689
      %v5851 = vpop.f32.mrf.mxu0
      %v5852 = vadd.f32 0.0, %v5851
      %v5853 = vpop.f32.mrf.mxu0
      %v5854 = vadd.f32 0.0, %v5853
      %5855 = vmatmul.bf16.gmra.mxu0 %v5692
      %v5856 = vpop.f32.mrf.mxu0
      %v5857 = vadd.f32 0.0, %v5856
      %v5858 = vpop.f32.mrf.mxu0
      %v5859 = vadd.f32 0.0, %v5858
      %5860 = vmatmul.bf16.gmra.mxu0 %v5695
      %v5861 = vpop.f32.mrf.mxu0
      %v5862 = vadd.f32 0.0, %v5861
      %v5863 = vpop.f32.mrf.mxu0
      %v5864 = vadd.f32 0.0, %v5863
      %5865 = vmatmul.bf16.gmra.mxu0 %v5698
      %v5866 = vpop.f32.mrf.mxu0
      %v5867 = vadd.f32 0.0, %v5866
      %v5868 = vpop.f32.mrf.mxu0
      %v5869 = vadd.f32 0.0, %v5868
      %5870 = vmatmul.bf16.gmra.mxu0 %v5701
      %v5871 = vpop.f32.mrf.mxu0
      %v5872 = vadd.f32 0.0, %v5871
      %v5873 = vpop.f32.mrf.mxu0
      %v5874 = vadd.f32 0.0, %v5873
      %5875 = vmatmul.bf16.gmra.mxu0 %v5704
      %v5876 = vpop.f32.mrf.mxu0
      %v5877 = vadd.f32 0.0, %v5876
      %v5878 = vpop.f32.mrf.mxu0
      %v5879 = vadd.f32 0.0, %v5878
      %5880 = vmatmul.bf16.gmra.mxu0 %v5707
      %v5881 = vpop.f32.mrf.mxu0
      %v5882 = vadd.f32 0.0, %v5881
      %v5883 = vpop.f32.mrf.mxu0
      %v5884 = vadd.f32 0.0, %v5883
      %5885 = vmatmul.bf16.gmra.mxu0 %v5710
      %v5886 = vpop.f32.mrf.mxu0
      %v5887 = vadd.f32 0.0, %v5886
      %v5888 = vpop.f32.mrf.mxu0
      %v5889 = vadd.f32 0.0, %v5888
      %5890 = vmatmul.bf16.gmra.mxu0 %v5713
      %v5891 = vpop.f32.mrf.mxu0
      %v5892 = vadd.f32 0.0, %v5891
      %v5893 = vpop.f32.mrf.mxu0
      %v5894 = vadd.f32 0.0, %v5893
      %5895 = vmatmul.bf16.gmra.mxu0 %v5716
      %v5896 = vpop.f32.mrf.mxu0
      %v5897 = vadd.f32 0.0, %v5896
      %v5898 = vpop.f32.mrf.mxu0
      %v5899 = vadd.f32 0.0, %v5898
      %5900 = vmatmul.bf16.gmra.mxu0 %v5719
      %v5901 = vpop.f32.mrf.mxu0
      %v5902 = vadd.f32 0.0, %v5901
      %v5903 = vpop.f32.mrf.mxu0
      %v5904 = vadd.f32 0.0, %v5903
      %5905 = vmatmul.bf16.gmra.mxu0 %v5722
      %v5906 = vpop.f32.mrf.mxu0
      %v5907 = vadd.f32 0.0, %v5906
      %v5908 = vpop.f32.mrf.mxu0
      %5909 = vdwg.mxu0
      %5910 = vmatpush.bf16.xpose.msra.mxu0 0
      %5911 = vmatpush.bf16.xpose.msra.mxu0 0
      %5912 = vmatpush.bf16.xpose.msra.mxu0 0
      %5913 = vmatpush.bf16.xpose.msra.mxu0 0
      %5914 = vmatpush.bf16.xpose.msra.mxu0 0
      %5915 = vmatpush.bf16.xpose.msra.mxu0 0
      %5916 = vmatpush.bf16.xpose.msra.mxu0 0
      %5917 = vmatpush.bf16.xpose.msra.mxu0 %v5722
      %5918 = vmatmul.bf16.gmra.mxu0 %v5674
      %v5919 = vpop.f32.mrf.mxu0
      %v5920 = vadd.f32 0.0, %v5919
      %v5921 = vpop.f32.mrf.mxu0
      %v5922 = vadd.f32 0.0, %v5921
      %5923 = vmatmul.bf16.gmra.mxu0 %v5677
      %v5924 = vpop.f32.mrf.mxu0
      %v5925 = vadd.f32 0.0, %v5924
      %v5926 = vpop.f32.mrf.mxu0
      %v5927 = vadd.f32 0.0, %v5926
      %5928 = vmatmul.bf16.gmra.mxu0 %v5680
      %v5929 = vpop.f32.mrf.mxu0
      %v5930 = vadd.f32 0.0, %v5929
      %v5931 = vpop.f32.mrf.mxu0
      %v5932 = vadd.f32 0.0, %v5931
      %5933 = vmatmul.bf16.gmra.mxu0 %v5683
      %v5934 = vpop.f32.mrf.mxu0
      %v5935 = vadd.f32 0.0, %v5934
      %v5936 = vpop.f32.mrf.mxu0
      %v5937 = vadd.f32 0.0, %v5936
      %5938 = vmatmul.bf16.gmra.mxu0 %v5686
      %v5939 = vpop.f32.mrf.mxu0
      %v5940 = vadd.f32 0.0, %v5939
      %v5941 = vpop.f32.mrf.mxu0
      %v5942 = vadd.f32 0.0, %v5941
      %5943 = vmatmul.bf16.gmra.mxu0 %v5689
      %v5944 = vpop.f32.mrf.mxu0
      %v5945 = vadd.f32 0.0, %v5944
      %v5946 = vpop.f32.mrf.mxu0
      %v5947 = vadd.f32 0.0, %v5946
      %5948 = vmatmul.bf16.gmra.mxu0 %v5692
      %v5949 = vpop.f32.mrf.mxu0
      %v5950 = vadd.f32 0.0, %v5949
      %v5951 = vpop.f32.mrf.mxu0
      %v5952 = vadd.f32 0.0, %v5951
      %5953 = vmatmul.bf16.gmra.mxu0 %v5695
      %v5954 = vpop.f32.mrf.mxu0
      %v5955 = vadd.f32 0.0, %v5954
      %v5956 = vpop.f32.mrf.mxu0
      %v5957 = vadd.f32 0.0, %v5956
      %5958 = vmatmul.bf16.gmra.mxu0 %v5698
      %v5959 = vpop.f32.mrf.mxu0
      %v5960 = vadd.f32 0.0, %v5959
      %v5961 = vpop.f32.mrf.mxu0
      %v5962 = vadd.f32 0.0, %v5961
      %5963 = vmatmul.bf16.gmra.mxu0 %v5701
      %v5964 = vpop.f32.mrf.mxu0
      %v5965 = vadd.f32 0.0, %v5964
      %v5966 = vpop.f32.mrf.mxu0
      %v5967 = vadd.f32 0.0, %v5966
      %5968 = vmatmul.bf16.gmra.mxu0 %v5704
      %v5969 = vpop.f32.mrf.mxu0
      %v5970 = vadd.f32 0.0, %v5969
      %v5971 = vpop.f32.mrf.mxu0
      %v5972 = vadd.f32 0.0, %v5971
      %5973 = vmatmul.bf16.gmra.mxu0 %v5707
      %v5974 = vpop.f32.mrf.mxu0
      %v5975 = vadd.f32 0.0, %v5974
      %v5976 = vpop.f32.mrf.mxu0
      %v5977 = vadd.f32 0.0, %v5976
      %5978 = vmatmul.bf16.gmra.mxu0 %v5710
      %v5979 = vpop.f32.mrf.mxu0
      %v5980 = vadd.f32 0.0, %v5979
      %v5981 = vpop.f32.mrf.mxu0
      %v5982 = vadd.f32 0.0, %v5981
      %5983 = vmatmul.bf16.gmra.mxu0 %v5713
      %v5984 = vpop.f32.mrf.mxu0
      %v5985 = vadd.f32 0.0, %v5984
      %v5986 = vpop.f32.mrf.mxu0
      %v5987 = vadd.f32 0.0, %v5986
      %5988 = vmatmul.bf16.gmra.mxu0 %v5716
      %v5989 = vpop.f32.mrf.mxu0
      %v5990 = vadd.f32 0.0, %v5989
      %v5991 = vpop.f32.mrf.mxu0
      %v5992 = vadd.f32 0.0, %v5991
      %5993 = vmatmul.bf16.gmra.mxu0 %v5719
      %v5994 = vpop.f32.mrf.mxu0
      %v5995 = vadd.f32 0.0, %v5994
      %v5996 = vpop.f32.mrf.mxu0
      %v5997 = vadd.f32 0.0, %v5996
      %5998 = vmatmul.bf16.gmra.mxu0 %v5722
      %v5999 = vpop.f32.mrf.mxu0
      %v6000 = vadd.f32 0.0, %v5999
      %v6001 = vpop.f32.mrf.mxu0
      %6002 = vdwg.mxu0
      %v6003 = vmax.f32 %v5734, %v5827
      %v6004 = vsel %vm2081, %v5920, -inf
      %v6005 = vmax.f32 %v6003, %v6004
      %6006 = vmax.xlane.f32.xlu0 %v6005
      %v6007 = vpop.xlane.xlu0 %6006
      %v6008 = vmax.f32 %v5736, %v5829
      %v6009 = vsel %vm2081, %v5922, -inf
      %v6010 = vmax.f32 %v6008, %v6009
      %6011 = vmax.xlane.f32.xlu0 %v6010
      %v6012 = vpop.xlane.xlu0 %6011
      %v6013 = vmax.f32 %v5739, %v5832
      %v6014 = vsel %vm2081, %v5925, -inf
      %v6015 = vmax.f32 %v6013, %v6014
      %6016 = vmax.xlane.f32.xlu0 %v6015
      %v6017 = vpop.xlane.xlu0 %6016
      %v6018 = vmax.f32 %v5741, %v5834
      %v6019 = vsel %vm2081, %v5927, -inf
      %v6020 = vmax.f32 %v6018, %v6019
      %6021 = vmax.xlane.f32.xlu0 %v6020
      %v6022 = vpop.xlane.xlu0 %6021
      %v6023 = vmax.f32 %v5744, %v5837
      %v6024 = vsel %vm2081, %v5930, -inf
      %v6025 = vmax.f32 %v6023, %v6024
      %6026 = vmax.xlane.f32.xlu0 %v6025
      %v6027 = vpop.xlane.xlu0 %6026
      %v6028 = vmax.f32 %v5746, %v5839
      %v6029 = vsel %vm2081, %v5932, -inf
      %v6030 = vmax.f32 %v6028, %v6029
      %6031 = vmax.xlane.f32.xlu0 %v6030
      %v6032 = vpop.xlane.xlu0 %6031
      %v6033 = vmax.f32 %v5749, %v5842
      %v6034 = vsel %vm2081, %v5935, -inf
      %v6035 = vmax.f32 %v6033, %v6034
      %6036 = vmax.xlane.f32.xlu0 %v6035
      %v6037 = vpop.xlane.xlu0 %6036
      %v6038 = vmax.f32 %v5751, %v5844
      %v6039 = vsel %vm2081, %v5937, -inf
      %v6040 = vmax.f32 %v6038, %v6039
      %6041 = vmax.xlane.f32.xlu0 %v6040
      %v6042 = vpop.xlane.xlu0 %6041
      %v6043 = vmax.f32 %v5754, %v5847
      %v6044 = vsel %vm2081, %v5940, -inf
      %v6045 = vmax.f32 %v6043, %v6044
      %6046 = vmax.xlane.f32.xlu0 %v6045
      %v6047 = vpop.xlane.xlu0 %6046
      %v6048 = vmax.f32 %v5756, %v5849
      %v6049 = vsel %vm2081, %v5942, -inf
      %v6050 = vmax.f32 %v6048, %v6049
      %6051 = vmax.xlane.f32.xlu0 %v6050
      %v6052 = vpop.xlane.xlu0 %6051
      %v6053 = vmax.f32 %v5759, %v5852
      %v6054 = vsel %vm2081, %v5945, -inf
      %v6055 = vmax.f32 %v6053, %v6054
      %6056 = vmax.xlane.f32.xlu0 %v6055
      %v6057 = vpop.xlane.xlu0 %6056
      %v6058 = vmax.f32 %v5761, %v5854
      %v6059 = vsel %vm2081, %v5947, -inf
      %v6060 = vmax.f32 %v6058, %v6059
      %6061 = vmax.xlane.f32.xlu0 %v6060
      %v6062 = vpop.xlane.xlu0 %6061
      %v6063 = vmax.f32 %v5764, %v5857
      %v6064 = vsel %vm2081, %v5950, -inf
      %v6065 = vmax.f32 %v6063, %v6064
      %6066 = vmax.xlane.f32.xlu0 %v6065
      %v6067 = vpop.xlane.xlu0 %6066
      %v6068 = vmax.f32 %v5766, %v5859
      %v6069 = vsel %vm2081, %v5952, -inf
      %v6070 = vmax.f32 %v6068, %v6069
      %6071 = vmax.xlane.f32.xlu0 %v6070
      %v6072 = vpop.xlane.xlu0 %6071
      %v6073 = vmax.f32 %v5769, %v5862
      %v6074 = vsel %vm2081, %v5955, -inf
      %v6075 = vmax.f32 %v6073, %v6074
      %6076 = vmax.xlane.f32.xlu0 %v6075
      %v6077 = vpop.xlane.xlu0 %6076
      %v6078 = vmax.f32 %v5771, %v5864
      %v6079 = vsel %vm2081, %v5957, -inf
      %v6080 = vmax.f32 %v6078, %v6079
      %6081 = vmax.xlane.f32.xlu0 %v6080
      %v6082 = vpop.xlane.xlu0 %6081
      %v6083 = vmax.f32 %v5774, %v5867
      %v6084 = vsel %vm2081, %v5960, -inf
      %v6085 = vmax.f32 %v6083, %v6084
      %6086 = vmax.xlane.f32.xlu0 %v6085
      %v6087 = vpop.xlane.xlu0 %6086
      %v6088 = vmax.f32 %v5776, %v5869
      %v6089 = vsel %vm2081, %v5962, -inf
      %v6090 = vmax.f32 %v6088, %v6089
      %6091 = vmax.xlane.f32.xlu0 %v6090
      %v6092 = vpop.xlane.xlu0 %6091
      %v6093 = vmax.f32 %v5779, %v5872
      %v6094 = vsel %vm2081, %v5965, -inf
      %v6095 = vmax.f32 %v6093, %v6094
      %6096 = vmax.xlane.f32.xlu0 %v6095
      %v6097 = vpop.xlane.xlu0 %6096
      %v6098 = vmax.f32 %v5781, %v5874
      %v6099 = vsel %vm2081, %v5967, -inf
      %v6100 = vmax.f32 %v6098, %v6099
      %6101 = vmax.xlane.f32.xlu0 %v6100
      %v6102 = vpop.xlane.xlu0 %6101
      %v6103 = vmax.f32 %v5784, %v5877
      %v6104 = vsel %vm2081, %v5970, -inf
      %v6105 = vmax.f32 %v6103, %v6104
      %6106 = vmax.xlane.f32.xlu0 %v6105
      %v6107 = vpop.xlane.xlu0 %6106
      %v6108 = vmax.f32 %v5786, %v5879
      %v6109 = vsel %vm2081, %v5972, -inf
      %v6110 = vmax.f32 %v6108, %v6109
      %6111 = vmax.xlane.f32.xlu0 %v6110
      %v6112 = vpop.xlane.xlu0 %6111
      %v6113 = vmax.f32 %v5789, %v5882
      %v6114 = vsel %vm2081, %v5975, -inf
      %v6115 = vmax.f32 %v6113, %v6114
      %6116 = vmax.xlane.f32.xlu0 %v6115
      %v6117 = vpop.xlane.xlu0 %6116
      %v6118 = vmax.f32 %v5791, %v5884
      %v6119 = vsel %vm2081, %v5977, -inf
      %v6120 = vmax.f32 %v6118, %v6119
      %6121 = vmax.xlane.f32.xlu0 %v6120
      %v6122 = vpop.xlane.xlu0 %6121
      %v6123 = vmax.f32 %v5794, %v5887
      %v6124 = vsel %vm2081, %v5980, -inf
      %v6125 = vmax.f32 %v6123, %v6124
      %6126 = vmax.xlane.f32.xlu0 %v6125
      %v6127 = vpop.xlane.xlu0 %6126
      %v6128 = vmax.f32 %v5796, %v5889
      %v6129 = vsel %vm2081, %v5982, -inf
      %v6130 = vmax.f32 %v6128, %v6129
      %6131 = vmax.xlane.f32.xlu0 %v6130
      %v6132 = vpop.xlane.xlu0 %6131
      %v6133 = vmax.f32 %v5799, %v5892
      %v6134 = vsel %vm2081, %v5985, -inf
      %v6135 = vmax.f32 %v6133, %v6134
      %6136 = vmax.xlane.f32.xlu0 %v6135
      %v6137 = vpop.xlane.xlu0 %6136
      %v6138 = vmax.f32 %v5801, %v5894
      %v6139 = vsel %vm2081, %v5987, -inf
      %v6140 = vmax.f32 %v6138, %v6139
      %6141 = vmax.xlane.f32.xlu0 %v6140
      %v6142 = vpop.xlane.xlu0 %6141
      %v6143 = vmax.f32 %v5804, %v5897
      %v6144 = vsel %vm2081, %v5990, -inf
      %v6145 = vmax.f32 %v6143, %v6144
      %6146 = vmax.xlane.f32.xlu0 %v6145
      %v6147 = vpop.xlane.xlu0 %6146
      %v6148 = vmax.f32 %v5806, %v5899
      %v6149 = vsel %vm2081, %v5992, -inf
      %v6150 = vmax.f32 %v6148, %v6149
      %6151 = vmax.xlane.f32.xlu0 %v6150
      %v6152 = vpop.xlane.xlu0 %6151
      %v6153 = vmax.f32 %v5809, %v5902
      %v6154 = vsel %vm2081, %v5995, -inf
      %v6155 = vmax.f32 %v6153, %v6154
      %6156 = vmax.xlane.f32.xlu0 %v6155
      %v6157 = vpop.xlane.xlu0 %6156
      %v6158 = vmax.f32 %v5811, %v5904
      %v6159 = vsel %vm2081, %v5997, -inf
      %v6160 = vmax.f32 %v6158, %v6159
      %6161 = vmax.xlane.f32.xlu0 %v6160
      %v6162 = vpop.xlane.xlu0 %6161
      %v6163 = vmax.f32 %v5814, %v5907
      %v6164 = vsel %vm2081, %v6000, -inf
      %v6165 = vmax.f32 %v6163, %v6164
      %6166 = vmax.xlane.f32.xlu0 %v6165
      %v6167 = vpop.xlane.xlu0 %6166
      %v6168 = vsub.f32 %v5734, %v6007
      %v6169 = vsub.f32 %v5827, %v6007
      %v6170 = vsub.f32 %v5920, %v6007
      %v6171 = vsub.f32 %v5736, %v6012
      %v6172 = vsub.f32 %v5829, %v6012
      %v6173 = vsub.f32 %v5922, %v6012
      %v6174 = vsub.f32 %v5739, %v6017
      %v6175 = vsub.f32 %v5832, %v6017
      %v6176 = vsub.f32 %v5925, %v6017
      %v6177 = vsub.f32 %v5741, %v6022
      %v6178 = vsub.f32 %v5834, %v6022
      %v6179 = vsub.f32 %v5927, %v6022
      %v6180 = vsub.f32 %v5744, %v6027
      %v6181 = vsub.f32 %v5837, %v6027
      %v6182 = vsub.f32 %v5930, %v6027
      %v6183 = vsub.f32 %v5746, %v6032
      %v6184 = vsub.f32 %v5839, %v6032
      %v6185 = vsub.f32 %v5932, %v6032
      %v6186 = vsub.f32 %v5749, %v6037
      %v6187 = vsub.f32 %v5842, %v6037
      %v6188 = vsub.f32 %v5935, %v6037
      %v6189 = vsub.f32 %v5751, %v6042
      %v6190 = vsub.f32 %v5844, %v6042
      %v6191 = vsub.f32 %v5937, %v6042
      %v6192 = vsub.f32 %v5754, %v6047
      %v6193 = vsub.f32 %v5847, %v6047
      %v6194 = vsub.f32 %v5940, %v6047
      %v6195 = vsub.f32 %v5756, %v6052
      %v6196 = vsub.f32 %v5849, %v6052
      %v6197 = vsub.f32 %v5942, %v6052
      %v6198 = vsub.f32 %v5759, %v6057
      %v6199 = vsub.f32 %v5852, %v6057
      %v6200 = vsub.f32 %v5945, %v6057
      %v6201 = vsub.f32 %v5761, %v6062
      %v6202 = vsub.f32 %v5854, %v6062
      %v6203 = vsub.f32 %v5947, %v6062
      %v6204 = vsub.f32 %v5764, %v6067
      %v6205 = vsub.f32 %v5857, %v6067
      %v6206 = vsub.f32 %v5950, %v6067
      %v6207 = vsub.f32 %v5766, %v6072
      %v6208 = vsub.f32 %v5859, %v6072
      %v6209 = vsub.f32 %v5952, %v6072
      %v6210 = vsub.f32 %v5769, %v6077
      %v6211 = vsub.f32 %v5862, %v6077
      %v6212 = vsub.f32 %v5955, %v6077
      %v6213 = vsub.f32 %v5771, %v6082
      %v6214 = vsub.f32 %v5864, %v6082
      %v6215 = vsub.f32 %v5957, %v6082
      %v6216 = vsub.f32 %v5774, %v6087
      %v6217 = vsub.f32 %v5867, %v6087
      %v6218 = vsub.f32 %v5960, %v6087
      %v6219 = vsub.f32 %v5776, %v6092
      %v6220 = vsub.f32 %v5869, %v6092
      %v6221 = vsub.f32 %v5962, %v6092
      %v6222 = vsub.f32 %v5779, %v6097
      %v6223 = vsub.f32 %v5872, %v6097
      %v6224 = vsub.f32 %v5965, %v6097
      %v6225 = vsub.f32 %v5781, %v6102
      %v6226 = vsub.f32 %v5874, %v6102
      %v6227 = vsub.f32 %v5967, %v6102
      %v6228 = vsub.f32 %v5784, %v6107
      %v6229 = vsub.f32 %v5877, %v6107
      %v6230 = vsub.f32 %v5970, %v6107
      %v6231 = vsub.f32 %v5786, %v6112
      %v6232 = vsub.f32 %v5879, %v6112
      %v6233 = vsub.f32 %v5972, %v6112
      %v6234 = vsub.f32 %v5789, %v6117
      %v6235 = vsub.f32 %v5882, %v6117
      %v6236 = vsub.f32 %v5975, %v6117
      %v6237 = vsub.f32 %v5791, %v6122
      %v6238 = vsub.f32 %v5884, %v6122
      %v6239 = vsub.f32 %v5977, %v6122
      %v6240 = vsub.f32 %v5794, %v6127
      %v6241 = vsub.f32 %v5887, %v6127
      %v6242 = vsub.f32 %v5980, %v6127
      %v6243 = vsub.f32 %v5796, %v6132
      %v6244 = vsub.f32 %v5889, %v6132
      %v6245 = vsub.f32 %v5982, %v6132
      %v6246 = vsub.f32 %v5799, %v6137
      %v6247 = vsub.f32 %v5892, %v6137
      %v6248 = vsub.f32 %v5985, %v6137
      %v6249 = vsub.f32 %v5801, %v6142
      %v6250 = vsub.f32 %v5894, %v6142
      %v6251 = vsub.f32 %v5987, %v6142
      %v6252 = vsub.f32 %v5804, %v6147
      %v6253 = vsub.f32 %v5897, %v6147
      %v6254 = vsub.f32 %v5990, %v6147
      %v6255 = vsub.f32 %v5806, %v6152
      %v6256 = vsub.f32 %v5899, %v6152
      %v6257 = vsub.f32 %v5992, %v6152
      %v6258 = vsub.f32 %v5809, %v6157
      %v6259 = vsub.f32 %v5902, %v6157
      %v6260 = vsub.f32 %v5995, %v6157
      %v6261 = vsub.f32 %v5811, %v6162
      %v6262 = vsub.f32 %v5904, %v6162
      %v6263 = vsub.f32 %v5997, %v6162
      %v6264 = vsub.f32 %v5814, %v6167
      %v6265 = vsub.f32 %v5907, %v6167
      %v6266 = vsub.f32 %v6000, %v6167
      %v6267 = vmul.f32 %v6168, 1.442695
      %v6268 = vpow.pop %v6267
      %v6269 = vmul.f32 %v6169, 1.442695
      %v6270 = vpow.pop %v6269
      %v6271 = vmul.f32 %v6170, 1.442695
      %v6272 = vpow.pop %v6271
      %v6273 = vmul.f32 %v6171, 1.442695
      %v6274 = vpow.pop %v6273
      %v6275 = vmul.f32 %v6172, 1.442695
      %v6276 = vpow.pop %v6275
      %v6277 = vmul.f32 %v6173, 1.442695
      %v6278 = vpow.pop %v6277
      %v6279 = vmul.f32 %v6174, 1.442695
      %v6280 = vpow.pop %v6279
      %v6281 = vmul.f32 %v6175, 1.442695
      %v6282 = vpow.pop %v6281
      %v6283 = vmul.f32 %v6176, 1.442695
      %v6284 = vpow.pop %v6283
      %v6285 = vmul.f32 %v6177, 1.442695
      %v6286 = vpow.pop %v6285
      %v6287 = vmul.f32 %v6178, 1.442695
      %v6288 = vpow.pop %v6287
      %v6289 = vmul.f32 %v6179, 1.442695
      %v6290 = vpow.pop %v6289
      %v6291 = vmul.f32 %v6180, 1.442695
      %v6292 = vpow.pop %v6291
      %v6293 = vmul.f32 %v6181, 1.442695
      %v6294 = vpow.pop %v6293
      %v6295 = vmul.f32 %v6182, 1.442695
      %v6296 = vpow.pop %v6295
      %v6297 = vmul.f32 %v6183, 1.442695
      %v6298 = vpow.pop %v6297
      %v6299 = vmul.f32 %v6184, 1.442695
      %v6300 = vpow.pop %v6299
      %v6301 = vmul.f32 %v6185, 1.442695
      %v6302 = vpow.pop %v6301
      %v6303 = vmul.f32 %v6186, 1.442695
      %v6304 = vpow.pop %v6303
      %v6305 = vmul.f32 %v6187, 1.442695
      %v6306 = vpow.pop %v6305
      %v6307 = vmul.f32 %v6188, 1.442695
      %v6308 = vpow.pop %v6307
      %v6309 = vmul.f32 %v6189, 1.442695
      %v6310 = vpow.pop %v6309
      %v6311 = vmul.f32 %v6190, 1.442695
      %v6312 = vpow.pop %v6311
      %v6313 = vmul.f32 %v6191, 1.442695
      %v6314 = vpow.pop %v6313
      %v6315 = vmul.f32 %v6192, 1.442695
      %v6316 = vpow.pop %v6315
      %v6317 = vmul.f32 %v6193, 1.442695
      %v6318 = vpow.pop %v6317
      %v6319 = vmul.f32 %v6194, 1.442695
      %v6320 = vpow.pop %v6319
      %v6321 = vmul.f32 %v6195, 1.442695
      %v6322 = vpow.pop %v6321
      %v6323 = vmul.f32 %v6196, 1.442695
      %v6324 = vpow.pop %v6323
      %v6325 = vmul.f32 %v6197, 1.442695
      %v6326 = vpow.pop %v6325
      %v6327 = vmul.f32 %v6198, 1.442695
      %v6328 = vpow.pop %v6327
      %v6329 = vmul.f32 %v6199, 1.442695
      %v6330 = vpow.pop %v6329
      %v6331 = vmul.f32 %v6200, 1.442695
      %v6332 = vpow.pop %v6331
      %v6333 = vmul.f32 %v6201, 1.442695
      %v6334 = vpow.pop %v6333
      %v6335 = vmul.f32 %v6202, 1.442695
      %v6336 = vpow.pop %v6335
      %v6337 = vmul.f32 %v6203, 1.442695
      %v6338 = vpow.pop %v6337
      %v6339 = vmul.f32 %v6204, 1.442695
      %v6340 = vpow.pop %v6339
      %v6341 = vmul.f32 %v6205, 1.442695
      %v6342 = vpow.pop %v6341
      %v6343 = vmul.f32 %v6206, 1.442695
      %v6344 = vpow.pop %v6343
      %v6345 = vmul.f32 %v6207, 1.442695
      %v6346 = vpow.pop %v6345
      %v6347 = vmul.f32 %v6208, 1.442695
      %v6348 = vpow.pop %v6347
      %v6349 = vmul.f32 %v6209, 1.442695
      %v6350 = vpow.pop %v6349
      %v6351 = vmul.f32 %v6210, 1.442695
      %v6352 = vpow.pop %v6351
      %v6353 = vmul.f32 %v6211, 1.442695
      %v6354 = vpow.pop %v6353
      %v6355 = vmul.f32 %v6212, 1.442695
      %v6356 = vpow.pop %v6355
      %v6357 = vmul.f32 %v6213, 1.442695
      %v6358 = vpow.pop %v6357
      %v6359 = vmul.f32 %v6214, 1.442695
      %v6360 = vpow.pop %v6359
      %v6361 = vmul.f32 %v6215, 1.442695
      %v6362 = vpow.pop %v6361
      %v6363 = vmul.f32 %v6216, 1.442695
      %v6364 = vpow.pop %v6363
      %v6365 = vmul.f32 %v6217, 1.442695
      %v6366 = vpow.pop %v6365
      %v6367 = vmul.f32 %v6218, 1.442695
      %v6368 = vpow.pop %v6367
      %v6369 = vmul.f32 %v6219, 1.442695
      %v6370 = vpow.pop %v6369
      %v6371 = vmul.f32 %v6220, 1.442695
      %v6372 = vpow.pop %v6371
      %v6373 = vmul.f32 %v6221, 1.442695
      %v6374 = vpow.pop %v6373
      %v6375 = vmul.f32 %v6222, 1.442695
      %v6376 = vpow.pop %v6375
      %v6377 = vmul.f32 %v6223, 1.442695
      %v6378 = vpow.pop %v6377
      %v6379 = vmul.f32 %v6224, 1.442695
      %v6380 = vpow.pop %v6379
      %v6381 = vmul.f32 %v6225, 1.442695
      %v6382 = vpow.pop %v6381
      %v6383 = vmul.f32 %v6226, 1.442695
      %v6384 = vpow.pop %v6383
      %v6385 = vmul.f32 %v6227, 1.442695
      %v6386 = vpow.pop %v6385
      %v6387 = vmul.f32 %v6228, 1.442695
      %v6388 = vpow.pop %v6387
      %v6389 = vmul.f32 %v6229, 1.442695
      %v6390 = vpow.pop %v6389
      %v6391 = vmul.f32 %v6230, 1.442695
      %v6392 = vpow.pop %v6391
      %v6393 = vmul.f32 %v6231, 1.442695
      %v6394 = vpow.pop %v6393
      %v6395 = vmul.f32 %v6232, 1.442695
      %v6396 = vpow.pop %v6395
      %v6397 = vmul.f32 %v6233, 1.442695
      %v6398 = vpow.pop %v6397
      %v6399 = vmul.f32 %v6234, 1.442695
      %v6400 = vpow.pop %v6399
      %v6401 = vmul.f32 %v6235, 1.442695
      %v6402 = vpow.pop %v6401
      %v6403 = vmul.f32 %v6236, 1.442695
      %v6404 = vpow.pop %v6403
      %v6405 = vmul.f32 %v6237, 1.442695
      %v6406 = vpow.pop %v6405
      %v6407 = vmul.f32 %v6238, 1.442695
      %v6408 = vpow.pop %v6407
      %v6409 = vmul.f32 %v6239, 1.442695
      %v6410 = vpow.pop %v6409
      %v6411 = vmul.f32 %v6240, 1.442695
      %v6412 = vpow.pop %v6411
      %v6413 = vmul.f32 %v6241, 1.442695
      %v6414 = vpow.pop %v6413
      %v6415 = vmul.f32 %v6242, 1.442695
      %v6416 = vpow.pop %v6415
      %v6417 = vmul.f32 %v6243, 1.442695
      %v6418 = vpow.pop %v6417
      %v6419 = vmul.f32 %v6244, 1.442695
      %v6420 = vpow.pop %v6419
      %v6421 = vmul.f32 %v6245, 1.442695
      %v6422 = vpow.pop %v6421
      %v6423 = vmul.f32 %v6246, 1.442695
      %v6424 = vpow.pop %v6423
      %v6425 = vmul.f32 %v6247, 1.442695
      %v6426 = vpow.pop %v6425
      %v6427 = vmul.f32 %v6248, 1.442695
      %v6428 = vpow.pop %v6427
      %v6429 = vmul.f32 %v6249, 1.442695
      %v6430 = vpow.pop %v6429
      %v6431 = vmul.f32 %v6250, 1.442695
      %v6432 = vpow.pop %v6431
      %v6433 = vmul.f32 %v6251, 1.442695
      %v6434 = vpow.pop %v6433
      %v6435 = vmul.f32 %v6252, 1.442695
      %v6436 = vpow.pop %v6435
      %v6437 = vmul.f32 %v6253, 1.442695
      %v6438 = vpow.pop %v6437
      %v6439 = vmul.f32 %v6254, 1.442695
      %v6440 = vpow.pop %v6439
      %v6441 = vmul.f32 %v6255, 1.442695
      %v6442 = vpow.pop %v6441
      %v6443 = vmul.f32 %v6256, 1.442695
      %v6444 = vpow.pop %v6443
      %v6445 = vmul.f32 %v6257, 1.442695
      %v6446 = vpow.pop %v6445
      %v6447 = vmul.f32 %v6258, 1.442695
      %v6448 = vpow.pop %v6447
      %v6449 = vmul.f32 %v6259, 1.442695
      %v6450 = vpow.pop %v6449
      %v6451 = vmul.f32 %v6260, 1.442695
      %v6452 = vpow.pop %v6451
      %v6453 = vmul.f32 %v6261, 1.442695
      %v6454 = vpow.pop %v6453
      %v6455 = vmul.f32 %v6262, 1.442695
      %v6456 = vpow.pop %v6455
      %v6457 = vmul.f32 %v6263, 1.442695
      %v6458 = vpow.pop %v6457
      %v6459 = vmul.f32 %v6264, 1.442695
      %v6460 = vpow.pop %v6459
      %v6461 = vmul.f32 %v6265, 1.442695
      %v6462 = vpow.pop %v6461
      %v6463 = vmul.f32 %v6266, 1.442695
      %v6464 = vpow.pop %v6463
      %v6465 = vadd.f32 %v6268, %v6270
      %v6466 = vsel %vm2081, %v6272, 0.0
      %v6467 = vadd.f32 %v6465, %v6466
      %6468 = vadd.xlane.f32.xlu0 %v6467
      %v6469 = vpop.xlane.xlu0 %6468
      %v6470 = vadd.f32 %v6274, %v6276
      %v6471 = vsel %vm2081, %v6278, 0.0
      %v6472 = vadd.f32 %v6470, %v6471
      %6473 = vadd.xlane.f32.xlu0 %v6472
      %v6474 = vpop.xlane.xlu0 %6473
      %v6475 = vadd.f32 %v6280, %v6282
      %v6476 = vsel %vm2081, %v6284, 0.0
      %v6477 = vadd.f32 %v6475, %v6476
      %6478 = vadd.xlane.f32.xlu0 %v6477
      %v6479 = vpop.xlane.xlu0 %6478
      %v6480 = vadd.f32 %v6286, %v6288
      %v6481 = vsel %vm2081, %v6290, 0.0
      %v6482 = vadd.f32 %v6480, %v6481
      %6483 = vadd.xlane.f32.xlu0 %v6482
      %v6484 = vpop.xlane.xlu0 %6483
      %v6485 = vadd.f32 %v6292, %v6294
      %v6486 = vsel %vm2081, %v6296, 0.0
      %v6487 = vadd.f32 %v6485, %v6486
      %6488 = vadd.xlane.f32.xlu0 %v6487
      %v6489 = vpop.xlane.xlu0 %6488
      %v6490 = vadd.f32 %v6298, %v6300
      %v6491 = vsel %vm2081, %v6302, 0.0
      %v6492 = vadd.f32 %v6490, %v6491
      %6493 = vadd.xlane.f32.xlu0 %v6492
      %v6494 = vpop.xlane.xlu0 %6493
      %v6495 = vadd.f32 %v6304, %v6306
      %v6496 = vsel %vm2081, %v6308, 0.0
      %v6497 = vadd.f32 %v6495, %v6496
      %6498 = vadd.xlane.f32.xlu0 %v6497
      %v6499 = vpop.xlane.xlu0 %6498
      %v6500 = vadd.f32 %v6310, %v6312
      %v6501 = vsel %vm2081, %v6314, 0.0
      %v6502 = vadd.f32 %v6500, %v6501
      %6503 = vadd.xlane.f32.xlu0 %v6502
      %v6504 = vpop.xlane.xlu0 %6503
      %v6505 = vadd.f32 %v6316, %v6318
      %v6506 = vsel %vm2081, %v6320, 0.0
      %v6507 = vadd.f32 %v6505, %v6506
      %6508 = vadd.xlane.f32.xlu0 %v6507
      %v6509 = vpop.xlane.xlu0 %6508
      %v6510 = vadd.f32 %v6322, %v6324
      %v6511 = vsel %vm2081, %v6326, 0.0
      %v6512 = vadd.f32 %v6510, %v6511
      %6513 = vadd.xlane.f32.xlu0 %v6512
      %v6514 = vpop.xlane.xlu0 %6513
      %v6515 = vadd.f32 %v6328, %v6330
      %v6516 = vsel %vm2081, %v6332, 0.0
      %v6517 = vadd.f32 %v6515, %v6516
      %6518 = vadd.xlane.f32.xlu0 %v6517
      %v6519 = vpop.xlane.xlu0 %6518
      %v6520 = vadd.f32 %v6334, %v6336
      %v6521 = vsel %vm2081, %v6338, 0.0
      %v6522 = vadd.f32 %v6520, %v6521
      %6523 = vadd.xlane.f32.xlu0 %v6522
      %v6524 = vpop.xlane.xlu0 %6523
      %v6525 = vadd.f32 %v6340, %v6342
      %v6526 = vsel %vm2081, %v6344, 0.0
      %v6527 = vadd.f32 %v6525, %v6526
      %6528 = vadd.xlane.f32.xlu0 %v6527
      %v6529 = vpop.xlane.xlu0 %6528
      %v6530 = vadd.f32 %v6346, %v6348
      %v6531 = vsel %vm2081, %v6350, 0.0
      %v6532 = vadd.f32 %v6530, %v6531
      %6533 = vadd.xlane.f32.xlu0 %v6532
      %v6534 = vpop.xlane.xlu0 %6533
      %v6535 = vadd.f32 %v6352, %v6354
      %v6536 = vsel %vm2081, %v6356, 0.0
      %v6537 = vadd.f32 %v6535, %v6536
      %6538 = vadd.xlane.f32.xlu0 %v6537
      %v6539 = vpop.xlane.xlu0 %6538
      %v6540 = vadd.f32 %v6358, %v6360
      %v6541 = vsel %vm2081, %v6362, 0.0
      %v6542 = vadd.f32 %v6540, %v6541
      %6543 = vadd.xlane.f32.xlu0 %v6542
      %v6544 = vpop.xlane.xlu0 %6543
      %v6545 = vadd.f32 %v6364, %v6366
      %v6546 = vsel %vm2081, %v6368, 0.0
      %v6547 = vadd.f32 %v6545, %v6546
      %6548 = vadd.xlane.f32.xlu0 %v6547
      %v6549 = vpop.xlane.xlu0 %6548
      %v6550 = vadd.f32 %v6370, %v6372
      %v6551 = vsel %vm2081, %v6374, 0.0
      %v6552 = vadd.f32 %v6550, %v6551
      %6553 = vadd.xlane.f32.xlu0 %v6552
      %v6554 = vpop.xlane.xlu0 %6553
      %v6555 = vadd.f32 %v6376, %v6378
      %v6556 = vsel %vm2081, %v6380, 0.0
      %v6557 = vadd.f32 %v6555, %v6556
      %6558 = vadd.xlane.f32.xlu0 %v6557
      %v6559 = vpop.xlane.xlu0 %6558
      %v6560 = vadd.f32 %v6382, %v6384
      %v6561 = vsel %vm2081, %v6386, 0.0
      %v6562 = vadd.f32 %v6560, %v6561
      %6563 = vadd.xlane.f32.xlu0 %v6562
      %v6564 = vpop.xlane.xlu0 %6563
      %v6565 = vadd.f32 %v6388, %v6390
      %v6566 = vsel %vm2081, %v6392, 0.0
      %v6567 = vadd.f32 %v6565, %v6566
      %6568 = vadd.xlane.f32.xlu0 %v6567
      %v6569 = vpop.xlane.xlu0 %6568
      %v6570 = vadd.f32 %v6394, %v6396
      %v6571 = vsel %vm2081, %v6398, 0.0
      %v6572 = vadd.f32 %v6570, %v6571
      %6573 = vadd.xlane.f32.xlu0 %v6572
      %v6574 = vpop.xlane.xlu0 %6573
      %v6575 = vadd.f32 %v6400, %v6402
      %v6576 = vsel %vm2081, %v6404, 0.0
      %v6577 = vadd.f32 %v6575, %v6576
      %6578 = vadd.xlane.f32.xlu0 %v6577
      %v6579 = vpop.xlane.xlu0 %6578
      %v6580 = vadd.f32 %v6406, %v6408
      %v6581 = vsel %vm2081, %v6410, 0.0
      %v6582 = vadd.f32 %v6580, %v6581
      %6583 = vadd.xlane.f32.xlu0 %v6582
      %v6584 = vpop.xlane.xlu0 %6583
      %v6585 = vadd.f32 %v6412, %v6414
      %v6586 = vsel %vm2081, %v6416, 0.0
      %v6587 = vadd.f32 %v6585, %v6586
      %6588 = vadd.xlane.f32.xlu0 %v6587
      %v6589 = vpop.xlane.xlu0 %6588
      %v6590 = vadd.f32 %v6418, %v6420
      %v6591 = vsel %vm2081, %v6422, 0.0
      %v6592 = vadd.f32 %v6590, %v6591
      %6593 = vadd.xlane.f32.xlu0 %v6592
      %v6594 = vpop.xlane.xlu0 %6593
      %v6595 = vadd.f32 %v6424, %v6426
      %v6596 = vsel %vm2081, %v6428, 0.0
      %v6597 = vadd.f32 %v6595, %v6596
      %6598 = vadd.xlane.f32.xlu0 %v6597
      %v6599 = vpop.xlane.xlu0 %6598
      %v6600 = vadd.f32 %v6430, %v6432
      %v6601 = vsel %vm2081, %v6434, 0.0
      %v6602 = vadd.f32 %v6600, %v6601
      %6603 = vadd.xlane.f32.xlu0 %v6602
      %v6604 = vpop.xlane.xlu0 %6603
      %v6605 = vadd.f32 %v6436, %v6438
      %v6606 = vsel %vm2081, %v6440, 0.0
      %v6607 = vadd.f32 %v6605, %v6606
      %6608 = vadd.xlane.f32.xlu0 %v6607
      %v6609 = vpop.xlane.xlu0 %6608
      %v6610 = vadd.f32 %v6442, %v6444
      %v6611 = vsel %vm2081, %v6446, 0.0
      %v6612 = vadd.f32 %v6610, %v6611
      %6613 = vadd.xlane.f32.xlu0 %v6612
      %v6614 = vpop.xlane.xlu0 %6613
      %v6615 = vadd.f32 %v6448, %v6450
      %v6616 = vsel %vm2081, %v6452, 0.0
      %v6617 = vadd.f32 %v6615, %v6616
      %6618 = vadd.xlane.f32.xlu0 %v6617
      %v6619 = vpop.xlane.xlu0 %6618
      %v6620 = vadd.f32 %v6454, %v6456
      %v6621 = vsel %vm2081, %v6458, 0.0
      %v6622 = vadd.f32 %v6620, %v6621
      %6623 = vadd.xlane.f32.xlu0 %v6622
      %v6624 = vpop.xlane.xlu0 %6623
      %v6625 = vadd.f32 %v6460, %v6462
      %v6626 = vsel %vm2081, %v6464, 0.0
      %v6627 = vadd.f32 %v6625, %v6626
      %6628 = vadd.xlane.f32.xlu0 %v6627
      %v6629 = vpop.xlane.xlu0 %6628
      %v6630 = vrcp.pop %v6469
      %v6631 = vrcp.pop %v6474
      %v6632 = vrcp.pop %v6479
      %v6633 = vrcp.pop %v6484
      %v6634 = vrcp.pop %v6489
      %v6635 = vrcp.pop %v6494
      %v6636 = vrcp.pop %v6499
      %v6637 = vrcp.pop %v6504
      %v6638 = vrcp.pop %v6509
      %v6639 = vrcp.pop %v6514
      %v6640 = vrcp.pop %v6519
      %v6641 = vrcp.pop %v6524
      %v6642 = vrcp.pop %v6529
      %v6643 = vrcp.pop %v6534
      %v6644 = vrcp.pop %v6539
      %v6645 = vrcp.pop %v6544
      %v6646 = vrcp.pop %v6549
      %v6647 = vrcp.pop %v6554
      %v6648 = vrcp.pop %v6559
      %v6649 = vrcp.pop %v6564
      %v6650 = vrcp.pop %v6569
      %v6651 = vrcp.pop %v6574
      %v6652 = vrcp.pop %v6579
      %v6653 = vrcp.pop %v6584
      %v6654 = vrcp.pop %v6589
      %v6655 = vrcp.pop %v6594
      %v6656 = vrcp.pop %v6599
      %v6657 = vrcp.pop %v6604
      %v6658 = vrcp.pop %v6609
      %v6659 = vrcp.pop %v6614
      %v6660 = vrcp.pop %v6619
      %v6661 = vrcp.pop %v6624
      %v6662 = vrcp.pop %v6629
      %v6663 = vmul.f32 %v6268, %v6630
      %v6664 = vmul.f32 %v6270, %v6630
      %v6665 = vmul.f32 %v6272, %v6630
      %v6666 = vmul.f32 %v6274, %v6631
      %v6667 = vmul.f32 %v6276, %v6631
      %v6668 = vmul.f32 %v6278, %v6631
      %v6669 = vmul.f32 %v6280, %v6632
      %v6670 = vmul.f32 %v6282, %v6632
      %v6671 = vmul.f32 %v6284, %v6632
      %v6672 = vmul.f32 %v6286, %v6633
      %v6673 = vmul.f32 %v6288, %v6633
      %v6674 = vmul.f32 %v6290, %v6633
      %v6675 = vmul.f32 %v6292, %v6634
      %v6676 = vmul.f32 %v6294, %v6634
      %v6677 = vmul.f32 %v6296, %v6634
      %v6678 = vmul.f32 %v6298, %v6635
      %v6679 = vmul.f32 %v6300, %v6635
      %v6680 = vmul.f32 %v6302, %v6635
      %v6681 = vmul.f32 %v6304, %v6636
      %v6682 = vmul.f32 %v6306, %v6636
      %v6683 = vmul.f32 %v6308, %v6636
      %v6684 = vmul.f32 %v6310, %v6637
      %v6685 = vmul.f32 %v6312, %v6637
      %v6686 = vmul.f32 %v6314, %v6637
      %v6687 = vmul.f32 %v6316, %v6638
      %v6688 = vmul.f32 %v6318, %v6638
      %v6689 = vmul.f32 %v6320, %v6638
      %v6690 = vmul.f32 %v6322, %v6639
      %v6691 = vmul.f32 %v6324, %v6639
      %v6692 = vmul.f32 %v6326, %v6639
      %v6693 = vmul.f32 %v6328, %v6640
      %v6694 = vmul.f32 %v6330, %v6640
      %v6695 = vmul.f32 %v6332, %v6640
      %v6696 = vmul.f32 %v6334, %v6641
      %v6697 = vmul.f32 %v6336, %v6641
      %v6698 = vmul.f32 %v6338, %v6641
      %v6699 = vmul.f32 %v6340, %v6642
      %v6700 = vmul.f32 %v6342, %v6642
      %v6701 = vmul.f32 %v6344, %v6642
      %v6702 = vmul.f32 %v6346, %v6643
      %v6703 = vmul.f32 %v6348, %v6643
      %v6704 = vmul.f32 %v6350, %v6643
      %v6705 = vmul.f32 %v6352, %v6644
      %v6706 = vmul.f32 %v6354, %v6644
      %v6707 = vmul.f32 %v6356, %v6644
      %v6708 = vmul.f32 %v6358, %v6645
      %v6709 = vmul.f32 %v6360, %v6645
      %v6710 = vmul.f32 %v6362, %v6645
      %v6711 = vmul.f32 %v6364, %v6646
      %v6712 = vmul.f32 %v6366, %v6646
      %v6713 = vmul.f32 %v6368, %v6646
      %v6714 = vmul.f32 %v6370, %v6647
      %v6715 = vmul.f32 %v6372, %v6647
      %v6716 = vmul.f32 %v6374, %v6647
      %v6717 = vmul.f32 %v6376, %v6648
      %v6718 = vmul.f32 %v6378, %v6648
      %v6719 = vmul.f32 %v6380, %v6648
      %v6720 = vmul.f32 %v6382, %v6649
      %v6721 = vmul.f32 %v6384, %v6649
      %v6722 = vmul.f32 %v6386, %v6649
      %v6723 = vmul.f32 %v6388, %v6650
      %v6724 = vmul.f32 %v6390, %v6650
      %v6725 = vmul.f32 %v6392, %v6650
      %v6726 = vmul.f32 %v6394, %v6651
      %v6727 = vmul.f32 %v6396, %v6651
      %v6728 = vmul.f32 %v6398, %v6651
      %v6729 = vmul.f32 %v6400, %v6652
      %v6730 = vmul.f32 %v6402, %v6652
      %v6731 = vmul.f32 %v6404, %v6652
      %v6732 = vmul.f32 %v6406, %v6653
      %v6733 = vmul.f32 %v6408, %v6653
      %v6734 = vmul.f32 %v6410, %v6653
      %v6735 = vmul.f32 %v6412, %v6654
      %v6736 = vmul.f32 %v6414, %v6654
      %v6737 = vmul.f32 %v6416, %v6654
      %v6738 = vmul.f32 %v6418, %v6655
      %v6739 = vmul.f32 %v6420, %v6655
      %v6740 = vmul.f32 %v6422, %v6655
      %v6741 = vmul.f32 %v6424, %v6656
      %v6742 = vmul.f32 %v6426, %v6656
      %v6743 = vmul.f32 %v6428, %v6656
      %v6744 = vmul.f32 %v6430, %v6657
      %v6745 = vmul.f32 %v6432, %v6657
      %v6746 = vmul.f32 %v6434, %v6657
      %v6747 = vmul.f32 %v6436, %v6658
      %v6748 = vmul.f32 %v6438, %v6658
      %v6749 = vmul.f32 %v6440, %v6658
      %v6750 = vmul.f32 %v6442, %v6659
      %v6751 = vmul.f32 %v6444, %v6659
      %v6752 = vmul.f32 %v6446, %v6659
      %v6753 = vmul.f32 %v6448, %v6660
      %v6754 = vmul.f32 %v6450, %v6660
      %v6755 = vmul.f32 %v6452, %v6660
      %v6756 = vmul.f32 %v6454, %v6661
      %v6757 = vmul.f32 %v6456, %v6661
      %v6758 = vmul.f32 %v6458, %v6661
      %v6759 = vmul.f32 %v6460, %v6662
      %v6760 = vmul.f32 %v6462, %v6662
      %v6761 = vmul.f32 %v6464, %v6662
      %v6762 = vpack.c.bf16 %v6666, %v6663
      %v6763 = vpack.c.bf16 %v6667, %v6664
      %v6764 = vpack.c.bf16 %v6668, %v6665
      %v6765 = vpack.c.bf16 %v6672, %v6669
      %v6766 = vpack.c.bf16 %v6673, %v6670
      %v6767 = vpack.c.bf16 %v6674, %v6671
      %v6768 = vpack.c.bf16 %v6678, %v6675
      %v6769 = vpack.c.bf16 %v6679, %v6676
      %v6770 = vpack.c.bf16 %v6680, %v6677
      %v6771 = vpack.c.bf16 %v6684, %v6681
      %v6772 = vpack.c.bf16 %v6685, %v6682
      %v6773 = vpack.c.bf16 %v6686, %v6683
      %v6774 = vpack.c.bf16 %v6690, %v6687
      %v6775 = vpack.c.bf16 %v6691, %v6688
      %v6776 = vpack.c.bf16 %v6692, %v6689
      %v6777 = vpack.c.bf16 %v6696, %v6693
      %v6778 = vpack.c.bf16 %v6697, %v6694
      %v6779 = vpack.c.bf16 %v6698, %v6695
      %v6780 = vpack.c.bf16 %v6702, %v6699
      %v6781 = vpack.c.bf16 %v6703, %v6700
      %v6782 = vpack.c.bf16 %v6704, %v6701
      %v6783 = vpack.c.bf16 %v6708, %v6705
      %v6784 = vpack.c.bf16 %v6709, %v6706
      %v6785 = vpack.c.bf16 %v6710, %v6707
      %v6786 = vpack.c.bf16 %v6714, %v6711
      %v6787 = vpack.c.bf16 %v6715, %v6712
      %v6788 = vpack.c.bf16 %v6716, %v6713
      %v6789 = vpack.c.bf16 %v6720, %v6717
      %v6790 = vpack.c.bf16 %v6721, %v6718
      %v6791 = vpack.c.bf16 %v6722, %v6719
      %v6792 = vpack.c.bf16 %v6726, %v6723
      %v6793 = vpack.c.bf16 %v6727, %v6724
      %v6794 = vpack.c.bf16 %v6728, %v6725
      %v6795 = vpack.c.bf16 %v6732, %v6729
      %v6796 = vpack.c.bf16 %v6733, %v6730
      %v6797 = vpack.c.bf16 %v6734, %v6731
      %v6798 = vpack.c.bf16 %v6738, %v6735
      %v6799 = vpack.c.bf16 %v6739, %v6736
      %v6800 = vpack.c.bf16 %v6740, %v6737
      %v6801 = vpack.c.bf16 %v6744, %v6741
      %v6802 = vpack.c.bf16 %v6745, %v6742
      %v6803 = vpack.c.bf16 %v6746, %v6743
      %v6804 = vpack.c.bf16 %v6750, %v6747
      %v6805 = vpack.c.bf16 %v6751, %v6748
      %v6806 = vpack.c.bf16 %v6752, %v6749
      %v6807 = vpack.c.bf16 %v6756, %v6753
      %v6808 = vpack.c.bf16 %v6757, %v6754
      %v6809 = vpack.c.bf16 %v6758, %v6755
      %v6810 = vpack.c.bf16 %v6759, %v6759
      %v6811 = vpack.c.bf16 %v6760, %v6760
      %v6812 = vpack.c.bf16 %v6761, %v6761
      %v6814 = vsel %vm2081, %v6764, 0
      %v6817 = vsel %vm2081, %v6767, 0
      %v6820 = vsel %vm2081, %v6770, 0
      %v6823 = vsel %vm2081, %v6773, 0
      %v6826 = vsel %vm2081, %v6776, 0
      %v6829 = vsel %vm2081, %v6779, 0
      %v6832 = vsel %vm2081, %v6782, 0
      %v6835 = vsel %vm2081, %v6785, 0
      %v6838 = vsel %vm2081, %v6788, 0
      %v6841 = vsel %vm2081, %v6791, 0
      %v6844 = vsel %vm2081, %v6794, 0
      %v6847 = vsel %vm2081, %v6797, 0
      %v6850 = vsel %vm2081, %v6800, 0
      %v6853 = vsel %vm2081, %v6803, 0
      %v6856 = vsel %vm2081, %v6806, 0
      %v6859 = vsel %vm2081, %v6809, 0
      %v6862 = vsel %vm2081, %v6812, 0
      %v6865 = vsel %vm2942, %v5672, 0
      %6867 = vmatpush.bf16.msra.mxu0 %v5663
      %6868 = vmatpush.bf16.msra.mxu0 %v5662
      %6869 = vmatpush.bf16.msra.mxu0 %v5661
      %6870 = vmatpush.bf16.msra.mxu0 %v5660
      %6871 = vmatpush.bf16.msra.mxu0 %v5659
      %6872 = vmatpush.bf16.msra.mxu0 %v5658
      %6873 = vmatpush.bf16.msra.mxu0 %v5657
      %6874 = vmatpush.bf16.msra.mxu0 %v5656
      %6875 = vmatmul.bf16.gmra.mxu0 %v6762
      %v6876 = vpop.f32.mrf.mxu0
      %v6877 = vadd.f32 0.0, %v6876
      %v6878 = vpop.f32.mrf.mxu0
      %v6879 = vadd.f32 0.0, %v6878
      %6880 = vmatmul.bf16.gmra.mxu0 %v6765
      %v6881 = vpop.f32.mrf.mxu0
      %v6882 = vadd.f32 0.0, %v6881
      %v6883 = vpop.f32.mrf.mxu0
      %v6884 = vadd.f32 0.0, %v6883
      %6885 = vmatmul.bf16.gmra.mxu0 %v6768
      %v6886 = vpop.f32.mrf.mxu0
      %v6887 = vadd.f32 0.0, %v6886
      %v6888 = vpop.f32.mrf.mxu0
      %v6889 = vadd.f32 0.0, %v6888
      %6890 = vmatmul.bf16.gmra.mxu0 %v6771
      %v6891 = vpop.f32.mrf.mxu0
      %v6892 = vadd.f32 0.0, %v6891
      %v6893 = vpop.f32.mrf.mxu0
      %v6894 = vadd.f32 0.0, %v6893
      %6895 = vmatmul.bf16.gmra.mxu0 %v6774
      %v6896 = vpop.f32.mrf.mxu0
      %v6897 = vadd.f32 0.0, %v6896
      %v6898 = vpop.f32.mrf.mxu0
      %v6899 = vadd.f32 0.0, %v6898
      %6900 = vmatmul.bf16.gmra.mxu0 %v6777
      %v6901 = vpop.f32.mrf.mxu0
      %v6902 = vadd.f32 0.0, %v6901
      %v6903 = vpop.f32.mrf.mxu0
      %v6904 = vadd.f32 0.0, %v6903
      %6905 = vmatmul.bf16.gmra.mxu0 %v6780
      %v6906 = vpop.f32.mrf.mxu0
      %v6907 = vadd.f32 0.0, %v6906
      %v6908 = vpop.f32.mrf.mxu0
      %v6909 = vadd.f32 0.0, %v6908
      %6910 = vmatmul.bf16.gmra.mxu0 %v6783
      %v6911 = vpop.f32.mrf.mxu0
      %v6912 = vadd.f32 0.0, %v6911
      %v6913 = vpop.f32.mrf.mxu0
      %v6914 = vadd.f32 0.0, %v6913
      %6915 = vmatmul.bf16.gmra.mxu0 %v6786
      %v6916 = vpop.f32.mrf.mxu0
      %v6917 = vadd.f32 0.0, %v6916
      %v6918 = vpop.f32.mrf.mxu0
      %v6919 = vadd.f32 0.0, %v6918
      %6920 = vmatmul.bf16.gmra.mxu0 %v6789
      %v6921 = vpop.f32.mrf.mxu0
      %v6922 = vadd.f32 0.0, %v6921
      %v6923 = vpop.f32.mrf.mxu0
      %v6924 = vadd.f32 0.0, %v6923
      %6925 = vmatmul.bf16.gmra.mxu0 %v6792
      %v6926 = vpop.f32.mrf.mxu0
      %v6927 = vadd.f32 0.0, %v6926
      %v6928 = vpop.f32.mrf.mxu0
      %v6929 = vadd.f32 0.0, %v6928
      %6930 = vmatmul.bf16.gmra.mxu0 %v6795
      %v6931 = vpop.f32.mrf.mxu0
      %v6932 = vadd.f32 0.0, %v6931
      %v6933 = vpop.f32.mrf.mxu0
      %v6934 = vadd.f32 0.0, %v6933
      %6935 = vmatmul.bf16.gmra.mxu0 %v6798
      %v6936 = vpop.f32.mrf.mxu0
      %v6937 = vadd.f32 0.0, %v6936
      %v6938 = vpop.f32.mrf.mxu0
      %v6939 = vadd.f32 0.0, %v6938
      %6940 = vmatmul.bf16.gmra.mxu0 %v6801
      %v6941 = vpop.f32.mrf.mxu0
      %v6942 = vadd.f32 0.0, %v6941
      %v6943 = vpop.f32.mrf.mxu0
      %v6944 = vadd.f32 0.0, %v6943
      %6945 = vmatmul.bf16.gmra.mxu0 %v6804
      %v6946 = vpop.f32.mrf.mxu0
      %v6947 = vadd.f32 0.0, %v6946
      %v6948 = vpop.f32.mrf.mxu0
      %v6949 = vadd.f32 0.0, %v6948
      %6950 = vmatmul.bf16.gmra.mxu0 %v6807
      %v6951 = vpop.f32.mrf.mxu0
      %v6952 = vadd.f32 0.0, %v6951
      %v6953 = vpop.f32.mrf.mxu0
      %v6954 = vadd.f32 0.0, %v6953
      %6955 = vmatmul.bf16.gmra.mxu0 %v6810
      %v6956 = vpop.f32.mrf.mxu0
      %v6957 = vadd.f32 0.0, %v6956
      %v6958 = vpop.f32.mrf.mxu0
      %6959 = vdwg.mxu0
      %6960 = vmatpush.bf16.msra.mxu0 %v5671
      %6961 = vmatpush.bf16.msra.mxu0 %v5670
      %6962 = vmatpush.bf16.msra.mxu0 %v5669
      %6963 = vmatpush.bf16.msra.mxu0 %v5668
      %6964 = vmatpush.bf16.msra.mxu0 %v5667
      %6965 = vmatpush.bf16.msra.mxu0 %v5666
      %6966 = vmatpush.bf16.msra.mxu0 %v5665
      %6967 = vmatpush.bf16.msra.mxu0 %v5664
      %6968 = vmatmul.bf16.gmra.mxu0 %v6763
      %v6969 = vpop.f32.mrf.mxu0
      %v6970 = vadd.f32 %v6877, %v6969
      %v6971 = vpop.f32.mrf.mxu0
      %v6972 = vadd.f32 %v6879, %v6971
      %6973 = vmatmul.bf16.gmra.mxu0 %v6766
      %v6974 = vpop.f32.mrf.mxu0
      %v6975 = vadd.f32 %v6882, %v6974
      %v6976 = vpop.f32.mrf.mxu0
      %v6977 = vadd.f32 %v6884, %v6976
      %6978 = vmatmul.bf16.gmra.mxu0 %v6769
      %v6979 = vpop.f32.mrf.mxu0
      %v6980 = vadd.f32 %v6887, %v6979
      %v6981 = vpop.f32.mrf.mxu0
      %v6982 = vadd.f32 %v6889, %v6981
      %6983 = vmatmul.bf16.gmra.mxu0 %v6772
      %v6984 = vpop.f32.mrf.mxu0
      %v6985 = vadd.f32 %v6892, %v6984
      %v6986 = vpop.f32.mrf.mxu0
      %v6987 = vadd.f32 %v6894, %v6986
      %6988 = vmatmul.bf16.gmra.mxu0 %v6775
      %v6989 = vpop.f32.mrf.mxu0
      %v6990 = vadd.f32 %v6897, %v6989
      %v6991 = vpop.f32.mrf.mxu0
      %v6992 = vadd.f32 %v6899, %v6991
      %6993 = vmatmul.bf16.gmra.mxu0 %v6778
      %v6994 = vpop.f32.mrf.mxu0
      %v6995 = vadd.f32 %v6902, %v6994
      %v6996 = vpop.f32.mrf.mxu0
      %v6997 = vadd.f32 %v6904, %v6996
      %6998 = vmatmul.bf16.gmra.mxu0 %v6781
      %v6999 = vpop.f32.mrf.mxu0
      %v7000 = vadd.f32 %v6907, %v6999
      %v7001 = vpop.f32.mrf.mxu0
      %v7002 = vadd.f32 %v6909, %v7001
      %7003 = vmatmul.bf16.gmra.mxu0 %v6784
      %v7004 = vpop.f32.mrf.mxu0
      %v7005 = vadd.f32 %v6912, %v7004
      %v7006 = vpop.f32.mrf.mxu0
      %v7007 = vadd.f32 %v6914, %v7006
      %7008 = vmatmul.bf16.gmra.mxu0 %v6787
      %v7009 = vpop.f32.mrf.mxu0
      %v7010 = vadd.f32 %v6917, %v7009
      %v7011 = vpop.f32.mrf.mxu0
      %v7012 = vadd.f32 %v6919, %v7011
      %7013 = vmatmul.bf16.gmra.mxu0 %v6790
      %v7014 = vpop.f32.mrf.mxu0
      %v7015 = vadd.f32 %v6922, %v7014
      %v7016 = vpop.f32.mrf.mxu0
      %v7017 = vadd.f32 %v6924, %v7016
      %7018 = vmatmul.bf16.gmra.mxu0 %v6793
      %v7019 = vpop.f32.mrf.mxu0
      %v7020 = vadd.f32 %v6927, %v7019
      %v7021 = vpop.f32.mrf.mxu0
      %v7022 = vadd.f32 %v6929, %v7021
      %7023 = vmatmul.bf16.gmra.mxu0 %v6796
      %v7024 = vpop.f32.mrf.mxu0
      %v7025 = vadd.f32 %v6932, %v7024
      %v7026 = vpop.f32.mrf.mxu0
      %v7027 = vadd.f32 %v6934, %v7026
      %7028 = vmatmul.bf16.gmra.mxu0 %v6799
      %v7029 = vpop.f32.mrf.mxu0
      %v7030 = vadd.f32 %v6937, %v7029
      %v7031 = vpop.f32.mrf.mxu0
      %v7032 = vadd.f32 %v6939, %v7031
      %7033 = vmatmul.bf16.gmra.mxu0 %v6802
      %v7034 = vpop.f32.mrf.mxu0
      %v7035 = vadd.f32 %v6942, %v7034
      %v7036 = vpop.f32.mrf.mxu0
      %v7037 = vadd.f32 %v6944, %v7036
      %7038 = vmatmul.bf16.gmra.mxu0 %v6805
      %v7039 = vpop.f32.mrf.mxu0
      %v7040 = vadd.f32 %v6947, %v7039
      %v7041 = vpop.f32.mrf.mxu0
      %v7042 = vadd.f32 %v6949, %v7041
      %7043 = vmatmul.bf16.gmra.mxu0 %v6808
      %v7044 = vpop.f32.mrf.mxu0
      %v7045 = vadd.f32 %v6952, %v7044
      %v7046 = vpop.f32.mrf.mxu0
      %v7047 = vadd.f32 %v6954, %v7046
      %7048 = vmatmul.bf16.gmra.mxu0 %v6811
      %v7049 = vpop.f32.mrf.mxu0
      %v7050 = vadd.f32 %v6957, %v7049
      %v7051 = vpop.f32.mrf.mxu0
      %7052 = vdwg.mxu0
      %7053 = vmatpush.bf16.msra.mxu0 0
      %7054 = vmatpush.bf16.msra.mxu0 0
      %7055 = vmatpush.bf16.msra.mxu0 0
      %7056 = vmatpush.bf16.msra.mxu0 0
      %7057 = vmatpush.bf16.msra.mxu0 0
      %7058 = vmatpush.bf16.msra.mxu0 0
      %7059 = vmatpush.bf16.msra.mxu0 0
      %7060 = vmatpush.bf16.msra.mxu0 %v6865
      %7061 = vmatmul.bf16.gmra.mxu0 %v6814
      %v7062 = vpop.f32.mrf.mxu0
      %v7063 = vadd.f32 %v6970, %v7062
      %v7064 = vpop.f32.mrf.mxu0
      %v7065 = vadd.f32 %v6972, %v7064
      %7066 = vmatmul.bf16.gmra.mxu0 %v6817
      %v7067 = vpop.f32.mrf.mxu0
      %v7068 = vadd.f32 %v6975, %v7067
      %v7069 = vpop.f32.mrf.mxu0
      %v7070 = vadd.f32 %v6977, %v7069
      %7071 = vmatmul.bf16.gmra.mxu0 %v6820
      %v7072 = vpop.f32.mrf.mxu0
      %v7073 = vadd.f32 %v6980, %v7072
      %v7074 = vpop.f32.mrf.mxu0
      %v7075 = vadd.f32 %v6982, %v7074
      %7076 = vmatmul.bf16.gmra.mxu0 %v6823
      %v7077 = vpop.f32.mrf.mxu0
      %v7078 = vadd.f32 %v6985, %v7077
      %v7079 = vpop.f32.mrf.mxu0
      %v7080 = vadd.f32 %v6987, %v7079
      %7081 = vmatmul.bf16.gmra.mxu0 %v6826
      %v7082 = vpop.f32.mrf.mxu0
      %v7083 = vadd.f32 %v6990, %v7082
      %v7084 = vpop.f32.mrf.mxu0
      %v7085 = vadd.f32 %v6992, %v7084
      %7086 = vmatmul.bf16.gmra.mxu0 %v6829
      %v7087 = vpop.f32.mrf.mxu0
      %v7088 = vadd.f32 %v6995, %v7087
      %v7089 = vpop.f32.mrf.mxu0
      %v7090 = vadd.f32 %v6997, %v7089
      %7091 = vmatmul.bf16.gmra.mxu0 %v6832
      %v7092 = vpop.f32.mrf.mxu0
      %v7093 = vadd.f32 %v7000, %v7092
      %v7094 = vpop.f32.mrf.mxu0
      %v7095 = vadd.f32 %v7002, %v7094
      %7096 = vmatmul.bf16.gmra.mxu0 %v6835
      %v7097 = vpop.f32.mrf.mxu0
      %v7098 = vadd.f32 %v7005, %v7097
      %v7099 = vpop.f32.mrf.mxu0
      %v7100 = vadd.f32 %v7007, %v7099
      %7101 = vmatmul.bf16.gmra.mxu0 %v6838
      %v7102 = vpop.f32.mrf.mxu0
      %v7103 = vadd.f32 %v7010, %v7102
      %v7104 = vpop.f32.mrf.mxu0
      %v7105 = vadd.f32 %v7012, %v7104
      %7106 = vmatmul.bf16.gmra.mxu0 %v6841
      %v7107 = vpop.f32.mrf.mxu0
      %v7108 = vadd.f32 %v7015, %v7107
      %v7109 = vpop.f32.mrf.mxu0
      %v7110 = vadd.f32 %v7017, %v7109
      %7111 = vmatmul.bf16.gmra.mxu0 %v6844
      %v7112 = vpop.f32.mrf.mxu0
      %v7113 = vadd.f32 %v7020, %v7112
      %v7114 = vpop.f32.mrf.mxu0
      %v7115 = vadd.f32 %v7022, %v7114
      %7116 = vmatmul.bf16.gmra.mxu0 %v6847
      %v7117 = vpop.f32.mrf.mxu0
      %v7118 = vadd.f32 %v7025, %v7117
      %v7119 = vpop.f32.mrf.mxu0
      %v7120 = vadd.f32 %v7027, %v7119
      %7121 = vmatmul.bf16.gmra.mxu0 %v6850
      %v7122 = vpop.f32.mrf.mxu0
      %v7123 = vadd.f32 %v7030, %v7122
      %v7124 = vpop.f32.mrf.mxu0
      %v7125 = vadd.f32 %v7032, %v7124
      %7126 = vmatmul.bf16.gmra.mxu0 %v6853
      %v7127 = vpop.f32.mrf.mxu0
      %v7128 = vadd.f32 %v7035, %v7127
      %v7129 = vpop.f32.mrf.mxu0
      %v7130 = vadd.f32 %v7037, %v7129
      %7131 = vmatmul.bf16.gmra.mxu0 %v6856
      %v7132 = vpop.f32.mrf.mxu0
      %v7133 = vadd.f32 %v7040, %v7132
      %v7134 = vpop.f32.mrf.mxu0
      %v7135 = vadd.f32 %v7042, %v7134
      %7136 = vmatmul.bf16.gmra.mxu0 %v6859
      %v7137 = vpop.f32.mrf.mxu0
      %v7138 = vadd.f32 %v7045, %v7137
      %v7139 = vpop.f32.mrf.mxu0
      %v7140 = vadd.f32 %v7047, %v7139
      %7141 = vmatmul.bf16.gmra.mxu0 %v6862
      %v7142 = vpop.f32.mrf.mxu0
      %v7143 = vadd.f32 %v7050, %v7142
      %v7144 = vpop.f32.mrf.mxu0
      %7145 = vdwg.mxu0
      %v7146 = vpack.c.bf16 %v7065, %v7063
      %v7147 = vpack.c.bf16 %v7070, %v7068
      %v7148 = vpack.c.bf16 %v7075, %v7073
      %v7149 = vpack.c.bf16 %v7080, %v7078
      %v7150 = vpack.c.bf16 %v7085, %v7083
      %v7151 = vpack.c.bf16 %v7090, %v7088
      %v7152 = vpack.c.bf16 %v7095, %v7093
      %v7153 = vpack.c.bf16 %v7100, %v7098
      %v7154 = vpack.c.bf16 %v7105, %v7103
      %v7155 = vpack.c.bf16 %v7110, %v7108
      %v7156 = vpack.c.bf16 %v7115, %v7113
      %v7157 = vpack.c.bf16 %v7120, %v7118
      %v7158 = vpack.c.bf16 %v7125, %v7123
      %v7159 = vpack.c.bf16 %v7130, %v7128
      %v7160 = vpack.c.bf16 %v7135, %v7133
      %v7161 = vpack.c.bf16 %v7140, %v7138
      %v7162 = vpack.c.bf16 %v7143, %v7143
      %s7163 = scalar_lea.vmem %s6, 16
      %v7164 = vld [vmem:[%s7163] sm:$0xf]
      %v7165 = vld [vmem:[%s7163 + $0x4] sm:$0xf]
      %v7168 = vunpack.c.l.b16 %v7164
      %v7169 = vunpack.c.l.b16 %v7165
      %v7170 = vpack.c.b16 %v7169, %v7168
      %v7173 = vsel %vm1749, %v7146, 0
      %v7176 = vsel %vm1749, %v7147, 0
      %v7179 = vsel %vm1749, %v7148, 0
      %v7182 = vsel %vm1749, %v7149, 0
      %v7185 = vsel %vm1749, %v7150, 0
      %v7188 = vsel %vm1749, %v7151, 0
      %v7191 = vsel %vm1749, %v7152, 0
      %v7194 = vsel %vm1749, %v7153, 0
      %v7197 = vsel %vm1749, %v7154, 0
      %v7200 = vsel %vm1749, %v7155, 0
      %v7203 = vsel %vm1749, %v7156, 0
      %v7206 = vsel %vm1749, %v7157, 0
      %v7209 = vsel %vm1749, %v7158, 0
      %v7212 = vsel %vm1749, %v7159, 0
      %v7215 = vsel %vm1749, %v7160, 0
      %v7218 = vsel %vm1749, %v7161, 0
      %v7221 = vsel %vm1749, %v7162, 0
      %7223 = vmatpush.bf16.msra.mxu0 0
      %7224 = vmatpush.bf16.msra.mxu0 0
      %7225 = vmatpush.bf16.msra.mxu0 0
      %7226 = vmatpush.bf16.msra.mxu0 0
      %7227 = vmatpush.bf16.msra.mxu0 0
      %7228 = vmatpush.bf16.msra.mxu0 0
      %7229 = vmatpush.bf16.msra.mxu0 0
      %7230 = vmatpush.bf16.msra.mxu0 %v7170
      %7231 = vmatmul.bf16.gmra.mxu0 %v7173
      %v7232 = vpop.f32.mrf.mxu0
      %v7233 = vpop.f32.mrf.mxu0
      %v7234 = vadd.f32 0.0, %v7233
      %7235 = vmatmul.bf16.gmra.mxu0 %v7176
      %v7236 = vpop.f32.mrf.mxu0
      %v7237 = vadd.f32 0.0, %v7236
      %v7238 = vpop.f32.mrf.mxu0
      %v7239 = vadd.f32 0.0, %v7238
      %7240 = vmatmul.bf16.gmra.mxu0 %v7179
      %v7241 = vpop.f32.mrf.mxu0
      %v7242 = vadd.f32 0.0, %v7241
      %v7243 = vpop.f32.mrf.mxu0
      %v7244 = vadd.f32 0.0, %v7243
      %7245 = vmatmul.bf16.gmra.mxu0 %v7182
      %v7246 = vpop.f32.mrf.mxu0
      %v7247 = vadd.f32 0.0, %v7246
      %v7248 = vpop.f32.mrf.mxu0
      %v7249 = vadd.f32 0.0, %v7248
      %7250 = vmatmul.bf16.gmra.mxu0 %v7185
      %v7251 = vpop.f32.mrf.mxu0
      %v7252 = vadd.f32 0.0, %v7251
      %v7253 = vpop.f32.mrf.mxu0
      %v7254 = vadd.f32 0.0, %v7253
      %7255 = vmatmul.bf16.gmra.mxu0 %v7188
      %v7256 = vpop.f32.mrf.mxu0
      %v7257 = vadd.f32 0.0, %v7256
      %v7258 = vpop.f32.mrf.mxu0
      %v7259 = vadd.f32 0.0, %v7258
      %7260 = vmatmul.bf16.gmra.mxu0 %v7191
      %v7261 = vpop.f32.mrf.mxu0
      %v7262 = vadd.f32 0.0, %v7261
      %v7263 = vpop.f32.mrf.mxu0
      %v7264 = vadd.f32 0.0, %v7263
      %7265 = vmatmul.bf16.gmra.mxu0 %v7194
      %v7266 = vpop.f32.mrf.mxu0
      %v7267 = vadd.f32 0.0, %v7266
      %v7268 = vpop.f32.mrf.mxu0
      %v7269 = vadd.f32 0.0, %v7268
      %7270 = vmatmul.bf16.gmra.mxu0 %v7197
      %v7271 = vpop.f32.mrf.mxu0
      %v7272 = vadd.f32 0.0, %v7271
      %v7273 = vpop.f32.mrf.mxu0
      %v7274 = vadd.f32 0.0, %v7273
      %7275 = vmatmul.bf16.gmra.mxu0 %v7200
      %v7276 = vpop.f32.mrf.mxu0
      %v7277 = vadd.f32 0.0, %v7276
      %v7278 = vpop.f32.mrf.mxu0
      %v7279 = vadd.f32 0.0, %v7278
      %7280 = vmatmul.bf16.gmra.mxu0 %v7203
      %v7281 = vpop.f32.mrf.mxu0
      %v7282 = vadd.f32 0.0, %v7281
      %v7283 = vpop.f32.mrf.mxu0
      %v7284 = vadd.f32 0.0, %v7283
      %7285 = vmatmul.bf16.gmra.mxu0 %v7206
      %v7286 = vpop.f32.mrf.mxu0
      %v7287 = vadd.f32 0.0, %v7286
      %v7288 = vpop.f32.mrf.mxu0
      %v7289 = vadd.f32 0.0, %v7288
      %7290 = vmatmul.bf16.gmra.mxu0 %v7209
      %v7291 = vpop.f32.mrf.mxu0
      %v7292 = vadd.f32 0.0, %v7291
      %v7293 = vpop.f32.mrf.mxu0
      %v7294 = vadd.f32 0.0, %v7293
      %7295 = vmatmul.bf16.gmra.mxu0 %v7212
      %v7296 = vpop.f32.mrf.mxu0
      %v7297 = vadd.f32 0.0, %v7296
      %v7298 = vpop.f32.mrf.mxu0
      %v7299 = vadd.f32 0.0, %v7298
      %7300 = vmatmul.bf16.gmra.mxu0 %v7215
      %v7301 = vpop.f32.mrf.mxu0
      %v7302 = vadd.f32 0.0, %v7301
      %v7303 = vpop.f32.mrf.mxu0
      %v7304 = vadd.f32 0.0, %v7303
      %7305 = vmatmul.bf16.gmra.mxu0 %v7218
      %v7306 = vpop.f32.mrf.mxu0
      %v7307 = vadd.f32 0.0, %v7306
      %v7308 = vpop.f32.mrf.mxu0
      %v7309 = vadd.f32 0.0, %v7308
      %7310 = vmatmul.bf16.gmra.mxu0 %v7221
      %v7311 = vpop.f32.mrf.mxu0
      %v7312 = vadd.f32 0.0, %v7311
      %v7313 = vpop.f32.mrf.mxu0
      %7314 = vdwg.mxu0
      %v7315 = vadd.f32 %v5273, %v7234
      %v7316 = vadd.f32 %v5276, %v7237
      %v7317 = vadd.f32 %v5278, %v7239
      %v7318 = vadd.f32 %v5281, %v7242
      %v7319 = vadd.f32 %v5283, %v7244
      %v7320 = vadd.f32 %v5286, %v7247
      %v7321 = vadd.f32 %v5288, %v7249
      %v7322 = vadd.f32 %v5291, %v7252
      %v7323 = vadd.f32 %v5293, %v7254
      %v7324 = vadd.f32 %v5296, %v7257
      %v7325 = vadd.f32 %v5298, %v7259
      %v7326 = vadd.f32 %v5301, %v7262
      %v7327 = vadd.f32 %v5303, %v7264
      %v7328 = vadd.f32 %v5306, %v7267
      %v7329 = vadd.f32 %v5308, %v7269
      %v7330 = vadd.f32 %v5311, %v7272
      %v7331 = vadd.f32 %v5313, %v7274
      %v7332 = vadd.f32 %v5316, %v7277
      %v7333 = vadd.f32 %v5318, %v7279
      %v7334 = vadd.f32 %v5321, %v7282
      %v7335 = vadd.f32 %v5323, %v7284
      %v7336 = vadd.f32 %v5326, %v7287
      %v7337 = vadd.f32 %v5328, %v7289
      %v7338 = vadd.f32 %v5331, %v7292
      %v7339 = vadd.f32 %v5333, %v7294
      %v7340 = vadd.f32 %v5336, %v7297
      %v7341 = vadd.f32 %v5338, %v7299
      %v7342 = vadd.f32 %v5341, %v7302
      %v7343 = vadd.f32 %v5343, %v7304
      %v7344 = vadd.f32 %v5346, %v7307
      %v7345 = vadd.f32 %v5348, %v7309
      %v7346 = vadd.f32 %v5351, %v7312
      %s7347 = scalar_lea.vmem %s4, 96
      %v7348 = vld [vmem:[%s7347] sm:$0xf]
      %v7349 = vld [vmem:[%s7347 + $0x4] sm:$0xf]
      %v7350 = vld [vmem:[%s7347 + $0x8] sm:$0xf]
      %v7351 = vld [vmem:[%s7347 + $0xc] sm:$0xf]
      %v7352 = vld [vmem:[%s7347 + $0x10] sm:$0xf]
      %v7353 = vld [vmem:[%s7347 + $0x14] sm:$0xf]
      %v7354 = vld [vmem:[%s7347 + $0x18] sm:$0xf]
      %v7355 = vld [vmem:[%s7347 + $0x1c] sm:$0xf]
      %v7364 = vunpack.c.l.b16 %v7348
      %v7365 = vunpack.c.l.b16 %v7349
      %v7366 = vunpack.c.l.b16 %v7350
      %v7367 = vunpack.c.l.b16 %v7351
      %v7368 = vunpack.c.l.b16 %v7352
      %v7369 = vunpack.c.l.b16 %v7353
      %v7370 = vunpack.c.l.b16 %v7354
      %v7371 = vunpack.c.l.b16 %v7355
      %v7372 = vpack.c.b16 %v7365, %v7364
      %v7373 = vpack.c.b16 %v7367, %v7366
      %v7374 = vpack.c.b16 %v7369, %v7368
      %v7375 = vpack.c.b16 %v7371, %v7370
      %7380 = vmatpush.bf16.msra.mxu0 0
      %7381 = vmatpush.bf16.msra.mxu0 0
      %7382 = vmatpush.bf16.msra.mxu0 0
      %7383 = vmatpush.bf16.msra.mxu0 0
      %7384 = vmatpush.bf16.msra.mxu0 %v7375
      %7385 = vmatpush.bf16.msra.mxu0 %v7374
      %7386 = vmatpush.bf16.msra.mxu0 %v7373
      %7387 = vmatpush.bf16.msra.mxu0 %v7372
      %7388 = vmatmul.bf16.gmra.mxu0 %v1414
      %v7389 = vpop.f32.mrf.mxu0
      %v7390 = vadd.f32 0.0, %v7389
      %v7391 = vpop.f32.mrf.mxu0
      %v7392 = vadd.f32 0.0, %v7391
      %7393 = vmatmul.bf16.gmra.mxu0 %v1417
      %v7394 = vpop.f32.mrf.mxu0
      %v7395 = vadd.f32 0.0, %v7394
      %v7396 = vpop.f32.mrf.mxu0
      %v7397 = vadd.f32 0.0, %v7396
      %7398 = vmatmul.bf16.gmra.mxu0 %v1420
      %v7399 = vpop.f32.mrf.mxu0
      %v7400 = vadd.f32 0.0, %v7399
      %v7401 = vpop.f32.mrf.mxu0
      %v7402 = vadd.f32 0.0, %v7401
      %7403 = vmatmul.bf16.gmra.mxu0 %v1423
      %v7404 = vpop.f32.mrf.mxu0
      %v7405 = vadd.f32 0.0, %v7404
      %v7406 = vpop.f32.mrf.mxu0
      %v7407 = vadd.f32 0.0, %v7406
      %7408 = vmatmul.bf16.gmra.mxu0 %v1426
      %v7409 = vpop.f32.mrf.mxu0
      %v7410 = vadd.f32 0.0, %v7409
      %v7411 = vpop.f32.mrf.mxu0
      %v7412 = vadd.f32 0.0, %v7411
      %7413 = vmatmul.bf16.gmra.mxu0 %v1429
      %v7414 = vpop.f32.mrf.mxu0
      %v7415 = vadd.f32 0.0, %v7414
      %v7416 = vpop.f32.mrf.mxu0
      %v7417 = vadd.f32 0.0, %v7416
      %7418 = vmatmul.bf16.gmra.mxu0 %v1432
      %v7419 = vpop.f32.mrf.mxu0
      %v7420 = vadd.f32 0.0, %v7419
      %v7421 = vpop.f32.mrf.mxu0
      %v7422 = vadd.f32 0.0, %v7421
      %7423 = vmatmul.bf16.gmra.mxu0 %v1435
      %v7424 = vpop.f32.mrf.mxu0
      %v7425 = vadd.f32 0.0, %v7424
      %v7426 = vpop.f32.mrf.mxu0
      %v7427 = vadd.f32 0.0, %v7426
      %7428 = vmatmul.bf16.gmra.mxu0 %v1438
      %v7429 = vpop.f32.mrf.mxu0
      %v7430 = vadd.f32 0.0, %v7429
      %v7431 = vpop.f32.mrf.mxu0
      %v7432 = vadd.f32 0.0, %v7431
      %7433 = vmatmul.bf16.gmra.mxu0 %v1441
      %v7434 = vpop.f32.mrf.mxu0
      %v7435 = vadd.f32 0.0, %v7434
      %v7436 = vpop.f32.mrf.mxu0
      %v7437 = vadd.f32 0.0, %v7436
      %7438 = vmatmul.bf16.gmra.mxu0 %v1444
      %v7439 = vpop.f32.mrf.mxu0
      %v7440 = vadd.f32 0.0, %v7439
      %v7441 = vpop.f32.mrf.mxu0
      %v7442 = vadd.f32 0.0, %v7441
      %7443 = vmatmul.bf16.gmra.mxu0 %v1447
      %v7444 = vpop.f32.mrf.mxu0
      %v7445 = vadd.f32 0.0, %v7444
      %v7446 = vpop.f32.mrf.mxu0
      %v7447 = vadd.f32 0.0, %v7446
      %7448 = vmatmul.bf16.gmra.mxu0 %v1450
      %v7449 = vpop.f32.mrf.mxu0
      %v7450 = vadd.f32 0.0, %v7449
      %v7451 = vpop.f32.mrf.mxu0
      %v7452 = vadd.f32 0.0, %v7451
      %7453 = vmatmul.bf16.gmra.mxu0 %v1453
      %v7454 = vpop.f32.mrf.mxu0
      %v7455 = vadd.f32 0.0, %v7454
      %v7456 = vpop.f32.mrf.mxu0
      %v7457 = vadd.f32 0.0, %v7456
      %7458 = vmatmul.bf16.gmra.mxu0 %v1456
      %v7459 = vpop.f32.mrf.mxu0
      %v7460 = vadd.f32 0.0, %v7459
      %v7461 = vpop.f32.mrf.mxu0
      %v7462 = vadd.f32 0.0, %v7461
      %7463 = vmatmul.bf16.gmra.mxu0 %v1459
      %v7464 = vpop.f32.mrf.mxu0
      %v7465 = vadd.f32 0.0, %v7464
      %v7466 = vpop.f32.mrf.mxu0
      %v7467 = vadd.f32 0.0, %v7466
      %7468 = vmatmul.bf16.gmra.mxu0 %v1462
      %v7469 = vpop.f32.mrf.mxu0
      %v7470 = vadd.f32 0.0, %v7469
      %v7471 = vpop.f32.mrf.mxu0
      %7472 = vdwg.mxu0
      %s7473 = scalar_lea.vmem %s5, 96
      %v7474 = vld [vmem:[%s7473] sm:$0xf]
      %v7475 = vld [vmem:[%s7473 + $0x4] sm:$0xf]
      %v7476 = vld [vmem:[%s7473 + $0x8] sm:$0xf]
      %v7477 = vld [vmem:[%s7473 + $0xc] sm:$0xf]
      %v7478 = vld [vmem:[%s7473 + $0x10] sm:$0xf]
      %v7479 = vld [vmem:[%s7473 + $0x14] sm:$0xf]
      %v7480 = vld [vmem:[%s7473 + $0x18] sm:$0xf]
      %v7481 = vld [vmem:[%s7473 + $0x1c] sm:$0xf]
      %v7490 = vunpack.c.l.b16 %v7474
      %v7491 = vunpack.c.l.b16 %v7475
      %v7492 = vunpack.c.l.b16 %v7476
      %v7493 = vunpack.c.l.b16 %v7477
      %v7494 = vunpack.c.l.b16 %v7478
      %v7495 = vunpack.c.l.b16 %v7479
      %v7496 = vunpack.c.l.b16 %v7480
      %v7497 = vunpack.c.l.b16 %v7481
      %v7498 = vpack.c.b16 %v7491, %v7490
      %v7499 = vpack.c.b16 %v7493, %v7492
      %v7500 = vpack.c.b16 %v7495, %v7494
      %v7501 = vpack.c.b16 %v7497, %v7496
      %7506 = vmatpush.bf16.msra.mxu0 0
      %7507 = vmatpush.bf16.msra.mxu0 0
      %7508 = vmatpush.bf16.msra.mxu0 0
      %7509 = vmatpush.bf16.msra.mxu0 0
      %7510 = vmatpush.bf16.msra.mxu0 %v7501
      %7511 = vmatpush.bf16.msra.mxu0 %v7500
      %7512 = vmatpush.bf16.msra.mxu0 %v7499
      %7513 = vmatpush.bf16.msra.mxu0 %v7498
      %7514 = vmatmul.bf16.gmra.mxu0 %v1414
      %v7515 = vpop.f32.mrf.mxu0
      %v7516 = vadd.f32 0.0, %v7515
      %v7517 = vpop.f32.mrf.mxu0
      %v7518 = vadd.f32 0.0, %v7517
      %7519 = vmatmul.bf16.gmra.mxu0 %v1417
      %v7520 = vpop.f32.mrf.mxu0
      %v7521 = vadd.f32 0.0, %v7520
      %v7522 = vpop.f32.mrf.mxu0
      %v7523 = vadd.f32 0.0, %v7522
      %7524 = vmatmul.bf16.gmra.mxu0 %v1420
      %v7525 = vpop.f32.mrf.mxu0
      %v7526 = vadd.f32 0.0, %v7525
      %v7527 = vpop.f32.mrf.mxu0
      %v7528 = vadd.f32 0.0, %v7527
      %7529 = vmatmul.bf16.gmra.mxu0 %v1423
      %v7530 = vpop.f32.mrf.mxu0
      %v7531 = vadd.f32 0.0, %v7530
      %v7532 = vpop.f32.mrf.mxu0
      %v7533 = vadd.f32 0.0, %v7532
      %7534 = vmatmul.bf16.gmra.mxu0 %v1426
      %v7535 = vpop.f32.mrf.mxu0
      %v7536 = vadd.f32 0.0, %v7535
      %v7537 = vpop.f32.mrf.mxu0
      %v7538 = vadd.f32 0.0, %v7537
      %7539 = vmatmul.bf16.gmra.mxu0 %v1429
      %v7540 = vpop.f32.mrf.mxu0
      %v7541 = vadd.f32 0.0, %v7540
      %v7542 = vpop.f32.mrf.mxu0
      %v7543 = vadd.f32 0.0, %v7542
      %7544 = vmatmul.bf16.gmra.mxu0 %v1432
      %v7545 = vpop.f32.mrf.mxu0
      %v7546 = vadd.f32 0.0, %v7545
      %v7547 = vpop.f32.mrf.mxu0
      %v7548 = vadd.f32 0.0, %v7547
      %7549 = vmatmul.bf16.gmra.mxu0 %v1435
      %v7550 = vpop.f32.mrf.mxu0
      %v7551 = vadd.f32 0.0, %v7550
      %v7552 = vpop.f32.mrf.mxu0
      %v7553 = vadd.f32 0.0, %v7552
      %7554 = vmatmul.bf16.gmra.mxu0 %v1438
      %v7555 = vpop.f32.mrf.mxu0
      %v7556 = vadd.f32 0.0, %v7555
      %v7557 = vpop.f32.mrf.mxu0
      %v7558 = vadd.f32 0.0, %v7557
      %7559 = vmatmul.bf16.gmra.mxu0 %v1441
      %v7560 = vpop.f32.mrf.mxu0
      %v7561 = vadd.f32 0.0, %v7560
      %v7562 = vpop.f32.mrf.mxu0
      %v7563 = vadd.f32 0.0, %v7562
      %7564 = vmatmul.bf16.gmra.mxu0 %v1444
      %v7565 = vpop.f32.mrf.mxu0
      %v7566 = vadd.f32 0.0, %v7565
      %v7567 = vpop.f32.mrf.mxu0
      %v7568 = vadd.f32 0.0, %v7567
      %7569 = vmatmul.bf16.gmra.mxu0 %v1447
      %v7570 = vpop.f32.mrf.mxu0
      %v7571 = vadd.f32 0.0, %v7570
      %v7572 = vpop.f32.mrf.mxu0
      %v7573 = vadd.f32 0.0, %v7572
      %7574 = vmatmul.bf16.gmra.mxu0 %v1450
      %v7575 = vpop.f32.mrf.mxu0
      %v7576 = vadd.f32 0.0, %v7575
      %v7577 = vpop.f32.mrf.mxu0
      %v7578 = vadd.f32 0.0, %v7577
      %7579 = vmatmul.bf16.gmra.mxu0 %v1453
      %v7580 = vpop.f32.mrf.mxu0
      %v7581 = vadd.f32 0.0, %v7580
      %v7582 = vpop.f32.mrf.mxu0
      %v7583 = vadd.f32 0.0, %v7582
      %7584 = vmatmul.bf16.gmra.mxu0 %v1456
      %v7585 = vpop.f32.mrf.mxu0
      %v7586 = vadd.f32 0.0, %v7585
      %v7587 = vpop.f32.mrf.mxu0
      %v7588 = vadd.f32 0.0, %v7587
      %7589 = vmatmul.bf16.gmra.mxu0 %v1459
      %v7590 = vpop.f32.mrf.mxu0
      %v7591 = vadd.f32 0.0, %v7590
      %v7592 = vpop.f32.mrf.mxu0
      %v7593 = vadd.f32 0.0, %v7592
      %7594 = vmatmul.bf16.gmra.mxu0 %v1462
      %v7595 = vpop.f32.mrf.mxu0
      %v7596 = vadd.f32 0.0, %v7595
      %v7597 = vpop.f32.mrf.mxu0
      %7598 = vdwg.mxu0
      %v7599 = vmul.f32 %v7390, 0.5
      %v7600 = vmul.f32 %v7392, 0.5
      %v7601 = vmul.f32 %v7395, 0.5
      %v7602 = vmul.f32 %v7397, 0.5
      %v7603 = vmul.f32 %v7400, 0.5
      %v7604 = vmul.f32 %v7402, 0.5
      %v7605 = vmul.f32 %v7405, 0.5
      %v7606 = vmul.f32 %v7407, 0.5
      %v7607 = vmul.f32 %v7410, 0.5
      %v7608 = vmul.f32 %v7412, 0.5
      %v7609 = vmul.f32 %v7415, 0.5
      %v7610 = vmul.f32 %v7417, 0.5
      %v7611 = vmul.f32 %v7420, 0.5
      %v7612 = vmul.f32 %v7422, 0.5
      %v7613 = vmul.f32 %v7425, 0.5
      %v7614 = vmul.f32 %v7427, 0.5
      %v7615 = vmul.f32 %v7430, 0.5
      %v7616 = vmul.f32 %v7432, 0.5
      %v7617 = vmul.f32 %v7435, 0.5
      %v7618 = vmul.f32 %v7437, 0.5
      %v7619 = vmul.f32 %v7440, 0.5
      %v7620 = vmul.f32 %v7442, 0.5
      %v7621 = vmul.f32 %v7445, 0.5
      %v7622 = vmul.f32 %v7447, 0.5
      %v7623 = vmul.f32 %v7450, 0.5
      %v7624 = vmul.f32 %v7452, 0.5
      %v7625 = vmul.f32 %v7455, 0.5
      %v7626 = vmul.f32 %v7457, 0.5
      %v7627 = vmul.f32 %v7460, 0.5
      %v7628 = vmul.f32 %v7462, 0.5
      %v7629 = vmul.f32 %v7465, 0.5
      %v7630 = vmul.f32 %v7467, 0.5
      %v7631 = vmul.f32 %v7470, 0.5
      %v7632 = vpack.c.bf16 %v7600, %v7599
      %v7633 = vpack.c.bf16 %v7602, %v7601
      %v7634 = vpack.c.bf16 %v7604, %v7603
      %v7635 = vpack.c.bf16 %v7606, %v7605
      %v7636 = vpack.c.bf16 %v7608, %v7607
      %v7637 = vpack.c.bf16 %v7610, %v7609
      %v7638 = vpack.c.bf16 %v7612, %v7611
      %v7639 = vpack.c.bf16 %v7614, %v7613
      %v7640 = vpack.c.bf16 %v7616, %v7615
      %v7641 = vpack.c.bf16 %v7618, %v7617
      %v7642 = vpack.c.bf16 %v7620, %v7619
      %v7643 = vpack.c.bf16 %v7622, %v7621
      %v7644 = vpack.c.bf16 %v7624, %v7623
      %v7645 = vpack.c.bf16 %v7626, %v7625
      %v7646 = vpack.c.bf16 %v7628, %v7627
      %v7647 = vpack.c.bf16 %v7630, %v7629
      %v7648 = vpack.c.bf16 %v7631, %v7631
      %v7649 = vpack.c.bf16 %v7518, %v7516
      %v7650 = vpack.c.bf16 %v7523, %v7521
      %v7651 = vpack.c.bf16 %v7528, %v7526
      %v7652 = vpack.c.bf16 %v7533, %v7531
      %v7653 = vpack.c.bf16 %v7538, %v7536
      %v7654 = vpack.c.bf16 %v7543, %v7541
      %v7655 = vpack.c.bf16 %v7548, %v7546
      %v7656 = vpack.c.bf16 %v7553, %v7551
      %v7657 = vpack.c.bf16 %v7558, %v7556
      %v7658 = vpack.c.bf16 %v7563, %v7561
      %v7659 = vpack.c.bf16 %v7568, %v7566
      %v7660 = vpack.c.bf16 %v7573, %v7571
      %v7661 = vpack.c.bf16 %v7578, %v7576
      %v7662 = vpack.c.bf16 %v7583, %v7581
      %v7663 = vpack.c.bf16 %v7588, %v7586
      %v7664 = vpack.c.bf16 %v7593, %v7591
      %v7665 = vpack.c.bf16 %v7596, %v7596
      %v7667 = vsel %vm1749, %v7632, 0
      %v7670 = vsel %vm1749, %v7633, 0
      %v7673 = vsel %vm1749, %v7634, 0
      %v7676 = vsel %vm1749, %v7635, 0
      %v7679 = vsel %vm1749, %v7636, 0
      %v7682 = vsel %vm1749, %v7637, 0
      %v7685 = vsel %vm1749, %v7638, 0
      %v7688 = vsel %vm1749, %v7639, 0
      %v7691 = vsel %vm1749, %v7640, 0
      %v7694 = vsel %vm1749, %v7641, 0
      %v7697 = vsel %vm1749, %v7642, 0
      %v7700 = vsel %vm1749, %v7643, 0
      %v7703 = vsel %vm1749, %v7644, 0
      %v7706 = vsel %vm1749, %v7645, 0
      %v7709 = vsel %vm1749, %v7646, 0
      %v7712 = vsel %vm1749, %v7647, 0
      %v7715 = vsel %vm1749, %v7648, 0
      %7717 = vmatpush.bf16.xpose.msra.mxu0 %v7688
      %7718 = vmatpush.bf16.xpose.msra.mxu0 %v7685
      %7719 = vmatpush.bf16.xpose.msra.mxu0 %v7682
      %7720 = vmatpush.bf16.xpose.msra.mxu0 %v7679
      %7721 = vmatpush.bf16.xpose.msra.mxu0 %v7676
      %7722 = vmatpush.bf16.xpose.msra.mxu0 %v7673
      %7723 = vmatpush.bf16.xpose.msra.mxu0 %v7670
      %7724 = vmatpush.bf16.xpose.msra.mxu0 %v7667
      %7725 = vmatmul.bf16.gmra.mxu0 %v7667
      %v7726 = vpop.f32.mrf.mxu0
      %v7727 = vadd.f32 0.0, %v7726
      %v7728 = vpop.f32.mrf.mxu0
      %v7729 = vadd.f32 0.0, %v7728
      %7730 = vmatmul.bf16.gmra.mxu0 %v7670
      %v7731 = vpop.f32.mrf.mxu0
      %v7732 = vadd.f32 0.0, %v7731
      %v7733 = vpop.f32.mrf.mxu0
      %v7734 = vadd.f32 0.0, %v7733
      %7735 = vmatmul.bf16.gmra.mxu0 %v7673
      %v7736 = vpop.f32.mrf.mxu0
      %v7737 = vadd.f32 0.0, %v7736
      %v7738 = vpop.f32.mrf.mxu0
      %v7739 = vadd.f32 0.0, %v7738
      %7740 = vmatmul.bf16.gmra.mxu0 %v7676
      %v7741 = vpop.f32.mrf.mxu0
      %v7742 = vadd.f32 0.0, %v7741
      %v7743 = vpop.f32.mrf.mxu0
      %v7744 = vadd.f32 0.0, %v7743
      %7745 = vmatmul.bf16.gmra.mxu0 %v7679
      %v7746 = vpop.f32.mrf.mxu0
      %v7747 = vadd.f32 0.0, %v7746
      %v7748 = vpop.f32.mrf.mxu0
      %v7749 = vadd.f32 0.0, %v7748
      %7750 = vmatmul.bf16.gmra.mxu0 %v7682
      %v7751 = vpop.f32.mrf.mxu0
      %v7752 = vadd.f32 0.0, %v7751
      %v7753 = vpop.f32.mrf.mxu0
      %v7754 = vadd.f32 0.0, %v7753
      %7755 = vmatmul.bf16.gmra.mxu0 %v7685
      %v7756 = vpop.f32.mrf.mxu0
      %v7757 = vadd.f32 0.0, %v7756
      %v7758 = vpop.f32.mrf.mxu0
      %v7759 = vadd.f32 0.0, %v7758
      %7760 = vmatmul.bf16.gmra.mxu0 %v7688
      %v7761 = vpop.f32.mrf.mxu0
      %v7762 = vadd.f32 0.0, %v7761
      %v7763 = vpop.f32.mrf.mxu0
      %v7764 = vadd.f32 0.0, %v7763
      %7765 = vmatmul.bf16.gmra.mxu0 %v7691
      %v7766 = vpop.f32.mrf.mxu0
      %v7767 = vadd.f32 0.0, %v7766
      %v7768 = vpop.f32.mrf.mxu0
      %v7769 = vadd.f32 0.0, %v7768
      %7770 = vmatmul.bf16.gmra.mxu0 %v7694
      %v7771 = vpop.f32.mrf.mxu0
      %v7772 = vadd.f32 0.0, %v7771
      %v7773 = vpop.f32.mrf.mxu0
      %v7774 = vadd.f32 0.0, %v7773
      %7775 = vmatmul.bf16.gmra.mxu0 %v7697
      %v7776 = vpop.f32.mrf.mxu0
      %v7777 = vadd.f32 0.0, %v7776
      %v7778 = vpop.f32.mrf.mxu0
      %v7779 = vadd.f32 0.0, %v7778
      %7780 = vmatmul.bf16.gmra.mxu0 %v7700
      %v7781 = vpop.f32.mrf.mxu0
      %v7782 = vadd.f32 0.0, %v7781
      %v7783 = vpop.f32.mrf.mxu0
      %v7784 = vadd.f32 0.0, %v7783
      %7785 = vmatmul.bf16.gmra.mxu0 %v7703
      %v7786 = vpop.f32.mrf.mxu0
      %v7787 = vadd.f32 0.0, %v7786
      %v7788 = vpop.f32.mrf.mxu0
      %v7789 = vadd.f32 0.0, %v7788
      %7790 = vmatmul.bf16.gmra.mxu0 %v7706
      %v7791 = vpop.f32.mrf.mxu0
      %v7792 = vadd.f32 0.0, %v7791
      %v7793 = vpop.f32.mrf.mxu0
      %v7794 = vadd.f32 0.0, %v7793
      %7795 = vmatmul.bf16.gmra.mxu0 %v7709
      %v7796 = vpop.f32.mrf.mxu0
      %v7797 = vadd.f32 0.0, %v7796
      %v7798 = vpop.f32.mrf.mxu0
      %v7799 = vadd.f32 0.0, %v7798
      %7800 = vmatmul.bf16.gmra.mxu0 %v7712
      %v7801 = vpop.f32.mrf.mxu0
      %v7802 = vadd.f32 0.0, %v7801
      %v7803 = vpop.f32.mrf.mxu0
      %v7804 = vadd.f32 0.0, %v7803
      %7805 = vmatmul.bf16.gmra.mxu0 %v7715
      %v7806 = vpop.f32.mrf.mxu0
      %v7807 = vadd.f32 0.0, %v7806
      %v7808 = vpop.f32.mrf.mxu0
      %7809 = vdwg.mxu0
      %7810 = vmatpush.bf16.xpose.msra.mxu0 %v7712
      %7811 = vmatpush.bf16.xpose.msra.mxu0 %v7709
      %7812 = vmatpush.bf16.xpose.msra.mxu0 %v7706
      %7813 = vmatpush.bf16.xpose.msra.mxu0 %v7703
      %7814 = vmatpush.bf16.xpose.msra.mxu0 %v7700
      %7815 = vmatpush.bf16.xpose.msra.mxu0 %v7697
      %7816 = vmatpush.bf16.xpose.msra.mxu0 %v7694
      %7817 = vmatpush.bf16.xpose.msra.mxu0 %v7691
      %7818 = vmatmul.bf16.gmra.mxu0 %v7667
      %v7819 = vpop.f32.mrf.mxu0
      %v7820 = vadd.f32 0.0, %v7819
      %v7821 = vpop.f32.mrf.mxu0
      %v7822 = vadd.f32 0.0, %v7821
      %7823 = vmatmul.bf16.gmra.mxu0 %v7670
      %v7824 = vpop.f32.mrf.mxu0
      %v7825 = vadd.f32 0.0, %v7824
      %v7826 = vpop.f32.mrf.mxu0
      %v7827 = vadd.f32 0.0, %v7826
      %7828 = vmatmul.bf16.gmra.mxu0 %v7673
      %v7829 = vpop.f32.mrf.mxu0
      %v7830 = vadd.f32 0.0, %v7829
      %v7831 = vpop.f32.mrf.mxu0
      %v7832 = vadd.f32 0.0, %v7831
      %7833 = vmatmul.bf16.gmra.mxu0 %v7676
      %v7834 = vpop.f32.mrf.mxu0
      %v7835 = vadd.f32 0.0, %v7834
      %v7836 = vpop.f32.mrf.mxu0
      %v7837 = vadd.f32 0.0, %v7836
      %7838 = vmatmul.bf16.gmra.mxu0 %v7679
      %v7839 = vpop.f32.mrf.mxu0
      %v7840 = vadd.f32 0.0, %v7839
      %v7841 = vpop.f32.mrf.mxu0
      %v7842 = vadd.f32 0.0, %v7841
      %7843 = vmatmul.bf16.gmra.mxu0 %v7682
      %v7844 = vpop.f32.mrf.mxu0
      %v7845 = vadd.f32 0.0, %v7844
      %v7846 = vpop.f32.mrf.mxu0
      %v7847 = vadd.f32 0.0, %v7846
      %7848 = vmatmul.bf16.gmra.mxu0 %v7685
      %v7849 = vpop.f32.mrf.mxu0
      %v7850 = vadd.f32 0.0, %v7849
      %v7851 = vpop.f32.mrf.mxu0
      %v7852 = vadd.f32 0.0, %v7851
      %7853 = vmatmul.bf16.gmra.mxu0 %v7688
      %v7854 = vpop.f32.mrf.mxu0
      %v7855 = vadd.f32 0.0, %v7854
      %v7856 = vpop.f32.mrf.mxu0
      %v7857 = vadd.f32 0.0, %v7856
      %7858 = vmatmul.bf16.gmra.mxu0 %v7691
      %v7859 = vpop.f32.mrf.mxu0
      %v7860 = vadd.f32 0.0, %v7859
      %v7861 = vpop.f32.mrf.mxu0
      %v7862 = vadd.f32 0.0, %v7861
      %7863 = vmatmul.bf16.gmra.mxu0 %v7694
      %v7864 = vpop.f32.mrf.mxu0
      %v7865 = vadd.f32 0.0, %v7864
      %v7866 = vpop.f32.mrf.mxu0
      %v7867 = vadd.f32 0.0, %v7866
      %7868 = vmatmul.bf16.gmra.mxu0 %v7697
      %v7869 = vpop.f32.mrf.mxu0
      %v7870 = vadd.f32 0.0, %v7869
      %v7871 = vpop.f32.mrf.mxu0
      %v7872 = vadd.f32 0.0, %v7871
      %7873 = vmatmul.bf16.gmra.mxu0 %v7700
      %v7874 = vpop.f32.mrf.mxu0
      %v7875 = vadd.f32 0.0, %v7874
      %v7876 = vpop.f32.mrf.mxu0
      %v7877 = vadd.f32 0.0, %v7876
      %7878 = vmatmul.bf16.gmra.mxu0 %v7703
      %v7879 = vpop.f32.mrf.mxu0
      %v7880 = vadd.f32 0.0, %v7879
      %v7881 = vpop.f32.mrf.mxu0
      %v7882 = vadd.f32 0.0, %v7881
      %7883 = vmatmul.bf16.gmra.mxu0 %v7706
      %v7884 = vpop.f32.mrf.mxu0
      %v7885 = vadd.f32 0.0, %v7884
      %v7886 = vpop.f32.mrf.mxu0
      %v7887 = vadd.f32 0.0, %v7886
      %7888 = vmatmul.bf16.gmra.mxu0 %v7709
      %v7889 = vpop.f32.mrf.mxu0
      %v7890 = vadd.f32 0.0, %v7889
      %v7891 = vpop.f32.mrf.mxu0
      %v7892 = vadd.f32 0.0, %v7891
      %7893 = vmatmul.bf16.gmra.mxu0 %v7712
      %v7894 = vpop.f32.mrf.mxu0
      %v7895 = vadd.f32 0.0, %v7894
      %v7896 = vpop.f32.mrf.mxu0
      %v7897 = vadd.f32 0.0, %v7896
      %7898 = vmatmul.bf16.gmra.mxu0 %v7715
      %v7899 = vpop.f32.mrf.mxu0
      %v7900 = vadd.f32 0.0, %v7899
      %v7901 = vpop.f32.mrf.mxu0
      %7902 = vdwg.mxu0
      %7903 = vmatpush.bf16.xpose.msra.mxu0 0
      %7904 = vmatpush.bf16.xpose.msra.mxu0 0
      %7905 = vmatpush.bf16.xpose.msra.mxu0 0
      %7906 = vmatpush.bf16.xpose.msra.mxu0 0
      %7907 = vmatpush.bf16.xpose.msra.mxu0 0
      %7908 = vmatpush.bf16.xpose.msra.mxu0 0
      %7909 = vmatpush.bf16.xpose.msra.mxu0 0
      %7910 = vmatpush.bf16.xpose.msra.mxu0 %v7715
      %7911 = vmatmul.bf16.gmra.mxu0 %v7667
      %v7912 = vpop.f32.mrf.mxu0
      %v7913 = vadd.f32 0.0, %v7912
      %v7914 = vpop.f32.mrf.mxu0
      %v7915 = vadd.f32 0.0, %v7914
      %7916 = vmatmul.bf16.gmra.mxu0 %v7670
      %v7917 = vpop.f32.mrf.mxu0
      %v7918 = vadd.f32 0.0, %v7917
      %v7919 = vpop.f32.mrf.mxu0
      %v7920 = vadd.f32 0.0, %v7919
      %7921 = vmatmul.bf16.gmra.mxu0 %v7673
      %v7922 = vpop.f32.mrf.mxu0
      %v7923 = vadd.f32 0.0, %v7922
      %v7924 = vpop.f32.mrf.mxu0
      %v7925 = vadd.f32 0.0, %v7924
      %7926 = vmatmul.bf16.gmra.mxu0 %v7676
      %v7927 = vpop.f32.mrf.mxu0
      %v7928 = vadd.f32 0.0, %v7927
      %v7929 = vpop.f32.mrf.mxu0
      %v7930 = vadd.f32 0.0, %v7929
      %7931 = vmatmul.bf16.gmra.mxu0 %v7679
      %v7932 = vpop.f32.mrf.mxu0
      %v7933 = vadd.f32 0.0, %v7932
      %v7934 = vpop.f32.mrf.mxu0
      %v7935 = vadd.f32 0.0, %v7934
      %7936 = vmatmul.bf16.gmra.mxu0 %v7682
      %v7937 = vpop.f32.mrf.mxu0
      %v7938 = vadd.f32 0.0, %v7937
      %v7939 = vpop.f32.mrf.mxu0
      %v7940 = vadd.f32 0.0, %v7939
      %7941 = vmatmul.bf16.gmra.mxu0 %v7685
      %v7942 = vpop.f32.mrf.mxu0
      %v7943 = vadd.f32 0.0, %v7942
      %v7944 = vpop.f32.mrf.mxu0
      %v7945 = vadd.f32 0.0, %v7944
      %7946 = vmatmul.bf16.gmra.mxu0 %v7688
      %v7947 = vpop.f32.mrf.mxu0
      %v7948 = vadd.f32 0.0, %v7947
      %v7949 = vpop.f32.mrf.mxu0
      %v7950 = vadd.f32 0.0, %v7949
      %7951 = vmatmul.bf16.gmra.mxu0 %v7691
      %v7952 = vpop.f32.mrf.mxu0
      %v7953 = vadd.f32 0.0, %v7952
      %v7954 = vpop.f32.mrf.mxu0
      %v7955 = vadd.f32 0.0, %v7954
      %7956 = vmatmul.bf16.gmra.mxu0 %v7694
      %v7957 = vpop.f32.mrf.mxu0
      %v7958 = vadd.f32 0.0, %v7957
      %v7959 = vpop.f32.mrf.mxu0
      %v7960 = vadd.f32 0.0, %v7959
      %7961 = vmatmul.bf16.gmra.mxu0 %v7697
      %v7962 = vpop.f32.mrf.mxu0
      %v7963 = vadd.f32 0.0, %v7962
      %v7964 = vpop.f32.mrf.mxu0
      %v7965 = vadd.f32 0.0, %v7964
      %7966 = vmatmul.bf16.gmra.mxu0 %v7700
      %v7967 = vpop.f32.mrf.mxu0
      %v7968 = vadd.f32 0.0, %v7967
      %v7969 = vpop.f32.mrf.mxu0
      %v7970 = vadd.f32 0.0, %v7969
      %7971 = vmatmul.bf16.gmra.mxu0 %v7703
      %v7972 = vpop.f32.mrf.mxu0
      %v7973 = vadd.f32 0.0, %v7972
      %v7974 = vpop.f32.mrf.mxu0
      %v7975 = vadd.f32 0.0, %v7974
      %7976 = vmatmul.bf16.gmra.mxu0 %v7706
      %v7977 = vpop.f32.mrf.mxu0
      %v7978 = vadd.f32 0.0, %v7977
      %v7979 = vpop.f32.mrf.mxu0
      %v7980 = vadd.f32 0.0, %v7979
      %7981 = vmatmul.bf16.gmra.mxu0 %v7709
      %v7982 = vpop.f32.mrf.mxu0
      %v7983 = vadd.f32 0.0, %v7982
      %v7984 = vpop.f32.mrf.mxu0
      %v7985 = vadd.f32 0.0, %v7984
      %7986 = vmatmul.bf16.gmra.mxu0 %v7712
      %v7987 = vpop.f32.mrf.mxu0
      %v7988 = vadd.f32 0.0, %v7987
      %v7989 = vpop.f32.mrf.mxu0
      %v7990 = vadd.f32 0.0, %v7989
      %7991 = vmatmul.bf16.gmra.mxu0 %v7715
      %v7992 = vpop.f32.mrf.mxu0
      %v7993 = vadd.f32 0.0, %v7992
      %v7994 = vpop.f32.mrf.mxu0
      %7995 = vdwg.mxu0
      %v7996 = vmax.f32 %v7727, %v7820
      %v7997 = vsel %vm2081, %v7913, -inf
      %v7998 = vmax.f32 %v7996, %v7997
      %7999 = vmax.xlane.f32.xlu0 %v7998
      %v8000 = vpop.xlane.xlu0 %7999
      %v8001 = vmax.f32 %v7729, %v7822
      %v8002 = vsel %vm2081, %v7915, -inf
      %v8003 = vmax.f32 %v8001, %v8002
      %8004 = vmax.xlane.f32.xlu0 %v8003
      %v8005 = vpop.xlane.xlu0 %8004
      %v8006 = vmax.f32 %v7732, %v7825
      %v8007 = vsel %vm2081, %v7918, -inf
      %v8008 = vmax.f32 %v8006, %v8007
      %8009 = vmax.xlane.f32.xlu0 %v8008
      %v8010 = vpop.xlane.xlu0 %8009
      %v8011 = vmax.f32 %v7734, %v7827
      %v8012 = vsel %vm2081, %v7920, -inf
      %v8013 = vmax.f32 %v8011, %v8012
      %8014 = vmax.xlane.f32.xlu0 %v8013
      %v8015 = vpop.xlane.xlu0 %8014
      %v8016 = vmax.f32 %v7737, %v7830
      %v8017 = vsel %vm2081, %v7923, -inf
      %v8018 = vmax.f32 %v8016, %v8017
      %8019 = vmax.xlane.f32.xlu0 %v8018
      %v8020 = vpop.xlane.xlu0 %8019
      %v8021 = vmax.f32 %v7739, %v7832
      %v8022 = vsel %vm2081, %v7925, -inf
      %v8023 = vmax.f32 %v8021, %v8022
      %8024 = vmax.xlane.f32.xlu0 %v8023
      %v8025 = vpop.xlane.xlu0 %8024
      %v8026 = vmax.f32 %v7742, %v7835
      %v8027 = vsel %vm2081, %v7928, -inf
      %v8028 = vmax.f32 %v8026, %v8027
      %8029 = vmax.xlane.f32.xlu0 %v8028
      %v8030 = vpop.xlane.xlu0 %8029
      %v8031 = vmax.f32 %v7744, %v7837
      %v8032 = vsel %vm2081, %v7930, -inf
      %v8033 = vmax.f32 %v8031, %v8032
      %8034 = vmax.xlane.f32.xlu0 %v8033
      %v8035 = vpop.xlane.xlu0 %8034
      %v8036 = vmax.f32 %v7747, %v7840
      %v8037 = vsel %vm2081, %v7933, -inf
      %v8038 = vmax.f32 %v8036, %v8037
      %8039 = vmax.xlane.f32.xlu0 %v8038
      %v8040 = vpop.xlane.xlu0 %8039
      %v8041 = vmax.f32 %v7749, %v7842
      %v8042 = vsel %vm2081, %v7935, -inf
      %v8043 = vmax.f32 %v8041, %v8042
      %8044 = vmax.xlane.f32.xlu0 %v8043
      %v8045 = vpop.xlane.xlu0 %8044
      %v8046 = vmax.f32 %v7752, %v7845
      %v8047 = vsel %vm2081, %v7938, -inf
      %v8048 = vmax.f32 %v8046, %v8047
      %8049 = vmax.xlane.f32.xlu0 %v8048
      %v8050 = vpop.xlane.xlu0 %8049
      %v8051 = vmax.f32 %v7754, %v7847
      %v8052 = vsel %vm2081, %v7940, -inf
      %v8053 = vmax.f32 %v8051, %v8052
      %8054 = vmax.xlane.f32.xlu0 %v8053
      %v8055 = vpop.xlane.xlu0 %8054
      %v8056 = vmax.f32 %v7757, %v7850
      %v8057 = vsel %vm2081, %v7943, -inf
      %v8058 = vmax.f32 %v8056, %v8057
      %8059 = vmax.xlane.f32.xlu0 %v8058
      %v8060 = vpop.xlane.xlu0 %8059
      %v8061 = vmax.f32 %v7759, %v7852
      %v8062 = vsel %vm2081, %v7945, -inf
      %v8063 = vmax.f32 %v8061, %v8062
      %8064 = vmax.xlane.f32.xlu0 %v8063
      %v8065 = vpop.xlane.xlu0 %8064
      %v8066 = vmax.f32 %v7762, %v7855
      %v8067 = vsel %vm2081, %v7948, -inf
      %v8068 = vmax.f32 %v8066, %v8067
      %8069 = vmax.xlane.f32.xlu0 %v8068
      %v8070 = vpop.xlane.xlu0 %8069
      %v8071 = vmax.f32 %v7764, %v7857
      %v8072 = vsel %vm2081, %v7950, -inf
      %v8073 = vmax.f32 %v8071, %v8072
      %8074 = vmax.xlane.f32.xlu0 %v8073
      %v8075 = vpop.xlane.xlu0 %8074
      %v8076 = vmax.f32 %v7767, %v7860
      %v8077 = vsel %vm2081, %v7953, -inf
      %v8078 = vmax.f32 %v8076, %v8077
      %8079 = vmax.xlane.f32.xlu0 %v8078
      %v8080 = vpop.xlane.xlu0 %8079
      %v8081 = vmax.f32 %v7769, %v7862
      %v8082 = vsel %vm2081, %v7955, -inf
      %v8083 = vmax.f32 %v8081, %v8082
      %8084 = vmax.xlane.f32.xlu0 %v8083
      %v8085 = vpop.xlane.xlu0 %8084
      %v8086 = vmax.f32 %v7772, %v7865
      %v8087 = vsel %vm2081, %v7958, -inf
      %v8088 = vmax.f32 %v8086, %v8087
      %8089 = vmax.xlane.f32.xlu0 %v8088
      %v8090 = vpop.xlane.xlu0 %8089
      %v8091 = vmax.f32 %v7774, %v7867
      %v8092 = vsel %vm2081, %v7960, -inf
      %v8093 = vmax.f32 %v8091, %v8092
      %8094 = vmax.xlane.f32.xlu0 %v8093
      %v8095 = vpop.xlane.xlu0 %8094
      %v8096 = vmax.f32 %v7777, %v7870
      %v8097 = vsel %vm2081, %v7963, -inf
      %v8098 = vmax.f32 %v8096, %v8097
      %8099 = vmax.xlane.f32.xlu0 %v8098
      %v8100 = vpop.xlane.xlu0 %8099
      %v8101 = vmax.f32 %v7779, %v7872
      %v8102 = vsel %vm2081, %v7965, -inf
      %v8103 = vmax.f32 %v8101, %v8102
      %8104 = vmax.xlane.f32.xlu0 %v8103
      %v8105 = vpop.xlane.xlu0 %8104
      %v8106 = vmax.f32 %v7782, %v7875
      %v8107 = vsel %vm2081, %v7968, -inf
      %v8108 = vmax.f32 %v8106, %v8107
      %8109 = vmax.xlane.f32.xlu0 %v8108
      %v8110 = vpop.xlane.xlu0 %8109
      %v8111 = vmax.f32 %v7784, %v7877
      %v8112 = vsel %vm2081, %v7970, -inf
      %v8113 = vmax.f32 %v8111, %v8112
      %8114 = vmax.xlane.f32.xlu0 %v8113
      %v8115 = vpop.xlane.xlu0 %8114
      %v8116 = vmax.f32 %v7787, %v7880
      %v8117 = vsel %vm2081, %v7973, -inf
      %v8118 = vmax.f32 %v8116, %v8117
      %8119 = vmax.xlane.f32.xlu0 %v8118
      %v8120 = vpop.xlane.xlu0 %8119
      %v8121 = vmax.f32 %v7789, %v7882
      %v8122 = vsel %vm2081, %v7975, -inf
      %v8123 = vmax.f32 %v8121, %v8122
      %8124 = vmax.xlane.f32.xlu0 %v8123
      %v8125 = vpop.xlane.xlu0 %8124
      %v8126 = vmax.f32 %v7792, %v7885
      %v8127 = vsel %vm2081, %v7978, -inf
      %v8128 = vmax.f32 %v8126, %v8127
      %8129 = vmax.xlane.f32.xlu0 %v8128
      %v8130 = vpop.xlane.xlu0 %8129
      %v8131 = vmax.f32 %v7794, %v7887
      %v8132 = vsel %vm2081, %v7980, -inf
      %v8133 = vmax.f32 %v8131, %v8132
      %8134 = vmax.xlane.f32.xlu0 %v8133
      %v8135 = vpop.xlane.xlu0 %8134
      %v8136 = vmax.f32 %v7797, %v7890
      %v8137 = vsel %vm2081, %v7983, -inf
      %v8138 = vmax.f32 %v8136, %v8137
      %8139 = vmax.xlane.f32.xlu0 %v8138
      %v8140 = vpop.xlane.xlu0 %8139
      %v8141 = vmax.f32 %v7799, %v7892
      %v8142 = vsel %vm2081, %v7985, -inf
      %v8143 = vmax.f32 %v8141, %v8142
      %8144 = vmax.xlane.f32.xlu0 %v8143
      %v8145 = vpop.xlane.xlu0 %8144
      %v8146 = vmax.f32 %v7802, %v7895
      %v8147 = vsel %vm2081, %v7988, -inf
      %v8148 = vmax.f32 %v8146, %v8147
      %8149 = vmax.xlane.f32.xlu0 %v8148
      %v8150 = vpop.xlane.xlu0 %8149
      %v8151 = vmax.f32 %v7804, %v7897
      %v8152 = vsel %vm2081, %v7990, -inf
      %v8153 = vmax.f32 %v8151, %v8152
      %8154 = vmax.xlane.f32.xlu0 %v8153
      %v8155 = vpop.xlane.xlu0 %8154
      %v8156 = vmax.f32 %v7807, %v7900
      %v8157 = vsel %vm2081, %v7993, -inf
      %v8158 = vmax.f32 %v8156, %v8157
      %8159 = vmax.xlane.f32.xlu0 %v8158
      %v8160 = vpop.xlane.xlu0 %8159
      %v8161 = vsub.f32 %v7727, %v8000
      %v8162 = vsub.f32 %v7820, %v8000
      %v8163 = vsub.f32 %v7913, %v8000
      %v8164 = vsub.f32 %v7729, %v8005
      %v8165 = vsub.f32 %v7822, %v8005
      %v8166 = vsub.f32 %v7915, %v8005
      %v8167 = vsub.f32 %v7732, %v8010
      %v8168 = vsub.f32 %v7825, %v8010
      %v8169 = vsub.f32 %v7918, %v8010
      %v8170 = vsub.f32 %v7734, %v8015
      %v8171 = vsub.f32 %v7827, %v8015
      %v8172 = vsub.f32 %v7920, %v8015
      %v8173 = vsub.f32 %v7737, %v8020
      %v8174 = vsub.f32 %v7830, %v8020
      %v8175 = vsub.f32 %v7923, %v8020
      %v8176 = vsub.f32 %v7739, %v8025
      %v8177 = vsub.f32 %v7832, %v8025
      %v8178 = vsub.f32 %v7925, %v8025
      %v8179 = vsub.f32 %v7742, %v8030
      %v8180 = vsub.f32 %v7835, %v8030
      %v8181 = vsub.f32 %v7928, %v8030
      %v8182 = vsub.f32 %v7744, %v8035
      %v8183 = vsub.f32 %v7837, %v8035
      %v8184 = vsub.f32 %v7930, %v8035
      %v8185 = vsub.f32 %v7747, %v8040
      %v8186 = vsub.f32 %v7840, %v8040
      %v8187 = vsub.f32 %v7933, %v8040
      %v8188 = vsub.f32 %v7749, %v8045
      %v8189 = vsub.f32 %v7842, %v8045
      %v8190 = vsub.f32 %v7935, %v8045
      %v8191 = vsub.f32 %v7752, %v8050
      %v8192 = vsub.f32 %v7845, %v8050
      %v8193 = vsub.f32 %v7938, %v8050
      %v8194 = vsub.f32 %v7754, %v8055
      %v8195 = vsub.f32 %v7847, %v8055
      %v8196 = vsub.f32 %v7940, %v8055
      %v8197 = vsub.f32 %v7757, %v8060
      %v8198 = vsub.f32 %v7850, %v8060
      %v8199 = vsub.f32 %v7943, %v8060
      %v8200 = vsub.f32 %v7759, %v8065
      %v8201 = vsub.f32 %v7852, %v8065
      %v8202 = vsub.f32 %v7945, %v8065
      %v8203 = vsub.f32 %v7762, %v8070
      %v8204 = vsub.f32 %v7855, %v8070
      %v8205 = vsub.f32 %v7948, %v8070
      %v8206 = vsub.f32 %v7764, %v8075
      %v8207 = vsub.f32 %v7857, %v8075
      %v8208 = vsub.f32 %v7950, %v8075
      %v8209 = vsub.f32 %v7767, %v8080
      %v8210 = vsub.f32 %v7860, %v8080
      %v8211 = vsub.f32 %v7953, %v8080
      %v8212 = vsub.f32 %v7769, %v8085
      %v8213 = vsub.f32 %v7862, %v8085
      %v8214 = vsub.f32 %v7955, %v8085
      %v8215 = vsub.f32 %v7772, %v8090
      %v8216 = vsub.f32 %v7865, %v8090
      %v8217 = vsub.f32 %v7958, %v8090
      %v8218 = vsub.f32 %v7774, %v8095
      %v8219 = vsub.f32 %v7867, %v8095
      %v8220 = vsub.f32 %v7960, %v8095
      %v8221 = vsub.f32 %v7777, %v8100
      %v8222 = vsub.f32 %v7870, %v8100
      %v8223 = vsub.f32 %v7963, %v8100
      %v8224 = vsub.f32 %v7779, %v8105
      %v8225 = vsub.f32 %v7872, %v8105
      %v8226 = vsub.f32 %v7965, %v8105
      %v8227 = vsub.f32 %v7782, %v8110
      %v8228 = vsub.f32 %v7875, %v8110
      %v8229 = vsub.f32 %v7968, %v8110
      %v8230 = vsub.f32 %v7784, %v8115
      %v8231 = vsub.f32 %v7877, %v8115
      %v8232 = vsub.f32 %v7970, %v8115
      %v8233 = vsub.f32 %v7787, %v8120
      %v8234 = vsub.f32 %v7880, %v8120
      %v8235 = vsub.f32 %v7973, %v8120
      %v8236 = vsub.f32 %v7789, %v8125
      %v8237 = vsub.f32 %v7882, %v8125
      %v8238 = vsub.f32 %v7975, %v8125
      %v8239 = vsub.f32 %v7792, %v8130
      %v8240 = vsub.f32 %v7885, %v8130
      %v8241 = vsub.f32 %v7978, %v8130
      %v8242 = vsub.f32 %v7794, %v8135
      %v8243 = vsub.f32 %v7887, %v8135
      %v8244 = vsub.f32 %v7980, %v8135
      %v8245 = vsub.f32 %v7797, %v8140
      %v8246 = vsub.f32 %v7890, %v8140
      %v8247 = vsub.f32 %v7983, %v8140
      %v8248 = vsub.f32 %v7799, %v8145
      %v8249 = vsub.f32 %v7892, %v8145
      %v8250 = vsub.f32 %v7985, %v8145
      %v8251 = vsub.f32 %v7802, %v8150
      %v8252 = vsub.f32 %v7895, %v8150
      %v8253 = vsub.f32 %v7988, %v8150
      %v8254 = vsub.f32 %v7804, %v8155
      %v8255 = vsub.f32 %v7897, %v8155
      %v8256 = vsub.f32 %v7990, %v8155
      %v8257 = vsub.f32 %v7807, %v8160
      %v8258 = vsub.f32 %v7900, %v8160
      %v8259 = vsub.f32 %v7993, %v8160
      %v8260 = vmul.f32 %v8161, 1.442695
      %v8261 = vpow.pop %v8260
      %v8262 = vmul.f32 %v8162, 1.442695
      %v8263 = vpow.pop %v8262
      %v8264 = vmul.f32 %v8163, 1.442695
      %v8265 = vpow.pop %v8264
      %v8266 = vmul.f32 %v8164, 1.442695
      %v8267 = vpow.pop %v8266
      %v8268 = vmul.f32 %v8165, 1.442695
      %v8269 = vpow.pop %v8268
      %v8270 = vmul.f32 %v8166, 1.442695
      %v8271 = vpow.pop %v8270
      %v8272 = vmul.f32 %v8167, 1.442695
      %v8273 = vpow.pop %v8272
      %v8274 = vmul.f32 %v8168, 1.442695
      %v8275 = vpow.pop %v8274
      %v8276 = vmul.f32 %v8169, 1.442695
      %v8277 = vpow.pop %v8276
      %v8278 = vmul.f32 %v8170, 1.442695
      %v8279 = vpow.pop %v8278
      %v8280 = vmul.f32 %v8171, 1.442695
      %v8281 = vpow.pop %v8280
      %v8282 = vmul.f32 %v8172, 1.442695
      %v8283 = vpow.pop %v8282
      %v8284 = vmul.f32 %v8173, 1.442695
      %v8285 = vpow.pop %v8284
      %v8286 = vmul.f32 %v8174, 1.442695
      %v8287 = vpow.pop %v8286
      %v8288 = vmul.f32 %v8175, 1.442695
      %v8289 = vpow.pop %v8288
      %v8290 = vmul.f32 %v8176, 1.442695
      %v8291 = vpow.pop %v8290
      %v8292 = vmul.f32 %v8177, 1.442695
      %v8293 = vpow.pop %v8292
      %v8294 = vmul.f32 %v8178, 1.442695
      %v8295 = vpow.pop %v8294
      %v8296 = vmul.f32 %v8179, 1.442695
      %v8297 = vpow.pop %v8296
      %v8298 = vmul.f32 %v8180, 1.442695
      %v8299 = vpow.pop %v8298
      %v8300 = vmul.f32 %v8181, 1.442695
      %v8301 = vpow.pop %v8300
      %v8302 = vmul.f32 %v8182, 1.442695
      %v8303 = vpow.pop %v8302
      %v8304 = vmul.f32 %v8183, 1.442695
      %v8305 = vpow.pop %v8304
      %v8306 = vmul.f32 %v8184, 1.442695
      %v8307 = vpow.pop %v8306
      %v8308 = vmul.f32 %v8185, 1.442695
      %v8309 = vpow.pop %v8308
      %v8310 = vmul.f32 %v8186, 1.442695
      %v8311 = vpow.pop %v8310
      %v8312 = vmul.f32 %v8187, 1.442695
      %v8313 = vpow.pop %v8312
      %v8314 = vmul.f32 %v8188, 1.442695
      %v8315 = vpow.pop %v8314
      %v8316 = vmul.f32 %v8189, 1.442695
      %v8317 = vpow.pop %v8316
      %v8318 = vmul.f32 %v8190, 1.442695
      %v8319 = vpow.pop %v8318
      %v8320 = vmul.f32 %v8191, 1.442695
      %v8321 = vpow.pop %v8320
      %v8322 = vmul.f32 %v8192, 1.442695
      %v8323 = vpow.pop %v8322
      %v8324 = vmul.f32 %v8193, 1.442695
      %v8325 = vpow.pop %v8324
      %v8326 = vmul.f32 %v8194, 1.442695
      %v8327 = vpow.pop %v8326
      %v8328 = vmul.f32 %v8195, 1.442695
      %v8329 = vpow.pop %v8328
      %v8330 = vmul.f32 %v8196, 1.442695
      %v8331 = vpow.pop %v8330
      %v8332 = vmul.f32 %v8197, 1.442695
      %v8333 = vpow.pop %v8332
      %v8334 = vmul.f32 %v8198, 1.442695
      %v8335 = vpow.pop %v8334
      %v8336 = vmul.f32 %v8199, 1.442695
      %v8337 = vpow.pop %v8336
      %v8338 = vmul.f32 %v8200, 1.442695
      %v8339 = vpow.pop %v8338
      %v8340 = vmul.f32 %v8201, 1.442695
      %v8341 = vpow.pop %v8340
      %v8342 = vmul.f32 %v8202, 1.442695
      %v8343 = vpow.pop %v8342
      %v8344 = vmul.f32 %v8203, 1.442695
      %v8345 = vpow.pop %v8344
      %v8346 = vmul.f32 %v8204, 1.442695
      %v8347 = vpow.pop %v8346
      %v8348 = vmul.f32 %v8205, 1.442695
      %v8349 = vpow.pop %v8348
      %v8350 = vmul.f32 %v8206, 1.442695
      %v8351 = vpow.pop %v8350
      %v8352 = vmul.f32 %v8207, 1.442695
      %v8353 = vpow.pop %v8352
      %v8354 = vmul.f32 %v8208, 1.442695
      %v8355 = vpow.pop %v8354
      %v8356 = vmul.f32 %v8209, 1.442695
      %v8357 = vpow.pop %v8356
      %v8358 = vmul.f32 %v8210, 1.442695
      %v8359 = vpow.pop %v8358
      %v8360 = vmul.f32 %v8211, 1.442695
      %v8361 = vpow.pop %v8360
      %v8362 = vmul.f32 %v8212, 1.442695
      %v8363 = vpow.pop %v8362
      %v8364 = vmul.f32 %v8213, 1.442695
      %v8365 = vpow.pop %v8364
      %v8366 = vmul.f32 %v8214, 1.442695
      %v8367 = vpow.pop %v8366
      %v8368 = vmul.f32 %v8215, 1.442695
      %v8369 = vpow.pop %v8368
      %v8370 = vmul.f32 %v8216, 1.442695
      %v8371 = vpow.pop %v8370
      %v8372 = vmul.f32 %v8217, 1.442695
      %v8373 = vpow.pop %v8372
      %v8374 = vmul.f32 %v8218, 1.442695
      %v8375 = vpow.pop %v8374
      %v8376 = vmul.f32 %v8219, 1.442695
      %v8377 = vpow.pop %v8376
      %v8378 = vmul.f32 %v8220, 1.442695
      %v8379 = vpow.pop %v8378
      %v8380 = vmul.f32 %v8221, 1.442695
      %v8381 = vpow.pop %v8380
      %v8382 = vmul.f32 %v8222, 1.442695
      %v8383 = vpow.pop %v8382
      %v8384 = vmul.f32 %v8223, 1.442695
      %v8385 = vpow.pop %v8384
      %v8386 = vmul.f32 %v8224, 1.442695
      %v8387 = vpow.pop %v8386
      %v8388 = vmul.f32 %v8225, 1.442695
      %v8389 = vpow.pop %v8388
      %v8390 = vmul.f32 %v8226, 1.442695
      %v8391 = vpow.pop %v8390
      %v8392 = vmul.f32 %v8227, 1.442695
      %v8393 = vpow.pop %v8392
      %v8394 = vmul.f32 %v8228, 1.442695
      %v8395 = vpow.pop %v8394
      %v8396 = vmul.f32 %v8229, 1.442695
      %v8397 = vpow.pop %v8396
      %v8398 = vmul.f32 %v8230, 1.442695
      %v8399 = vpow.pop %v8398
      %v8400 = vmul.f32 %v8231, 1.442695
      %v8401 = vpow.pop %v8400
      %v8402 = vmul.f32 %v8232, 1.442695
      %v8403 = vpow.pop %v8402
      %v8404 = vmul.f32 %v8233, 1.442695
      %v8405 = vpow.pop %v8404
      %v8406 = vmul.f32 %v8234, 1.442695
      %v8407 = vpow.pop %v8406
      %v8408 = vmul.f32 %v8235, 1.442695
      %v8409 = vpow.pop %v8408
      %v8410 = vmul.f32 %v8236, 1.442695
      %v8411 = vpow.pop %v8410
      %v8412 = vmul.f32 %v8237, 1.442695
      %v8413 = vpow.pop %v8412
      %v8414 = vmul.f32 %v8238, 1.442695
      %v8415 = vpow.pop %v8414
      %v8416 = vmul.f32 %v8239, 1.442695
      %v8417 = vpow.pop %v8416
      %v8418 = vmul.f32 %v8240, 1.442695
      %v8419 = vpow.pop %v8418
      %v8420 = vmul.f32 %v8241, 1.442695
      %v8421 = vpow.pop %v8420
      %v8422 = vmul.f32 %v8242, 1.442695
      %v8423 = vpow.pop %v8422
      %v8424 = vmul.f32 %v8243, 1.442695
      %v8425 = vpow.pop %v8424
      %v8426 = vmul.f32 %v8244, 1.442695
      %v8427 = vpow.pop %v8426
      %v8428 = vmul.f32 %v8245, 1.442695
      %v8429 = vpow.pop %v8428
      %v8430 = vmul.f32 %v8246, 1.442695
      %v8431 = vpow.pop %v8430
      %v8432 = vmul.f32 %v8247, 1.442695
      %v8433 = vpow.pop %v8432
      %v8434 = vmul.f32 %v8248, 1.442695
      %v8435 = vpow.pop %v8434
      %v8436 = vmul.f32 %v8249, 1.442695
      %v8437 = vpow.pop %v8436
      %v8438 = vmul.f32 %v8250, 1.442695
      %v8439 = vpow.pop %v8438
      %v8440 = vmul.f32 %v8251, 1.442695
      %v8441 = vpow.pop %v8440
      %v8442 = vmul.f32 %v8252, 1.442695
      %v8443 = vpow.pop %v8442
      %v8444 = vmul.f32 %v8253, 1.442695
      %v8445 = vpow.pop %v8444
      %v8446 = vmul.f32 %v8254, 1.442695
      %v8447 = vpow.pop %v8446
      %v8448 = vmul.f32 %v8255, 1.442695
      %v8449 = vpow.pop %v8448
      %v8450 = vmul.f32 %v8256, 1.442695
      %v8451 = vpow.pop %v8450
      %v8452 = vmul.f32 %v8257, 1.442695
      %v8453 = vpow.pop %v8452
      %v8454 = vmul.f32 %v8258, 1.442695
      %v8455 = vpow.pop %v8454
      %v8456 = vmul.f32 %v8259, 1.442695
      %v8457 = vpow.pop %v8456
      %v8458 = vadd.f32 %v8261, %v8263
      %v8459 = vsel %vm2081, %v8265, 0.0
      %v8460 = vadd.f32 %v8458, %v8459
      %8461 = vadd.xlane.f32.xlu0 %v8460
      %v8462 = vpop.xlane.xlu0 %8461
      %v8463 = vadd.f32 %v8267, %v8269
      %v8464 = vsel %vm2081, %v8271, 0.0
      %v8465 = vadd.f32 %v8463, %v8464
      %8466 = vadd.xlane.f32.xlu0 %v8465
      %v8467 = vpop.xlane.xlu0 %8466
      %v8468 = vadd.f32 %v8273, %v8275
      %v8469 = vsel %vm2081, %v8277, 0.0
      %v8470 = vadd.f32 %v8468, %v8469
      %8471 = vadd.xlane.f32.xlu0 %v8470
      %v8472 = vpop.xlane.xlu0 %8471
      %v8473 = vadd.f32 %v8279, %v8281
      %v8474 = vsel %vm2081, %v8283, 0.0
      %v8475 = vadd.f32 %v8473, %v8474
      %8476 = vadd.xlane.f32.xlu0 %v8475
      %v8477 = vpop.xlane.xlu0 %8476
      %v8478 = vadd.f32 %v8285, %v8287
      %v8479 = vsel %vm2081, %v8289, 0.0
      %v8480 = vadd.f32 %v8478, %v8479
      %8481 = vadd.xlane.f32.xlu0 %v8480
      %v8482 = vpop.xlane.xlu0 %8481
      %v8483 = vadd.f32 %v8291, %v8293
      %v8484 = vsel %vm2081, %v8295, 0.0
      %v8485 = vadd.f32 %v8483, %v8484
      %8486 = vadd.xlane.f32.xlu0 %v8485
      %v8487 = vpop.xlane.xlu0 %8486
      %v8488 = vadd.f32 %v8297, %v8299
      %v8489 = vsel %vm2081, %v8301, 0.0
      %v8490 = vadd.f32 %v8488, %v8489
      %8491 = vadd.xlane.f32.xlu0 %v8490
      %v8492 = vpop.xlane.xlu0 %8491
      %v8493 = vadd.f32 %v8303, %v8305
      %v8494 = vsel %vm2081, %v8307, 0.0
      %v8495 = vadd.f32 %v8493, %v8494
      %8496 = vadd.xlane.f32.xlu0 %v8495
      %v8497 = vpop.xlane.xlu0 %8496
      %v8498 = vadd.f32 %v8309, %v8311
      %v8499 = vsel %vm2081, %v8313, 0.0
      %v8500 = vadd.f32 %v8498, %v8499
      %8501 = vadd.xlane.f32.xlu0 %v8500
      %v8502 = vpop.xlane.xlu0 %8501
      %v8503 = vadd.f32 %v8315, %v8317
      %v8504 = vsel %vm2081, %v8319, 0.0
      %v8505 = vadd.f32 %v8503, %v8504
      %8506 = vadd.xlane.f32.xlu0 %v8505
      %v8507 = vpop.xlane.xlu0 %8506
      %v8508 = vadd.f32 %v8321, %v8323
      %v8509 = vsel %vm2081, %v8325, 0.0
      %v8510 = vadd.f32 %v8508, %v8509
      %8511 = vadd.xlane.f32.xlu0 %v8510
      %v8512 = vpop.xlane.xlu0 %8511
      %v8513 = vadd.f32 %v8327, %v8329
      %v8514 = vsel %vm2081, %v8331, 0.0
      %v8515 = vadd.f32 %v8513, %v8514
      %8516 = vadd.xlane.f32.xlu0 %v8515
      %v8517 = vpop.xlane.xlu0 %8516
      %v8518 = vadd.f32 %v8333, %v8335
      %v8519 = vsel %vm2081, %v8337, 0.0
      %v8520 = vadd.f32 %v8518, %v8519
      %8521 = vadd.xlane.f32.xlu0 %v8520
      %v8522 = vpop.xlane.xlu0 %8521
      %v8523 = vadd.f32 %v8339, %v8341
      %v8524 = vsel %vm2081, %v8343, 0.0
      %v8525 = vadd.f32 %v8523, %v8524
      %8526 = vadd.xlane.f32.xlu0 %v8525
      %v8527 = vpop.xlane.xlu0 %8526
      %v8528 = vadd.f32 %v8345, %v8347
      %v8529 = vsel %vm2081, %v8349, 0.0
      %v8530 = vadd.f32 %v8528, %v8529
      %8531 = vadd.xlane.f32.xlu0 %v8530
      %v8532 = vpop.xlane.xlu0 %8531
      %v8533 = vadd.f32 %v8351, %v8353
      %v8534 = vsel %vm2081, %v8355, 0.0
      %v8535 = vadd.f32 %v8533, %v8534
      %8536 = vadd.xlane.f32.xlu0 %v8535
      %v8537 = vpop.xlane.xlu0 %8536
      %v8538 = vadd.f32 %v8357, %v8359
      %v8539 = vsel %vm2081, %v8361, 0.0
      %v8540 = vadd.f32 %v8538, %v8539
      %8541 = vadd.xlane.f32.xlu0 %v8540
      %v8542 = vpop.xlane.xlu0 %8541
      %v8543 = vadd.f32 %v8363, %v8365
      %v8544 = vsel %vm2081, %v8367, 0.0
      %v8545 = vadd.f32 %v8543, %v8544
      %8546 = vadd.xlane.f32.xlu0 %v8545
      %v8547 = vpop.xlane.xlu0 %8546
      %v8548 = vadd.f32 %v8369, %v8371
      %v8549 = vsel %vm2081, %v8373, 0.0
      %v8550 = vadd.f32 %v8548, %v8549
      %8551 = vadd.xlane.f32.xlu0 %v8550
      %v8552 = vpop.xlane.xlu0 %8551
      %v8553 = vadd.f32 %v8375, %v8377
      %v8554 = vsel %vm2081, %v8379, 0.0
      %v8555 = vadd.f32 %v8553, %v8554
      %8556 = vadd.xlane.f32.xlu0 %v8555
      %v8557 = vpop.xlane.xlu0 %8556
      %v8558 = vadd.f32 %v8381, %v8383
      %v8559 = vsel %vm2081, %v8385, 0.0
      %v8560 = vadd.f32 %v8558, %v8559
      %8561 = vadd.xlane.f32.xlu0 %v8560
      %v8562 = vpop.xlane.xlu0 %8561
      %v8563 = vadd.f32 %v8387, %v8389
      %v8564 = vsel %vm2081, %v8391, 0.0
      %v8565 = vadd.f32 %v8563, %v8564
      %8566 = vadd.xlane.f32.xlu0 %v8565
      %v8567 = vpop.xlane.xlu0 %8566
      %v8568 = vadd.f32 %v8393, %v8395
      %v8569 = vsel %vm2081, %v8397, 0.0
      %v8570 = vadd.f32 %v8568, %v8569
      %8571 = vadd.xlane.f32.xlu0 %v8570
      %v8572 = vpop.xlane.xlu0 %8571
      %v8573 = vadd.f32 %v8399, %v8401
      %v8574 = vsel %vm2081, %v8403, 0.0
      %v8575 = vadd.f32 %v8573, %v8574
      %8576 = vadd.xlane.f32.xlu0 %v8575
      %v8577 = vpop.xlane.xlu0 %8576
      %v8578 = vadd.f32 %v8405, %v8407
      %v8579 = vsel %vm2081, %v8409, 0.0
      %v8580 = vadd.f32 %v8578, %v8579
      %8581 = vadd.xlane.f32.xlu0 %v8580
      %v8582 = vpop.xlane.xlu0 %8581
      %v8583 = vadd.f32 %v8411, %v8413
      %v8584 = vsel %vm2081, %v8415, 0.0
      %v8585 = vadd.f32 %v8583, %v8584
      %8586 = vadd.xlane.f32.xlu0 %v8585
      %v8587 = vpop.xlane.xlu0 %8586
      %v8588 = vadd.f32 %v8417, %v8419
      %v8589 = vsel %vm2081, %v8421, 0.0
      %v8590 = vadd.f32 %v8588, %v8589
      %8591 = vadd.xlane.f32.xlu0 %v8590
      %v8592 = vpop.xlane.xlu0 %8591
      %v8593 = vadd.f32 %v8423, %v8425
      %v8594 = vsel %vm2081, %v8427, 0.0
      %v8595 = vadd.f32 %v8593, %v8594
      %8596 = vadd.xlane.f32.xlu0 %v8595
      %v8597 = vpop.xlane.xlu0 %8596
      %v8598 = vadd.f32 %v8429, %v8431
      %v8599 = vsel %vm2081, %v8433, 0.0
      %v8600 = vadd.f32 %v8598, %v8599
      %8601 = vadd.xlane.f32.xlu0 %v8600
      %v8602 = vpop.xlane.xlu0 %8601
      %v8603 = vadd.f32 %v8435, %v8437
      %v8604 = vsel %vm2081, %v8439, 0.0
      %v8605 = vadd.f32 %v8603, %v8604
      %8606 = vadd.xlane.f32.xlu0 %v8605
      %v8607 = vpop.xlane.xlu0 %8606
      %v8608 = vadd.f32 %v8441, %v8443
      %v8609 = vsel %vm2081, %v8445, 0.0
      %v8610 = vadd.f32 %v8608, %v8609
      %8611 = vadd.xlane.f32.xlu0 %v8610
      %v8612 = vpop.xlane.xlu0 %8611
      %v8613 = vadd.f32 %v8447, %v8449
      %v8614 = vsel %vm2081, %v8451, 0.0
      %v8615 = vadd.f32 %v8613, %v8614
      %8616 = vadd.xlane.f32.xlu0 %v8615
      %v8617 = vpop.xlane.xlu0 %8616
      %v8618 = vadd.f32 %v8453, %v8455
      %v8619 = vsel %vm2081, %v8457, 0.0
      %v8620 = vadd.f32 %v8618, %v8619
      %8621 = vadd.xlane.f32.xlu0 %v8620
      %v8622 = vpop.xlane.xlu0 %8621
      %v8623 = vrcp.pop %v8462
      %v8624 = vrcp.pop %v8467
      %v8625 = vrcp.pop %v8472
      %v8626 = vrcp.pop %v8477
      %v8627 = vrcp.pop %v8482
      %v8628 = vrcp.pop %v8487
      %v8629 = vrcp.pop %v8492
      %v8630 = vrcp.pop %v8497
      %v8631 = vrcp.pop %v8502
      %v8632 = vrcp.pop %v8507
      %v8633 = vrcp.pop %v8512
      %v8634 = vrcp.pop %v8517
      %v8635 = vrcp.pop %v8522
      %v8636 = vrcp.pop %v8527
      %v8637 = vrcp.pop %v8532
      %v8638 = vrcp.pop %v8537
      %v8639 = vrcp.pop %v8542
      %v8640 = vrcp.pop %v8547
      %v8641 = vrcp.pop %v8552
      %v8642 = vrcp.pop %v8557
      %v8643 = vrcp.pop %v8562
      %v8644 = vrcp.pop %v8567
      %v8645 = vrcp.pop %v8572
      %v8646 = vrcp.pop %v8577
      %v8647 = vrcp.pop %v8582
      %v8648 = vrcp.pop %v8587
      %v8649 = vrcp.pop %v8592
      %v8650 = vrcp.pop %v8597
      %v8651 = vrcp.pop %v8602
      %v8652 = vrcp.pop %v8607
      %v8653 = vrcp.pop %v8612
      %v8654 = vrcp.pop %v8617
      %v8655 = vrcp.pop %v8622
      %v8656 = vmul.f32 %v8261, %v8623
      %v8657 = vmul.f32 %v8263, %v8623
      %v8658 = vmul.f32 %v8265, %v8623
      %v8659 = vmul.f32 %v8267, %v8624
      %v8660 = vmul.f32 %v8269, %v8624
      %v8661 = vmul.f32 %v8271, %v8624
      %v8662 = vmul.f32 %v8273, %v8625
      %v8663 = vmul.f32 %v8275, %v8625
      %v8664 = vmul.f32 %v8277, %v8625
      %v8665 = vmul.f32 %v8279, %v8626
      %v8666 = vmul.f32 %v8281, %v8626
      %v8667 = vmul.f32 %v8283, %v8626
      %v8668 = vmul.f32 %v8285, %v8627
      %v8669 = vmul.f32 %v8287, %v8627
      %v8670 = vmul.f32 %v8289, %v8627
      %v8671 = vmul.f32 %v8291, %v8628
      %v8672 = vmul.f32 %v8293, %v8628
      %v8673 = vmul.f32 %v8295, %v8628
      %v8674 = vmul.f32 %v8297, %v8629
      %v8675 = vmul.f32 %v8299, %v8629
      %v8676 = vmul.f32 %v8301, %v8629
      %v8677 = vmul.f32 %v8303, %v8630
      %v8678 = vmul.f32 %v8305, %v8630
      %v8679 = vmul.f32 %v8307, %v8630
      %v8680 = vmul.f32 %v8309, %v8631
      %v8681 = vmul.f32 %v8311, %v8631
      %v8682 = vmul.f32 %v8313, %v8631
      %v8683 = vmul.f32 %v8315, %v8632
      %v8684 = vmul.f32 %v8317, %v8632
      %v8685 = vmul.f32 %v8319, %v8632
      %v8686 = vmul.f32 %v8321, %v8633
      %v8687 = vmul.f32 %v8323, %v8633
      %v8688 = vmul.f32 %v8325, %v8633
      %v8689 = vmul.f32 %v8327, %v8634
      %v8690 = vmul.f32 %v8329, %v8634
      %v8691 = vmul.f32 %v8331, %v8634
      %v8692 = vmul.f32 %v8333, %v8635
      %v8693 = vmul.f32 %v8335, %v8635
      %v8694 = vmul.f32 %v8337, %v8635
      %v8695 = vmul.f32 %v8339, %v8636
      %v8696 = vmul.f32 %v8341, %v8636
      %v8697 = vmul.f32 %v8343, %v8636
      %v8698 = vmul.f32 %v8345, %v8637
      %v8699 = vmul.f32 %v8347, %v8637
      %v8700 = vmul.f32 %v8349, %v8637
      %v8701 = vmul.f32 %v8351, %v8638
      %v8702 = vmul.f32 %v8353, %v8638
      %v8703 = vmul.f32 %v8355, %v8638
      %v8704 = vmul.f32 %v8357, %v8639
      %v8705 = vmul.f32 %v8359, %v8639
      %v8706 = vmul.f32 %v8361, %v8639
      %v8707 = vmul.f32 %v8363, %v8640
      %v8708 = vmul.f32 %v8365, %v8640
      %v8709 = vmul.f32 %v8367, %v8640
      %v8710 = vmul.f32 %v8369, %v8641
      %v8711 = vmul.f32 %v8371, %v8641
      %v8712 = vmul.f32 %v8373, %v8641
      %v8713 = vmul.f32 %v8375, %v8642
      %v8714 = vmul.f32 %v8377, %v8642
      %v8715 = vmul.f32 %v8379, %v8642
      %v8716 = vmul.f32 %v8381, %v8643
      %v8717 = vmul.f32 %v8383, %v8643
      %v8718 = vmul.f32 %v8385, %v8643
      %v8719 = vmul.f32 %v8387, %v8644
      %v8720 = vmul.f32 %v8389, %v8644
      %v8721 = vmul.f32 %v8391, %v8644
      %v8722 = vmul.f32 %v8393, %v8645
      %v8723 = vmul.f32 %v8395, %v8645
      %v8724 = vmul.f32 %v8397, %v8645
      %v8725 = vmul.f32 %v8399, %v8646
      %v8726 = vmul.f32 %v8401, %v8646
      %v8727 = vmul.f32 %v8403, %v8646
      %v8728 = vmul.f32 %v8405, %v8647
      %v8729 = vmul.f32 %v8407, %v8647
      %v8730 = vmul.f32 %v8409, %v8647
      %v8731 = vmul.f32 %v8411, %v8648
      %v8732 = vmul.f32 %v8413, %v8648
      %v8733 = vmul.f32 %v8415, %v8648
      %v8734 = vmul.f32 %v8417, %v8649
      %v8735 = vmul.f32 %v8419, %v8649
      %v8736 = vmul.f32 %v8421, %v8649
      %v8737 = vmul.f32 %v8423, %v8650
      %v8738 = vmul.f32 %v8425, %v8650
      %v8739 = vmul.f32 %v8427, %v8650
      %v8740 = vmul.f32 %v8429, %v8651
      %v8741 = vmul.f32 %v8431, %v8651
      %v8742 = vmul.f32 %v8433, %v8651
      %v8743 = vmul.f32 %v8435, %v8652
      %v8744 = vmul.f32 %v8437, %v8652
      %v8745 = vmul.f32 %v8439, %v8652
      %v8746 = vmul.f32 %v8441, %v8653
      %v8747 = vmul.f32 %v8443, %v8653
      %v8748 = vmul.f32 %v8445, %v8653
      %v8749 = vmul.f32 %v8447, %v8654
      %v8750 = vmul.f32 %v8449, %v8654
      %v8751 = vmul.f32 %v8451, %v8654
      %v8752 = vmul.f32 %v8453, %v8655
      %v8753 = vmul.f32 %v8455, %v8655
      %v8754 = vmul.f32 %v8457, %v8655
      %v8755 = vpack.c.bf16 %v8659, %v8656
      %v8756 = vpack.c.bf16 %v8660, %v8657
      %v8757 = vpack.c.bf16 %v8661, %v8658
      %v8758 = vpack.c.bf16 %v8665, %v8662
      %v8759 = vpack.c.bf16 %v8666, %v8663
      %v8760 = vpack.c.bf16 %v8667, %v8664
      %v8761 = vpack.c.bf16 %v8671, %v8668
      %v8762 = vpack.c.bf16 %v8672, %v8669
      %v8763 = vpack.c.bf16 %v8673, %v8670
      %v8764 = vpack.c.bf16 %v8677, %v8674
      %v8765 = vpack.c.bf16 %v8678, %v8675
      %v8766 = vpack.c.bf16 %v8679, %v8676
      %v8767 = vpack.c.bf16 %v8683, %v8680
      %v8768 = vpack.c.bf16 %v8684, %v8681
      %v8769 = vpack.c.bf16 %v8685, %v8682
      %v8770 = vpack.c.bf16 %v8689, %v8686
      %v8771 = vpack.c.bf16 %v8690, %v8687
      %v8772 = vpack.c.bf16 %v8691, %v8688
      %v8773 = vpack.c.bf16 %v8695, %v8692
      %v8774 = vpack.c.bf16 %v8696, %v8693
      %v8775 = vpack.c.bf16 %v8697, %v8694
      %v8776 = vpack.c.bf16 %v8701, %v8698
      %v8777 = vpack.c.bf16 %v8702, %v8699
      %v8778 = vpack.c.bf16 %v8703, %v8700
      %v8779 = vpack.c.bf16 %v8707, %v8704
      %v8780 = vpack.c.bf16 %v8708, %v8705
      %v8781 = vpack.c.bf16 %v8709, %v8706
      %v8782 = vpack.c.bf16 %v8713, %v8710
      %v8783 = vpack.c.bf16 %v8714, %v8711
      %v8784 = vpack.c.bf16 %v8715, %v8712
      %v8785 = vpack.c.bf16 %v8719, %v8716
      %v8786 = vpack.c.bf16 %v8720, %v8717
      %v8787 = vpack.c.bf16 %v8721, %v8718
      %v8788 = vpack.c.bf16 %v8725, %v8722
      %v8789 = vpack.c.bf16 %v8726, %v8723
      %v8790 = vpack.c.bf16 %v8727, %v8724
      %v8791 = vpack.c.bf16 %v8731, %v8728
      %v8792 = vpack.c.bf16 %v8732, %v8729
      %v8793 = vpack.c.bf16 %v8733, %v8730
      %v8794 = vpack.c.bf16 %v8737, %v8734
      %v8795 = vpack.c.bf16 %v8738, %v8735
      %v8796 = vpack.c.bf16 %v8739, %v8736
      %v8797 = vpack.c.bf16 %v8743, %v8740
      %v8798 = vpack.c.bf16 %v8744, %v8741
      %v8799 = vpack.c.bf16 %v8745, %v8742
      %v8800 = vpack.c.bf16 %v8749, %v8746
      %v8801 = vpack.c.bf16 %v8750, %v8747
      %v8802 = vpack.c.bf16 %v8751, %v8748
      %v8803 = vpack.c.bf16 %v8752, %v8752
      %v8804 = vpack.c.bf16 %v8753, %v8753
      %v8805 = vpack.c.bf16 %v8754, %v8754
      %v8807 = vsel %vm2081, %v8757, 0
      %v8810 = vsel %vm2081, %v8760, 0
      %v8813 = vsel %vm2081, %v8763, 0
      %v8816 = vsel %vm2081, %v8766, 0
      %v8819 = vsel %vm2081, %v8769, 0
      %v8822 = vsel %vm2081, %v8772, 0
      %v8825 = vsel %vm2081, %v8775, 0
      %v8828 = vsel %vm2081, %v8778, 0
      %v8831 = vsel %vm2081, %v8781, 0
      %v8834 = vsel %vm2081, %v8784, 0
      %v8837 = vsel %vm2081, %v8787, 0
      %v8840 = vsel %vm2081, %v8790, 0
      %v8843 = vsel %vm2081, %v8793, 0
      %v8846 = vsel %vm2081, %v8796, 0
      %v8849 = vsel %vm2081, %v8799, 0
      %v8852 = vsel %vm2081, %v8802, 0
      %v8855 = vsel %vm2081, %v8805, 0
      %v8858 = vsel %vm2942, %v7665, 0
      %8860 = vmatpush.bf16.msra.mxu0 %v7656
      %8861 = vmatpush.bf16.msra.mxu0 %v7655
      %8862 = vmatpush.bf16.msra.mxu0 %v7654
      %8863 = vmatpush.bf16.msra.mxu0 %v7653
      %8864 = vmatpush.bf16.msra.mxu0 %v7652
      %8865 = vmatpush.bf16.msra.mxu0 %v7651
      %8866 = vmatpush.bf16.msra.mxu0 %v7650
      %8867 = vmatpush.bf16.msra.mxu0 %v7649
      %8868 = vmatmul.bf16.gmra.mxu0 %v8755
      %v8869 = vpop.f32.mrf.mxu0
      %v8870 = vadd.f32 0.0, %v8869
      %v8871 = vpop.f32.mrf.mxu0
      %v8872 = vadd.f32 0.0, %v8871
      %8873 = vmatmul.bf16.gmra.mxu0 %v8758
      %v8874 = vpop.f32.mrf.mxu0
      %v8875 = vadd.f32 0.0, %v8874
      %v8876 = vpop.f32.mrf.mxu0
      %v8877 = vadd.f32 0.0, %v8876
      %8878 = vmatmul.bf16.gmra.mxu0 %v8761
      %v8879 = vpop.f32.mrf.mxu0
      %v8880 = vadd.f32 0.0, %v8879
      %v8881 = vpop.f32.mrf.mxu0
      %v8882 = vadd.f32 0.0, %v8881
      %8883 = vmatmul.bf16.gmra.mxu0 %v8764
      %v8884 = vpop.f32.mrf.mxu0
      %v8885 = vadd.f32 0.0, %v8884
      %v8886 = vpop.f32.mrf.mxu0
      %v8887 = vadd.f32 0.0, %v8886
      %8888 = vmatmul.bf16.gmra.mxu0 %v8767
      %v8889 = vpop.f32.mrf.mxu0
      %v8890 = vadd.f32 0.0, %v8889
      %v8891 = vpop.f32.mrf.mxu0
      %v8892 = vadd.f32 0.0, %v8891
      %8893 = vmatmul.bf16.gmra.mxu0 %v8770
      %v8894 = vpop.f32.mrf.mxu0
      %v8895 = vadd.f32 0.0, %v8894
      %v8896 = vpop.f32.mrf.mxu0
      %v8897 = vadd.f32 0.0, %v8896
      %8898 = vmatmul.bf16.gmra.mxu0 %v8773
      %v8899 = vpop.f32.mrf.mxu0
      %v8900 = vadd.f32 0.0, %v8899
      %v8901 = vpop.f32.mrf.mxu0
      %v8902 = vadd.f32 0.0, %v8901
      %8903 = vmatmul.bf16.gmra.mxu0 %v8776
      %v8904 = vpop.f32.mrf.mxu0
      %v8905 = vadd.f32 0.0, %v8904
      %v8906 = vpop.f32.mrf.mxu0
      %v8907 = vadd.f32 0.0, %v8906
      %8908 = vmatmul.bf16.gmra.mxu0 %v8779
      %v8909 = vpop.f32.mrf.mxu0
      %v8910 = vadd.f32 0.0, %v8909
      %v8911 = vpop.f32.mrf.mxu0
      %v8912 = vadd.f32 0.0, %v8911
      %8913 = vmatmul.bf16.gmra.mxu0 %v8782
      %v8914 = vpop.f32.mrf.mxu0
      %v8915 = vadd.f32 0.0, %v8914
      %v8916 = vpop.f32.mrf.mxu0
      %v8917 = vadd.f32 0.0, %v8916
      %8918 = vmatmul.bf16.gmra.mxu0 %v8785
      %v8919 = vpop.f32.mrf.mxu0
      %v8920 = vadd.f32 0.0, %v8919
      %v8921 = vpop.f32.mrf.mxu0
      %v8922 = vadd.f32 0.0, %v8921
      %8923 = vmatmul.bf16.gmra.mxu0 %v8788
      %v8924 = vpop.f32.mrf.mxu0
      %v8925 = vadd.f32 0.0, %v8924
      %v8926 = vpop.f32.mrf.mxu0
      %v8927 = vadd.f32 0.0, %v8926
      %8928 = vmatmul.bf16.gmra.mxu0 %v8791
      %v8929 = vpop.f32.mrf.mxu0
      %v8930 = vadd.f32 0.0, %v8929
      %v8931 = vpop.f32.mrf.mxu0
      %v8932 = vadd.f32 0.0, %v8931
      %8933 = vmatmul.bf16.gmra.mxu0 %v8794
      %v8934 = vpop.f32.mrf.mxu0
      %v8935 = vadd.f32 0.0, %v8934
      %v8936 = vpop.f32.mrf.mxu0
      %v8937 = vadd.f32 0.0, %v8936
      %8938 = vmatmul.bf16.gmra.mxu0 %v8797
      %v8939 = vpop.f32.mrf.mxu0
      %v8940 = vadd.f32 0.0, %v8939
      %v8941 = vpop.f32.mrf.mxu0
      %v8942 = vadd.f32 0.0, %v8941
      %8943 = vmatmul.bf16.gmra.mxu0 %v8800
      %v8944 = vpop.f32.mrf.mxu0
      %v8945 = vadd.f32 0.0, %v8944
      %v8946 = vpop.f32.mrf.mxu0
      %v8947 = vadd.f32 0.0, %v8946
      %8948 = vmatmul.bf16.gmra.mxu0 %v8803
      %v8949 = vpop.f32.mrf.mxu0
      %v8950 = vadd.f32 0.0, %v8949
      %v8951 = vpop.f32.mrf.mxu0
      %8952 = vdwg.mxu0
      %8953 = vmatpush.bf16.msra.mxu0 %v7664
      %8954 = vmatpush.bf16.msra.mxu0 %v7663
      %8955 = vmatpush.bf16.msra.mxu0 %v7662
      %8956 = vmatpush.bf16.msra.mxu0 %v7661
      %8957 = vmatpush.bf16.msra.mxu0 %v7660
      %8958 = vmatpush.bf16.msra.mxu0 %v7659
      %8959 = vmatpush.bf16.msra.mxu0 %v7658
      %8960 = vmatpush.bf16.msra.mxu0 %v7657
      %8961 = vmatmul.bf16.gmra.mxu0 %v8756
      %v8962 = vpop.f32.mrf.mxu0
      %v8963 = vadd.f32 %v8870, %v8962
      %v8964 = vpop.f32.mrf.mxu0
      %v8965 = vadd.f32 %v8872, %v8964
      %8966 = vmatmul.bf16.gmra.mxu0 %v8759
      %v8967 = vpop.f32.mrf.mxu0
      %v8968 = vadd.f32 %v8875, %v8967
      %v8969 = vpop.f32.mrf.mxu0
      %v8970 = vadd.f32 %v8877, %v8969
      %8971 = vmatmul.bf16.gmra.mxu0 %v8762
      %v8972 = vpop.f32.mrf.mxu0
      %v8973 = vadd.f32 %v8880, %v8972
      %v8974 = vpop.f32.mrf.mxu0
      %v8975 = vadd.f32 %v8882, %v8974
      %8976 = vmatmul.bf16.gmra.mxu0 %v8765
      %v8977 = vpop.f32.mrf.mxu0
      %v8978 = vadd.f32 %v8885, %v8977
      %v8979 = vpop.f32.mrf.mxu0
      %v8980 = vadd.f32 %v8887, %v8979
      %8981 = vmatmul.bf16.gmra.mxu0 %v8768
      %v8982 = vpop.f32.mrf.mxu0
      %v8983 = vadd.f32 %v8890, %v8982
      %v8984 = vpop.f32.mrf.mxu0
      %v8985 = vadd.f32 %v8892, %v8984
      %8986 = vmatmul.bf16.gmra.mxu0 %v8771
      %v8987 = vpop.f32.mrf.mxu0
      %v8988 = vadd.f32 %v8895, %v8987
      %v8989 = vpop.f32.mrf.mxu0
      %v8990 = vadd.f32 %v8897, %v8989
      %8991 = vmatmul.bf16.gmra.mxu0 %v8774
      %v8992 = vpop.f32.mrf.mxu0
      %v8993 = vadd.f32 %v8900, %v8992
      %v8994 = vpop.f32.mrf.mxu0
      %v8995 = vadd.f32 %v8902, %v8994
      %8996 = vmatmul.bf16.gmra.mxu0 %v8777
      %v8997 = vpop.f32.mrf.mxu0
      %v8998 = vadd.f32 %v8905, %v8997
      %v8999 = vpop.f32.mrf.mxu0
      %v9000 = vadd.f32 %v8907, %v8999
      %9001 = vmatmul.bf16.gmra.mxu0 %v8780
      %v9002 = vpop.f32.mrf.mxu0
      %v9003 = vadd.f32 %v8910, %v9002
      %v9004 = vpop.f32.mrf.mxu0
      %v9005 = vadd.f32 %v8912, %v9004
      %9006 = vmatmul.bf16.gmra.mxu0 %v8783
      %v9007 = vpop.f32.mrf.mxu0
      %v9008 = vadd.f32 %v8915, %v9007
      %v9009 = vpop.f32.mrf.mxu0
      %v9010 = vadd.f32 %v8917, %v9009
      %9011 = vmatmul.bf16.gmra.mxu0 %v8786
      %v9012 = vpop.f32.mrf.mxu0
      %v9013 = vadd.f32 %v8920, %v9012
      %v9014 = vpop.f32.mrf.mxu0
      %v9015 = vadd.f32 %v8922, %v9014
      %9016 = vmatmul.bf16.gmra.mxu0 %v8789
      %v9017 = vpop.f32.mrf.mxu0
      %v9018 = vadd.f32 %v8925, %v9017
      %v9019 = vpop.f32.mrf.mxu0
      %v9020 = vadd.f32 %v8927, %v9019
      %9021 = vmatmul.bf16.gmra.mxu0 %v8792
      %v9022 = vpop.f32.mrf.mxu0
      %v9023 = vadd.f32 %v8930, %v9022
      %v9024 = vpop.f32.mrf.mxu0
      %v9025 = vadd.f32 %v8932, %v9024
      %9026 = vmatmul.bf16.gmra.mxu0 %v8795
      %v9027 = vpop.f32.mrf.mxu0
      %v9028 = vadd.f32 %v8935, %v9027
      %v9029 = vpop.f32.mrf.mxu0
      %v9030 = vadd.f32 %v8937, %v9029
      %9031 = vmatmul.bf16.gmra.mxu0 %v8798
      %v9032 = vpop.f32.mrf.mxu0
      %v9033 = vadd.f32 %v8940, %v9032
      %v9034 = vpop.f32.mrf.mxu0
      %v9035 = vadd.f32 %v8942, %v9034
      %9036 = vmatmul.bf16.gmra.mxu0 %v8801
      %v9037 = vpop.f32.mrf.mxu0
      %v9038 = vadd.f32 %v8945, %v9037
      %v9039 = vpop.f32.mrf.mxu0
      %v9040 = vadd.f32 %v8947, %v9039
      %9041 = vmatmul.bf16.gmra.mxu0 %v8804
      %v9042 = vpop.f32.mrf.mxu0
      %v9043 = vadd.f32 %v8950, %v9042
      %v9044 = vpop.f32.mrf.mxu0
      %9045 = vdwg.mxu0
      %9046 = vmatpush.bf16.msra.mxu0 0
      %9047 = vmatpush.bf16.msra.mxu0 0
      %9048 = vmatpush.bf16.msra.mxu0 0
      %9049 = vmatpush.bf16.msra.mxu0 0
      %9050 = vmatpush.bf16.msra.mxu0 0
      %9051 = vmatpush.bf16.msra.mxu0 0
      %9052 = vmatpush.bf16.msra.mxu0 0
      %9053 = vmatpush.bf16.msra.mxu0 %v8858
      %9054 = vmatmul.bf16.gmra.mxu0 %v8807
      %v9055 = vpop.f32.mrf.mxu0
      %v9056 = vadd.f32 %v8963, %v9055
      %v9057 = vpop.f32.mrf.mxu0
      %v9058 = vadd.f32 %v8965, %v9057
      %9059 = vmatmul.bf16.gmra.mxu0 %v8810
      %v9060 = vpop.f32.mrf.mxu0
      %v9061 = vadd.f32 %v8968, %v9060
      %v9062 = vpop.f32.mrf.mxu0
      %v9063 = vadd.f32 %v8970, %v9062
      %9064 = vmatmul.bf16.gmra.mxu0 %v8813
      %v9065 = vpop.f32.mrf.mxu0
      %v9066 = vadd.f32 %v8973, %v9065
      %v9067 = vpop.f32.mrf.mxu0
      %v9068 = vadd.f32 %v8975, %v9067
      %9069 = vmatmul.bf16.gmra.mxu0 %v8816
      %v9070 = vpop.f32.mrf.mxu0
      %v9071 = vadd.f32 %v8978, %v9070
      %v9072 = vpop.f32.mrf.mxu0
      %v9073 = vadd.f32 %v8980, %v9072
      %9074 = vmatmul.bf16.gmra.mxu0 %v8819
      %v9075 = vpop.f32.mrf.mxu0
      %v9076 = vadd.f32 %v8983, %v9075
      %v9077 = vpop.f32.mrf.mxu0
      %v9078 = vadd.f32 %v8985, %v9077
      %9079 = vmatmul.bf16.gmra.mxu0 %v8822
      %v9080 = vpop.f32.mrf.mxu0
      %v9081 = vadd.f32 %v8988, %v9080
      %v9082 = vpop.f32.mrf.mxu0
      %v9083 = vadd.f32 %v8990, %v9082
      %9084 = vmatmul.bf16.gmra.mxu0 %v8825
      %v9085 = vpop.f32.mrf.mxu0
      %v9086 = vadd.f32 %v8993, %v9085
      %v9087 = vpop.f32.mrf.mxu0
      %v9088 = vadd.f32 %v8995, %v9087
      %9089 = vmatmul.bf16.gmra.mxu0 %v8828
      %v9090 = vpop.f32.mrf.mxu0
      %v9091 = vadd.f32 %v8998, %v9090
      %v9092 = vpop.f32.mrf.mxu0
      %v9093 = vadd.f32 %v9000, %v9092
      %9094 = vmatmul.bf16.gmra.mxu0 %v8831
      %v9095 = vpop.f32.mrf.mxu0
      %v9096 = vadd.f32 %v9003, %v9095
      %v9097 = vpop.f32.mrf.mxu0
      %v9098 = vadd.f32 %v9005, %v9097
      %9099 = vmatmul.bf16.gmra.mxu0 %v8834
      %v9100 = vpop.f32.mrf.mxu0
      %v9101 = vadd.f32 %v9008, %v9100
      %v9102 = vpop.f32.mrf.mxu0
      %v9103 = vadd.f32 %v9010, %v9102
      %9104 = vmatmul.bf16.gmra.mxu0 %v8837
      %v9105 = vpop.f32.mrf.mxu0
      %v9106 = vadd.f32 %v9013, %v9105
      %v9107 = vpop.f32.mrf.mxu0
      %v9108 = vadd.f32 %v9015, %v9107
      %9109 = vmatmul.bf16.gmra.mxu0 %v8840
      %v9110 = vpop.f32.mrf.mxu0
      %v9111 = vadd.f32 %v9018, %v9110
      %v9112 = vpop.f32.mrf.mxu0
      %v9113 = vadd.f32 %v9020, %v9112
      %9114 = vmatmul.bf16.gmra.mxu0 %v8843
      %v9115 = vpop.f32.mrf.mxu0
      %v9116 = vadd.f32 %v9023, %v9115
      %v9117 = vpop.f32.mrf.mxu0
      %v9118 = vadd.f32 %v9025, %v9117
      %9119 = vmatmul.bf16.gmra.mxu0 %v8846
      %v9120 = vpop.f32.mrf.mxu0
      %v9121 = vadd.f32 %v9028, %v9120
      %v9122 = vpop.f32.mrf.mxu0
      %v9123 = vadd.f32 %v9030, %v9122
      %9124 = vmatmul.bf16.gmra.mxu0 %v8849
      %v9125 = vpop.f32.mrf.mxu0
      %v9126 = vadd.f32 %v9033, %v9125
      %v9127 = vpop.f32.mrf.mxu0
      %v9128 = vadd.f32 %v9035, %v9127
      %9129 = vmatmul.bf16.gmra.mxu0 %v8852
      %v9130 = vpop.f32.mrf.mxu0
      %v9131 = vadd.f32 %v9038, %v9130
      %v9132 = vpop.f32.mrf.mxu0
      %v9133 = vadd.f32 %v9040, %v9132
      %9134 = vmatmul.bf16.gmra.mxu0 %v8855
      %v9135 = vpop.f32.mrf.mxu0
      %v9136 = vadd.f32 %v9043, %v9135
      %v9137 = vpop.f32.mrf.mxu0
      %9138 = vdwg.mxu0
      %v9139 = vpack.c.bf16 %v9058, %v9056
      %v9140 = vpack.c.bf16 %v9063, %v9061
      %v9141 = vpack.c.bf16 %v9068, %v9066
      %v9142 = vpack.c.bf16 %v9073, %v9071
      %v9143 = vpack.c.bf16 %v9078, %v9076
      %v9144 = vpack.c.bf16 %v9083, %v9081
      %v9145 = vpack.c.bf16 %v9088, %v9086
      %v9146 = vpack.c.bf16 %v9093, %v9091
      %v9147 = vpack.c.bf16 %v9098, %v9096
      %v9148 = vpack.c.bf16 %v9103, %v9101
      %v9149 = vpack.c.bf16 %v9108, %v9106
      %v9150 = vpack.c.bf16 %v9113, %v9111
      %v9151 = vpack.c.bf16 %v9118, %v9116
      %v9152 = vpack.c.bf16 %v9123, %v9121
      %v9153 = vpack.c.bf16 %v9128, %v9126
      %v9154 = vpack.c.bf16 %v9133, %v9131
      %v9155 = vpack.c.bf16 %v9136, %v9136
      %s9156 = scalar_lea.vmem %s6, 24
      %v9157 = vld [vmem:[%s9156] sm:$0xf]
      %v9158 = vld [vmem:[%s9156 + $0x4] sm:$0xf]
      %v9161 = vunpack.c.l.b16 %v9157
      %v9162 = vunpack.c.l.b16 %v9158
      %v9163 = vpack.c.b16 %v9162, %v9161
      %v9166 = vsel %vm1749, %v9139, 0
      %v9169 = vsel %vm1749, %v9140, 0
      %v9172 = vsel %vm1749, %v9141, 0
      %v9175 = vsel %vm1749, %v9142, 0
      %v9178 = vsel %vm1749, %v9143, 0
      %v9181 = vsel %vm1749, %v9144, 0
      %v9184 = vsel %vm1749, %v9145, 0
      %v9187 = vsel %vm1749, %v9146, 0
      %v9190 = vsel %vm1749, %v9147, 0
      %v9193 = vsel %vm1749, %v9148, 0
      %v9196 = vsel %vm1749, %v9149, 0
      %v9199 = vsel %vm1749, %v9150, 0
      %v9202 = vsel %vm1749, %v9151, 0
      %v9205 = vsel %vm1749, %v9152, 0
      %v9208 = vsel %vm1749, %v9153, 0
      %v9211 = vsel %vm1749, %v9154, 0
      %v9214 = vsel %vm1749, %v9155, 0
      %9216 = vmatpush.bf16.msra.mxu0 0
      %9217 = vmatpush.bf16.msra.mxu0 0
      %9218 = vmatpush.bf16.msra.mxu0 0
      %9219 = vmatpush.bf16.msra.mxu0 0
      %9220 = vmatpush.bf16.msra.mxu0 0
      %9221 = vmatpush.bf16.msra.mxu0 0
      %9222 = vmatpush.bf16.msra.mxu0 0
      %9223 = vmatpush.bf16.msra.mxu0 %v9163
      %9224 = vmatmul.bf16.gmra.mxu0 %v9166
      %v9225 = vpop.f32.mrf.mxu0
      %v9226 = vpop.f32.mrf.mxu0
      %v9227 = vadd.f32 0.0, %v9226
      %9228 = vmatmul.bf16.gmra.mxu0 %v9169
      %v9229 = vpop.f32.mrf.mxu0
      %v9230 = vadd.f32 0.0, %v9229
      %v9231 = vpop.f32.mrf.mxu0
      %v9232 = vadd.f32 0.0, %v9231
      %9233 = vmatmul.bf16.gmra.mxu0 %v9172
      %v9234 = vpop.f32.mrf.mxu0
      %v9235 = vadd.f32 0.0, %v9234
      %v9236 = vpop.f32.mrf.mxu0
      %v9237 = vadd.f32 0.0, %v9236
      %9238 = vmatmul.bf16.gmra.mxu0 %v9175
      %v9239 = vpop.f32.mrf.mxu0
      %v9240 = vadd.f32 0.0, %v9239
      %v9241 = vpop.f32.mrf.mxu0
      %v9242 = vadd.f32 0.0, %v9241
      %9243 = vmatmul.bf16.gmra.mxu0 %v9178
      %v9244 = vpop.f32.mrf.mxu0
      %v9245 = vadd.f32 0.0, %v9244
      %v9246 = vpop.f32.mrf.mxu0
      %v9247 = vadd.f32 0.0, %v9246
      %9248 = vmatmul.bf16.gmra.mxu0 %v9181
      %v9249 = vpop.f32.mrf.mxu0
      %v9250 = vadd.f32 0.0, %v9249
      %v9251 = vpop.f32.mrf.mxu0
      %v9252 = vadd.f32 0.0, %v9251
      %9253 = vmatmul.bf16.gmra.mxu0 %v9184
      %v9254 = vpop.f32.mrf.mxu0
      %v9255 = vadd.f32 0.0, %v9254
      %v9256 = vpop.f32.mrf.mxu0
      %v9257 = vadd.f32 0.0, %v9256
      %9258 = vmatmul.bf16.gmra.mxu0 %v9187
      %v9259 = vpop.f32.mrf.mxu0
      %v9260 = vadd.f32 0.0, %v9259
      %v9261 = vpop.f32.mrf.mxu0
      %v9262 = vadd.f32 0.0, %v9261
      %9263 = vmatmul.bf16.gmra.mxu0 %v9190
      %v9264 = vpop.f32.mrf.mxu0
      %v9265 = vadd.f32 0.0, %v9264
      %v9266 = vpop.f32.mrf.mxu0
      %v9267 = vadd.f32 0.0, %v9266
      %9268 = vmatmul.bf16.gmra.mxu0 %v9193
      %v9269 = vpop.f32.mrf.mxu0
      %v9270 = vadd.f32 0.0, %v9269
      %v9271 = vpop.f32.mrf.mxu0
      %v9272 = vadd.f32 0.0, %v9271
      %9273 = vmatmul.bf16.gmra.mxu0 %v9196
      %v9274 = vpop.f32.mrf.mxu0
      %v9275 = vadd.f32 0.0, %v9274
      %v9276 = vpop.f32.mrf.mxu0
      %v9277 = vadd.f32 0.0, %v9276
      %9278 = vmatmul.bf16.gmra.mxu0 %v9199
      %v9279 = vpop.f32.mrf.mxu0
      %v9280 = vadd.f32 0.0, %v9279
      %v9281 = vpop.f32.mrf.mxu0
      %v9282 = vadd.f32 0.0, %v9281
      %9283 = vmatmul.bf16.gmra.mxu0 %v9202
      %v9284 = vpop.f32.mrf.mxu0
      %v9285 = vadd.f32 0.0, %v9284
      %v9286 = vpop.f32.mrf.mxu0
      %v9287 = vadd.f32 0.0, %v9286
      %9288 = vmatmul.bf16.gmra.mxu0 %v9205
      %v9289 = vpop.f32.mrf.mxu0
      %v9290 = vadd.f32 0.0, %v9289
      %v9291 = vpop.f32.mrf.mxu0
      %v9292 = vadd.f32 0.0, %v9291
      %9293 = vmatmul.bf16.gmra.mxu0 %v9208
      %v9294 = vpop.f32.mrf.mxu0
      %v9295 = vadd.f32 0.0, %v9294
      %v9296 = vpop.f32.mrf.mxu0
      %v9297 = vadd.f32 0.0, %v9296
      %9298 = vmatmul.bf16.gmra.mxu0 %v9211
      %v9299 = vpop.f32.mrf.mxu0
      %v9300 = vadd.f32 0.0, %v9299
      %v9301 = vpop.f32.mrf.mxu0
      %v9302 = vadd.f32 0.0, %v9301
      %9303 = vmatmul.bf16.gmra.mxu0 %v9214
      %v9304 = vpop.f32.mrf.mxu0
      %v9305 = vadd.f32 0.0, %v9304
      %v9306 = vpop.f32.mrf.mxu0
      %9307 = vdwg.mxu0
      %v9308 = vadd.f32 %v7315, %v9227
      %v9309 = vadd.f32 %v7316, %v9230
      %v9310 = vadd.f32 %v7317, %v9232
      %v9311 = vadd.f32 %v7318, %v9235
      %v9312 = vadd.f32 %v7319, %v9237
      %v9313 = vadd.f32 %v7320, %v9240
      %v9314 = vadd.f32 %v7321, %v9242
      %v9315 = vadd.f32 %v7322, %v9245
      %v9316 = vadd.f32 %v7323, %v9247
      %v9317 = vadd.f32 %v7324, %v9250
      %v9318 = vadd.f32 %v7325, %v9252
      %v9319 = vadd.f32 %v7326, %v9255
      %v9320 = vadd.f32 %v7327, %v9257
      %v9321 = vadd.f32 %v7328, %v9260
      %v9322 = vadd.f32 %v7329, %v9262
      %v9323 = vadd.f32 %v7330, %v9265
      %v9324 = vadd.f32 %v7331, %v9267
      %v9325 = vadd.f32 %v7332, %v9270
      %v9326 = vadd.f32 %v7333, %v9272
      %v9327 = vadd.f32 %v7334, %v9275
      %v9328 = vadd.f32 %v7335, %v9277
      %v9329 = vadd.f32 %v7336, %v9280
      %v9330 = vadd.f32 %v7337, %v9282
      %v9331 = vadd.f32 %v7338, %v9285
      %v9332 = vadd.f32 %v7339, %v9287
      %v9333 = vadd.f32 %v7340, %v9290
      %v9334 = vadd.f32 %v7341, %v9292
      %v9335 = vadd.f32 %v7342, %v9295
      %v9336 = vadd.f32 %v7343, %v9297
      %v9337 = vadd.f32 %v7344, %v9300
      %v9338 = vadd.f32 %v7345, %v9302
      %v9339 = vadd.f32 %v7346, %v9305
      %v9340 = vadd.f32 %v524, %v9308
      %v9341 = vadd.f32 %v525, %v9309
      %v9342 = vadd.f32 %v526, %v9310
      %v9343 = vadd.f32 %v527, %v9311
      %v9344 = vadd.f32 %v528, %v9312
      %v9345 = vadd.f32 %v529, %v9313
      %v9346 = vadd.f32 %v530, %v9314
      %v9347 = vadd.f32 %v531, %v9315
      %v9348 = vadd.f32 %v532, %v9316
      %v9349 = vadd.f32 %v533, %v9317
      %v9350 = vadd.f32 %v534, %v9318
      %v9351 = vadd.f32 %v535, %v9319
      %v9352 = vadd.f32 %v536, %v9320
      %v9353 = vadd.f32 %v537, %v9321
      %v9354 = vadd.f32 %v538, %v9322
      %v9355 = vadd.f32 %v539, %v9323
      %v9356 = vadd.f32 %v540, %v9324
      %v9357 = vadd.f32 %v541, %v9325
      %v9358 = vadd.f32 %v542, %v9326
      %v9359 = vadd.f32 %v543, %v9327
      %v9360 = vadd.f32 %v544, %v9328
      %v9361 = vadd.f32 %v545, %v9329
      %v9362 = vadd.f32 %v546, %v9330
      %v9363 = vadd.f32 %v547, %v9331
      %v9364 = vadd.f32 %v548, %v9332
      %v9365 = vadd.f32 %v549, %v9333
      %v9366 = vadd.f32 %v550, %v9334
      %v9367 = vadd.f32 %v551, %v9335
      %v9368 = vadd.f32 %v552, %v9336
      %v9369 = vadd.f32 %v553, %v9337
      %v9370 = vadd.f32 %v554, %v9338
      %v9371 = vadd.f32 %v555, %v9339
      %v9372 = vld [vmem:[%s7] sm:$0x1]
      %v9374 = vperm.slane %v9372, 0
      %v9376 = vadd.f32 %v9340, %v9374
      %v9377 = vadd.f32 %v9341, %v9374
      %v9378 = vadd.f32 %v9342, %v9374
      %v9379 = vadd.f32 %v9343, %v9374
      %v9380 = vadd.f32 %v9344, %v9374
      %v9381 = vadd.f32 %v9345, %v9374
      %v9382 = vadd.f32 %v9346, %v9374
      %v9383 = vadd.f32 %v9347, %v9374
      %v9384 = vadd.f32 %v9348, %v9374
      %v9385 = vadd.f32 %v9349, %v9374
      %v9386 = vadd.f32 %v9350, %v9374
      %v9387 = vadd.f32 %v9351, %v9374
      %v9388 = vadd.f32 %v9352, %v9374
      %v9389 = vadd.f32 %v9353, %v9374
      %v9390 = vadd.f32 %v9354, %v9374
      %v9391 = vadd.f32 %v9355, %v9374
      %v9392 = vadd.f32 %v9356, %v9374
      %v9393 = vadd.f32 %v9357, %v9374
      %v9394 = vadd.f32 %v9358, %v9374
      %v9395 = vadd.f32 %v9359, %v9374
      %v9396 = vadd.f32 %v9360, %v9374
      %v9397 = vadd.f32 %v9361, %v9374
      %v9398 = vadd.f32 %v9362, %v9374
      %v9399 = vadd.f32 %v9363, %v9374
      %v9400 = vadd.f32 %v9364, %v9374
      %v9401 = vadd.f32 %v9365, %v9374
      %v9402 = vadd.f32 %v9366, %v9374
      %v9403 = vadd.f32 %v9367, %v9374
      %v9404 = vadd.f32 %v9368, %v9374
      %v9405 = vadd.f32 %v9369, %v9374
      %v9406 = vadd.f32 %v9370, %v9374
      %v9407 = vadd.f32 %v9371, %v9374
      %v9408 = vld [vmem:[%s8] sm:$0x1]
      %v9409 = vld [vmem:[%s9] sm:$0x1]
      %v9410 = vsel %vm558, %v9376, 0.0
      %9411 = vadd.xlane.f32.xlu0 %v9410
      %v9412 = vpop.xlane.xlu0 %9411
      %v9413 = vsel %vm558, %v9377, 0.0
      %9414 = vadd.xlane.f32.xlu0 %v9413
      %v9415 = vpop.xlane.xlu0 %9414
      %v9416 = vsel %vm558, %v9378, 0.0
      %9417 = vadd.xlane.f32.xlu0 %v9416
      %v9418 = vpop.xlane.xlu0 %9417
      %v9419 = vsel %vm558, %v9379, 0.0
      %9420 = vadd.xlane.f32.xlu0 %v9419
      %v9421 = vpop.xlane.xlu0 %9420
      %v9422 = vsel %vm558, %v9380, 0.0
      %9423 = vadd.xlane.f32.xlu0 %v9422
      %v9424 = vpop.xlane.xlu0 %9423
      %v9425 = vsel %vm558, %v9381, 0.0
      %9426 = vadd.xlane.f32.xlu0 %v9425
      %v9427 = vpop.xlane.xlu0 %9426
      %v9428 = vsel %vm558, %v9382, 0.0
      %9429 = vadd.xlane.f32.xlu0 %v9428
      %v9430 = vpop.xlane.xlu0 %9429
      %v9431 = vsel %vm558, %v9383, 0.0
      %9432 = vadd.xlane.f32.xlu0 %v9431
      %v9433 = vpop.xlane.xlu0 %9432
      %v9434 = vsel %vm558, %v9384, 0.0
      %9435 = vadd.xlane.f32.xlu0 %v9434
      %v9436 = vpop.xlane.xlu0 %9435
      %v9437 = vsel %vm558, %v9385, 0.0
      %9438 = vadd.xlane.f32.xlu0 %v9437
      %v9439 = vpop.xlane.xlu0 %9438
      %v9440 = vsel %vm558, %v9386, 0.0
      %9441 = vadd.xlane.f32.xlu0 %v9440
      %v9442 = vpop.xlane.xlu0 %9441
      %v9443 = vsel %vm558, %v9387, 0.0
      %9444 = vadd.xlane.f32.xlu0 %v9443
      %v9445 = vpop.xlane.xlu0 %9444
      %v9446 = vsel %vm558, %v9388, 0.0
      %9447 = vadd.xlane.f32.xlu0 %v9446
      %v9448 = vpop.xlane.xlu0 %9447
      %v9449 = vsel %vm558, %v9389, 0.0
      %9450 = vadd.xlane.f32.xlu0 %v9449
      %v9451 = vpop.xlane.xlu0 %9450
      %v9452 = vsel %vm558, %v9390, 0.0
      %9453 = vadd.xlane.f32.xlu0 %v9452
      %v9454 = vpop.xlane.xlu0 %9453
      %v9455 = vsel %vm558, %v9391, 0.0
      %9456 = vadd.xlane.f32.xlu0 %v9455
      %v9457 = vpop.xlane.xlu0 %9456
      %v9458 = vsel %vm558, %v9392, 0.0
      %9459 = vadd.xlane.f32.xlu0 %v9458
      %v9460 = vpop.xlane.xlu0 %9459
      %v9461 = vsel %vm558, %v9393, 0.0
      %9462 = vadd.xlane.f32.xlu0 %v9461
      %v9463 = vpop.xlane.xlu0 %9462
      %v9464 = vsel %vm558, %v9394, 0.0
      %9465 = vadd.xlane.f32.xlu0 %v9464
      %v9466 = vpop.xlane.xlu0 %9465
      %v9467 = vsel %vm558, %v9395, 0.0
      %9468 = vadd.xlane.f32.xlu0 %v9467
      %v9469 = vpop.xlane.xlu0 %9468
      %v9470 = vsel %vm558, %v9396, 0.0
      %9471 = vadd.xlane.f32.xlu0 %v9470
      %v9472 = vpop.xlane.xlu0 %9471
      %v9473 = vsel %vm558, %v9397, 0.0
      %9474 = vadd.xlane.f32.xlu0 %v9473
      %v9475 = vpop.xlane.xlu0 %9474
      %v9476 = vsel %vm558, %v9398, 0.0
      %9477 = vadd.xlane.f32.xlu0 %v9476
      %v9478 = vpop.xlane.xlu0 %9477
      %v9479 = vsel %vm558, %v9399, 0.0
      %9480 = vadd.xlane.f32.xlu0 %v9479
      %v9481 = vpop.xlane.xlu0 %9480
      %v9482 = vsel %vm558, %v9400, 0.0
      %9483 = vadd.xlane.f32.xlu0 %v9482
      %v9484 = vpop.xlane.xlu0 %9483
      %v9485 = vsel %vm558, %v9401, 0.0
      %9486 = vadd.xlane.f32.xlu0 %v9485
      %v9487 = vpop.xlane.xlu0 %9486
      %v9488 = vsel %vm558, %v9402, 0.0
      %9489 = vadd.xlane.f32.xlu0 %v9488
      %v9490 = vpop.xlane.xlu0 %9489
      %v9491 = vsel %vm558, %v9403, 0.0
      %9492 = vadd.xlane.f32.xlu0 %v9491
      %v9493 = vpop.xlane.xlu0 %9492
      %v9494 = vsel %vm558, %v9404, 0.0
      %9495 = vadd.xlane.f32.xlu0 %v9494
      %v9496 = vpop.xlane.xlu0 %9495
      %v9497 = vsel %vm558, %v9405, 0.0
      %9498 = vadd.xlane.f32.xlu0 %v9497
      %v9499 = vpop.xlane.xlu0 %9498
      %v9500 = vsel %vm558, %v9406, 0.0
      %9501 = vadd.xlane.f32.xlu0 %v9500
      %v9502 = vpop.xlane.xlu0 %9501
      %v9503 = vsel %vm558, %v9407, 0.0
      %9504 = vadd.xlane.f32.xlu0 %v9503
      %v9505 = vpop.xlane.xlu0 %9504
      %v9506 = vmul.f32 %v9412, %v664
      %v9507 = vmul.f32 %v9415, %v664
      %v9508 = vmul.f32 %v9418, %v664
      %v9509 = vmul.f32 %v9421, %v664
      %v9510 = vmul.f32 %v9424, %v664
      %v9511 = vmul.f32 %v9427, %v664
      %v9512 = vmul.f32 %v9430, %v664
      %v9513 = vmul.f32 %v9433, %v664
      %v9514 = vmul.f32 %v9436, %v664
      %v9515 = vmul.f32 %v9439, %v664
      %v9516 = vmul.f32 %v9442, %v664
      %v9517 = vmul.f32 %v9445, %v664
      %v9518 = vmul.f32 %v9448, %v664
      %v9519 = vmul.f32 %v9451, %v664
      %v9520 = vmul.f32 %v9454, %v664
      %v9521 = vmul.f32 %v9457, %v664
      %v9522 = vmul.f32 %v9460, %v664
      %v9523 = vmul.f32 %v9463, %v664
      %v9524 = vmul.f32 %v9466, %v664
      %v9525 = vmul.f32 %v9469, %v664
      %v9526 = vmul.f32 %v9472, %v664
      %v9527 = vmul.f32 %v9475, %v664
      %v9528 = vmul.f32 %v9478, %v664
      %v9529 = vmul.f32 %v9481, %v664
      %v9530 = vmul.f32 %v9484, %v664
      %v9531 = vmul.f32 %v9487, %v664
      %v9532 = vmul.f32 %v9490, %v664
      %v9533 = vmul.f32 %v9493, %v664
      %v9534 = vmul.f32 %v9496, %v664
      %v9535 = vmul.f32 %v9499, %v664
      %v9536 = vmul.f32 %v9502, %v664
      %v9537 = vmul.f32 %v9505, %v664
      %v9538 = vsub.f32 %v9376, %v9506
      %v9539 = vsub.f32 %v9377, %v9507
      %v9540 = vsub.f32 %v9378, %v9508
      %v9541 = vsub.f32 %v9379, %v9509
      %v9542 = vsub.f32 %v9380, %v9510
      %v9543 = vsub.f32 %v9381, %v9511
      %v9544 = vsub.f32 %v9382, %v9512
      %v9545 = vsub.f32 %v9383, %v9513
      %v9546 = vsub.f32 %v9384, %v9514
      %v9547 = vsub.f32 %v9385, %v9515
      %v9548 = vsub.f32 %v9386, %v9516
      %v9549 = vsub.f32 %v9387, %v9517
      %v9550 = vsub.f32 %v9388, %v9518
      %v9551 = vsub.f32 %v9389, %v9519
      %v9552 = vsub.f32 %v9390, %v9520
      %v9553 = vsub.f32 %v9391, %v9521
      %v9554 = vsub.f32 %v9392, %v9522
      %v9555 = vsub.f32 %v9393, %v9523
      %v9556 = vsub.f32 %v9394, %v9524
      %v9557 = vsub.f32 %v9395, %v9525
      %v9558 = vsub.f32 %v9396, %v9526
      %v9559 = vsub.f32 %v9397, %v9527
      %v9560 = vsub.f32 %v9398, %v9528
      %v9561 = vsub.f32 %v9399, %v9529
      %v9562 = vsub.f32 %v9400, %v9530
      %v9563 = vsub.f32 %v9401, %v9531
      %v9564 = vsub.f32 %v9402, %v9532
      %v9565 = vsub.f32 %v9403, %v9533
      %v9566 = vsub.f32 %v9404, %v9534
      %v9567 = vsub.f32 %v9405, %v9535
      %v9568 = vsub.f32 %v9406, %v9536
      %v9569 = vsub.f32 %v9407, %v9537
      %v9570 = vmul.f32 %v9538, %v9538
      %v9571 = vmul.f32 %v9539, %v9539
      %v9572 = vmul.f32 %v9540, %v9540
      %v9573 = vmul.f32 %v9541, %v9541
      %v9574 = vmul.f32 %v9542, %v9542
      %v9575 = vmul.f32 %v9543, %v9543
      %v9576 = vmul.f32 %v9544, %v9544
      %v9577 = vmul.f32 %v9545, %v9545
      %v9578 = vmul.f32 %v9546, %v9546
      %v9579 = vmul.f32 %v9547, %v9547
      %v9580 = vmul.f32 %v9548, %v9548
      %v9581 = vmul.f32 %v9549, %v9549
      %v9582 = vmul.f32 %v9550, %v9550
      %v9583 = vmul.f32 %v9551, %v9551
      %v9584 = vmul.f32 %v9552, %v9552
      %v9585 = vmul.f32 %v9553, %v9553
      %v9586 = vmul.f32 %v9554, %v9554
      %v9587 = vmul.f32 %v9555, %v9555
      %v9588 = vmul.f32 %v9556, %v9556
      %v9589 = vmul.f32 %v9557, %v9557
      %v9590 = vmul.f32 %v9558, %v9558
      %v9591 = vmul.f32 %v9559, %v9559
      %v9592 = vmul.f32 %v9560, %v9560
      %v9593 = vmul.f32 %v9561, %v9561
      %v9594 = vmul.f32 %v9562, %v9562
      %v9595 = vmul.f32 %v9563, %v9563
      %v9596 = vmul.f32 %v9564, %v9564
      %v9597 = vmul.f32 %v9565, %v9565
      %v9598 = vmul.f32 %v9566, %v9566
      %v9599 = vmul.f32 %v9567, %v9567
      %v9600 = vmul.f32 %v9568, %v9568
      %v9601 = vmul.f32 %v9569, %v9569
      %v9602 = vsel %vm558, %v9570, 0.0
      %9603 = vadd.xlane.f32.xlu0 %v9602
      %v9604 = vpop.xlane.xlu0 %9603
      %v9605 = vsel %vm558, %v9571, 0.0
      %9606 = vadd.xlane.f32.xlu0 %v9605
      %v9607 = vpop.xlane.xlu0 %9606
      %v9608 = vsel %vm558, %v9572, 0.0
      %9609 = vadd.xlane.f32.xlu0 %v9608
      %v9610 = vpop.xlane.xlu0 %9609
      %v9611 = vsel %vm558, %v9573, 0.0
      %9612 = vadd.xlane.f32.xlu0 %v9611
      %v9613 = vpop.xlane.xlu0 %9612
      %v9614 = vsel %vm558, %v9574, 0.0
      %9615 = vadd.xlane.f32.xlu0 %v9614
      %v9616 = vpop.xlane.xlu0 %9615
      %v9617 = vsel %vm558, %v9575, 0.0
      %9618 = vadd.xlane.f32.xlu0 %v9617
      %v9619 = vpop.xlane.xlu0 %9618
      %v9620 = vsel %vm558, %v9576, 0.0
      %9621 = vadd.xlane.f32.xlu0 %v9620
      %v9622 = vpop.xlane.xlu0 %9621
      %v9623 = vsel %vm558, %v9577, 0.0
      %9624 = vadd.xlane.f32.xlu0 %v9623
      %v9625 = vpop.xlane.xlu0 %9624
      %v9626 = vsel %vm558, %v9578, 0.0
      %9627 = vadd.xlane.f32.xlu0 %v9626
      %v9628 = vpop.xlane.xlu0 %9627
      %v9629 = vsel %vm558, %v9579, 0.0
      %9630 = vadd.xlane.f32.xlu0 %v9629
      %v9631 = vpop.xlane.xlu0 %9630
      %v9632 = vsel %vm558, %v9580, 0.0
      %9633 = vadd.xlane.f32.xlu0 %v9632
      %v9634 = vpop.xlane.xlu0 %9633
      %v9635 = vsel %vm558, %v9581, 0.0
      %9636 = vadd.xlane.f32.xlu0 %v9635
      %v9637 = vpop.xlane.xlu0 %9636
      %v9638 = vsel %vm558, %v9582, 0.0
      %9639 = vadd.xlane.f32.xlu0 %v9638
      %v9640 = vpop.xlane.xlu0 %9639
      %v9641 = vsel %vm558, %v9583, 0.0
      %9642 = vadd.xlane.f32.xlu0 %v9641
      %v9643 = vpop.xlane.xlu0 %9642
      %v9644 = vsel %vm558, %v9584, 0.0
      %9645 = vadd.xlane.f32.xlu0 %v9644
      %v9646 = vpop.xlane.xlu0 %9645
      %v9647 = vsel %vm558, %v9585, 0.0
      %9648 = vadd.xlane.f32.xlu0 %v9647
      %v9649 = vpop.xlane.xlu0 %9648
      %v9650 = vsel %vm558, %v9586, 0.0
      %9651 = vadd.xlane.f32.xlu0 %v9650
      %v9652 = vpop.xlane.xlu0 %9651
      %v9653 = vsel %vm558, %v9587, 0.0
      %9654 = vadd.xlane.f32.xlu0 %v9653
      %v9655 = vpop.xlane.xlu0 %9654
      %v9656 = vsel %vm558, %v9588, 0.0
      %9657 = vadd.xlane.f32.xlu0 %v9656
      %v9658 = vpop.xlane.xlu0 %9657
      %v9659 = vsel %vm558, %v9589, 0.0
      %9660 = vadd.xlane.f32.xlu0 %v9659
      %v9661 = vpop.xlane.xlu0 %9660
      %v9662 = vsel %vm558, %v9590, 0.0
      %9663 = vadd.xlane.f32.xlu0 %v9662
      %v9664 = vpop.xlane.xlu0 %9663
      %v9665 = vsel %vm558, %v9591, 0.0
      %9666 = vadd.xlane.f32.xlu0 %v9665
      %v9667 = vpop.xlane.xlu0 %9666
      %v9668 = vsel %vm558, %v9592, 0.0
      %9669 = vadd.xlane.f32.xlu0 %v9668
      %v9670 = vpop.xlane.xlu0 %9669
      %v9671 = vsel %vm558, %v9593, 0.0
      %9672 = vadd.xlane.f32.xlu0 %v9671
      %v9673 = vpop.xlane.xlu0 %9672
      %v9674 = vsel %vm558, %v9594, 0.0
      %9675 = vadd.xlane.f32.xlu0 %v9674
      %v9676 = vpop.xlane.xlu0 %9675
      %v9677 = vsel %vm558, %v9595, 0.0
      %9678 = vadd.xlane.f32.xlu0 %v9677
      %v9679 = vpop.xlane.xlu0 %9678
      %v9680 = vsel %vm558, %v9596, 0.0
      %9681 = vadd.xlane.f32.xlu0 %v9680
      %v9682 = vpop.xlane.xlu0 %9681
      %v9683 = vsel %vm558, %v9597, 0.0
      %9684 = vadd.xlane.f32.xlu0 %v9683
      %v9685 = vpop.xlane.xlu0 %9684
      %v9686 = vsel %vm558, %v9598, 0.0
      %9687 = vadd.xlane.f32.xlu0 %v9686
      %v9688 = vpop.xlane.xlu0 %9687
      %v9689 = vsel %vm558, %v9599, 0.0
      %9690 = vadd.xlane.f32.xlu0 %v9689
      %v9691 = vpop.xlane.xlu0 %9690
      %v9692 = vsel %vm558, %v9600, 0.0
      %9693 = vadd.xlane.f32.xlu0 %v9692
      %v9694 = vpop.xlane.xlu0 %9693
      %v9695 = vsel %vm558, %v9601, 0.0
      %9696 = vadd.xlane.f32.xlu0 %v9695
      %v9697 = vpop.xlane.xlu0 %9696
      %v9698 = vmul.f32 %v9604, %v664
      %v9699 = vmul.f32 %v9607, %v664
      %v9700 = vmul.f32 %v9610, %v664
      %v9701 = vmul.f32 %v9613, %v664
      %v9702 = vmul.f32 %v9616, %v664
      %v9703 = vmul.f32 %v9619, %v664
      %v9704 = vmul.f32 %v9622, %v664
      %v9705 = vmul.f32 %v9625, %v664
      %v9706 = vmul.f32 %v9628, %v664
      %v9707 = vmul.f32 %v9631, %v664
      %v9708 = vmul.f32 %v9634, %v664
      %v9709 = vmul.f32 %v9637, %v664
      %v9710 = vmul.f32 %v9640, %v664
      %v9711 = vmul.f32 %v9643, %v664
      %v9712 = vmul.f32 %v9646, %v664
      %v9713 = vmul.f32 %v9649, %v664
      %v9714 = vmul.f32 %v9652, %v664
      %v9715 = vmul.f32 %v9655, %v664
      %v9716 = vmul.f32 %v9658, %v664
      %v9717 = vmul.f32 %v9661, %v664
      %v9718 = vmul.f32 %v9664, %v664
      %v9719 = vmul.f32 %v9667, %v664
      %v9720 = vmul.f32 %v9670, %v664
      %v9721 = vmul.f32 %v9673, %v664
      %v9722 = vmul.f32 %v9676, %v664
      %v9723 = vmul.f32 %v9679, %v664
      %v9724 = vmul.f32 %v9682, %v664
      %v9725 = vmul.f32 %v9685, %v664
      %v9726 = vmul.f32 %v9688, %v664
      %v9727 = vmul.f32 %v9691, %v664
      %v9728 = vmul.f32 %v9694, %v664
      %v9729 = vmul.f32 %v9697, %v664
      %v9730 = vadd.f32 %v9698, 1e-05
      %v9731 = vadd.f32 %v9699, 1e-05
      %v9732 = vadd.f32 %v9700, 1e-05
      %v9733 = vadd.f32 %v9701, 1e-05
      %v9734 = vadd.f32 %v9702, 1e-05
      %v9735 = vadd.f32 %v9703, 1e-05
      %v9736 = vadd.f32 %v9704, 1e-05
      %v9737 = vadd.f32 %v9705, 1e-05
      %v9738 = vadd.f32 %v9706, 1e-05
      %v9739 = vadd.f32 %v9707, 1e-05
      %v9740 = vadd.f32 %v9708, 1e-05
      %v9741 = vadd.f32 %v9709, 1e-05
      %v9742 = vadd.f32 %v9710, 1e-05
      %v9743 = vadd.f32 %v9711, 1e-05
      %v9744 = vadd.f32 %v9712, 1e-05
      %v9745 = vadd.f32 %v9713, 1e-05
      %v9746 = vadd.f32 %v9714, 1e-05
      %v9747 = vadd.f32 %v9715, 1e-05
      %v9748 = vadd.f32 %v9716, 1e-05
      %v9749 = vadd.f32 %v9717, 1e-05
      %v9750 = vadd.f32 %v9718, 1e-05
      %v9751 = vadd.f32 %v9719, 1e-05
      %v9752 = vadd.f32 %v9720, 1e-05
      %v9753 = vadd.f32 %v9721, 1e-05
      %v9754 = vadd.f32 %v9722, 1e-05
      %v9755 = vadd.f32 %v9723, 1e-05
      %v9756 = vadd.f32 %v9724, 1e-05
      %v9757 = vadd.f32 %v9725, 1e-05
      %v9758 = vadd.f32 %v9726, 1e-05
      %v9759 = vadd.f32 %v9727, 1e-05
      %v9760 = vadd.f32 %v9728, 1e-05
      %v9761 = vadd.f32 %v9729, 1e-05
      %v9762 = vrsqrt.pop %v9730
      %v9763 = vmul.f32 %v9762, %v9730
      %v9764 = vmul.f32 %v9763, %v9762
      %v9765 = vmul.f32 0.5, %v9764
      %v9766 = vsub.f32 1.5, %v9765
      %v9767 = vmul.f32 %v9762, %v9766
      %vm9768 = vweird.f32 %v9730
      %vm9769 = vweird.f32 %v9762
      %vm9770 = vmor %vm9768, %vm9769
      %v9771 = vsel %vm9770, %v9762, %v9767
      %v9772 = vrsqrt.pop %v9731
      %v9773 = vmul.f32 %v9772, %v9731
      %v9774 = vmul.f32 %v9773, %v9772
      %v9775 = vmul.f32 0.5, %v9774
      %v9776 = vsub.f32 1.5, %v9775
      %v9777 = vmul.f32 %v9772, %v9776
      %vm9778 = vweird.f32 %v9731
      %vm9779 = vweird.f32 %v9772
      %vm9780 = vmor %vm9778, %vm9779
      %v9781 = vsel %vm9780, %v9772, %v9777
      %v9782 = vrsqrt.pop %v9732
      %v9783 = vmul.f32 %v9782, %v9732
      %v9784 = vmul.f32 %v9783, %v9782
      %v9785 = vmul.f32 0.5, %v9784
      %v9786 = vsub.f32 1.5, %v9785
      %v9787 = vmul.f32 %v9782, %v9786
      %vm9788 = vweird.f32 %v9732
      %vm9789 = vweird.f32 %v9782
      %vm9790 = vmor %vm9788, %vm9789
      %v9791 = vsel %vm9790, %v9782, %v9787
      %v9792 = vrsqrt.pop %v9733
      %v9793 = vmul.f32 %v9792, %v9733
      %v9794 = vmul.f32 %v9793, %v9792
      %v9795 = vmul.f32 0.5, %v9794
      %v9796 = vsub.f32 1.5, %v9795
      %v9797 = vmul.f32 %v9792, %v9796
      %vm9798 = vweird.f32 %v9733
      %vm9799 = vweird.f32 %v9792
      %vm9800 = vmor %vm9798, %vm9799
      %v9801 = vsel %vm9800, %v9792, %v9797
      %v9802 = vrsqrt.pop %v9734
      %v9803 = vmul.f32 %v9802, %v9734
      %v9804 = vmul.f32 %v9803, %v9802
      %v9805 = vmul.f32 0.5, %v9804
      %v9806 = vsub.f32 1.5, %v9805
      %v9807 = vmul.f32 %v9802, %v9806
      %vm9808 = vweird.f32 %v9734
      %vm9809 = vweird.f32 %v9802
      %vm9810 = vmor %vm9808, %vm9809
      %v9811 = vsel %vm9810, %v9802, %v9807
      %v9812 = vrsqrt.pop %v9735
      %v9813 = vmul.f32 %v9812, %v9735
      %v9814 = vmul.f32 %v9813, %v9812
      %v9815 = vmul.f32 0.5, %v9814
      %v9816 = vsub.f32 1.5, %v9815
      %v9817 = vmul.f32 %v9812, %v9816
      %vm9818 = vweird.f32 %v9735
      %vm9819 = vweird.f32 %v9812
      %vm9820 = vmor %vm9818, %vm9819
      %v9821 = vsel %vm9820, %v9812, %v9817
      %v9822 = vrsqrt.pop %v9736
      %v9823 = vmul.f32 %v9822, %v9736
      %v9824 = vmul.f32 %v9823, %v9822
      %v9825 = vmul.f32 0.5, %v9824
      %v9826 = vsub.f32 1.5, %v9825
      %v9827 = vmul.f32 %v9822, %v9826
      %vm9828 = vweird.f32 %v9736
      %vm9829 = vweird.f32 %v9822
      %vm9830 = vmor %vm9828, %vm9829
      %v9831 = vsel %vm9830, %v9822, %v9827
      %v9832 = vrsqrt.pop %v9737
      %v9833 = vmul.f32 %v9832, %v9737
      %v9834 = vmul.f32 %v9833, %v9832
      %v9835 = vmul.f32 0.5, %v9834
      %v9836 = vsub.f32 1.5, %v9835
      %v9837 = vmul.f32 %v9832, %v9836
      %vm9838 = vweird.f32 %v9737
      %vm9839 = vweird.f32 %v9832
      %vm9840 = vmor %vm9838, %vm9839
      %v9841 = vsel %vm9840, %v9832, %v9837
      %v9842 = vrsqrt.pop %v9738
      %v9843 = vmul.f32 %v9842, %v9738
      %v9844 = vmul.f32 %v9843, %v9842
      %v9845 = vmul.f32 0.5, %v9844
      %v9846 = vsub.f32 1.5, %v9845
      %v9847 = vmul.f32 %v9842, %v9846
      %vm9848 = vweird.f32 %v9738
      %vm9849 = vweird.f32 %v9842
      %vm9850 = vmor %vm9848, %vm9849
      %v9851 = vsel %vm9850, %v9842, %v9847
      %v9852 = vrsqrt.pop %v9739
      %v9853 = vmul.f32 %v9852, %v9739
      %v9854 = vmul.f32 %v9853, %v9852
      %v9855 = vmul.f32 0.5, %v9854
      %v9856 = vsub.f32 1.5, %v9855
      %v9857 = vmul.f32 %v9852, %v9856
      %vm9858 = vweird.f32 %v9739
      %vm9859 = vweird.f32 %v9852
      %vm9860 = vmor %vm9858, %vm9859
      %v9861 = vsel %vm9860, %v9852, %v9857
      %v9862 = vrsqrt.pop %v9740
      %v9863 = vmul.f32 %v9862, %v9740
      %v9864 = vmul.f32 %v9863, %v9862
      %v9865 = vmul.f32 0.5, %v9864
      %v9866 = vsub.f32 1.5, %v9865
      %v9867 = vmul.f32 %v9862, %v9866
      %vm9868 = vweird.f32 %v9740
      %vm9869 = vweird.f32 %v9862
      %vm9870 = vmor %vm9868, %vm9869
      %v9871 = vsel %vm9870, %v9862, %v9867
      %v9872 = vrsqrt.pop %v9741
      %v9873 = vmul.f32 %v9872, %v9741
      %v9874 = vmul.f32 %v9873, %v9872
      %v9875 = vmul.f32 0.5, %v9874
      %v9876 = vsub.f32 1.5, %v9875
      %v9877 = vmul.f32 %v9872, %v9876
      %vm9878 = vweird.f32 %v9741
      %vm9879 = vweird.f32 %v9872
      %vm9880 = vmor %vm9878, %vm9879
      %v9881 = vsel %vm9880, %v9872, %v9877
      %v9882 = vrsqrt.pop %v9742
      %v9883 = vmul.f32 %v9882, %v9742
      %v9884 = vmul.f32 %v9883, %v9882
      %v9885 = vmul.f32 0.5, %v9884
      %v9886 = vsub.f32 1.5, %v9885
      %v9887 = vmul.f32 %v9882, %v9886
      %vm9888 = vweird.f32 %v9742
      %vm9889 = vweird.f32 %v9882
      %vm9890 = vmor %vm9888, %vm9889
      %v9891 = vsel %vm9890, %v9882, %v9887
      %v9892 = vrsqrt.pop %v9743
      %v9893 = vmul.f32 %v9892, %v9743
      %v9894 = vmul.f32 %v9893, %v9892
      %v9895 = vmul.f32 0.5, %v9894
      %v9896 = vsub.f32 1.5, %v9895
      %v9897 = vmul.f32 %v9892, %v9896
      %vm9898 = vweird.f32 %v9743
      %vm9899 = vweird.f32 %v9892
      %vm9900 = vmor %vm9898, %vm9899
      %v9901 = vsel %vm9900, %v9892, %v9897
      %v9902 = vrsqrt.pop %v9744
      %v9903 = vmul.f32 %v9902, %v9744
      %v9904 = vmul.f32 %v9903, %v9902
      %v9905 = vmul.f32 0.5, %v9904
      %v9906 = vsub.f32 1.5, %v9905
      %v9907 = vmul.f32 %v9902, %v9906
      %vm9908 = vweird.f32 %v9744
      %vm9909 = vweird.f32 %v9902
      %vm9910 = vmor %vm9908, %vm9909
      %v9911 = vsel %vm9910, %v9902, %v9907
      %v9912 = vrsqrt.pop %v9745
      %v9913 = vmul.f32 %v9912, %v9745
      %v9914 = vmul.f32 %v9913, %v9912
      %v9915 = vmul.f32 0.5, %v9914
      %v9916 = vsub.f32 1.5, %v9915
      %v9917 = vmul.f32 %v9912, %v9916
      %vm9918 = vweird.f32 %v9745
      %vm9919 = vweird.f32 %v9912
      %vm9920 = vmor %vm9918, %vm9919
      %v9921 = vsel %vm9920, %v9912, %v9917
      %v9922 = vrsqrt.pop %v9746
      %v9923 = vmul.f32 %v9922, %v9746
      %v9924 = vmul.f32 %v9923, %v9922
      %v9925 = vmul.f32 0.5, %v9924
      %v9926 = vsub.f32 1.5, %v9925
      %v9927 = vmul.f32 %v9922, %v9926
      %vm9928 = vweird.f32 %v9746
      %vm9929 = vweird.f32 %v9922
      %vm9930 = vmor %vm9928, %vm9929
      %v9931 = vsel %vm9930, %v9922, %v9927
      %v9932 = vrsqrt.pop %v9747
      %v9933 = vmul.f32 %v9932, %v9747
      %v9934 = vmul.f32 %v9933, %v9932
      %v9935 = vmul.f32 0.5, %v9934
      %v9936 = vsub.f32 1.5, %v9935
      %v9937 = vmul.f32 %v9932, %v9936
      %vm9938 = vweird.f32 %v9747
      %vm9939 = vweird.f32 %v9932
      %vm9940 = vmor %vm9938, %vm9939
      %v9941 = vsel %vm9940, %v9932, %v9937
      %v9942 = vrsqrt.pop %v9748
      %v9943 = vmul.f32 %v9942, %v9748
      %v9944 = vmul.f32 %v9943, %v9942
      %v9945 = vmul.f32 0.5, %v9944
      %v9946 = vsub.f32 1.5, %v9945
      %v9947 = vmul.f32 %v9942, %v9946
      %vm9948 = vweird.f32 %v9748
      %vm9949 = vweird.f32 %v9942
      %vm9950 = vmor %vm9948, %vm9949
      %v9951 = vsel %vm9950, %v9942, %v9947
      %v9952 = vrsqrt.pop %v9749
      %v9953 = vmul.f32 %v9952, %v9749
      %v9954 = vmul.f32 %v9953, %v9952
      %v9955 = vmul.f32 0.5, %v9954
      %v9956 = vsub.f32 1.5, %v9955
      %v9957 = vmul.f32 %v9952, %v9956
      %vm9958 = vweird.f32 %v9749
      %vm9959 = vweird.f32 %v9952
      %vm9960 = vmor %vm9958, %vm9959
      %v9961 = vsel %vm9960, %v9952, %v9957
      %v9962 = vrsqrt.pop %v9750
      %v9963 = vmul.f32 %v9962, %v9750
      %v9964 = vmul.f32 %v9963, %v9962
      %v9965 = vmul.f32 0.5, %v9964
      %v9966 = vsub.f32 1.5, %v9965
      %v9967 = vmul.f32 %v9962, %v9966
      %vm9968 = vweird.f32 %v9750
      %vm9969 = vweird.f32 %v9962
      %vm9970 = vmor %vm9968, %vm9969
      %v9971 = vsel %vm9970, %v9962, %v9967
      %v9972 = vrsqrt.pop %v9751
      %v9973 = vmul.f32 %v9972, %v9751
      %v9974 = vmul.f32 %v9973, %v9972
      %v9975 = vmul.f32 0.5, %v9974
      %v9976 = vsub.f32 1.5, %v9975
      %v9977 = vmul.f32 %v9972, %v9976
      %vm9978 = vweird.f32 %v9751
      %vm9979 = vweird.f32 %v9972
      %vm9980 = vmor %vm9978, %vm9979
      %v9981 = vsel %vm9980, %v9972, %v9977
      %v9982 = vrsqrt.pop %v9752
      %v9983 = vmul.f32 %v9982, %v9752
      %v9984 = vmul.f32 %v9983, %v9982
      %v9985 = vmul.f32 0.5, %v9984
      %v9986 = vsub.f32 1.5, %v9985
      %v9987 = vmul.f32 %v9982, %v9986
      %vm9988 = vweird.f32 %v9752
      %vm9989 = vweird.f32 %v9982
      %vm9990 = vmor %vm9988, %vm9989
      %v9991 = vsel %vm9990, %v9982, %v9987
      %v9992 = vrsqrt.pop %v9753
      %v9993 = vmul.f32 %v9992, %v9753
      %v9994 = vmul.f32 %v9993, %v9992
      %v9995 = vmul.f32 0.5, %v9994
      %v9996 = vsub.f32 1.5, %v9995
      %v9997 = vmul.f32 %v9992, %v9996
      %vm9998 = vweird.f32 %v9753
      %vm9999 = vweird.f32 %v9992
      %vm10000 = vmor %vm9998, %vm9999
      %v10001 = vsel %vm10000, %v9992, %v9997
      %v10002 = vrsqrt.pop %v9754
      %v10003 = vmul.f32 %v10002, %v9754
      %v10004 = vmul.f32 %v10003, %v10002
      %v10005 = vmul.f32 0.5, %v10004
      %v10006 = vsub.f32 1.5, %v10005
      %v10007 = vmul.f32 %v10002, %v10006
      %vm10008 = vweird.f32 %v9754
      %vm10009 = vweird.f32 %v10002
      %vm10010 = vmor %vm10008, %vm10009
      %v10011 = vsel %vm10010, %v10002, %v10007
      %v10012 = vrsqrt.pop %v9755
      %v10013 = vmul.f32 %v10012, %v9755
      %v10014 = vmul.f32 %v10013, %v10012
      %v10015 = vmul.f32 0.5, %v10014
      %v10016 = vsub.f32 1.5, %v10015
      %v10017 = vmul.f32 %v10012, %v10016
      %vm10018 = vweird.f32 %v9755
      %vm10019 = vweird.f32 %v10012
      %vm10020 = vmor %vm10018, %vm10019
      %v10021 = vsel %vm10020, %v10012, %v10017
      %v10022 = vrsqrt.pop %v9756
      %v10023 = vmul.f32 %v10022, %v9756
      %v10024 = vmul.f32 %v10023, %v10022
      %v10025 = vmul.f32 0.5, %v10024
      %v10026 = vsub.f32 1.5, %v10025
      %v10027 = vmul.f32 %v10022, %v10026
      %vm10028 = vweird.f32 %v9756
      %vm10029 = vweird.f32 %v10022
      %vm10030 = vmor %vm10028, %vm10029
      %v10031 = vsel %vm10030, %v10022, %v10027
      %v10032 = vrsqrt.pop %v9757
      %v10033 = vmul.f32 %v10032, %v9757
      %v10034 = vmul.f32 %v10033, %v10032
      %v10035 = vmul.f32 0.5, %v10034
      %v10036 = vsub.f32 1.5, %v10035
      %v10037 = vmul.f32 %v10032, %v10036
      %vm10038 = vweird.f32 %v9757
      %vm10039 = vweird.f32 %v10032
      %vm10040 = vmor %vm10038, %vm10039
      %v10041 = vsel %vm10040, %v10032, %v10037
      %v10042 = vrsqrt.pop %v9758
      %v10043 = vmul.f32 %v10042, %v9758
      %v10044 = vmul.f32 %v10043, %v10042
      %v10045 = vmul.f32 0.5, %v10044
      %v10046 = vsub.f32 1.5, %v10045
      %v10047 = vmul.f32 %v10042, %v10046
      %vm10048 = vweird.f32 %v9758
      %vm10049 = vweird.f32 %v10042
      %vm10050 = vmor %vm10048, %vm10049
      %v10051 = vsel %vm10050, %v10042, %v10047
      %v10052 = vrsqrt.pop %v9759
      %v10053 = vmul.f32 %v10052, %v9759
      %v10054 = vmul.f32 %v10053, %v10052
      %v10055 = vmul.f32 0.5, %v10054
      %v10056 = vsub.f32 1.5, %v10055
      %v10057 = vmul.f32 %v10052, %v10056
      %vm10058 = vweird.f32 %v9759
      %vm10059 = vweird.f32 %v10052
      %vm10060 = vmor %vm10058, %vm10059
      %v10061 = vsel %vm10060, %v10052, %v10057
      %v10062 = vrsqrt.pop %v9760
      %v10063 = vmul.f32 %v10062, %v9760
      %v10064 = vmul.f32 %v10063, %v10062
      %v10065 = vmul.f32 0.5, %v10064
      %v10066 = vsub.f32 1.5, %v10065
      %v10067 = vmul.f32 %v10062, %v10066
      %vm10068 = vweird.f32 %v9760
      %vm10069 = vweird.f32 %v10062
      %vm10070 = vmor %vm10068, %vm10069
      %v10071 = vsel %vm10070, %v10062, %v10067
      %v10072 = vrsqrt.pop %v9761
      %v10073 = vmul.f32 %v10072, %v9761
      %v10074 = vmul.f32 %v10073, %v10072
      %v10075 = vmul.f32 0.5, %v10074
      %v10076 = vsub.f32 1.5, %v10075
      %v10077 = vmul.f32 %v10072, %v10076
      %vm10078 = vweird.f32 %v9761
      %vm10079 = vweird.f32 %v10072
      %vm10080 = vmor %vm10078, %vm10079
      %v10081 = vsel %vm10080, %v10072, %v10077
      %v10082 = vmul.f32 %v9538, %v9771
      %v10083 = vmul.f32 %v9539, %v9781
      %v10084 = vmul.f32 %v9540, %v9791
      %v10085 = vmul.f32 %v9541, %v9801
      %v10086 = vmul.f32 %v9542, %v9811
      %v10087 = vmul.f32 %v9543, %v9821
      %v10088 = vmul.f32 %v9544, %v9831
      %v10089 = vmul.f32 %v9545, %v9841
      %v10090 = vmul.f32 %v9546, %v9851
      %v10091 = vmul.f32 %v9547, %v9861
      %v10092 = vmul.f32 %v9548, %v9871
      %v10093 = vmul.f32 %v9549, %v9881
      %v10094 = vmul.f32 %v9550, %v9891
      %v10095 = vmul.f32 %v9551, %v9901
      %v10096 = vmul.f32 %v9552, %v9911
      %v10097 = vmul.f32 %v9553, %v9921
      %v10098 = vmul.f32 %v9554, %v9931
      %v10099 = vmul.f32 %v9555, %v9941
      %v10100 = vmul.f32 %v9556, %v9951
      %v10101 = vmul.f32 %v9557, %v9961
      %v10102 = vmul.f32 %v9558, %v9971
      %v10103 = vmul.f32 %v9559, %v9981
      %v10104 = vmul.f32 %v9560, %v9991
      %v10105 = vmul.f32 %v9561, %v10001
      %v10106 = vmul.f32 %v9562, %v10011
      %v10107 = vmul.f32 %v9563, %v10021
      %v10108 = vmul.f32 %v9564, %v10031
      %v10109 = vmul.f32 %v9565, %v10041
      %v10110 = vmul.f32 %v9566, %v10051
      %v10111 = vmul.f32 %v9567, %v10061
      %v10112 = vmul.f32 %v9568, %v10071
      %v10113 = vmul.f32 %v9569, %v10081
      %v10115 = vperm.slane %v9408, 0
      %v10117 = vmul.f32 %v10082, %v10115
      %v10118 = vmul.f32 %v10083, %v10115
      %v10119 = vmul.f32 %v10084, %v10115
      %v10120 = vmul.f32 %v10085, %v10115
      %v10121 = vmul.f32 %v10086, %v10115
      %v10122 = vmul.f32 %v10087, %v10115
      %v10123 = vmul.f32 %v10088, %v10115
      %v10124 = vmul.f32 %v10089, %v10115
      %v10125 = vmul.f32 %v10090, %v10115
      %v10126 = vmul.f32 %v10091, %v10115
      %v10127 = vmul.f32 %v10092, %v10115
      %v10128 = vmul.f32 %v10093, %v10115
      %v10129 = vmul.f32 %v10094, %v10115
      %v10130 = vmul.f32 %v10095, %v10115
      %v10131 = vmul.f32 %v10096, %v10115
      %v10132 = vmul.f32 %v10097, %v10115
      %v10133 = vmul.f32 %v10098, %v10115
      %v10134 = vmul.f32 %v10099, %v10115
      %v10135 = vmul.f32 %v10100, %v10115
      %v10136 = vmul.f32 %v10101, %v10115
      %v10137 = vmul.f32 %v10102, %v10115
      %v10138 = vmul.f32 %v10103, %v10115
      %v10139 = vmul.f32 %v10104, %v10115
      %v10140 = vmul.f32 %v10105, %v10115
      %v10141 = vmul.f32 %v10106, %v10115
      %v10142 = vmul.f32 %v10107, %v10115
      %v10143 = vmul.f32 %v10108, %v10115
      %v10144 = vmul.f32 %v10109, %v10115
      %v10145 = vmul.f32 %v10110, %v10115
      %v10146 = vmul.f32 %v10111, %v10115
      %v10147 = vmul.f32 %v10112, %v10115
      %v10148 = vmul.f32 %v10113, %v10115
      %v10150 = vperm.slane %v9409, 0
      %v10152 = vadd.f32 %v10117, %v10150
      %v10153 = vadd.f32 %v10118, %v10150
      %v10154 = vadd.f32 %v10119, %v10150
      %v10155 = vadd.f32 %v10120, %v10150
      %v10156 = vadd.f32 %v10121, %v10150
      %v10157 = vadd.f32 %v10122, %v10150
      %v10158 = vadd.f32 %v10123, %v10150
      %v10159 = vadd.f32 %v10124, %v10150
      %v10160 = vadd.f32 %v10125, %v10150
      %v10161 = vadd.f32 %v10126, %v10150
      %v10162 = vadd.f32 %v10127, %v10150
      %v10163 = vadd.f32 %v10128, %v10150
      %v10164 = vadd.f32 %v10129, %v10150
      %v10165 = vadd.f32 %v10130, %v10150
      %v10166 = vadd.f32 %v10131, %v10150
      %v10167 = vadd.f32 %v10132, %v10150
      %v10168 = vadd.f32 %v10133, %v10150
      %v10169 = vadd.f32 %v10134, %v10150
      %v10170 = vadd.f32 %v10135, %v10150
      %v10171 = vadd.f32 %v10136, %v10150
      %v10172 = vadd.f32 %v10137, %v10150
      %v10173 = vadd.f32 %v10138, %v10150
      %v10174 = vadd.f32 %v10139, %v10150
      %v10175 = vadd.f32 %v10140, %v10150
      %v10176 = vadd.f32 %v10141, %v10150
      %v10177 = vadd.f32 %v10142, %v10150
      %v10178 = vadd.f32 %v10143, %v10150
      %v10179 = vadd.f32 %v10144, %v10150
      %v10180 = vadd.f32 %v10145, %v10150
      %v10181 = vadd.f32 %v10146, %v10150
      %v10182 = vadd.f32 %v10147, %v10150
      %v10183 = vadd.f32 %v10148, %v10150
      %v10184 = vpack.c.bf16 %v10153, %v10152
      %v10185 = vpack.c.bf16 %v10155, %v10154
      %v10186 = vpack.c.bf16 %v10157, %v10156
      %v10187 = vpack.c.bf16 %v10159, %v10158
      %v10188 = vpack.c.bf16 %v10161, %v10160
      %v10189 = vpack.c.bf16 %v10163, %v10162
      %v10190 = vpack.c.bf16 %v10165, %v10164
      %v10191 = vpack.c.bf16 %v10167, %v10166
      %v10192 = vpack.c.bf16 %v10169, %v10168
      %v10193 = vpack.c.bf16 %v10171, %v10170
      %v10194 = vpack.c.bf16 %v10173, %v10172
      %v10195 = vpack.c.bf16 %v10175, %v10174
      %v10196 = vpack.c.bf16 %v10177, %v10176
      %v10197 = vpack.c.bf16 %v10179, %v10178
      %v10198 = vpack.c.bf16 %v10181, %v10180
      %v10199 = vpack.c.bf16 %v10183, %v10182
      %v10200 = vld [vmem:[%s10] sm:$0xf]
      %v10201 = vld [vmem:[%s10 + $0x4] sm:$0xf]
      %v10202 = vld [vmem:[%s10 + $0x8] sm:$0xf]
      %v10203 = vld [vmem:[%s10 + $0xc] sm:$0xf]
      %v10204 = vld [vmem:[%s10 + $0x10] sm:$0xf]
      %v10205 = vld [vmem:[%s10 + $0x14] sm:$0xf]
      %v10206 = vld [vmem:[%s10 + $0x18] sm:$0xf]
      %v10207 = vld [vmem:[%s10 + $0x1c] sm:$0xf]
      %v10208 = vld [vmem:[%s11] sm:$0x1]
      %v10210 = vperm.slane %v10208, 0
      %v10220 = vunpack.c.l.b16 %v10200
      %v10221 = vunpack.c.l.b16 %v10201
      %v10222 = vunpack.c.l.b16 %v10202
      %v10223 = vunpack.c.l.b16 %v10203
      %v10224 = vunpack.c.l.b16 %v10204
      %v10225 = vunpack.c.l.b16 %v10205
      %v10226 = vunpack.c.l.b16 %v10206
      %v10227 = vunpack.c.l.b16 %v10207
      %v10228 = vpack.c.b16 %v10221, %v10220
      %v10229 = vpack.c.b16 %v10223, %v10222
      %v10230 = vpack.c.b16 %v10225, %v10224
      %v10231 = vpack.c.b16 %v10227, %v10226
      %v10237 = vsel %vm558, %v10184, 0
      %v10240 = vsel %vm558, %v10185, 0
      %v10243 = vsel %vm558, %v10186, 0
      %v10246 = vsel %vm558, %v10187, 0
      %v10249 = vsel %vm558, %v10188, 0
      %v10252 = vsel %vm558, %v10189, 0
      %v10255 = vsel %vm558, %v10190, 0
      %v10258 = vsel %vm558, %v10191, 0
      %v10261 = vsel %vm558, %v10192, 0
      %v10264 = vsel %vm558, %v10193, 0
      %v10267 = vsel %vm558, %v10194, 0
      %v10270 = vsel %vm558, %v10195, 0
      %v10273 = vsel %vm558, %v10196, 0
      %v10276 = vsel %vm558, %v10197, 0
      %v10279 = vsel %vm558, %v10198, 0
      %v10282 = vsel %vm558, %v10199, 0
      %10284 = vmatpush.bf16.msra.mxu0 0
      %10285 = vmatpush.bf16.msra.mxu0 0
      %10286 = vmatpush.bf16.msra.mxu0 0
      %10287 = vmatpush.bf16.msra.mxu0 0
      %10288 = vmatpush.bf16.msra.mxu0 %v10231
      %10289 = vmatpush.bf16.msra.mxu0 %v10230
      %10290 = vmatpush.bf16.msra.mxu0 %v10229
      %10291 = vmatpush.bf16.msra.mxu0 %v10228
      %10292 = vmatmul.bf16.gmra.mxu0 %v10237
      %v10293 = vpop.f32.mrf.mxu0
      %v10294 = vadd.f32 %v10210, %v10293
      %v10295 = vpop.f32.mrf.mxu0
      %v10296 = vadd.f32 %v10210, %v10295
      %10297 = vmatmul.bf16.gmra.mxu0 %v10240
      %v10298 = vpop.f32.mrf.mxu0
      %v10299 = vadd.f32 %v10210, %v10298
      %v10300 = vpop.f32.mrf.mxu0
      %v10301 = vadd.f32 %v10210, %v10300
      %10302 = vmatmul.bf16.gmra.mxu0 %v10243
      %v10303 = vpop.f32.mrf.mxu0
      %v10304 = vadd.f32 %v10210, %v10303
      %v10305 = vpop.f32.mrf.mxu0
      %v10306 = vadd.f32 %v10210, %v10305
      %10307 = vmatmul.bf16.gmra.mxu0 %v10246
      %v10308 = vpop.f32.mrf.mxu0
      %v10309 = vadd.f32 %v10210, %v10308
      %v10310 = vpop.f32.mrf.mxu0
      %v10311 = vadd.f32 %v10210, %v10310
      %10312 = vmatmul.bf16.gmra.mxu0 %v10249
      %v10313 = vpop.f32.mrf.mxu0
      %v10314 = vadd.f32 %v10210, %v10313
      %v10315 = vpop.f32.mrf.mxu0
      %v10316 = vadd.f32 %v10210, %v10315
      %10317 = vmatmul.bf16.gmra.mxu0 %v10252
      %v10318 = vpop.f32.mrf.mxu0
      %v10319 = vadd.f32 %v10210, %v10318
      %v10320 = vpop.f32.mrf.mxu0
      %v10321 = vadd.f32 %v10210, %v10320
      %10322 = vmatmul.bf16.gmra.mxu0 %v10255
      %v10323 = vpop.f32.mrf.mxu0
      %v10324 = vadd.f32 %v10210, %v10323
      %v10325 = vpop.f32.mrf.mxu0
      %v10326 = vadd.f32 %v10210, %v10325
      %10327 = vmatmul.bf16.gmra.mxu0 %v10258
      %v10328 = vpop.f32.mrf.mxu0
      %v10329 = vadd.f32 %v10210, %v10328
      %v10330 = vpop.f32.mrf.mxu0
      %v10331 = vadd.f32 %v10210, %v10330
      %10332 = vmatmul.bf16.gmra.mxu0 %v10261
      %v10333 = vpop.f32.mrf.mxu0
      %v10334 = vadd.f32 %v10210, %v10333
      %v10335 = vpop.f32.mrf.mxu0
      %v10336 = vadd.f32 %v10210, %v10335
      %10337 = vmatmul.bf16.gmra.mxu0 %v10264
      %v10338 = vpop.f32.mrf.mxu0
      %v10339 = vadd.f32 %v10210, %v10338
      %v10340 = vpop.f32.mrf.mxu0
      %v10341 = vadd.f32 %v10210, %v10340
      %10342 = vmatmul.bf16.gmra.mxu0 %v10267
      %v10343 = vpop.f32.mrf.mxu0
      %v10344 = vadd.f32 %v10210, %v10343
      %v10345 = vpop.f32.mrf.mxu0
      %v10346 = vadd.f32 %v10210, %v10345
      %10347 = vmatmul.bf16.gmra.mxu0 %v10270
      %v10348 = vpop.f32.mrf.mxu0
      %v10349 = vadd.f32 %v10210, %v10348
      %v10350 = vpop.f32.mrf.mxu0
      %v10351 = vadd.f32 %v10210, %v10350
      %10352 = vmatmul.bf16.gmra.mxu0 %v10273
      %v10353 = vpop.f32.mrf.mxu0
      %v10354 = vadd.f32 %v10210, %v10353
      %v10355 = vpop.f32.mrf.mxu0
      %v10356 = vadd.f32 %v10210, %v10355
      %10357 = vmatmul.bf16.gmra.mxu0 %v10276
      %v10358 = vpop.f32.mrf.mxu0
      %v10359 = vadd.f32 %v10210, %v10358
      %v10360 = vpop.f32.mrf.mxu0
      %v10361 = vadd.f32 %v10210, %v10360
      %10362 = vmatmul.bf16.gmra.mxu0 %v10279
      %v10363 = vpop.f32.mrf.mxu0
      %v10364 = vadd.f32 %v10210, %v10363
      %v10365 = vpop.f32.mrf.mxu0
      %v10366 = vadd.f32 %v10210, %v10365
      %10367 = vmatmul.bf16.gmra.mxu0 %v10282
      %v10368 = vpop.f32.mrf.mxu0
      %v10369 = vadd.f32 %v10210, %v10368
      %v10370 = vpop.f32.mrf.mxu0
      %v10371 = vadd.f32 %v10210, %v10370
      %10372 = vdwg.mxu0
      %v10373 = vmul.f32 %v10294, %v10294
      %v10374 = vmul.f32 %v10296, %v10296
      %v10375 = vmul.f32 %v10299, %v10299
      %v10376 = vmul.f32 %v10301, %v10301
      %v10377 = vmul.f32 %v10304, %v10304
      %v10378 = vmul.f32 %v10306, %v10306
      %v10379 = vmul.f32 %v10309, %v10309
      %v10380 = vmul.f32 %v10311, %v10311
      %v10381 = vmul.f32 %v10314, %v10314
      %v10382 = vmul.f32 %v10316, %v10316
      %v10383 = vmul.f32 %v10319, %v10319
      %v10384 = vmul.f32 %v10321, %v10321
      %v10385 = vmul.f32 %v10324, %v10324
      %v10386 = vmul.f32 %v10326, %v10326
      %v10387 = vmul.f32 %v10329, %v10329
      %v10388 = vmul.f32 %v10331, %v10331
      %v10389 = vmul.f32 %v10334, %v10334
      %v10390 = vmul.f32 %v10336, %v10336
      %v10391 = vmul.f32 %v10339, %v10339
      %v10392 = vmul.f32 %v10341, %v10341
      %v10393 = vmul.f32 %v10344, %v10344
      %v10394 = vmul.f32 %v10346, %v10346
      %v10395 = vmul.f32 %v10349, %v10349
      %v10396 = vmul.f32 %v10351, %v10351
      %v10397 = vmul.f32 %v10354, %v10354
      %v10398 = vmul.f32 %v10356, %v10356
      %v10399 = vmul.f32 %v10359, %v10359
      %v10400 = vmul.f32 %v10361, %v10361
      %v10401 = vmul.f32 %v10364, %v10364
      %v10402 = vmul.f32 %v10366, %v10366
      %v10403 = vmul.f32 %v10369, %v10369
      %v10404 = vmul.f32 %v10371, %v10371
      %v10405 = vmul.f32 %v10294, %v10373
      %v10406 = vmul.f32 %v10296, %v10374
      %v10407 = vmul.f32 %v10299, %v10375
      %v10408 = vmul.f32 %v10301, %v10376
      %v10409 = vmul.f32 %v10304, %v10377
      %v10410 = vmul.f32 %v10306, %v10378
      %v10411 = vmul.f32 %v10309, %v10379
      %v10412 = vmul.f32 %v10311, %v10380
      %v10413 = vmul.f32 %v10314, %v10381
      %v10414 = vmul.f32 %v10316, %v10382
      %v10415 = vmul.f32 %v10319, %v10383
      %v10416 = vmul.f32 %v10321, %v10384
      %v10417 = vmul.f32 %v10324, %v10385
      %v10418 = vmul.f32 %v10326, %v10386
      %v10419 = vmul.f32 %v10329, %v10387
      %v10420 = vmul.f32 %v10331, %v10388
      %v10421 = vmul.f32 %v10334, %v10389
      %v10422 = vmul.f32 %v10336, %v10390
      %v10423 = vmul.f32 %v10339, %v10391
      %v10424 = vmul.f32 %v10341, %v10392
      %v10425 = vmul.f32 %v10344, %v10393
      %v10426 = vmul.f32 %v10346, %v10394
      %v10427 = vmul.f32 %v10349, %v10395
      %v10428 = vmul.f32 %v10351, %v10396
      %v10429 = vmul.f32 %v10354, %v10397
      %v10430 = vmul.f32 %v10356, %v10398
      %v10431 = vmul.f32 %v10359, %v10399
      %v10432 = vmul.f32 %v10361, %v10400
      %v10433 = vmul.f32 %v10364, %v10401
      %v10434 = vmul.f32 %v10366, %v10402
      %v10435 = vmul.f32 %v10369, %v10403
      %v10436 = vmul.f32 %v10371, %v10404
      %v10437 = vmul.f32 %v10405, 0.044715
      %v10438 = vmul.f32 %v10406, 0.044715
      %v10439 = vmul.f32 %v10407, 0.044715
      %v10440 = vmul.f32 %v10408, 0.044715
      %v10441 = vmul.f32 %v10409, 0.044715
      %v10442 = vmul.f32 %v10410, 0.044715
      %v10443 = vmul.f32 %v10411, 0.044715
      %v10444 = vmul.f32 %v10412, 0.044715
      %v10445 = vmul.f32 %v10413, 0.044715
      %v10446 = vmul.f32 %v10414, 0.044715
      %v10447 = vmul.f32 %v10415, 0.044715
      %v10448 = vmul.f32 %v10416, 0.044715
      %v10449 = vmul.f32 %v10417, 0.044715
      %v10450 = vmul.f32 %v10418, 0.044715
      %v10451 = vmul.f32 %v10419, 0.044715
      %v10452 = vmul.f32 %v10420, 0.044715
      %v10453 = vmul.f32 %v10421, 0.044715
      %v10454 = vmul.f32 %v10422, 0.044715
      %v10455 = vmul.f32 %v10423, 0.044715
      %v10456 = vmul.f32 %v10424, 0.044715
      %v10457 = vmul.f32 %v10425, 0.044715
      %v10458 = vmul.f32 %v10426, 0.044715
      %v10459 = vmul.f32 %v10427, 0.044715
      %v10460 = vmul.f32 %v10428, 0.044715
      %v10461 = vmul.f32 %v10429, 0.044715
      %v10462 = vmul.f32 %v10430, 0.044715
      %v10463 = vmul.f32 %v10431, 0.044715
      %v10464 = vmul.f32 %v10432, 0.044715
      %v10465 = vmul.f32 %v10433, 0.044715
      %v10466 = vmul.f32 %v10434, 0.044715
      %v10467 = vmul.f32 %v10435, 0.044715
      %v10468 = vmul.f32 %v10436, 0.044715
      %v10469 = vadd.f32 %v10294, %v10437
      %v10470 = vadd.f32 %v10296, %v10438
      %v10471 = vadd.f32 %v10299, %v10439
      %v10472 = vadd.f32 %v10301, %v10440
      %v10473 = vadd.f32 %v10304, %v10441
      %v10474 = vadd.f32 %v10306, %v10442
      %v10475 = vadd.f32 %v10309, %v10443
      %v10476 = vadd.f32 %v10311, %v10444
      %v10477 = vadd.f32 %v10314, %v10445
      %v10478 = vadd.f32 %v10316, %v10446
      %v10479 = vadd.f32 %v10319, %v10447
      %v10480 = vadd.f32 %v10321, %v10448
      %v10481 = vadd.f32 %v10324, %v10449
      %v10482 = vadd.f32 %v10326, %v10450
      %v10483 = vadd.f32 %v10329, %v10451
      %v10484 = vadd.f32 %v10331, %v10452
      %v10485 = vadd.f32 %v10334, %v10453
      %v10486 = vadd.f32 %v10336, %v10454
      %v10487 = vadd.f32 %v10339, %v10455
      %v10488 = vadd.f32 %v10341, %v10456
      %v10489 = vadd.f32 %v10344, %v10457
      %v10490 = vadd.f32 %v10346, %v10458
      %v10491 = vadd.f32 %v10349, %v10459
      %v10492 = vadd.f32 %v10351, %v10460
      %v10493 = vadd.f32 %v10354, %v10461
      %v10494 = vadd.f32 %v10356, %v10462
      %v10495 = vadd.f32 %v10359, %v10463
      %v10496 = vadd.f32 %v10361, %v10464
      %v10497 = vadd.f32 %v10364, %v10465
      %v10498 = vadd.f32 %v10366, %v10466
      %v10499 = vadd.f32 %v10369, %v10467
      %v10500 = vadd.f32 %v10371, %v10468
      %v10501 = vmul.f32 %v10469, 0.7978846
      %v10502 = vmul.f32 %v10470, 0.7978846
      %v10503 = vmul.f32 %v10471, 0.7978846
      %v10504 = vmul.f32 %v10472, 0.7978846
      %v10505 = vmul.f32 %v10473, 0.7978846
      %v10506 = vmul.f32 %v10474, 0.7978846
      %v10507 = vmul.f32 %v10475, 0.7978846
      %v10508 = vmul.f32 %v10476, 0.7978846
      %v10509 = vmul.f32 %v10477, 0.7978846
      %v10510 = vmul.f32 %v10478, 0.7978846
      %v10511 = vmul.f32 %v10479, 0.7978846
      %v10512 = vmul.f32 %v10480, 0.7978846
      %v10513 = vmul.f32 %v10481, 0.7978846
      %v10514 = vmul.f32 %v10482, 0.7978846
      %v10515 = vmul.f32 %v10483, 0.7978846
      %v10516 = vmul.f32 %v10484, 0.7978846
      %v10517 = vmul.f32 %v10485, 0.7978846
      %v10518 = vmul.f32 %v10486, 0.7978846
      %v10519 = vmul.f32 %v10487, 0.7978846
      %v10520 = vmul.f32 %v10488, 0.7978846
      %v10521 = vmul.f32 %v10489, 0.7978846
      %v10522 = vmul.f32 %v10490, 0.7978846
      %v10523 = vmul.f32 %v10491, 0.7978846
      %v10524 = vmul.f32 %v10492, 0.7978846
      %v10525 = vmul.f32 %v10493, 0.7978846
      %v10526 = vmul.f32 %v10494, 0.7978846
      %v10527 = vmul.f32 %v10495, 0.7978846
      %v10528 = vmul.f32 %v10496, 0.7978846
      %v10529 = vmul.f32 %v10497, 0.7978846
      %v10530 = vmul.f32 %v10498, 0.7978846
      %v10531 = vmul.f32 %v10499, 0.7978846
      %v10532 = vmul.f32 %v10500, 0.7978846
      %v10533 = vtanh.pop %v10501
      %v10534 = vtanh.pop %v10502
      %v10535 = vtanh.pop %v10503
      %v10536 = vtanh.pop %v10504
      %v10537 = vtanh.pop %v10505
      %v10538 = vtanh.pop %v10506
      %v10539 = vtanh.pop %v10507
      %v10540 = vtanh.pop %v10508
      %v10541 = vtanh.pop %v10509
      %v10542 = vtanh.pop %v10510
      %v10543 = vtanh.pop %v10511
      %v10544 = vtanh.pop %v10512
      %v10545 = vtanh.pop %v10513
      %v10546 = vtanh.pop %v10514
      %v10547 = vtanh.pop %v10515
      %v10548 = vtanh.pop %v10516
      %v10549 = vtanh.pop %v10517
      %v10550 = vtanh.pop %v10518
      %v10551 = vtanh.pop %v10519
      %v10552 = vtanh.pop %v10520
      %v10553 = vtanh.pop %v10521
      %v10554 = vtanh.pop %v10522
      %v10555 = vtanh.pop %v10523
      %v10556 = vtanh.pop %v10524
      %v10557 = vtanh.pop %v10525
      %v10558 = vtanh.pop %v10526
      %v10559 = vtanh.pop %v10527
      %v10560 = vtanh.pop %v10528
      %v10561 = vtanh.pop %v10529
      %v10562 = vtanh.pop %v10530
      %v10563 = vtanh.pop %v10531
      %v10564 = vtanh.pop %v10532
      %v10565 = vadd.f32 %v10533, 1.0
      %v10566 = vadd.f32 %v10534, 1.0
      %v10567 = vadd.f32 %v10535, 1.0
      %v10568 = vadd.f32 %v10536, 1.0
      %v10569 = vadd.f32 %v10537, 1.0
      %v10570 = vadd.f32 %v10538, 1.0
      %v10571 = vadd.f32 %v10539, 1.0
      %v10572 = vadd.f32 %v10540, 1.0
      %v10573 = vadd.f32 %v10541, 1.0
      %v10574 = vadd.f32 %v10542, 1.0
      %v10575 = vadd.f32 %v10543, 1.0
      %v10576 = vadd.f32 %v10544, 1.0
      %v10577 = vadd.f32 %v10545, 1.0
      %v10578 = vadd.f32 %v10546, 1.0
      %v10579 = vadd.f32 %v10547, 1.0
      %v10580 = vadd.f32 %v10548, 1.0
      %v10581 = vadd.f32 %v10549, 1.0
      %v10582 = vadd.f32 %v10550, 1.0
      %v10583 = vadd.f32 %v10551, 1.0
      %v10584 = vadd.f32 %v10552, 1.0
      %v10585 = vadd.f32 %v10553, 1.0
      %v10586 = vadd.f32 %v10554, 1.0
      %v10587 = vadd.f32 %v10555, 1.0
      %v10588 = vadd.f32 %v10556, 1.0
      %v10589 = vadd.f32 %v10557, 1.0
      %v10590 = vadd.f32 %v10558, 1.0
      %v10591 = vadd.f32 %v10559, 1.0
      %v10592 = vadd.f32 %v10560, 1.0
      %v10593 = vadd.f32 %v10561, 1.0
      %v10594 = vadd.f32 %v10562, 1.0
      %v10595 = vadd.f32 %v10563, 1.0
      %v10596 = vadd.f32 %v10564, 1.0
      %v10597 = vmul.f32 %v10565, 0.5
      %v10598 = vmul.f32 %v10566, 0.5
      %v10599 = vmul.f32 %v10567, 0.5
      %v10600 = vmul.f32 %v10568, 0.5
      %v10601 = vmul.f32 %v10569, 0.5
      %v10602 = vmul.f32 %v10570, 0.5
      %v10603 = vmul.f32 %v10571, 0.5
      %v10604 = vmul.f32 %v10572, 0.5
      %v10605 = vmul.f32 %v10573, 0.5
      %v10606 = vmul.f32 %v10574, 0.5
      %v10607 = vmul.f32 %v10575, 0.5
      %v10608 = vmul.f32 %v10576, 0.5
      %v10609 = vmul.f32 %v10577, 0.5
      %v10610 = vmul.f32 %v10578, 0.5
      %v10611 = vmul.f32 %v10579, 0.5
      %v10612 = vmul.f32 %v10580, 0.5
      %v10613 = vmul.f32 %v10581, 0.5
      %v10614 = vmul.f32 %v10582, 0.5
      %v10615 = vmul.f32 %v10583, 0.5
      %v10616 = vmul.f32 %v10584, 0.5
      %v10617 = vmul.f32 %v10585, 0.5
      %v10618 = vmul.f32 %v10586, 0.5
      %v10619 = vmul.f32 %v10587, 0.5
      %v10620 = vmul.f32 %v10588, 0.5
      %v10621 = vmul.f32 %v10589, 0.5
      %v10622 = vmul.f32 %v10590, 0.5
      %v10623 = vmul.f32 %v10591, 0.5
      %v10624 = vmul.f32 %v10592, 0.5
      %v10625 = vmul.f32 %v10593, 0.5
      %v10626 = vmul.f32 %v10594, 0.5
      %v10627 = vmul.f32 %v10595, 0.5
      %v10628 = vmul.f32 %v10596, 0.5
      %v10629 = vmul.f32 %v10294, %v10597
      %v10630 = vmul.f32 %v10296, %v10598
      %v10631 = vmul.f32 %v10299, %v10599
      %v10632 = vmul.f32 %v10301, %v10600
      %v10633 = vmul.f32 %v10304, %v10601
      %v10634 = vmul.f32 %v10306, %v10602
      %v10635 = vmul.f32 %v10309, %v10603
      %v10636 = vmul.f32 %v10311, %v10604
      %v10637 = vmul.f32 %v10314, %v10605
      %v10638 = vmul.f32 %v10316, %v10606
      %v10639 = vmul.f32 %v10319, %v10607
      %v10640 = vmul.f32 %v10321, %v10608
      %v10641 = vmul.f32 %v10324, %v10609
      %v10642 = vmul.f32 %v10326, %v10610
      %v10643 = vmul.f32 %v10329, %v10611
      %v10644 = vmul.f32 %v10331, %v10612
      %v10645 = vmul.f32 %v10334, %v10613
      %v10646 = vmul.f32 %v10336, %v10614
      %v10647 = vmul.f32 %v10339, %v10615
      %v10648 = vmul.f32 %v10341, %v10616
      %v10649 = vmul.f32 %v10344, %v10617
      %v10650 = vmul.f32 %v10346, %v10618
      %v10651 = vmul.f32 %v10349, %v10619
      %v10652 = vmul.f32 %v10351, %v10620
      %v10653 = vmul.f32 %v10354, %v10621
      %v10654 = vmul.f32 %v10356, %v10622
      %v10655 = vmul.f32 %v10359, %v10623
      %v10656 = vmul.f32 %v10361, %v10624
      %v10657 = vmul.f32 %v10364, %v10625
      %v10658 = vmul.f32 %v10366, %v10626
      %v10659 = vmul.f32 %v10369, %v10627
      %v10660 = vmul.f32 %v10371, %v10628
      %v10661 = vpack.c.bf16 %v10630, %v10629
      %v10662 = vpack.c.bf16 %v10632, %v10631
      %v10663 = vpack.c.bf16 %v10634, %v10633
      %v10664 = vpack.c.bf16 %v10636, %v10635
      %v10665 = vpack.c.bf16 %v10638, %v10637
      %v10666 = vpack.c.bf16 %v10640, %v10639
      %v10667 = vpack.c.bf16 %v10642, %v10641
      %v10668 = vpack.c.bf16 %v10644, %v10643
      %v10669 = vpack.c.bf16 %v10646, %v10645
      %v10670 = vpack.c.bf16 %v10648, %v10647
      %v10671 = vpack.c.bf16 %v10650, %v10649
      %v10672 = vpack.c.bf16 %v10652, %v10651
      %v10673 = vpack.c.bf16 %v10654, %v10653
      %v10674 = vpack.c.bf16 %v10656, %v10655
      %v10675 = vpack.c.bf16 %v10658, %v10657
      %v10676 = vpack.c.bf16 %v10660, %v10659
      %v10677 = vld [vmem:[%s12] sm:$0xf]
      %v10678 = vld [vmem:[%s12 + $0x4] sm:$0xf]
      %v10679 = vld [vmem:[%s12 + $0x8] sm:$0xf]
      %v10680 = vld [vmem:[%s12 + $0xc] sm:$0xf]
      %v10681 = vld [vmem:[%s12 + $0x10] sm:$0xf]
      %v10682 = vld [vmem:[%s12 + $0x14] sm:$0xf]
      %v10683 = vld [vmem:[%s12 + $0x18] sm:$0xf]
      %v10684 = vld [vmem:[%s12 + $0x1c] sm:$0xf]
      %v10685 = vld [vmem:[%s13] sm:$0x1]
      %v10687 = vperm.slane %v10685, 0
      %v10697 = vunpack.c.l.b16 %v10677
      %v10698 = vunpack.c.l.b16 %v10678
      %v10699 = vunpack.c.l.b16 %v10679
      %v10700 = vunpack.c.l.b16 %v10680
      %v10701 = vunpack.c.l.b16 %v10681
      %v10702 = vunpack.c.l.b16 %v10682
      %v10703 = vunpack.c.l.b16 %v10683
      %v10704 = vunpack.c.l.b16 %v10684
      %v10705 = vpack.c.b16 %v10698, %v10697
      %v10706 = vpack.c.b16 %v10700, %v10699
      %v10707 = vpack.c.b16 %v10702, %v10701
      %v10708 = vpack.c.b16 %v10704, %v10703
      %v10714 = vsel %vm558, %v10661, 0
      %v10717 = vsel %vm558, %v10662, 0
      %v10720 = vsel %vm558, %v10663, 0
      %v10723 = vsel %vm558, %v10664, 0
      %v10726 = vsel %vm558, %v10665, 0
      %v10729 = vsel %vm558, %v10666, 0
      %v10732 = vsel %vm558, %v10667, 0
      %v10735 = vsel %vm558, %v10668, 0
      %v10738 = vsel %vm558, %v10669, 0
      %v10741 = vsel %vm558, %v10670, 0
      %v10744 = vsel %vm558, %v10671, 0
      %v10747 = vsel %vm558, %v10672, 0
      %v10750 = vsel %vm558, %v10673, 0
      %v10753 = vsel %vm558, %v10674, 0
      %v10756 = vsel %vm558, %v10675, 0
      %v10759 = vsel %vm558, %v10676, 0
      %10761 = vmatpush.bf16.msra.mxu0 0
      %10762 = vmatpush.bf16.msra.mxu0 0
      %10763 = vmatpush.bf16.msra.mxu0 0
      %10764 = vmatpush.bf16.msra.mxu0 0
      %10765 = vmatpush.bf16.msra.mxu0 %v10708
      %10766 = vmatpush.bf16.msra.mxu0 %v10707
      %10767 = vmatpush.bf16.msra.mxu0 %v10706
      %10768 = vmatpush.bf16.msra.mxu0 %v10705
      %10769 = vmatmul.bf16.gmra.mxu0 %v10714
      %v10770 = vpop.f32.mrf.mxu0
      %v10771 = vadd.f32 %v10687, %v10770
      %v10772 = vpop.f32.mrf.mxu0
      %v10773 = vadd.f32 %v10687, %v10772
      %10774 = vmatmul.bf16.gmra.mxu0 %v10717
      %v10775 = vpop.f32.mrf.mxu0
      %v10776 = vadd.f32 %v10687, %v10775
      %v10777 = vpop.f32.mrf.mxu0
      %v10778 = vadd.f32 %v10687, %v10777
      %10779 = vmatmul.bf16.gmra.mxu0 %v10720
      %v10780 = vpop.f32.mrf.mxu0
      %v10781 = vadd.f32 %v10687, %v10780
      %v10782 = vpop.f32.mrf.mxu0
      %v10783 = vadd.f32 %v10687, %v10782
      %10784 = vmatmul.bf16.gmra.mxu0 %v10723
      %v10785 = vpop.f32.mrf.mxu0
      %v10786 = vadd.f32 %v10687, %v10785
      %v10787 = vpop.f32.mrf.mxu0
      %v10788 = vadd.f32 %v10687, %v10787
      %10789 = vmatmul.bf16.gmra.mxu0 %v10726
      %v10790 = vpop.f32.mrf.mxu0
      %v10791 = vadd.f32 %v10687, %v10790
      %v10792 = vpop.f32.mrf.mxu0
      %v10793 = vadd.f32 %v10687, %v10792
      %10794 = vmatmul.bf16.gmra.mxu0 %v10729
      %v10795 = vpop.f32.mrf.mxu0
      %v10796 = vadd.f32 %v10687, %v10795
      %v10797 = vpop.f32.mrf.mxu0
      %v10798 = vadd.f32 %v10687, %v10797
      %10799 = vmatmul.bf16.gmra.mxu0 %v10732
      %v10800 = vpop.f32.mrf.mxu0
      %v10801 = vadd.f32 %v10687, %v10800
      %v10802 = vpop.f32.mrf.mxu0
      %v10803 = vadd.f32 %v10687, %v10802
      %10804 = vmatmul.bf16.gmra.mxu0 %v10735
      %v10805 = vpop.f32.mrf.mxu0
      %v10806 = vadd.f32 %v10687, %v10805
      %v10807 = vpop.f32.mrf.mxu0
      %v10808 = vadd.f32 %v10687, %v10807
      %10809 = vmatmul.bf16.gmra.mxu0 %v10738
      %v10810 = vpop.f32.mrf.mxu0
      %v10811 = vadd.f32 %v10687, %v10810
      %v10812 = vpop.f32.mrf.mxu0
      %v10813 = vadd.f32 %v10687, %v10812
      %10814 = vmatmul.bf16.gmra.mxu0 %v10741
      %v10815 = vpop.f32.mrf.mxu0
      %v10816 = vadd.f32 %v10687, %v10815
      %v10817 = vpop.f32.mrf.mxu0
      %v10818 = vadd.f32 %v10687, %v10817
      %10819 = vmatmul.bf16.gmra.mxu0 %v10744
      %v10820 = vpop.f32.mrf.mxu0
      %v10821 = vadd.f32 %v10687, %v10820
      %v10822 = vpop.f32.mrf.mxu0
      %v10823 = vadd.f32 %v10687, %v10822
      %10824 = vmatmul.bf16.gmra.mxu0 %v10747
      %v10825 = vpop.f32.mrf.mxu0
      %v10826 = vadd.f32 %v10687, %v10825
      %v10827 = vpop.f32.mrf.mxu0
      %v10828 = vadd.f32 %v10687, %v10827
      %10829 = vmatmul.bf16.gmra.mxu0 %v10750
      %v10830 = vpop.f32.mrf.mxu0
      %v10831 = vadd.f32 %v10687, %v10830
      %v10832 = vpop.f32.mrf.mxu0
      %v10833 = vadd.f32 %v10687, %v10832
      %10834 = vmatmul.bf16.gmra.mxu0 %v10753
      %v10835 = vpop.f32.mrf.mxu0
      %v10836 = vadd.f32 %v10687, %v10835
      %v10837 = vpop.f32.mrf.mxu0
      %v10838 = vadd.f32 %v10687, %v10837
      %10839 = vmatmul.bf16.gmra.mxu0 %v10756
      %v10840 = vpop.f32.mrf.mxu0
      %v10841 = vadd.f32 %v10687, %v10840
      %v10842 = vpop.f32.mrf.mxu0
      %v10843 = vadd.f32 %v10687, %v10842
      %10844 = vmatmul.bf16.gmra.mxu0 %v10759
      %v10845 = vpop.f32.mrf.mxu0
      %v10846 = vadd.f32 %v10687, %v10845
      %v10847 = vpop.f32.mrf.mxu0
      %v10848 = vadd.f32 %v10687, %v10847
      %10849 = vdwg.mxu0
      %v10850 = vpack.c.bf16 %v523, %v523
      %v10851 = vpack.c.bf16 %v10773, %v10771
      %v10852 = vpack.c.bf16 %v10778, %v10776
      %v10853 = vpack.c.bf16 %v10783, %v10781
      %v10854 = vpack.c.bf16 %v10788, %v10786
      %v10855 = vpack.c.bf16 %v10793, %v10791
      %v10856 = vpack.c.bf16 %v10798, %v10796
      %v10857 = vpack.c.bf16 %v10803, %v10801
      %v10858 = vpack.c.bf16 %v10808, %v10806
      %v10859 = vpack.c.bf16 %v10813, %v10811
      %v10860 = vpack.c.bf16 %v10818, %v10816
      %v10861 = vpack.c.bf16 %v10823, %v10821
      %v10862 = vpack.c.bf16 %v10828, %v10826
      %v10863 = vpack.c.bf16 %v10833, %v10831
      %v10864 = vpack.c.bf16 %v10838, %v10836
      %v10865 = vpack.c.bf16 %v10843, %v10841
      %v10866 = vpack.c.bf16 %v10848, %v10846
      %v10868 = vsel %vm558, %v10850, 0
      %v10871 = vsel %vm558, %v10851, 0
      %v10874 = vsel %vm558, %v10852, 0
      %v10877 = vsel %vm558, %v10853, 0
      %v10880 = vsel %vm558, %v10854, 0
      %v10883 = vsel %vm558, %v10855, 0
      %v10886 = vsel %vm558, %v10856, 0
      %v10889 = vsel %vm558, %v10857, 0
      %v10892 = vsel %vm558, %v10858, 0
      %v10895 = vsel %vm558, %v10859, 0
      %v10898 = vsel %vm558, %v10860, 0
      %v10901 = vsel %vm558, %v10861, 0
      %v10904 = vsel %vm558, %v10862, 0
      %v10907 = vsel %vm558, %v10863, 0
      %v10910 = vsel %vm558, %v10864, 0
      %v10913 = vsel %vm558, %v10865, 0
      %v10916 = vsel %vm558, %v10866, 0
      %10918 = vmatpush.bf16.xpose.msra.mxu0 %v10892
      %10919 = vmatpush.bf16.xpose.msra.mxu0 %v10889
      %10920 = vmatpush.bf16.xpose.msra.mxu0 %v10886
      %10921 = vmatpush.bf16.xpose.msra.mxu0 %v10883
      %10922 = vmatpush.bf16.xpose.msra.mxu0 %v10880
      %10923 = vmatpush.bf16.xpose.msra.mxu0 %v10877
      %10924 = vmatpush.bf16.xpose.msra.mxu0 %v10874
      %10925 = vmatpush.bf16.xpose.msra.mxu0 %v10871
      %10926 = vmatmul.bf16.gmra.mxu0 %v10868
      %v10927 = vpop.f32.mrf.mxu0
      %v10928 = vadd.f32 0.0, %v10927
      %v10929 = vpop.f32.mrf.mxu0
      %10930 = vdwg.mxu0
      %10931 = vmatpush.bf16.xpose.msra.mxu0 %v10916
      %10932 = vmatpush.bf16.xpose.msra.mxu0 %v10913
      %10933 = vmatpush.bf16.xpose.msra.mxu0 %v10910
      %10934 = vmatpush.bf16.xpose.msra.mxu0 %v10907
      %10935 = vmatpush.bf16.xpose.msra.mxu0 %v10904
      %10936 = vmatpush.bf16.xpose.msra.mxu0 %v10901
      %10937 = vmatpush.bf16.xpose.msra.mxu0 %v10898
      %10938 = vmatpush.bf16.xpose.msra.mxu0 %v10895
      %10939 = vmatmul.bf16.gmra.mxu0 %v10868
      %v10940 = vpop.f32.mrf.mxu0
      %v10941 = vadd.f32 0.0, %v10940
      %v10942 = vpop.f32.mrf.mxu0
      %10943 = vdwg.mxu0
      %v10944 = vrot.slane %v10928, 4
      %v10945 = vadd.f32 %v10928, %v10944
      %v10946 = vrot.slane %v10945, 2
      %v10947 = vadd.f32 %v10945, %v10946
      %v10948 = vrot.slane %v10947, 1
      %v10949 = vadd.f32 %v10947, %v10948
      %v10950 = vrot.slane %v10941, 4
      %v10951 = vadd.f32 %v10941, %v10950
      %v10952 = vrot.slane %v10951, 2
      %v10953 = vadd.f32 %v10951, %v10952
      %v10954 = vrot.slane %v10953, 1
      %v10955 = vadd.f32 %v10953, %v10954
      %v10956 = vrcp.pop 8.0
      %v10957 = vmul.f32 8.0, %v10956
      %v10958 = vsub.f32 1.0, %v10957
      %v10959 = vmul.f32 %v10956, %v10958
      %v10960 = vadd.f32 %v10956, %v10959
      %vm10961 = vweird.f32 %v10956
      %v10962 = vsel %vm10961, %v10956, %v10960
      %v10963 = vmul.f32 %v10949, %v10962
      %v10964 = vmul.f32 %v10955, %v10962
      %v10965 = vsub.f32 %v10928, %v10963
      %v10966 = vsub.f32 %v10941, %v10964
      %v10967 = vmul.f32 %v10965, %v10965
      %v10968 = vmul.f32 %v10966, %v10966
      %v10969 = vrot.slane %v10967, 4
      %v10970 = vadd.f32 %v10967, %v10969
      %v10971 = vrot.slane %v10970, 2
      %v10972 = vadd.f32 %v10970, %v10971
      %v10973 = vrot.slane %v10972, 1
      %v10974 = vadd.f32 %v10972, %v10973
      %v10975 = vrot.slane %v10968, 4
      %v10976 = vadd.f32 %v10968, %v10975
      %v10977 = vrot.slane %v10976, 2
      %v10978 = vadd.f32 %v10976, %v10977
      %v10979 = vrot.slane %v10978, 1
      %v10980 = vadd.f32 %v10978, %v10979
      %v10981 = vmul.f32 %v10974, %v10962
      %v10982 = vmul.f32 %v10980, %v10962
      %v10983 = vadd.f32 %v10981, 1e-05
      %v10984 = vadd.f32 %v10982, 1e-05
      %v10985 = vrsqrt.pop %v10983
      %v10986 = vmul.f32 %v10985, %v10983
      %v10987 = vmul.f32 %v10986, %v10985
      %v10988 = vmul.f32 0.5, %v10987
      %v10989 = vsub.f32 1.5, %v10988
      %v10990 = vmul.f32 %v10985, %v10989
      %vm10991 = vweird.f32 %v10983
      %vm10992 = vweird.f32 %v10985
      %vm10993 = vmor %vm10991, %vm10992
      %v10994 = vsel %vm10993, %v10985, %v10990
      %v10995 = vrsqrt.pop %v10984
      %v10996 = vmul.f32 %v10995, %v10984
      %v10997 = vmul.f32 %v10996, %v10995
      %v10998 = vmul.f32 0.5, %v10997
      %v10999 = vsub.f32 1.5, %v10998
      %v11000 = vmul.f32 %v10995, %v10999
      %vm11001 = vweird.f32 %v10984
      %vm11002 = vweird.f32 %v10995
      %vm11003 = vmor %vm11001, %vm11002
      %v11004 = vsel %vm11003, %v10995, %v11000
      %v11005 = vmul.f32 %v10965, %v10994
      %v11006 = vmul.f32 %v10966, %v11004
      %v11007 = vld [vmem:[%s14] sm:$0xff]
      %11009 = vset.pattern.permute.xlu0 0
      %11010 = vperm.xlu0 %11009, %v11007
      %v11011 = vpop.permute.xlu0 %11010
      %v11013 = vmul.f32 %v11005, %v11011
      %v11014 = vmul.f32 %v11006, %v11011
      %v11015 = vld [vmem:[%s15] sm:$0xff]
      %11017 = vset.pattern.permute.xlu0 0
      %11018 = vperm.xlu0 %11017, %v11015
      %v11019 = vpop.permute.xlu0 %11018
      %v11021 = vadd.f32 %v11013, %v11019
      %v11022 = vadd.f32 %v11014, %v11019
      %11023 = vst [vmem:[%s521] sm:$0xff] %v11021
      %11024 = vst [vmem:[%s521 + $0x8] sm:$0xff] %v11022
      %p11025 = scmp.lt.s32.totalorder %s27, 1
      %s11026 = scalar_select %p11025, %s27, 1
      %s11027 = smul.addr %s11026, 2
      %s11028 = smul.addr %s11027, 8
      %s11029 = scalar_lea.vmem %s16, %s11028
      // Predicated region
      $region85: #{transformer_segmentation_head.1} parent=83 // pred_check
        %p11030 = pneg %p386
      $region86: #{transformer_segmentation_head.1} parent=83 // pred_check_branch
        %11032 = sbr.rel (%p11030) target = $region88
      $region87: #{transformer_segmentation_head.1} parent=83 // pred_region
        _
      $region88: #{transformer_segmentation_head.1} parent=83 // pred_fallthru
        _
    $region84: #{transformer_segmentation_head.1} parent=5 // pred_fallthru
      _
    %p11033 = scmp.le.s32.totalorder 2, %s22
    // Predicated region
    $region89: #{transformer_segmentation_head.1} parent=5 // pred_check
      %p11034 = pneg %p11033
    $region90: #{transformer_segmentation_head.1} parent=5 // pred_check_branch
      %11036 = sbr.rel (%p11034) target = $region92
    $region91: #{transformer_segmentation_head.1} parent=5 // pred_region
      %s11037 = ssub.s32 %s22, 2
      // Predicated region
      $region93: #{transformer_segmentation_head.1} parent=91 // pred_check
        %p11038 = pneg %p392
      $region94: #{transformer_segmentation_head.1} parent=91 // pred_check_branch
        %11040 = sbr.rel (%p11038) target = $region96
      $region95: #{transformer_segmentation_head.1} parent=91 // pred_region
        %p11041 = scmp.lt.s32.totalorder %s28, 1
        %s11042 = scalar_select %p11041, %s28, 1
        %s11043 = smul.addr %s11042, 2
        %s11044 = smul.addr %s11043, 8
        %s11045 = scalar_lea.vmem %s16, %s11044
      $region96: #{transformer_segmentation_head.1} parent=91 // pred_fallthru
        _
    $region92: #{transformer_segmentation_head.1} parent=5 // pred_fallthru
      _
  $region6: #{transformer_segmentation_head.1} parent=0 // loop_footer
    %s26 = sadd.s32 1, %s22
  $region7: #{transformer_segmentation_head.1} parent=0 // loop_footer_branch
    %21 = sbr.rel target = $region3
  $region8: #{transformer_segmentation_head.1} parent=0 // loop_exit
    _

</llo_original>
